<compile_context>
chip_gen: v7x
topology: tpu7x:2x2x1
jax: 0.10.0
libtpu: 0.0.40
codegen_flags: <defaults>
</compile_context>

<pallas_src>
import functools
import math

import jax
import jax.numpy as jnp
import numpy as np
from jax.experimental import pallas as pl
from jax.experimental.pallas import tpu as pltpu

N_DIM = 3
PAD_DIM = 128                       # N_DIM zero-padded to a lane-dense width
TIME_EMB_DIM = 512
HALF_DIM = TIME_EMB_DIM // 2        # 256
LN_EPS = 1e-5
INV_NORM = 1.0 / math.sqrt(HALF_DIM)  # ||[sin,cos]||_2 == sqrt(HALF_DIM) exactly

# ----------------------------- packed layouts ------------------------------ #
# Slab A: weights with fan-in 512 (columns, all 128-aligned).
A_ROWS, A_WIDTH = 512, 1536
A_LAYOUT = {"tm2": (0, 512), "tp1": (512, 128), "tp2": (640, 128),
            "tpb": (768, 256), "tpu1": (1024, 256), "tpu2": (1280, 128),
            "tpu3": (1408, 128)}

# Slab B: weights with fan-in 256.
B_ROWS, B_WIDTH = 256, 1920
B_LAYOUT = {"tm1a": (0, 512), "tm1b": (512, 512), "bn": (1024, 256),
            "up1a": (1280, 256), "up1b": (1536, 256), "rp": (1792, 128)}

# Slab C: weights with fan-in 128 (64-wide pieces get a 128-wide padded home).
C_ROWS, C_WIDTH = 128, 896
C_LAYOUT = {"d1": (0, 128), "d2": (128, 256), "up2a": (384, 128),
            "up2b": (512, 128), "up3a": (640, 64), "up3b": (768, 64)}

FIN_ROWS = 64                       # final: (64, 3) padded to (64, 128)

# Small-vector slab: one row per bias / LN gamma / LN beta / freqs.
# value = (row index, width read by the kernel).
V_ROWS, V_WIDTH = 32, 512
V_LAYOUT = {"freqs": (0, 256), "tm1_b": (1, 512), "tm2_b": (2, 512),
            "tp1_b": (3, 128), "tp2_b": (4, 128), "tpb_b": (5, 256),
            "tpu1_b": (6, 256), "tpu2_b": (7, 128), "tpu3_b": (8, 128),
            "d1_b": (9, 128), "n1_g": (10, 128), "n1_b": (11, 128),
            "d2_b": (12, 256), "n2_g": (13, 256), "n2_b": (14, 256),
            "bn_b": (15, 256), "nb_g": (16, 256), "nb_b": (17, 256),
            "up1_b": (18, 256), "nu1_g": (19, 256), "nu1_b": (20, 256),
            "rp_b": (21, 128), "up2_b": (22, 128), "nu2_g": (23, 128),
            "nu2_b": (24, 128), "up3_b": (25, 64), "nu3_g": (26, 64),
            "nu3_b": (27, 64), "fin_b": (28, 128)}


# ----------------------------- kernel -------------------------------------- #
def unet1d_kernel(x_ref, t_ref, vec_ref, wa_ref, wb_ref, wc_ref, fin_ref,
                  out_ref):
    dot = functools.partial(jnp.dot, preferred_element_type=jnp.float32)
    f32 = jnp.float32

    def vec(name):                                   # (1, width) f32
        row, width = V_LAYOUT[name]
        return vec_ref[row:row + 1, :width]

    def w512(name):                                  # (512, width) f32
        col, width = A_LAYOUT[name]
        return wa_ref[:, col:col + width].astype(f32)

    def w256(name):                                  # (256, width) f32
        col, width = B_LAYOUT[name]
        return wb_ref[:, col:col + width].astype(f32)

    def w128(name):                                  # (128, width) f32
        col, width = C_LAYOUT[name]
        return wc_ref[:, col:col + width].astype(f32)

    def silu(u):
        # Compute is not the bottleneck here; keep the exact sigmoid.
        return u * (1.0 / (1.0 + jnp.exp(-u)))

    def layernorm(u, gamma, beta):
        mu = jnp.mean(u, axis=-1, keepdims=True)
        var = jnp.mean((u - mu) ** 2, axis=-1, keepdims=True)
        return (u - mu) * jax.lax.rsqrt(var + LN_EPS) * gamma + beta

    # --- SinusoidalPositionEmbeddings (sin/cos halves kept separate) --------
    # sin^2+cos^2 == 1 elementwise, so the L2 norm is exactly sqrt(HALF_DIM).
    angs = t_ref[...] * vec("freqs")                 # (TB, 256)
    sin_e = jnp.sin(angs) * INV_NORM
    cos_e = jnp.cos(angs) * INV_NORM

    # --- time_mlp: Linear -> SiLU -> Linear ----------------------------------
    h = silu(dot(sin_e, w256("tm1a")) + dot(cos_e, w256("tm1b")) + vec("tm1_b"))
    temb = dot(h, w512("tm2")) + vec("tm2_b")        # (TB, 512)

    x = x_ref[...]                                   # (TB, 128), lanes >= 3 are 0

    # --- down path ------------------------------------------------------------
    a = x + dot(temb, w512("tp1")) + vec("tp1_b")
    h1 = layernorm(silu(dot(a, w128("d1")) + vec("d1_b")),
                   vec("n1_g"), vec("n1_b"))         # (TB, 128)

    a = h1 + dot(temb, w512("tp2")) + vec("tp2_b")
    h2 = layernorm(silu(dot(a, w128("d2")) + vec("d2_b")),
                   vec("n2_g"), vec("n2_b"))         # (TB, 256)

    a = h2 + dot(temb, w512("tpb")) + vec("tpb_b")
    hb = layernorm(silu(dot(a, w256("bn")) + vec("bn_b")),
                   vec("nb_g"), vec("nb_b"))         # (TB, 256)

    # --- up path (torch.cat == two matmuls against split weights) -------------
    a = hb + dot(temb, w512("tpu1")) + vec("tpu1_b")
    h = dot(a, w256("up1a")) + dot(h2, w256("up1b")) + vec("up1_b")
    h = layernorm(silu(h), vec("nu1_g"), vec("nu1_b"))   # (TB, 256)

    h = dot(h, w256("rp")) + vec("rp_b")             # (TB, 128)

    a = h + dot(temb, w512("tpu2")) + vec("tpu2_b")
    h = dot(a, w128("up2a")) + dot(h1, w128("up2b")) + vec("up2_b")
    h = layernorm(silu(h), vec("nu2_g"), vec("nu2_b"))   # (TB, 128)

    a = h + dot(temb, w512("tpu3")) + vec("tpu3_b")
    h = dot(a, w128("up3a")) + dot(h1, w128("up3b")) + vec("up3_b")
    h = layernorm(silu(h), vec("nu3_g"), vec("nu3_b"))   # (TB, 64)

    out_ref[...] = dot(h, fin_ref[...].astype(f32)) + vec("fin_b")  # (TB, 128)


# ----------------------------- parameters ----------------------------------- #
def init_params(key):
    """PyTorch-Linear-style init; weight matrices stored in bf16 ([in, out])."""
    def linear(k, fan_in, fan_out):
        kw, kb = jax.random.split(k)
        bound = 1.0 / math.sqrt(fan_in)
        w = jax.random.uniform(kw, (fan_in, fan_out), jnp.float32, -bound, bound)
        b = jax.random.uniform(kb, (1, fan_out), jnp.float32, -bound, bound)
        return w.astype(jnp.bfloat16), b

    def ln(n):  # PyTorch LayerNorm default: gamma=1, beta=0
        return (jnp.ones((1, n), jnp.float32), jnp.zeros((1, n), jnp.float32))

    keys = jax.random.split(key, 16)
    p = {}
    p["tm1"] = linear(keys[0], TIME_EMB_DIM, TIME_EMB_DIM)
    p["tm2"] = linear(keys[1], TIME_EMB_DIM, TIME_EMB_DIM)
    p["tp1"] = linear(keys[2], TIME_EMB_DIM, N_DIM)
    p["tp2"] = linear(keys[3], TIME_EMB_DIM, 128)
    p["tpb"] = linear(keys[4], TIME_EMB_DIM, 256)
    p["tpu1"] = linear(keys[5], TIME_EMB_DIM, 256)
    p["tpu2"] = linear(keys[6], TIME_EMB_DIM, 128)
    p["tpu3"] = linear(keys[7], TIME_EMB_DIM, 128)
    p["d1"] = linear(keys[8], N_DIM, 128)
    p["d2"] = linear(keys[9], 128, 256)
    p["bn"] = linear(keys[10], 256, 256)
    p["up1"] = linear(keys[11], 512, 256)
    p["rp"] = linear(keys[12], 256, 128)
    p["up2"] = linear(keys[13], 256, 128)
    p["up3"] = linear(keys[14], 256, 64)
    p["fin"] = linear(keys[15], 64, N_DIM)
    p["n1"], p["n2"], p["nb"] = ln(128), ln(256), ln(256)
    p["nu1"], p["nu2"], p["nu3"] = ln(256), ln(128), ln(64)
    # NOTE: time_proj_3 exists in __init__ but is never used in forward(); omitted.
    return p


def _freqs():
    scale = math.log(10000.0) / (HALF_DIM - 1)
    return jnp.exp(-jnp.arange(HALF_DIM, dtype=jnp.float32) * scale).reshape(1, HALF_DIM)


def pack_params(p):
    """One-time host-side packing into the slabs consumed by the kernel."""
    bf16 = jnp.bfloat16

    def put(slab, w, col):
        w = jnp.asarray(w, bf16)
        r, c = w.shape
        return slab.at[:r, col:col + c].set(w)

    wa = jnp.zeros((A_ROWS, A_WIDTH), bf16)
    for name, src in (("tm2", p["tm2"][0]), ("tp1", p["tp1"][0]),
                      ("tp2", p["tp2"][0]), ("tpb", p["tpb"][0]),
                      ("tpu1", p["tpu1"][0]), ("tpu2", p["tpu2"][0]),
                      ("tpu3", p["tpu3"][0])):
        wa = put(wa, src, A_LAYOUT[name][0])

    tm1_w, up1_w = p["tm1"][0], p["up1"][0]
    wb = jnp.zeros((B_ROWS, B_WIDTH), bf16)
    for name, src in (("tm1a", tm1_w[:HALF_DIM]), ("tm1b", tm1_w[HALF_DIM:]),
                      ("bn", p["bn"][0]), ("up1a", up1_w[:256]),
                      ("up1b", up1_w[256:]), ("rp", p["rp"][0])):
        wb = put(wb, src, B_LAYOUT[name][0])

    up2_w, up3_w = p["up2"][0], p["up3"][0]
    wc = jnp.zeros((C_ROWS, C_WIDTH), bf16)
    for name, src in (("d1", p["d1"][0]), ("d2", p["d2"][0]),
                      ("up2a", up2_w[:128]), ("up2b", up2_w[128:]),
                      ("up3a", up3_w[:128]), ("up3b", up3_w[128:])):
        wc = put(wc, src, C_LAYOUT[name][0])

    fin = jnp.zeros((FIN_ROWS, PAD_DIM), bf16).at[:, :N_DIM].set(
        jnp.asarray(p["fin"][0], bf16))

    vec = jnp.zeros((V_ROWS, V_WIDTH), jnp.float32)
    vec = vec.at[V_LAYOUT["freqs"][0], :HALF_DIM].set(_freqs().reshape(-1))
    vec_entries = {
        "tm1_b": p["tm1"][1], "tm2_b": p["tm2"][1],
        "tp1_b": p["tp1"][1], "tp2_b": p["tp2"][1], "tpb_b": p["tpb"][1],
        "tpu1_b": p["tpu1"][1], "tpu2_b": p["tpu2"][1], "tpu3_b": p["tpu3"][1],
        "d1_b": p["d1"][1], "n1_g": p["n1"][0], "n1_b": p["n1"][1],
        "d2_b": p["d2"][1], "n2_g": p["n2"][0], "n2_b": p["n2"][1],
        "bn_b": p["bn"][1], "nb_g": p["nb"][0], "nb_b": p["nb"][1],
        "up1_b": p["up1"][1], "nu1_g": p["nu1"][0], "nu1_b": p["nu1"][1],
        "rp_b": p["rp"][1], "up2_b": p["up2"][1], "nu2_g": p["nu2"][0],
        "nu2_b": p["nu2"][1], "up3_b": p["up3"][1], "nu3_g": p["nu3"][0],
        "nu3_b": p["nu3"][1], "fin_b": p["fin"][1],
    }
    for name, arr in vec_entries.items():
        row, _ = V_LAYOUT[name]
        flat = jnp.asarray(arr, jnp.float32).reshape(-1)
        vec = vec.at[row, :flat.shape[0]].set(flat)

    return {"wa": wa, "wb": wb, "wc": wc, "fin": fin, "vec": vec}


# ----------------------------- wrapper --------------------------------------- #
def _batch_tiling(batch):
    if batch <= 128:
        b_pad = max(8, -(-batch // 8) * 8)
        return b_pad, b_pad
    b_pad = -(-batch // 128) * 128
    return b_pad, 128


def unet1d_forward(packed, x, t):
    batch = x.shape[0]
    b_pad, tb = _batch_tiling(batch)

    x_pad = jnp.zeros((b_pad, PAD_DIM), jnp.float32).at[:batch, :N_DIM].set(
        x.astype(jnp.float32))
    t_pad = jnp.zeros((b_pad, 1), jnp.float32).at[:batch, 0].set(
        t.astype(jnp.float32))

    const = lambda i: (0, 0)       # weight slabs: loaded once, stay resident
    batch_map = lambda i: (i, 0)   # activations: per-batch-tile blocks

    out = pl.pallas_call(
        unet1d_kernel,
        out_shape=jax.ShapeDtypeStruct((b_pad, PAD_DIM), jnp.float32),
        grid=(b_pad // tb,),
        in_specs=[
            pl.BlockSpec((tb, PAD_DIM), batch_map),      # x (lane-padded)
            pl.BlockSpec((tb, 1), batch_map),            # t
            pl.BlockSpec((V_ROWS, V_WIDTH), const),      # biases / LN / freqs slab
            pl.BlockSpec((A_ROWS, A_WIDTH), const),      # fan-in-512 weights (bf16)
            pl.BlockSpec((B_ROWS, B_WIDTH), const),      # fan-in-256 weights (bf16)
            pl.BlockSpec((C_ROWS, C_WIDTH), const),      # fan-in-128 weights (bf16)
            pl.BlockSpec((FIN_ROWS, PAD_DIM), const),    # final weight (padded, bf16)
        ],
        out_specs=pl.BlockSpec((tb, PAD_DIM), batch_map),
        compiler_params=pltpu.CompilerParams(
            dimension_semantics=("parallel",),
            vmem_limit_bytes=32 * 1024 * 1024),
    )(x_pad, t_pad, packed["vec"], packed["wa"], packed["wb"],
      packed["wc"], packed["fin"])

    return out[:batch, :N_DIM]


# ----------------------------- pure-JAX reference ---------------------------- #
def unet1d_reference(params, x, t):
    t_f = t.astype(jnp.float32)[:, None]
    emb = t_f * _freqs()
    emb = jnp.concatenate([jnp.sin(emb), jnp.cos(emb)], axis=-1)
    emb = emb / jnp.linalg.norm(emb, axis=-1, keepdims=True)

    def lin(v, p):
        return v @ p[0].astype(jnp.float32) + p[1]

    def silu(v):
        return v * jax.nn.sigmoid(v)

    def layernorm(v, p):
        mu = v.mean(-1, keepdims=True)
        var = ((v - mu) ** 2).mean(-1, keepdims=True)
        return (v - mu) / jnp.sqrt(var + LN_EPS) * p[0] + p[1]

    temb = lin(silu(lin(emb, params["tm1"])), params["tm2"])
    h1 = layernorm(silu(lin(x + lin(temb, params["tp1"]), params["d1"])), params["n1"])
    h2 = layernorm(silu(lin(h1 + lin(temb, params["tp2"]), params["d2"])), params["n2"])
    h = layernorm(silu(lin(h2 + lin(temb, params["tpb"]), params["bn"])), params["nb"])
    h = layernorm(silu(lin(jnp.concatenate([h + lin(temb, params["tpu1"]), h2], -1),
                           params["up1"])), params["nu1"])
    h = lin(h, params["rp"])
    h = layernorm(silu(lin(jnp.concatenate([h + lin(temb, params["tpu2"]), h1], -1),
                           params["up2"])), params["nu2"])
    h = layernorm(silu(lin(jnp.concatenate([h + lin(temb, params["tpu3"]), h1], -1),
                           params["up3"])), params["nu3"])
    return lin(h, params["fin"])


# ----------------------------- main ------------------------------------------ #
if __name__ == "__main__":
    key = jax.random.PRNGKey(0)
    kp, kx, kt = jax.random.split(key, 3)
    params = init_params(kp)
    packed = pack_params(params)          # one-time packing (not per call)

    B = 8
    x = jax.random.normal(kx, (B, N_DIM), jnp.float32)
    t = jax.random.randint(kt, (B,), 0, 1000)

    fwd = jax.jit(unet1d_forward)
    out = jax.block_until_ready(fwd(packed, x, t))

    ref = unet1d_reference(params, x, t)
    np.testing.assert_allclose(np.asarray(out), np.asarray(ref),
                               atol=5e-3, rtol=5e-3)
    print("KERNEL_OK")
</pallas_src>

<mosaic_0001>
module attributes {stable_mosaic.version = 11 : i64} {
  func.func @unet1d_kernel(%arg0: i32, %arg1: memref<8x128xf32, #tpu.memory_space<vmem>>, %arg2: memref<8x1xf32, #tpu.memory_space<vmem>>, %arg3: memref<32x512xf32, #tpu.memory_space<vmem>>, %arg4: memref<512x1536xbf16, #tpu.memory_space<vmem>>, %arg5: memref<256x1920xbf16, #tpu.memory_space<vmem>>, %arg6: memref<128x896xbf16, #tpu.memory_space<vmem>>, %arg7: memref<64x128xbf16, #tpu.memory_space<vmem>>, %arg8: memref<8x128xf32, #tpu.memory_space<vmem>>) attributes {dimension_semantics = [#tpu.dimension_semantics<parallel>], iteration_bounds = array<i64: 1>, scalar_prefetch = 0 : i64, scratch_operands = 0 : i64, tpu.core_type = #tpu.core_type<tc>, window_params = [{transform_indices = @transform_0, window_bounds = array<i64: 8, 128>}, {transform_indices = @transform_1, window_bounds = array<i64: 8, 1>}, {pipeline_mode = #tpu.pipeline_mode<synchronous>, transform_indices = @transform_2, window_bounds = array<i64: 32, 512>}, {pipeline_mode = #tpu.pipeline_mode<synchronous>, transform_indices = @transform_3, window_bounds = array<i64: 512, 1536>}, {pipeline_mode = #tpu.pipeline_mode<synchronous>, transform_indices = @transform_4, window_bounds = array<i64: 256, 1920>}, {pipeline_mode = #tpu.pipeline_mode<synchronous>, transform_indices = @transform_5, window_bounds = array<i64: 128, 896>}, {pipeline_mode = #tpu.pipeline_mode<synchronous>, transform_indices = @transform_6, window_bounds = array<i64: 64, 128>}, {transform_indices = @transform_7, window_bounds = array<i64: 8, 128>}]} {
    %c0 = arith.constant 0 : index
    %c0_0 = arith.constant 0 : index
    %0 = vector.load %arg2[%c0, %c0_0] : memref<8x1xf32, #tpu.memory_space<vmem>>, vector<8x1xf32>
    %c0_1 = arith.constant 0 : index
    %c0_2 = arith.constant 0 : index
    %1 = vector.load %arg3[%c0_1, %c0_2] : memref<32x512xf32, #tpu.memory_space<vmem>>, vector<1x256xf32>
    %2 = vector.broadcast %0 : vector<8x1xf32> to vector<8x256xf32>
    %3 = vector.broadcast %1 : vector<1x256xf32> to vector<8x256xf32>
    %4 = arith.mulf %2, %3 : vector<8x256xf32>
    %5 = math.sin %4 : vector<8x256xf32>
    %cst = arith.constant 6.250000e-02 : f32
    %6 = vector.broadcast %cst : f32 to vector<8x256xf32>
    %7 = arith.mulf %5, %6 : vector<8x256xf32>
    %8 = math.cos %4 : vector<8x256xf32>
    %cst_3 = arith.constant 6.250000e-02 : f32
    %9 = vector.broadcast %cst_3 : f32 to vector<8x256xf32>
    %10 = arith.mulf %8, %9 : vector<8x256xf32>
    %c0_4 = arith.constant 0 : index
    %c0_5 = arith.constant 0 : index
    %11 = vector.load %arg5[%c0_4, %c0_5] : memref<256x1920xbf16, #tpu.memory_space<vmem>>, vector<256x512xbf16>
    %12 = arith.extf %11 : vector<256x512xbf16> to vector<256x512xf32>
    %cst_6 = arith.constant dense<0.000000e+00> : vector<8x512xf32>
    %13 = tpu.matmul %7, %12, %cst_6 {dimension_numbers = #tpu.dot_dimension_numbers<[1], [0], [0], [1], [0, 0, 1, 1], [], []>} : vector<8x256xf32>, vector<256x512xf32>, vector<8x512xf32> -> vector<8x512xf32>
    %c0_7 = arith.constant 0 : index
    %c512 = arith.constant 512 : index
    %14 = vector.load %arg5[%c0_7, %c512] : memref<256x1920xbf16, #tpu.memory_space<vmem>>, vector<256x512xbf16>
    %15 = arith.extf %14 : vector<256x512xbf16> to vector<256x512xf32>
    %cst_8 = arith.constant dense<0.000000e+00> : vector<8x512xf32>
    %16 = tpu.matmul %10, %15, %cst_8 {dimension_numbers = #tpu.dot_dimension_numbers<[1], [0], [0], [1], [0, 0, 1, 1], [], []>} : vector<8x256xf32>, vector<256x512xf32>, vector<8x512xf32> -> vector<8x512xf32>
    %17 = arith.addf %13, %16 : vector<8x512xf32>
    %c1 = arith.constant 1 : index
    %c0_9 = arith.constant 0 : index
    %18 = vector.load %arg3[%c1, %c0_9] : memref<32x512xf32, #tpu.memory_space<vmem>>, vector<1x512xf32>
    %19 = vector.broadcast %18 : vector<1x512xf32> to vector<8x512xf32>
    %20 = arith.addf %17, %19 : vector<8x512xf32>
    %cst_10 = arith.constant 0.000000e+00 : f32
    %21 = vector.broadcast %cst_10 : f32 to vector<8x512xf32>
    %22 = arith.subf %21, %20 : vector<8x512xf32>
    %23 = math.exp %22 : vector<8x512xf32>
    %cst_11 = arith.constant 1.000000e+00 : f32
    %24 = vector.broadcast %cst_11 : f32 to vector<8x512xf32>
    %25 = arith.addf %24, %23 : vector<8x512xf32>
    %cst_12 = arith.constant 1.000000e+00 : f32
    %26 = vector.broadcast %cst_12 : f32 to vector<8x512xf32>
    %27 = arith.divf %26, %25 : vector<8x512xf32>
    %28 = arith.mulf %20, %27 : vector<8x512xf32>
    %c0_13 = arith.constant 0 : index
    %c0_14 = arith.constant 0 : index
    %29 = vector.load %arg4[%c0_13, %c0_14] : memref<512x1536xbf16, #tpu.memory_space<vmem>>, vector<512x512xbf16>
    %30 = arith.extf %29 : vector<512x512xbf16> to vector<512x512xf32>
    %cst_15 = arith.constant dense<0.000000e+00> : vector<8x512xf32>
    %31 = tpu.matmul %28, %30, %cst_15 {dimension_numbers = #tpu.dot_dimension_numbers<[1], [0], [0], [1], [0, 0, 1, 1], [], []>} : vector<8x512xf32>, vector<512x512xf32>, vector<8x512xf32> -> vector<8x512xf32>
    %c2 = arith.constant 2 : index
    %c0_16 = arith.constant 0 : index
    %32 = vector.load %arg3[%c2, %c0_16] : memref<32x512xf32, #tpu.memory_space<vmem>>, vector<1x512xf32>
    %33 = vector.broadcast %32 : vector<1x512xf32> to vector<8x512xf32>
    %34 = arith.addf %31, %33 : vector<8x512xf32>
    %c0_17 = arith.constant 0 : index
    %c0_18 = arith.constant 0 : index
    %35 = vector.load %arg1[%c0_17, %c0_18] : memref<8x128xf32, #tpu.memory_space<vmem>>, vector<8x128xf32>
    %c0_19 = arith.constant 0 : index
    %c512_20 = arith.constant 512 : index
    %36 = vector.load %arg4[%c0_19, %c512_20] : memref<512x1536xbf16, #tpu.memory_space<vmem>>, vector<512x128xbf16>
    %37 = arith.extf %36 : vector<512x128xbf16> to vector<512x128xf32>
    %cst_21 = arith.constant dense<0.000000e+00> : vector<8x128xf32>
    %38 = tpu.matmul %34, %37, %cst_21 {dimension_numbers = #tpu.dot_dimension_numbers<[1], [0], [0], [1], [0, 0, 1, 1], [], []>} : vector<8x512xf32>, vector<512x128xf32>, vector<8x128xf32> -> vector<8x128xf32>
    %39 = arith.addf %35, %38 : vector<8x128xf32>
    %c3 = arith.constant 3 : index
    %c0_22 = arith.constant 0 : index
    %40 = vector.load %arg3[%c3, %c0_22] : memref<32x512xf32, #tpu.memory_space<vmem>>, vector<1x128xf32>
    %41 = vector.broadcast %40 : vector<1x128xf32> to vector<8x128xf32>
    %42 = arith.addf %39, %41 : vector<8x128xf32>
    %c0_23 = arith.constant 0 : index
    %c0_24 = arith.constant 0 : index
    %43 = vector.load %arg6[%c0_23, %c0_24] : memref<128x896xbf16, #tpu.memory_space<vmem>>, vector<128x128xbf16>
    %44 = arith.extf %43 : vector<128x128xbf16> to vector<128x128xf32>
    %cst_25 = arith.constant dense<0.000000e+00> : vector<8x128xf32>
    %45 = tpu.matmul %42, %44, %cst_25 {dimension_numbers = #tpu.dot_dimension_numbers<[1], [0], [0], [1], [0, 0, 1, 1], [], []>} : vector<8x128xf32>, vector<128x128xf32>, vector<8x128xf32> -> vector<8x128xf32>
    %c9 = arith.constant 9 : index
    %c0_26 = arith.constant 0 : index
    %46 = vector.load %arg3[%c9, %c0_26] : memref<32x512xf32, #tpu.memory_space<vmem>>, vector<1x128xf32>
    %47 = vector.broadcast %46 : vector<1x128xf32> to vector<8x128xf32>
    %48 = arith.addf %45, %47 : vector<8x128xf32>
    %cst_27 = arith.constant 0.000000e+00 : f32
    %49 = vector.broadcast %cst_27 : f32 to vector<8x128xf32>
    %50 = arith.subf %49, %48 : vector<8x128xf32>
    %51 = math.exp %50 : vector<8x128xf32>
    %cst_28 = arith.constant 1.000000e+00 : f32
    %52 = vector.broadcast %cst_28 : f32 to vector<8x128xf32>
    %53 = arith.addf %52, %51 : vector<8x128xf32>
    %cst_29 = arith.constant 1.000000e+00 : f32
    %54 = vector.broadcast %cst_29 : f32 to vector<8x128xf32>
    %55 = arith.divf %54, %53 : vector<8x128xf32>
    %56 = arith.mulf %48, %55 : vector<8x128xf32>
    %c10 = arith.constant 10 : index
    %c0_30 = arith.constant 0 : index
    %57 = vector.load %arg3[%c10, %c0_30] : memref<32x512xf32, #tpu.memory_space<vmem>>, vector<1x128xf32>
    %c11 = arith.constant 11 : index
    %c0_31 = arith.constant 0 : index
    %58 = vector.load %arg3[%c11, %c0_31] : memref<32x512xf32, #tpu.memory_space<vmem>>, vector<1x128xf32>
    %cst_32 = arith.constant dense<0.000000e+00> : vector<8xf32>
    %59 = vector.multi_reduction <add>, %56, %cst_32 [1] : vector<8x128xf32> to vector<8xf32>
    %60 = vector.shape_cast %59 : vector<8xf32> to vector<8x1xf32>
    %cst_33 = arith.constant 1.280000e+02 : f32
    %61 = vector.broadcast %cst_33 : f32 to vector<8x1xf32>
    %62 = arith.divf %60, %61 : vector<8x1xf32>
    %63 = vector.broadcast %62 : vector<8x1xf32> to vector<8x128xf32>
    %64 = arith.subf %56, %63 : vector<8x128xf32>
    %65 = arith.mulf %64, %64 : vector<8x128xf32>
    %cst_34 = arith.constant dense<0.000000e+00> : vector<8xf32>
    %66 = vector.multi_reduction <add>, %65, %cst_34 [1] : vector<8x128xf32> to vector<8xf32>
    %67 = vector.shape_cast %66 : vector<8xf32> to vector<8x1xf32>
    %cst_35 = arith.constant 1.280000e+02 : f32
    %68 = vector.broadcast %cst_35 : f32 to vector<8x1xf32>
    %69 = arith.divf %67, %68 : vector<8x1xf32>
    %70 = vector.broadcast %62 : vector<8x1xf32> to vector<8x128xf32>
    %71 = arith.subf %56, %70 : vector<8x128xf32>
    %cst_36 = arith.constant 9.99999974E-6 : f32
    %72 = vector.broadcast %cst_36 : f32 to vector<8x1xf32>
    %73 = arith.addf %69, %72 : vector<8x1xf32>
    %74 = math.rsqrt %73 : vector<8x1xf32>
    %75 = vector.broadcast %74 : vector<8x1xf32> to vector<8x128xf32>
    %76 = arith.mulf %71, %75 : vector<8x128xf32>
    %77 = vector.broadcast %57 : vector<1x128xf32> to vector<8x128xf32>
    %78 = arith.mulf %76, %77 : vector<8x128xf32>
    %79 = vector.broadcast %58 : vector<1x128xf32> to vector<8x128xf32>
    %80 = arith.addf %78, %79 : vector<8x128xf32>
    %c0_37 = arith.constant 0 : index
    %c640 = arith.constant 640 : index
    %81 = vector.load %arg4[%c0_37, %c640] : memref<512x1536xbf16, #tpu.memory_space<vmem>>, vector<512x128xbf16>
    %82 = arith.extf %81 : vector<512x128xbf16> to vector<512x128xf32>
    %cst_38 = arith.constant dense<0.000000e+00> : vector<8x128xf32>
    %83 = tpu.matmul %34, %82, %cst_38 {dimension_numbers = #tpu.dot_dimension_numbers<[1], [0], [0], [1], [0, 0, 1, 1], [], []>} : vector<8x512xf32>, vector<512x128xf32>, vector<8x128xf32> -> vector<8x128xf32>
    %84 = arith.addf %80, %83 : vector<8x128xf32>
    %c4 = arith.constant 4 : index
    %c0_39 = arith.constant 0 : index
    %85 = vector.load %arg3[%c4, %c0_39] : memref<32x512xf32, #tpu.memory_space<vmem>>, vector<1x128xf32>
    %86 = vector.broadcast %85 : vector<1x128xf32> to vector<8x128xf32>
    %87 = arith.addf %84, %86 : vector<8x128xf32>
    %c0_40 = arith.constant 0 : index
    %c128 = arith.constant 128 : index
    %88 = vector.load %arg6[%c0_40, %c128] : memref<128x896xbf16, #tpu.memory_space<vmem>>, vector<128x256xbf16>
    %89 = arith.extf %88 : vector<128x256xbf16> to vector<128x256xf32>
    %cst_41 = arith.constant dense<0.000000e+00> : vector<8x256xf32>
    %90 = tpu.matmul %87, %89, %cst_41 {dimension_numbers = #tpu.dot_dimension_numbers<[1], [0], [0], [1], [0, 0, 1, 1], [], []>} : vector<8x128xf32>, vector<128x256xf32>, vector<8x256xf32> -> vector<8x256xf32>
    %c12 = arith.constant 12 : index
    %c0_42 = arith.constant 0 : index
    %91 = vector.load %arg3[%c12, %c0_42] : memref<32x512xf32, #tpu.memory_space<vmem>>, vector<1x256xf32>
    %92 = vector.broadcast %91 : vector<1x256xf32> to vector<8x256xf32>
    %93 = arith.addf %90, %92 : vector<8x256xf32>
    %cst_43 = arith.constant 0.000000e+00 : f32
    %94 = vector.broadcast %cst_43 : f32 to vector<8x256xf32>
    %95 = arith.subf %94, %93 : vector<8x256xf32>
    %96 = math.exp %95 : vector<8x256xf32>
    %cst_44 = arith.constant 1.000000e+00 : f32
    %97 = vector.broadcast %cst_44 : f32 to vector<8x256xf32>
    %98 = arith.addf %97, %96 : vector<8x256xf32>
    %cst_45 = arith.constant 1.000000e+00 : f32
    %99 = vector.broadcast %cst_45 : f32 to vector<8x256xf32>
    %100 = arith.divf %99, %98 : vector<8x256xf32>
    %101 = arith.mulf %93, %100 : vector<8x256xf32>
    %c13 = arith.constant 13 : index
    %c0_46 = arith.constant 0 : index
    %102 = vector.load %arg3[%c13, %c0_46] : memref<32x512xf32, #tpu.memory_space<vmem>>, vector<1x256xf32>
    %c14 = arith.constant 14 : index
    %c0_47 = arith.constant 0 : index
    %103 = vector.load %arg3[%c14, %c0_47] : memref<32x512xf32, #tpu.memory_space<vmem>>, vector<1x256xf32>
    %cst_48 = arith.constant dense<0.000000e+00> : vector<8xf32>
    %104 = vector.multi_reduction <add>, %101, %cst_48 [1] : vector<8x256xf32> to vector<8xf32>
    %105 = vector.shape_cast %104 : vector<8xf32> to vector<8x1xf32>
    %cst_49 = arith.constant 2.560000e+02 : f32
    %106 = vector.broadcast %cst_49 : f32 to vector<8x1xf32>
    %107 = arith.divf %105, %106 : vector<8x1xf32>
    %108 = vector.broadcast %107 : vector<8x1xf32> to vector<8x256xf32>
    %109 = arith.subf %101, %108 : vector<8x256xf32>
    %110 = arith.mulf %109, %109 : vector<8x256xf32>
    %cst_50 = arith.constant dense<0.000000e+00> : vector<8xf32>
    %111 = vector.multi_reduction <add>, %110, %cst_50 [1] : vector<8x256xf32> to vector<8xf32>
    %112 = vector.shape_cast %111 : vector<8xf32> to vector<8x1xf32>
    %cst_51 = arith.constant 2.560000e+02 : f32
    %113 = vector.broadcast %cst_51 : f32 to vector<8x1xf32>
    %114 = arith.divf %112, %113 : vector<8x1xf32>
    %115 = vector.broadcast %107 : vector<8x1xf32> to vector<8x256xf32>
    %116 = arith.subf %101, %115 : vector<8x256xf32>
    %cst_52 = arith.constant 9.99999974E-6 : f32
    %117 = vector.broadcast %cst_52 : f32 to vector<8x1xf32>
    %118 = arith.addf %114, %117 : vector<8x1xf32>
    %119 = math.rsqrt %118 : vector<8x1xf32>
    %120 = vector.broadcast %119 : vector<8x1xf32> to vector<8x256xf32>
    %121 = arith.mulf %116, %120 : vector<8x256xf32>
    %122 = vector.broadcast %102 : vector<1x256xf32> to vector<8x256xf32>
    %123 = arith.mulf %121, %122 : vector<8x256xf32>
    %124 = vector.broadcast %103 : vector<1x256xf32> to vector<8x256xf32>
    %125 = arith.addf %123, %124 : vector<8x256xf32>
    %c0_53 = arith.constant 0 : index
    %c768 = arith.constant 768 : index
    %126 = vector.load %arg4[%c0_53, %c768] : memref<512x1536xbf16, #tpu.memory_space<vmem>>, vector<512x256xbf16>
    %127 = arith.extf %126 : vector<512x256xbf16> to vector<512x256xf32>
    %cst_54 = arith.constant dense<0.000000e+00> : vector<8x256xf32>
    %128 = tpu.matmul %34, %127, %cst_54 {dimension_numbers = #tpu.dot_dimension_numbers<[1], [0], [0], [1], [0, 0, 1, 1], [], []>} : vector<8x512xf32>, vector<512x256xf32>, vector<8x256xf32> -> vector<8x256xf32>
    %129 = arith.addf %125, %128 : vector<8x256xf32>
    %c5 = arith.constant 5 : index
    %c0_55 = arith.constant 0 : index
    %130 = vector.load %arg3[%c5, %c0_55] : memref<32x512xf32, #tpu.memory_space<vmem>>, vector<1x256xf32>
    %131 = vector.broadcast %130 : vector<1x256xf32> to vector<8x256xf32>
    %132 = arith.addf %129, %131 : vector<8x256xf32>
    %c0_56 = arith.constant 0 : index
    %c1024 = arith.constant 1024 : index
    %133 = vector.load %arg5[%c0_56, %c1024] : memref<256x1920xbf16, #tpu.memory_space<vmem>>, vector<256x256xbf16>
    %134 = arith.extf %133 : vector<256x256xbf16> to vector<256x256xf32>
    %cst_57 = arith.constant dense<0.000000e+00> : vector<8x256xf32>
    %135 = tpu.matmul %132, %134, %cst_57 {dimension_numbers = #tpu.dot_dimension_numbers<[1], [0], [0], [1], [0, 0, 1, 1], [], []>} : vector<8x256xf32>, vector<256x256xf32>, vector<8x256xf32> -> vector<8x256xf32>
    %c15 = arith.constant 15 : index
    %c0_58 = arith.constant 0 : index
    %136 = vector.load %arg3[%c15, %c0_58] : memref<32x512xf32, #tpu.memory_space<vmem>>, vector<1x256xf32>
    %137 = vector.broadcast %136 : vector<1x256xf32> to vector<8x256xf32>
    %138 = arith.addf %135, %137 : vector<8x256xf32>
    %cst_59 = arith.constant 0.000000e+00 : f32
    %139 = vector.broadcast %cst_59 : f32 to vector<8x256xf32>
    %140 = arith.subf %139, %138 : vector<8x256xf32>
    %141 = math.exp %140 : vector<8x256xf32>
    %cst_60 = arith.constant 1.000000e+00 : f32
    %142 = vector.broadcast %cst_60 : f32 to vector<8x256xf32>
    %143 = arith.addf %142, %141 : vector<8x256xf32>
    %cst_61 = arith.constant 1.000000e+00 : f32
    %144 = vector.broadcast %cst_61 : f32 to vector<8x256xf32>
    %145 = arith.divf %144, %143 : vector<8x256xf32>
    %146 = arith.mulf %138, %145 : vector<8x256xf32>
    %c16 = arith.constant 16 : index
    %c0_62 = arith.constant 0 : index
    %147 = vector.load %arg3[%c16, %c0_62] : memref<32x512xf32, #tpu.memory_space<vmem>>, vector<1x256xf32>
    %c17 = arith.constant 17 : index
    %c0_63 = arith.constant 0 : index
    %148 = vector.load %arg3[%c17, %c0_63] : memref<32x512xf32, #tpu.memory_space<vmem>>, vector<1x256xf32>
    %cst_64 = arith.constant dense<0.000000e+00> : vector<8xf32>
    %149 = vector.multi_reduction <add>, %146, %cst_64 [1] : vector<8x256xf32> to vector<8xf32>
    %150 = vector.shape_cast %149 : vector<8xf32> to vector<8x1xf32>
    %cst_65 = arith.constant 2.560000e+02 : f32
    %151 = vector.broadcast %cst_65 : f32 to vector<8x1xf32>
    %152 = arith.divf %150, %151 : vector<8x1xf32>
    %153 = vector.broadcast %152 : vector<8x1xf32> to vector<8x256xf32>
    %154 = arith.subf %146, %153 : vector<8x256xf32>
    %155 = arith.mulf %154, %154 : vector<8x256xf32>
    %cst_66 = arith.constant dense<0.000000e+00> : vector<8xf32>
    %156 = vector.multi_reduction <add>, %155, %cst_66 [1] : vector<8x256xf32> to vector<8xf32>
    %157 = vector.shape_cast %156 : vector<8xf32> to vector<8x1xf32>
    %cst_67 = arith.constant 2.560000e+02 : f32
    %158 = vector.broadcast %cst_67 : f32 to vector<8x1xf32>
    %159 = arith.divf %157, %158 : vector<8x1xf32>
    %160 = vector.broadcast %152 : vector<8x1xf32> to vector<8x256xf32>
    %161 = arith.subf %146, %160 : vector<8x256xf32>
    %cst_68 = arith.constant 9.99999974E-6 : f32
    %162 = vector.broadcast %cst_68 : f32 to vector<8x1xf32>
    %163 = arith.addf %159, %162 : vector<8x1xf32>
    %164 = math.rsqrt %163 : vector<8x1xf32>
    %165 = vector.broadcast %164 : vector<8x1xf32> to vector<8x256xf32>
    %166 = arith.mulf %161, %165 : vector<8x256xf32>
    %167 = vector.broadcast %147 : vector<1x256xf32> to vector<8x256xf32>
    %168 = arith.mulf %166, %167 : vector<8x256xf32>
    %169 = vector.broadcast %148 : vector<1x256xf32> to vector<8x256xf32>
    %170 = arith.addf %168, %169 : vector<8x256xf32>
    %c0_69 = arith.constant 0 : index
    %c1024_70 = arith.constant 1024 : index
    %171 = vector.load %arg4[%c0_69, %c1024_70] : memref<512x1536xbf16, #tpu.memory_space<vmem>>, vector<512x256xbf16>
    %172 = arith.extf %171 : vector<512x256xbf16> to vector<512x256xf32>
    %cst_71 = arith.constant dense<0.000000e+00> : vector<8x256xf32>
    %173 = tpu.matmul %34, %172, %cst_71 {dimension_numbers = #tpu.dot_dimension_numbers<[1], [0], [0], [1], [0, 0, 1, 1], [], []>} : vector<8x512xf32>, vector<512x256xf32>, vector<8x256xf32> -> vector<8x256xf32>
    %174 = arith.addf %170, %173 : vector<8x256xf32>
    %c6 = arith.constant 6 : index
    %c0_72 = arith.constant 0 : index
    %175 = vector.load %arg3[%c6, %c0_72] : memref<32x512xf32, #tpu.memory_space<vmem>>, vector<1x256xf32>
    %176 = vector.broadcast %175 : vector<1x256xf32> to vector<8x256xf32>
    %177 = arith.addf %174, %176 : vector<8x256xf32>
    %c0_73 = arith.constant 0 : index
    %c1280 = arith.constant 1280 : index
    %178 = vector.load %arg5[%c0_73, %c1280] : memref<256x1920xbf16, #tpu.memory_space<vmem>>, vector<256x256xbf16>
    %179 = arith.extf %178 : vector<256x256xbf16> to vector<256x256xf32>
    %cst_74 = arith.constant dense<0.000000e+00> : vector<8x256xf32>
    %180 = tpu.matmul %177, %179, %cst_74 {dimension_numbers = #tpu.dot_dimension_numbers<[1], [0], [0], [1], [0, 0, 1, 1], [], []>} : vector<8x256xf32>, vector<256x256xf32>, vector<8x256xf32> -> vector<8x256xf32>
    %c0_75 = arith.constant 0 : index
    %c1536 = arith.constant 1536 : index
    %181 = vector.load %arg5[%c0_75, %c1536] : memref<256x1920xbf16, #tpu.memory_space<vmem>>, vector<256x256xbf16>
    %182 = arith.extf %181 : vector<256x256xbf16> to vector<256x256xf32>
    %cst_76 = arith.constant dense<0.000000e+00> : vector<8x256xf32>
    %183 = tpu.matmul %125, %182, %cst_76 {dimension_numbers = #tpu.dot_dimension_numbers<[1], [0], [0], [1], [0, 0, 1, 1], [], []>} : vector<8x256xf32>, vector<256x256xf32>, vector<8x256xf32> -> vector<8x256xf32>
    %184 = arith.addf %180, %183 : vector<8x256xf32>
    %c18 = arith.constant 18 : index
    %c0_77 = arith.constant 0 : index
    %185 = vector.load %arg3[%c18, %c0_77] : memref<32x512xf32, #tpu.memory_space<vmem>>, vector<1x256xf32>
    %186 = vector.broadcast %185 : vector<1x256xf32> to vector<8x256xf32>
    %187 = arith.addf %184, %186 : vector<8x256xf32>
    %cst_78 = arith.constant 0.000000e+00 : f32
    %188 = vector.broadcast %cst_78 : f32 to vector<8x256xf32>
    %189 = arith.subf %188, %187 : vector<8x256xf32>
    %190 = math.exp %189 : vector<8x256xf32>
    %cst_79 = arith.constant 1.000000e+00 : f32
    %191 = vector.broadcast %cst_79 : f32 to vector<8x256xf32>
    %192 = arith.addf %191, %190 : vector<8x256xf32>
    %cst_80 = arith.constant 1.000000e+00 : f32
    %193 = vector.broadcast %cst_80 : f32 to vector<8x256xf32>
    %194 = arith.divf %193, %192 : vector<8x256xf32>
    %195 = arith.mulf %187, %194 : vector<8x256xf32>
    %c19 = arith.constant 19 : index
    %c0_81 = arith.constant 0 : index
    %196 = vector.load %arg3[%c19, %c0_81] : memref<32x512xf32, #tpu.memory_space<vmem>>, vector<1x256xf32>
    %c20 = arith.constant 20 : index
    %c0_82 = arith.constant 0 : index
    %197 = vector.load %arg3[%c20, %c0_82] : memref<32x512xf32, #tpu.memory_space<vmem>>, vector<1x256xf32>
    %cst_83 = arith.constant dense<0.000000e+00> : vector<8xf32>
    %198 = vector.multi_reduction <add>, %195, %cst_83 [1] : vector<8x256xf32> to vector<8xf32>
    %199 = vector.shape_cast %198 : vector<8xf32> to vector<8x1xf32>
    %cst_84 = arith.constant 2.560000e+02 : f32
    %200 = vector.broadcast %cst_84 : f32 to vector<8x1xf32>
    %201 = arith.divf %199, %200 : vector<8x1xf32>
    %202 = vector.broadcast %201 : vector<8x1xf32> to vector<8x256xf32>
    %203 = arith.subf %195, %202 : vector<8x256xf32>
    %204 = arith.mulf %203, %203 : vector<8x256xf32>
    %cst_85 = arith.constant dense<0.000000e+00> : vector<8xf32>
    %205 = vector.multi_reduction <add>, %204, %cst_85 [1] : vector<8x256xf32> to vector<8xf32>
    %206 = vector.shape_cast %205 : vector<8xf32> to vector<8x1xf32>
    %cst_86 = arith.constant 2.560000e+02 : f32
    %207 = vector.broadcast %cst_86 : f32 to vector<8x1xf32>
    %208 = arith.divf %206, %207 : vector<8x1xf32>
    %209 = vector.broadcast %201 : vector<8x1xf32> to vector<8x256xf32>
    %210 = arith.subf %195, %209 : vector<8x256xf32>
    %cst_87 = arith.constant 9.99999974E-6 : f32
    %211 = vector.broadcast %cst_87 : f32 to vector<8x1xf32>
    %212 = arith.addf %208, %211 : vector<8x1xf32>
    %213 = math.rsqrt %212 : vector<8x1xf32>
    %214 = vector.broadcast %213 : vector<8x1xf32> to vector<8x256xf32>
    %215 = arith.mulf %210, %214 : vector<8x256xf32>
    %216 = vector.broadcast %196 : vector<1x256xf32> to vector<8x256xf32>
    %217 = arith.mulf %215, %216 : vector<8x256xf32>
    %218 = vector.broadcast %197 : vector<1x256xf32> to vector<8x256xf32>
    %219 = arith.addf %217, %218 : vector<8x256xf32>
    %c0_88 = arith.constant 0 : index
    %c1792 = arith.constant 1792 : index
    %220 = vector.load %arg5[%c0_88, %c1792] : memref<256x1920xbf16, #tpu.memory_space<vmem>>, vector<256x128xbf16>
    %221 = arith.extf %220 : vector<256x128xbf16> to vector<256x128xf32>
    %cst_89 = arith.constant dense<0.000000e+00> : vector<8x128xf32>
    %222 = tpu.matmul %219, %221, %cst_89 {dimension_numbers = #tpu.dot_dimension_numbers<[1], [0], [0], [1], [0, 0, 1, 1], [], []>} : vector<8x256xf32>, vector<256x128xf32>, vector<8x128xf32> -> vector<8x128xf32>
    %c21 = arith.constant 21 : index
    %c0_90 = arith.constant 0 : index
    %223 = vector.load %arg3[%c21, %c0_90] : memref<32x512xf32, #tpu.memory_space<vmem>>, vector<1x128xf32>
    %224 = vector.broadcast %223 : vector<1x128xf32> to vector<8x128xf32>
    %225 = arith.addf %222, %224 : vector<8x128xf32>
    %c0_91 = arith.constant 0 : index
    %c1280_92 = arith.constant 1280 : index
    %226 = vector.load %arg4[%c0_91, %c1280_92] : memref<512x1536xbf16, #tpu.memory_space<vmem>>, vector<512x128xbf16>
    %227 = arith.extf %226 : vector<512x128xbf16> to vector<512x128xf32>
    %cst_93 = arith.constant dense<0.000000e+00> : vector<8x128xf32>
    %228 = tpu.matmul %34, %227, %cst_93 {dimension_numbers = #tpu.dot_dimension_numbers<[1], [0], [0], [1], [0, 0, 1, 1], [], []>} : vector<8x512xf32>, vector<512x128xf32>, vector<8x128xf32> -> vector<8x128xf32>
    %229 = arith.addf %225, %228 : vector<8x128xf32>
    %c7 = arith.constant 7 : index
    %c0_94 = arith.constant 0 : index
    %230 = vector.load %arg3[%c7, %c0_94] : memref<32x512xf32, #tpu.memory_space<vmem>>, vector<1x128xf32>
    %231 = vector.broadcast %230 : vector<1x128xf32> to vector<8x128xf32>
    %232 = arith.addf %229, %231 : vector<8x128xf32>
    %c0_95 = arith.constant 0 : index
    %c384 = arith.constant 384 : index
    %233 = vector.load %arg6[%c0_95, %c384] : memref<128x896xbf16, #tpu.memory_space<vmem>>, vector<128x128xbf16>
    %234 = arith.extf %233 : vector<128x128xbf16> to vector<128x128xf32>
    %cst_96 = arith.constant dense<0.000000e+00> : vector<8x128xf32>
    %235 = tpu.matmul %232, %234, %cst_96 {dimension_numbers = #tpu.dot_dimension_numbers<[1], [0], [0], [1], [0, 0, 1, 1], [], []>} : vector<8x128xf32>, vector<128x128xf32>, vector<8x128xf32> -> vector<8x128xf32>
    %c0_97 = arith.constant 0 : index
    %c512_98 = arith.constant 512 : index
    %236 = vector.load %arg6[%c0_97, %c512_98] : memref<128x896xbf16, #tpu.memory_space<vmem>>, vector<128x128xbf16>
    %237 = arith.extf %236 : vector<128x128xbf16> to vector<128x128xf32>
    %cst_99 = arith.constant dense<0.000000e+00> : vector<8x128xf32>
    %238 = tpu.matmul %80, %237, %cst_99 {dimension_numbers = #tpu.dot_dimension_numbers<[1], [0], [0], [1], [0, 0, 1, 1], [], []>} : vector<8x128xf32>, vector<128x128xf32>, vector<8x128xf32> -> vector<8x128xf32>
    %239 = arith.addf %235, %238 : vector<8x128xf32>
    %c22 = arith.constant 22 : index
    %c0_100 = arith.constant 0 : index
    %240 = vector.load %arg3[%c22, %c0_100] : memref<32x512xf32, #tpu.memory_space<vmem>>, vector<1x128xf32>
    %241 = vector.broadcast %240 : vector<1x128xf32> to vector<8x128xf32>
    %242 = arith.addf %239, %241 : vector<8x128xf32>
    %cst_101 = arith.constant 0.000000e+00 : f32
    %243 = vector.broadcast %cst_101 : f32 to vector<8x128xf32>
    %244 = arith.subf %243, %242 : vector<8x128xf32>
    %245 = math.exp %244 : vector<8x128xf32>
    %cst_102 = arith.constant 1.000000e+00 : f32
    %246 = vector.broadcast %cst_102 : f32 to vector<8x128xf32>
    %247 = arith.addf %246, %245 : vector<8x128xf32>
    %cst_103 = arith.constant 1.000000e+00 : f32
    %248 = vector.broadcast %cst_103 : f32 to vector<8x128xf32>
    %249 = arith.divf %248, %247 : vector<8x128xf32>
    %250 = arith.mulf %242, %249 : vector<8x128xf32>
    %c23 = arith.constant 23 : index
    %c0_104 = arith.constant 0 : index
    %251 = vector.load %arg3[%c23, %c0_104] : memref<32x512xf32, #tpu.memory_space<vmem>>, vector<1x128xf32>
    %c24 = arith.constant 24 : index
    %c0_105 = arith.constant 0 : index
    %252 = vector.load %arg3[%c24, %c0_105] : memref<32x512xf32, #tpu.memory_space<vmem>>, vector<1x128xf32>
    %cst_106 = arith.constant dense<0.000000e+00> : vector<8xf32>
    %253 = vector.multi_reduction <add>, %250, %cst_106 [1] : vector<8x128xf32> to vector<8xf32>
    %254 = vector.shape_cast %253 : vector<8xf32> to vector<8x1xf32>
    %cst_107 = arith.constant 1.280000e+02 : f32
    %255 = vector.broadcast %cst_107 : f32 to vector<8x1xf32>
    %256 = arith.divf %254, %255 : vector<8x1xf32>
    %257 = vector.broadcast %256 : vector<8x1xf32> to vector<8x128xf32>
    %258 = arith.subf %250, %257 : vector<8x128xf32>
    %259 = arith.mulf %258, %258 : vector<8x128xf32>
    %cst_108 = arith.constant dense<0.000000e+00> : vector<8xf32>
    %260 = vector.multi_reduction <add>, %259, %cst_108 [1] : vector<8x128xf32> to vector<8xf32>
    %261 = vector.shape_cast %260 : vector<8xf32> to vector<8x1xf32>
    %cst_109 = arith.constant 1.280000e+02 : f32
    %262 = vector.broadcast %cst_109 : f32 to vector<8x1xf32>
    %263 = arith.divf %261, %262 : vector<8x1xf32>
    %264 = vector.broadcast %256 : vector<8x1xf32> to vector<8x128xf32>
    %265 = arith.subf %250, %264 : vector<8x128xf32>
    %cst_110 = arith.constant 9.99999974E-6 : f32
    %266 = vector.broadcast %cst_110 : f32 to vector<8x1xf32>
    %267 = arith.addf %263, %266 : vector<8x1xf32>
    %268 = math.rsqrt %267 : vector<8x1xf32>
    %269 = vector.broadcast %268 : vector<8x1xf32> to vector<8x128xf32>
    %270 = arith.mulf %265, %269 : vector<8x128xf32>
    %271 = vector.broadcast %251 : vector<1x128xf32> to vector<8x128xf32>
    %272 = arith.mulf %270, %271 : vector<8x128xf32>
    %273 = vector.broadcast %252 : vector<1x128xf32> to vector<8x128xf32>
    %274 = arith.addf %272, %273 : vector<8x128xf32>
    %c0_111 = arith.constant 0 : index
    %c1408 = arith.constant 1408 : index
    %275 = vector.load %arg4[%c0_111, %c1408] : memref<512x1536xbf16, #tpu.memory_space<vmem>>, vector<512x128xbf16>
    %276 = arith.extf %275 : vector<512x128xbf16> to vector<512x128xf32>
    %cst_112 = arith.constant dense<0.000000e+00> : vector<8x128xf32>
    %277 = tpu.matmul %34, %276, %cst_112 {dimension_numbers = #tpu.dot_dimension_numbers<[1], [0], [0], [1], [0, 0, 1, 1], [], []>} : vector<8x512xf32>, vector<512x128xf32>, vector<8x128xf32> -> vector<8x128xf32>
    %278 = arith.addf %274, %277 : vector<8x128xf32>
    %c8 = arith.constant 8 : index
    %c0_113 = arith.constant 0 : index
    %279 = vector.load %arg3[%c8, %c0_113] : memref<32x512xf32, #tpu.memory_space<vmem>>, vector<1x128xf32>
    %280 = vector.broadcast %279 : vector<1x128xf32> to vector<8x128xf32>
    %281 = arith.addf %278, %280 : vector<8x128xf32>
    %c0_114 = arith.constant 0 : index
    %c640_115 = arith.constant 640 : index
    %282 = vector.load %arg6[%c0_114, %c640_115] : memref<128x896xbf16, #tpu.memory_space<vmem>>, vector<128x64xbf16>
    %283 = arith.extf %282 : vector<128x64xbf16> to vector<128x64xf32>
    %cst_116 = arith.constant dense<0.000000e+00> : vector<8x64xf32>
    %284 = tpu.matmul %281, %283, %cst_116 {dimension_numbers = #tpu.dot_dimension_numbers<[1], [0], [0], [1], [0, 0, 1, 1], [], []>} : vector<8x128xf32>, vector<128x64xf32>, vector<8x64xf32> -> vector<8x64xf32>
    %c0_117 = arith.constant 0 : index
    %c768_118 = arith.constant 768 : index
    %285 = vector.load %arg6[%c0_117, %c768_118] : memref<128x896xbf16, #tpu.memory_space<vmem>>, vector<128x64xbf16>
    %286 = arith.extf %285 : vector<128x64xbf16> to vector<128x64xf32>
    %cst_119 = arith.constant dense<0.000000e+00> : vector<8x64xf32>
    %287 = tpu.matmul %80, %286, %cst_119 {dimension_numbers = #tpu.dot_dimension_numbers<[1], [0], [0], [1], [0, 0, 1, 1], [], []>} : vector<8x128xf32>, vector<128x64xf32>, vector<8x64xf32> -> vector<8x64xf32>
    %288 = arith.addf %284, %287 : vector<8x64xf32>
    %c25 = arith.constant 25 : index
    %c0_120 = arith.constant 0 : index
    %289 = vector.load %arg3[%c25, %c0_120] : memref<32x512xf32, #tpu.memory_space<vmem>>, vector<1x64xf32>
    %290 = vector.broadcast %289 : vector<1x64xf32> to vector<8x64xf32>
    %291 = arith.addf %288, %290 : vector<8x64xf32>
    %cst_121 = arith.constant 0.000000e+00 : f32
    %292 = vector.broadcast %cst_121 : f32 to vector<8x64xf32>
    %293 = arith.subf %292, %291 : vector<8x64xf32>
    %294 = math.exp %293 : vector<8x64xf32>
    %cst_122 = arith.constant 1.000000e+00 : f32
    %295 = vector.broadcast %cst_122 : f32 to vector<8x64xf32>
    %296 = arith.addf %295, %294 : vector<8x64xf32>
    %cst_123 = arith.constant 1.000000e+00 : f32
    %297 = vector.broadcast %cst_123 : f32 to vector<8x64xf32>
    %298 = arith.divf %297, %296 : vector<8x64xf32>
    %299 = arith.mulf %291, %298 : vector<8x64xf32>
    %c26 = arith.constant 26 : index
    %c0_124 = arith.constant 0 : index
    %300 = vector.load %arg3[%c26, %c0_124] : memref<32x512xf32, #tpu.memory_space<vmem>>, vector<1x64xf32>
    %c27 = arith.constant 27 : index
    %c0_125 = arith.constant 0 : index
    %301 = vector.load %arg3[%c27, %c0_125] : memref<32x512xf32, #tpu.memory_space<vmem>>, vector<1x64xf32>
    %cst_126 = arith.constant dense<0.000000e+00> : vector<8xf32>
    %302 = vector.multi_reduction <add>, %299, %cst_126 [1] : vector<8x64xf32> to vector<8xf32>
    %303 = vector.shape_cast %302 : vector<8xf32> to vector<8x1xf32>
    %cst_127 = arith.constant 6.400000e+01 : f32
    %304 = vector.broadcast %cst_127 : f32 to vector<8x1xf32>
    %305 = arith.divf %303, %304 : vector<8x1xf32>
    %306 = vector.broadcast %305 : vector<8x1xf32> to vector<8x64xf32>
    %307 = arith.subf %299, %306 : vector<8x64xf32>
    %308 = arith.mulf %307, %307 : vector<8x64xf32>
    %cst_128 = arith.constant dense<0.000000e+00> : vector<8xf32>
    %309 = vector.multi_reduction <add>, %308, %cst_128 [1] : vector<8x64xf32> to vector<8xf32>
    %310 = vector.shape_cast %309 : vector<8xf32> to vector<8x1xf32>
    %cst_129 = arith.constant 6.400000e+01 : f32
    %311 = vector.broadcast %cst_129 : f32 to vector<8x1xf32>
    %312 = arith.divf %310, %311 : vector<8x1xf32>
    %313 = vector.broadcast %305 : vector<8x1xf32> to vector<8x64xf32>
    %314 = arith.subf %299, %313 : vector<8x64xf32>
    %cst_130 = arith.constant 9.99999974E-6 : f32
    %315 = vector.broadcast %cst_130 : f32 to vector<8x1xf32>
    %316 = arith.addf %312, %315 : vector<8x1xf32>
    %317 = math.rsqrt %316 : vector<8x1xf32>
    %318 = vector.broadcast %317 : vector<8x1xf32> to vector<8x64xf32>
    %319 = arith.mulf %314, %318 : vector<8x64xf32>
    %320 = vector.broadcast %300 : vector<1x64xf32> to vector<8x64xf32>
    %321 = arith.mulf %319, %320 : vector<8x64xf32>
    %322 = vector.broadcast %301 : vector<1x64xf32> to vector<8x64xf32>
    %323 = arith.addf %321, %322 : vector<8x64xf32>
    %c0_131 = arith.constant 0 : index
    %c0_132 = arith.constant 0 : index
    %324 = vector.load %arg7[%c0_131, %c0_132] : memref<64x128xbf16, #tpu.memory_space<vmem>>, vector<64x128xbf16>
    %325 = arith.extf %324 : vector<64x128xbf16> to vector<64x128xf32>
    %cst_133 = arith.constant dense<0.000000e+00> : vector<8x128xf32>
    %326 = tpu.matmul %323, %325, %cst_133 {dimension_numbers = #tpu.dot_dimension_numbers<[1], [0], [0], [1], [0, 0, 1, 1], [], []>} : vector<8x64xf32>, vector<64x128xf32>, vector<8x128xf32> -> vector<8x128xf32>
    %c28 = arith.constant 28 : index
    %c0_134 = arith.constant 0 : index
    %327 = vector.load %arg3[%c28, %c0_134] : memref<32x512xf32, #tpu.memory_space<vmem>>, vector<1x128xf32>
    %328 = vector.broadcast %327 : vector<1x128xf32> to vector<8x128xf32>
    %329 = arith.addf %326, %328 : vector<8x128xf32>
    %c0_135 = arith.constant 0 : index
    %c0_136 = arith.constant 0 : index
    %330 = vector.load %arg8[%c0_135, %c0_136] : memref<8x128xf32, #tpu.memory_space<vmem>>, vector<8x128xf32>
    tpu.vector_store %arg8[%c0_135, %c0_136], %329 {strides = array<i32>} : memref<8x128xf32, #tpu.memory_space<vmem>>, vector<8x128xf32>,
    return
  }
  func.func @transform_0(%arg0: i32) -> (i32, i32) {
    %c0_i32 = arith.constant 0 : i32
    %c0_i32_0 = arith.constant 0 : i32
    return %arg0, %c0_i32 : i32, i32
  }
  func.func @transform_1(%arg0: i32) -> (i32, i32) {
    %c0_i32 = arith.constant 0 : i32
    %c0_i32_0 = arith.constant 0 : i32
    return %arg0, %c0_i32 : i32, i32
  }
  func.func @transform_2(%arg0: i32) -> (i32, i32) {
    %c0_i32 = arith.constant 0 : i32
    %c0_i32_0 = arith.constant 0 : i32
    %c0_i32_1 = arith.constant 0 : i32
    return %c0_i32, %c0_i32_0 : i32, i32
  }
  func.func @transform_3(%arg0: i32) -> (i32, i32) {
    %c0_i32 = arith.constant 0 : i32
    %c0_i32_0 = arith.constant 0 : i32
    %c0_i32_1 = arith.constant 0 : i32
    return %c0_i32, %c0_i32_0 : i32, i32
  }
  func.func @transform_4(%arg0: i32) -> (i32, i32) {
    %c0_i32 = arith.constant 0 : i32
    %c0_i32_0 = arith.constant 0 : i32
    %c0_i32_1 = arith.constant 0 : i32
    return %c0_i32, %c0_i32_0 : i32, i32
  }
  func.func @transform_5(%arg0: i32) -> (i32, i32) {
    %c0_i32 = arith.constant 0 : i32
    %c0_i32_0 = arith.constant 0 : i32
    %c0_i32_1 = arith.constant 0 : i32
    return %c0_i32, %c0_i32_0 : i32, i32
  }
  func.func @transform_6(%arg0: i32) -> (i32, i32) {
    %c0_i32 = arith.constant 0 : i32
    %c0_i32_0 = arith.constant 0 : i32
    %c0_i32_1 = arith.constant 0 : i32
    return %c0_i32, %c0_i32_0 : i32, i32
  }
  func.func @transform_7(%arg0: i32) -> (i32, i32) {
    %c0_i32 = arith.constant 0 : i32
    %c0_i32_0 = arith.constant 0 : i32
    return %arg0, %c0_i32 : i32, i32
  }
}

</mosaic_0001>

<llo_original>
// kernel: unet1d_forward.1
$region0: #{unet1d_forward.1}
  #allocation0 [shape = 'u32[]', space=smem, size = 0x4, offset = 0x4, fixed_abs, tag = 'smem constant byte address 0x4 - core index']
  #allocation1 [shape = 'u32[144,128]{1,0:T(1,128)}', space=vmem, size = 0x12000, scoped, tag = 'internal scratch']
  %s0 = inlined_call_operand.vmem [shape: f32[8,128], index: 0, kind: input, shape index: {}]
  %s1 = inlined_call_operand.vmem [shape: f32[8,1], index: 1, kind: input, shape index: {}]
  %s2 = inlined_call_operand.hbm [shape: f32[32,512], index: 2, kind: input, shape index: {}]
  %s3 = inlined_call_operand.hbm [shape: bf16[512,1536], index: 3, kind: input, shape index: {}]
  %s4 = inlined_call_operand.hbm [shape: bf16[256,1920], index: 4, kind: input, shape index: {}]
  %s5 = inlined_call_operand.hbm [shape: bf16[128,896], index: 5, kind: input, shape index: {}]
  %s6 = inlined_call_operand.hbm [shape: bf16[64,128], index: 6, kind: input, shape index: {}]
  %s7 = inlined_call_operand.vmem [shape: f32[8,128], index: 7, kind: output, shape index: {}]
  %s8 = sld [smem:[#allocation0]]
  $region58: #{unet1d_forward.1} parent=0
    _
  %s10 = ssub.s32 1, %s8
  %s11 = scalar_select 0, %s10, %s8
  $region1: #{unet1d_forward.1} parent=0
    #allocation2 [shape = 'u8[65536]{0}', space=vmem, size = 0x10000, scoped, tag = 'input window, operand 2, single buffered']
    #allocation3 [shape = 's32[1]{0}', space=sflag, size = 0x4, scoped, tag = 'scoped memory for unet1d_forward.1']
    #allocation4 [shape = 'u8[1572864]{0}', space=vmem, size = 0x180000, scoped, tag = 'input window, operand 3, single buffered']
    #allocation5 [shape = 's32[1]{0}', space=sflag, size = 0x4, scoped, tag = 'scoped memory for unet1d_forward.1']
    #allocation6 [shape = 'u8[983040]{0}', space=vmem, size = 0xf0000, scoped, tag = 'input window, operand 4, single buffered']
    #allocation7 [shape = 'u8[229376]{0}', space=vmem, size = 0x38000, scoped, tag = 'input window, operand 5, single buffered']
    #allocation8 [shape = 's32[1]{0}', space=sflag, size = 0x4, scoped, tag = 'scoped memory for unet1d_forward.1']
    #allocation9 [shape = 'u8[16384]{0}', space=vmem, size = 0x4000, scoped, tag = 'input window, operand 6, single buffered']
    %12 = vsyncpa [#allocation3], 0
    %13 = vsyncpa [#allocation5], 0
    %14 = vsyncpa [#allocation8], 0
    // Predicated region
    $region2: #{unet1d_forward.1} parent=1 // pred_check
      _
    $region3: #{unet1d_forward.1} parent=1 // pred_check_branch
      %16 = sbr.rel (0) target = $region5
    $region4: #{unet1d_forward.1} parent=1 // pred_region
      _
    $region5: #{unet1d_forward.1} parent=1 // pred_fallthru
      _
    // Predicated region
    $region6: #{unet1d_forward.1} parent=1 // pred_check
      _
    $region7: #{unet1d_forward.1} parent=1 // pred_check_branch
      %18 = sbr.rel (0) target = $region9
    $region8: #{unet1d_forward.1} parent=1 // pred_region
      _
    $region9: #{unet1d_forward.1} parent=1 // pred_fallthru
      _
    // Predicated region
    $region10: #{unet1d_forward.1} parent=1 // pred_check
      _
    $region11: #{unet1d_forward.1} parent=1 // pred_check_branch
      %20 = sbr.rel (0) target = $region13
    $region12: #{unet1d_forward.1} parent=1 // pred_region
      %s22 = ssub.s32 2048, 2048
      %23 = vsyncadd [#allocation3], %s22
      %s24 = sshll.u32 [#allocation2], 4
      %s25 = int_to_ptr.vmem [resolvable:$true] %s24
      %30 = dma.hbm_to_vmem [thread:$0]  %s2, 2048, %s25, [#allocation3], 512, 512, 32
    $region13: #{unet1d_forward.1} parent=1 // pred_fallthru
      _
    // Predicated region
    $region14: #{unet1d_forward.1} parent=1 // pred_check
      _
    $region15: #{unet1d_forward.1} parent=1 // pred_check_branch
      %32 = sbr.rel (0) target = $region17
    $region16: #{unet1d_forward.1} parent=1 // pred_region
      %s34 = ssub.s32 49152, 49152
      %35 = vsyncadd [#allocation5], %s34
      %s36 = sshll.u32 [#allocation4], 4
      %s37 = int_to_ptr.vmem [resolvable:$true] %s36
      %42 = dma.hbm_to_vmem [thread:$0]  %s3, 49152, %s37, [#allocation5], 768, 768, 48
    $region17: #{unet1d_forward.1} parent=1 // pred_fallthru
      _
    // Predicated region
    $region18: #{unet1d_forward.1} parent=1 // pred_check
      _
    $region19: #{unet1d_forward.1} parent=1 // pred_check_branch
      %44 = sbr.rel (0) target = $region21
    $region20: #{unet1d_forward.1} parent=1 // pred_region
      %s46 = ssub.s32 30720, 30720
      %47 = vsyncadd [#allocation5], %s46
      %s48 = sshll.u32 [#allocation6], 4
      %s49 = int_to_ptr.vmem [resolvable:$true] %s48
      %54 = dma.hbm_to_vmem [thread:$0]  %s4, 30720, %s49, [#allocation5], 960, 960, 60
    $region21: #{unet1d_forward.1} parent=1 // pred_fallthru
      _
    // Predicated region
    $region22: #{unet1d_forward.1} parent=1 // pred_check
      _
    $region23: #{unet1d_forward.1} parent=1 // pred_check_branch
      %56 = sbr.rel (0) target = $region25
    $region24: #{unet1d_forward.1} parent=1 // pred_region
      %s58 = ssub.s32 7168, 7168
      %59 = vsyncadd [#allocation8], %s58
      %s60 = sshll.u32 [#allocation7], 4
      %s61 = int_to_ptr.vmem [resolvable:$true] %s60
      %66 = dma.hbm_to_vmem [thread:$0]  %s5, 7168, %s61, [#allocation8], 448, 448, 28
    $region25: #{unet1d_forward.1} parent=1 // pred_fallthru
      _
    // Predicated region
    $region26: #{unet1d_forward.1} parent=1 // pred_check
      _
    $region27: #{unet1d_forward.1} parent=1 // pred_check_branch
      %68 = sbr.rel (0) target = $region29
    $region28: #{unet1d_forward.1} parent=1 // pred_region
      %s70 = ssub.s32 512, 512
      %71 = vsyncadd [#allocation8], %s70
      %s72 = sshll.u32 [#allocation9], 4
      %s73 = int_to_ptr.vmem [resolvable:$true] %s72
      %78 = dma.hbm_to_vmem [thread:$0]  %s6, 512, %s73, [#allocation8], 64, 64, 4
    $region29: #{unet1d_forward.1} parent=1 // pred_fallthru
      _
    // Predicated region
    $region30: #{unet1d_forward.1} parent=1 // pred_check
      _
    $region31: #{unet1d_forward.1} parent=1 // pred_check_branch
      %80 = sbr.rel (0) target = $region33
    $region32: #{unet1d_forward.1} parent=1 // pred_region
      %81 = dma.done [#allocation3], 2048
    $region33: #{unet1d_forward.1} parent=1 // pred_fallthru
      _
    // Predicated region
    $region34: #{unet1d_forward.1} parent=1 // pred_check
      _
    $region35: #{unet1d_forward.1} parent=1 // pred_check_branch
      %83 = sbr.rel (0) target = $region37
    $region36: #{unet1d_forward.1} parent=1 // pred_region
      %84 = dma.done [#allocation5], 49152
    $region37: #{unet1d_forward.1} parent=1 // pred_fallthru
      _
    // Predicated region
    $region38: #{unet1d_forward.1} parent=1 // pred_check
      _
    $region39: #{unet1d_forward.1} parent=1 // pred_check_branch
      %86 = sbr.rel (0) target = $region41
    $region40: #{unet1d_forward.1} parent=1 // pred_region
      %87 = dma.done [#allocation5], 30720
    $region41: #{unet1d_forward.1} parent=1 // pred_fallthru
      _
    // Predicated region
    $region42: #{unet1d_forward.1} parent=1 // pred_check
      _
    $region43: #{unet1d_forward.1} parent=1 // pred_check_branch
      %89 = sbr.rel (0) target = $region45
    $region44: #{unet1d_forward.1} parent=1 // pred_region
      %90 = dma.done [#allocation8], 7168
    $region45: #{unet1d_forward.1} parent=1 // pred_fallthru
      _
    // Predicated region
    $region46: #{unet1d_forward.1} parent=1 // pred_check
      _
    $region47: #{unet1d_forward.1} parent=1 // pred_check_branch
      %92 = sbr.rel (0) target = $region49
    $region48: #{unet1d_forward.1} parent=1 // pred_region
      %93 = dma.done [#allocation8], 512
    $region49: #{unet1d_forward.1} parent=1 // pred_fallthru
      _
    %v94 = vld [vmem:[%s1] sm:$0xff]
    %v95 = vld [vmem:[#allocation2] ss:$8 sm:$0x3]
    %97 = vset.pattern.permute.xlu0 0
    %98 = vperm.xlu0 %97, %v94
    %v99 = vpop.permute.xlu0 %98
    %v102 = vlaneseq
    %v103 = vshrl.u32 %v102, 7
    %v104 = vsub.s32 0, %v103
    %v105 = vrot.slane %v95, %v104
    %v106 = vlaneseq
    %v107 = vshrl.u32 %v106, 7
    %v108 = vsub.s32 1, %v107
    %v109 = vrot.slane %v95, %v108
    %v112 = vmul.f32 %v99, %v105
    %v113 = vmul.f32 %v99, %v109
    %v114 = vand.u32 2147483647, %v112
    %vm115 = vcmp.le.f32.partialorder %v114, 0.7853982
    %vm116 = vcmp.lt.s32.totalorder %v112, 0
    %v117 = vand.u32 %v112, 2139095040
    %v118 = vshrl.u32 %v117, 23
    %v119 = vsub.s32 %v118, 127
    %v120 = vand.u32 2147483647, %v112
    %v121 = vand.u32 %v120, 8388607
    %v122 = vor.u32 %v121, 8388608
    %v123 = vsub.s32 0, %v122
    %v124 = vadd.s32 %v119, 1
    %vm125 = vcmp.gt.s32.totalorder %v124, 0
    %v126 = vsel %vm125, %v124, 0
    %v127 = vshrl.u32 %v126, 5
    %v128 = vand.u32 %v126, 31
    %v129 = vsub.s32 32, %v128
    %v130 = vshrl.u32 683565275, %v129
    %v131 = vshll.u32 683565275, %v128
    %v132 = vshrl.u32 2475754826, %v129
    %v133 = vor.u32 %v131, %v132
    %v134 = vshll.u32 2475754826, %v128
    %v135 = vshrl.u32 2131351028, %v129
    %v136 = vor.u32 %v134, %v135
    %v137 = vshll.u32 2131351028, %v128
    %v138 = vshrl.u32 2102212464, %v129
    %v139 = vor.u32 %v137, %v138
    %v140 = vshll.u32 2102212464, %v128
    %v141 = vshrl.u32 920167782, %v129
    %v142 = vor.u32 %v140, %v141
    %v143 = vshll.u32 920167782, %v128
    %v144 = vshrl.u32 1326507024, %v129
    %v145 = vor.u32 %v143, %v144
    %vm146 = vcmp.lt.s32.totalorder %v127, 1
    %vm147 = vcmp.lt.s32.totalorder %v127, 2
    %vm148 = vcmp.lt.s32.totalorder %v127, 3
    %vm149 = vcmp.lt.s32.totalorder %v127, 4
    %v150 = vsel %vm146, %v130, %v133
    %v151 = vsel %vm149, %v139, 2102212464
    %v152 = vsel %vm148, %v136, %v151
    %v153 = vsel %vm147, %v150, %v152
    %v154 = vsel %vm146, %v133, %v136
    %v155 = vsel %vm149, %v142, 920167782
    %v156 = vsel %vm148, %v139, %v155
    %v157 = vsel %vm147, %v154, %v156
    %v158 = vsel %vm146, %v136, %v139
    %v159 = vsel %vm149, %v145, 1326507024
    %v160 = vsel %vm148, %v142, %v159
    %v161 = vsel %vm147, %v158, %v160
    %v162 = vshll.u32 %v122, 8
    %v163 = vmul.u32.u64.compose %v162, %v161
    %v164 = vextract.low.u32 %v163
    %v165 = vextract.high.u32 %v163
    %v166 = vmul.u32.u64.compose %v162, %v157
    %v167 = vextract.low.u32 %v166
    %v168 = vextract.high.u32 %v166
    %v169 = vmul.u32 %v162, %v153
    %v170 = vadd.s32 %v165, %v167
    %vm171 = vc.u32 %v165, %v167
    %v172 = vadd.s32 %v168, 1
    %v173 = vsel %vm171, %v172, %v168
    %v174 = vadd.s32 %v169, %v173
    %v175 = vadd.s32 %v174, 536870912
    %v176 = vshrl.u32 %v175, 30
    %v177 = vshll.u32 %v176, 30
    %v178 = vsub.s32 %v174, %v177
    %vm179 = vcmp.lt.s32.totalorder %v178, 0
    %v180 = vsub.s32 0, %v178
    %v181 = vsel %vm179, %v180, %v178
    %v182 = vclz %v181
    %v183 = vsub.s32 %v182, 2
    %vm184 = vcmp.gt.s32.totalorder 0, %v183
    %v185 = vsel %vm184, 0, %v183
    %v186 = vsub.s32 32, %v185
    %v187 = vshll.u32 %v178, %v185
    %v188 = vshrl.u32 %v170, %v186
    %v189 = vor.u32 %v187, %v188
    %v190 = vsub.s32 4294967266, %v185
    %v191 = vadd.s32 %v190, 127
    %v192 = vshll.u32 %v191, 23
    %v193 = vor.u32 4788187, %v192
    %v194 = vand.u32 2147483647, %v193
    %v196 = vcvt.s32.f32 %v189
    %v197 = vmul.f32 %v196, %v194
    %v198 = vxor.u32 %v197, 2147483648
    %v199 = vsel %vm116, %v198, %v197
    %v200 = vsub.s32 4, %v176
    %v201 = vsel %vm116, %v200, %v176
    %v202 = vsel %vm115, %v112, %v199
    %v203 = vsel %vm115, 0, %v201
    %v204 = vcosq.f32.pop %v202
    %v205 = vsinq.f32.pop %v202
    %vm206 = vweird.f32 %v112
    %v207 = vadd.s32 %v203, 3
    %v208 = vand.u32 %v207, 3
    %vm209 = vcmp.lt.s32.totalorder %v208, 2
    %vm210 = vcmp.eq.s32.totalorder %v208, 0
    %v211 = vxor.u32 %v205, 2147483648
    %v212 = vsel %vm210, %v204, %v211
    %vm213 = vcmp.eq.s32.totalorder %v208, 2
    %v214 = vxor.u32 %v204, 2147483648
    %v215 = vsel %vm213, %v214, %v205
    %v216 = vsel %vm209, %v212, %v215
    %v217 = vsel %vm206, nan, %v216
    %v218 = vand.u32 2147483647, %v113
    %vm219 = vcmp.le.f32.partialorder %v218, 0.7853982
    %vm220 = vcmp.lt.s32.totalorder %v113, 0
    %v221 = vand.u32 %v113, 2139095040
    %v222 = vshrl.u32 %v221, 23
    %v223 = vsub.s32 %v222, 127
    %v224 = vand.u32 2147483647, %v113
    %v225 = vand.u32 %v224, 8388607
    %v226 = vor.u32 %v225, 8388608
    %v227 = vsub.s32 0, %v226
    %v228 = vadd.s32 %v223, 1
    %vm229 = vcmp.gt.s32.totalorder %v228, 0
    %v230 = vsel %vm229, %v228, 0
    %v231 = vshrl.u32 %v230, 5
    %v232 = vand.u32 %v230, 31
    %v233 = vsub.s32 32, %v232
    %v234 = vshrl.u32 683565275, %v233
    %v235 = vshll.u32 683565275, %v232
    %v236 = vshrl.u32 2475754826, %v233
    %v237 = vor.u32 %v235, %v236
    %v238 = vshll.u32 2475754826, %v232
    %v239 = vshrl.u32 2131351028, %v233
    %v240 = vor.u32 %v238, %v239
    %v241 = vshll.u32 2131351028, %v232
    %v242 = vshrl.u32 2102212464, %v233
    %v243 = vor.u32 %v241, %v242
    %v244 = vshll.u32 2102212464, %v232
    %v245 = vshrl.u32 920167782, %v233
    %v246 = vor.u32 %v244, %v245
    %v247 = vshll.u32 920167782, %v232
    %v248 = vshrl.u32 1326507024, %v233
    %v249 = vor.u32 %v247, %v248
    %vm250 = vcmp.lt.s32.totalorder %v231, 1
    %vm251 = vcmp.lt.s32.totalorder %v231, 2
    %vm252 = vcmp.lt.s32.totalorder %v231, 3
    %vm253 = vcmp.lt.s32.totalorder %v231, 4
    %v254 = vsel %vm250, %v234, %v237
    %v255 = vsel %vm253, %v243, 2102212464
    %v256 = vsel %vm252, %v240, %v255
    %v257 = vsel %vm251, %v254, %v256
    %v258 = vsel %vm250, %v237, %v240
    %v259 = vsel %vm253, %v246, 920167782
    %v260 = vsel %vm252, %v243, %v259
    %v261 = vsel %vm251, %v258, %v260
    %v262 = vsel %vm250, %v240, %v243
    %v263 = vsel %vm253, %v249, 1326507024
    %v264 = vsel %vm252, %v246, %v263
    %v265 = vsel %vm251, %v262, %v264
    %v266 = vshll.u32 %v226, 8
    %v267 = vmul.u32.u64.compose %v266, %v265
    %v268 = vextract.low.u32 %v267
    %v269 = vextract.high.u32 %v267
    %v270 = vmul.u32.u64.compose %v266, %v261
    %v271 = vextract.low.u32 %v270
    %v272 = vextract.high.u32 %v270
    %v273 = vmul.u32 %v266, %v257
    %v274 = vadd.s32 %v269, %v271
    %vm275 = vc.u32 %v269, %v271
    %v276 = vadd.s32 %v272, 1
    %v277 = vsel %vm275, %v276, %v272
    %v278 = vadd.s32 %v273, %v277
    %v279 = vadd.s32 %v278, 536870912
    %v280 = vshrl.u32 %v279, 30
    %v281 = vshll.u32 %v280, 30
    %v282 = vsub.s32 %v278, %v281
    %vm283 = vcmp.lt.s32.totalorder %v282, 0
    %v284 = vsub.s32 0, %v282
    %v285 = vsel %vm283, %v284, %v282
    %v286 = vclz %v285
    %v287 = vsub.s32 %v286, 2
    %vm288 = vcmp.gt.s32.totalorder 0, %v287
    %v289 = vsel %vm288, 0, %v287
    %v290 = vsub.s32 32, %v289
    %v291 = vshll.u32 %v282, %v289
    %v292 = vshrl.u32 %v274, %v290
    %v293 = vor.u32 %v291, %v292
    %v294 = vsub.s32 4294967266, %v289
    %v295 = vadd.s32 %v294, 127
    %v296 = vshll.u32 %v295, 23
    %v297 = vor.u32 4788187, %v296
    %v298 = vand.u32 2147483647, %v297
    %v300 = vcvt.s32.f32 %v293
    %v301 = vmul.f32 %v300, %v298
    %v302 = vxor.u32 %v301, 2147483648
    %v303 = vsel %vm220, %v302, %v301
    %v304 = vsub.s32 4, %v280
    %v305 = vsel %vm220, %v304, %v280
    %v306 = vsel %vm219, %v113, %v303
    %v307 = vsel %vm219, 0, %v305
    %v308 = vcosq.f32.pop %v306
    %v309 = vsinq.f32.pop %v306
    %vm310 = vweird.f32 %v113
    %v311 = vadd.s32 %v307, 3
    %v312 = vand.u32 %v311, 3
    %vm313 = vcmp.lt.s32.totalorder %v312, 2
    %vm314 = vcmp.eq.s32.totalorder %v312, 0
    %v315 = vxor.u32 %v309, 2147483648
    %v316 = vsel %vm314, %v308, %v315
    %vm317 = vcmp.eq.s32.totalorder %v312, 2
    %v318 = vxor.u32 %v308, 2147483648
    %v319 = vsel %vm317, %v318, %v309
    %v320 = vsel %vm313, %v316, %v319
    %v321 = vsel %vm310, nan, %v320
    %v322 = vmul.f32 %v217, 0.0625
    %v323 = vmul.f32 %v321, 0.0625
    %v324 = vand.u32 2147483647, %v112
    %vm325 = vcmp.le.f32.partialorder %v324, 0.7853982
    %vm326 = vcmp.lt.s32.totalorder %v112, 0
    %v327 = vand.u32 %v112, 2139095040
    %v328 = vshrl.u32 %v327, 23
    %v329 = vsub.s32 %v328, 127
    %v330 = vand.u32 2147483647, %v112
    %v331 = vand.u32 %v330, 8388607
    %v332 = vor.u32 %v331, 8388608
    %v333 = vsub.s32 0, %v332
    %v334 = vadd.s32 %v329, 1
    %vm335 = vcmp.gt.s32.totalorder %v334, 0
    %v336 = vsel %vm335, %v334, 0
    %v337 = vshrl.u32 %v336, 5
    %v338 = vand.u32 %v336, 31
    %v339 = vsub.s32 32, %v338
    %v340 = vshrl.u32 683565275, %v339
    %v341 = vshll.u32 683565275, %v338
    %v342 = vshrl.u32 2475754826, %v339
    %v343 = vor.u32 %v341, %v342
    %v344 = vshll.u32 2475754826, %v338
    %v345 = vshrl.u32 2131351028, %v339
    %v346 = vor.u32 %v344, %v345
    %v347 = vshll.u32 2131351028, %v338
    %v348 = vshrl.u32 2102212464, %v339
    %v349 = vor.u32 %v347, %v348
    %v350 = vshll.u32 2102212464, %v338
    %v351 = vshrl.u32 920167782, %v339
    %v352 = vor.u32 %v350, %v351
    %v353 = vshll.u32 920167782, %v338
    %v354 = vshrl.u32 1326507024, %v339
    %v355 = vor.u32 %v353, %v354
    %vm356 = vcmp.lt.s32.totalorder %v337, 1
    %vm357 = vcmp.lt.s32.totalorder %v337, 2
    %vm358 = vcmp.lt.s32.totalorder %v337, 3
    %vm359 = vcmp.lt.s32.totalorder %v337, 4
    %v360 = vsel %vm356, %v340, %v343
    %v361 = vsel %vm359, %v349, 2102212464
    %v362 = vsel %vm358, %v346, %v361
    %v363 = vsel %vm357, %v360, %v362
    %v364 = vsel %vm356, %v343, %v346
    %v365 = vsel %vm359, %v352, 920167782
    %v366 = vsel %vm358, %v349, %v365
    %v367 = vsel %vm357, %v364, %v366
    %v368 = vsel %vm356, %v346, %v349
    %v369 = vsel %vm359, %v355, 1326507024
    %v370 = vsel %vm358, %v352, %v369
    %v371 = vsel %vm357, %v368, %v370
    %v372 = vshll.u32 %v332, 8
    %v373 = vmul.u32.u64.compose %v372, %v371
    %v374 = vextract.low.u32 %v373
    %v375 = vextract.high.u32 %v373
    %v376 = vmul.u32.u64.compose %v372, %v367
    %v377 = vextract.low.u32 %v376
    %v378 = vextract.high.u32 %v376
    %v379 = vmul.u32 %v372, %v363
    %v380 = vadd.s32 %v375, %v377
    %vm381 = vc.u32 %v375, %v377
    %v382 = vadd.s32 %v378, 1
    %v383 = vsel %vm381, %v382, %v378
    %v384 = vadd.s32 %v379, %v383
    %v385 = vadd.s32 %v384, 536870912
    %v386 = vshrl.u32 %v385, 30
    %v387 = vshll.u32 %v386, 30
    %v388 = vsub.s32 %v384, %v387
    %vm389 = vcmp.lt.s32.totalorder %v388, 0
    %v390 = vsub.s32 0, %v388
    %v391 = vsel %vm389, %v390, %v388
    %v392 = vclz %v391
    %v393 = vsub.s32 %v392, 2
    %vm394 = vcmp.gt.s32.totalorder 0, %v393
    %v395 = vsel %vm394, 0, %v393
    %v396 = vsub.s32 32, %v395
    %v397 = vshll.u32 %v388, %v395
    %v398 = vshrl.u32 %v380, %v396
    %v399 = vor.u32 %v397, %v398
    %v400 = vsub.s32 4294967266, %v395
    %v401 = vadd.s32 %v400, 127
    %v402 = vshll.u32 %v401, 23
    %v403 = vor.u32 4788187, %v402
    %v404 = vand.u32 2147483647, %v403
    %v406 = vcvt.s32.f32 %v399
    %v407 = vmul.f32 %v406, %v404
    %v408 = vxor.u32 %v407, 2147483648
    %v409 = vsel %vm326, %v408, %v407
    %v410 = vsub.s32 4, %v386
    %v411 = vsel %vm326, %v410, %v386
    %v412 = vsel %vm325, %v112, %v409
    %v413 = vsel %vm325, 0, %v411
    %v414 = vcosq.f32.pop %v412
    %v415 = vsinq.f32.pop %v412
    %vm416 = vweird.f32 %v112
    %v417 = vand.u32 %v413, 3
    %vm418 = vcmp.lt.s32.totalorder %v417, 2
    %vm419 = vcmp.eq.s32.totalorder %v417, 0
    %v420 = vxor.u32 %v415, 2147483648
    %v421 = vsel %vm419, %v414, %v420
    %vm422 = vcmp.eq.s32.totalorder %v417, 2
    %v423 = vxor.u32 %v414, 2147483648
    %v424 = vsel %vm422, %v423, %v415
    %v425 = vsel %vm418, %v421, %v424
    %v426 = vsel %vm416, nan, %v425
    %v427 = vand.u32 2147483647, %v113
    %vm428 = vcmp.le.f32.partialorder %v427, 0.7853982
    %vm429 = vcmp.lt.s32.totalorder %v113, 0
    %v430 = vand.u32 %v113, 2139095040
    %v431 = vshrl.u32 %v430, 23
    %v432 = vsub.s32 %v431, 127
    %v433 = vand.u32 2147483647, %v113
    %v434 = vand.u32 %v433, 8388607
    %v435 = vor.u32 %v434, 8388608
    %v436 = vsub.s32 0, %v435
    %v437 = vadd.s32 %v432, 1
    %vm438 = vcmp.gt.s32.totalorder %v437, 0
    %v439 = vsel %vm438, %v437, 0
    %v440 = vshrl.u32 %v439, 5
    %v441 = vand.u32 %v439, 31
    %v442 = vsub.s32 32, %v441
    %v443 = vshrl.u32 683565275, %v442
    %v444 = vshll.u32 683565275, %v441
    %v445 = vshrl.u32 2475754826, %v442
    %v446 = vor.u32 %v444, %v445
    %v447 = vshll.u32 2475754826, %v441
    %v448 = vshrl.u32 2131351028, %v442
    %v449 = vor.u32 %v447, %v448
    %v450 = vshll.u32 2131351028, %v441
    %v451 = vshrl.u32 2102212464, %v442
    %v452 = vor.u32 %v450, %v451
    %v453 = vshll.u32 2102212464, %v441
    %v454 = vshrl.u32 920167782, %v442
    %v455 = vor.u32 %v453, %v454
    %v456 = vshll.u32 920167782, %v441
    %v457 = vshrl.u32 1326507024, %v442
    %v458 = vor.u32 %v456, %v457
    %vm459 = vcmp.lt.s32.totalorder %v440, 1
    %vm460 = vcmp.lt.s32.totalorder %v440, 2
    %vm461 = vcmp.lt.s32.totalorder %v440, 3
    %vm462 = vcmp.lt.s32.totalorder %v440, 4
    %v463 = vsel %vm459, %v443, %v446
    %v464 = vsel %vm462, %v452, 2102212464
    %v465 = vsel %vm461, %v449, %v464
    %v466 = vsel %vm460, %v463, %v465
    %v467 = vsel %vm459, %v446, %v449
    %v468 = vsel %vm462, %v455, 920167782
    %v469 = vsel %vm461, %v452, %v468
    %v470 = vsel %vm460, %v467, %v469
    %v471 = vsel %vm459, %v449, %v452
    %v472 = vsel %vm462, %v458, 1326507024
    %v473 = vsel %vm461, %v455, %v472
    %v474 = vsel %vm460, %v471, %v473
    %v475 = vshll.u32 %v435, 8
    %v476 = vmul.u32.u64.compose %v475, %v474
    %v477 = vextract.low.u32 %v476
    %v478 = vextract.high.u32 %v476
    %v479 = vmul.u32.u64.compose %v475, %v470
    %v480 = vextract.low.u32 %v479
    %v481 = vextract.high.u32 %v479
    %v482 = vmul.u32 %v475, %v466
    %v483 = vadd.s32 %v478, %v480
    %vm484 = vc.u32 %v478, %v480
    %v485 = vadd.s32 %v481, 1
    %v486 = vsel %vm484, %v485, %v481
    %v487 = vadd.s32 %v482, %v486
    %v488 = vadd.s32 %v487, 536870912
    %v489 = vshrl.u32 %v488, 30
    %v490 = vshll.u32 %v489, 30
    %v491 = vsub.s32 %v487, %v490
    %vm492 = vcmp.lt.s32.totalorder %v491, 0
    %v493 = vsub.s32 0, %v491
    %v494 = vsel %vm492, %v493, %v491
    %v495 = vclz %v494
    %v496 = vsub.s32 %v495, 2
    %vm497 = vcmp.gt.s32.totalorder 0, %v496
    %v498 = vsel %vm497, 0, %v496
    %v499 = vsub.s32 32, %v498
    %v500 = vshll.u32 %v491, %v498
    %v501 = vshrl.u32 %v483, %v499
    %v502 = vor.u32 %v500, %v501
    %v503 = vsub.s32 4294967266, %v498
    %v504 = vadd.s32 %v503, 127
    %v505 = vshll.u32 %v504, 23
    %v506 = vor.u32 4788187, %v505
    %v507 = vand.u32 2147483647, %v506
    %v509 = vcvt.s32.f32 %v502
    %v510 = vmul.f32 %v509, %v507
    %v511 = vxor.u32 %v510, 2147483648
    %v512 = vsel %vm429, %v511, %v510
    %v513 = vsub.s32 4, %v489
    %v514 = vsel %vm429, %v513, %v489
    %v515 = vsel %vm428, %v113, %v512
    %v516 = vsel %vm428, 0, %v514
    %v517 = vcosq.f32.pop %v515
    %v518 = vsinq.f32.pop %v515
    %vm519 = vweird.f32 %v113
    %v520 = vand.u32 %v516, 3
    %vm521 = vcmp.lt.s32.totalorder %v520, 2
    %vm522 = vcmp.eq.s32.totalorder %v520, 0
    %v523 = vxor.u32 %v518, 2147483648
    %v524 = vsel %vm522, %v517, %v523
    %vm525 = vcmp.eq.s32.totalorder %v520, 2
    %v526 = vxor.u32 %v517, 2147483648
    %v527 = vsel %vm525, %v526, %v518
    %v528 = vsel %vm521, %v524, %v527
    %v529 = vsel %vm519, nan, %v528
    %v530 = vmul.f32 %v426, 0.0625
    %v531 = vmul.f32 %v529, 0.0625
    %v532 = vld [vmem:[#allocation6] sm:$0xff]
    %v533 = vld [vmem:[#allocation6 + $0x8] sm:$0xff]
    %v534 = vld [vmem:[#allocation6 + $0x3c] sm:$0xff]
    %v535 = vld [vmem:[#allocation6 + $0x44] sm:$0xff]
    %v536 = vld [vmem:[#allocation6 + $0x78] sm:$0xff]
    %v537 = vld [vmem:[#allocation6 + $0x80] sm:$0xff]
    %v538 = vld [vmem:[#allocation6 + $0xb4] sm:$0xff]
    %v539 = vld [vmem:[#allocation6 + $0xbc] sm:$0xff]
    %v540 = vld [vmem:[#allocation6 + $0xf0] sm:$0xff]
    %v541 = vld [vmem:[#allocation6 + $0xf8] sm:$0xff]
    %v542 = vld [vmem:[#allocation6 + $0x12c] sm:$0xff]
    %v543 = vld [vmem:[#allocation6 + $0x134] sm:$0xff]
    %v544 = vld [vmem:[#allocation6 + $0x168] sm:$0xff]
    %v545 = vld [vmem:[#allocation6 + $0x170] sm:$0xff]
    %v546 = vld [vmem:[#allocation6 + $0x1a4] sm:$0xff]
    %v547 = vld [vmem:[#allocation6 + $0x1ac] sm:$0xff]
    %v548 = vld [vmem:[#allocation6 + $0x1e0] sm:$0xff]
    %v549 = vld [vmem:[#allocation6 + $0x1e8] sm:$0xff]
    %v550 = vld [vmem:[#allocation6 + $0x21c] sm:$0xff]
    %v551 = vld [vmem:[#allocation6 + $0x224] sm:$0xff]
    %v552 = vld [vmem:[#allocation6 + $0x258] sm:$0xff]
    %v553 = vld [vmem:[#allocation6 + $0x260] sm:$0xff]
    %v554 = vld [vmem:[#allocation6 + $0x294] sm:$0xff]
    %v555 = vld [vmem:[#allocation6 + $0x29c] sm:$0xff]
    %v556 = vld [vmem:[#allocation6 + $0x2d0] sm:$0xff]
    %v557 = vld [vmem:[#allocation6 + $0x2d8] sm:$0xff]
    %v558 = vld [vmem:[#allocation6 + $0x30c] sm:$0xff]
    %v559 = vld [vmem:[#allocation6 + $0x314] sm:$0xff]
    %v560 = vld [vmem:[#allocation6 + $0x348] sm:$0xff]
    %v561 = vld [vmem:[#allocation6 + $0x350] sm:$0xff]
    %v562 = vld [vmem:[#allocation6 + $0x384] sm:$0xff]
    %v563 = vld [vmem:[#allocation6 + $0x38c] sm:$0xff]
    %v564 = vld [vmem:[#allocation6 + $0x3c0] sm:$0xff]
    %v565 = vld [vmem:[#allocation6 + $0x3c8] sm:$0xff]
    %v566 = vld [vmem:[#allocation6 + $0x3fc] sm:$0xff]
    %v567 = vld [vmem:[#allocation6 + $0x404] sm:$0xff]
    %v568 = vld [vmem:[#allocation6 + $0x438] sm:$0xff]
    %v569 = vld [vmem:[#allocation6 + $0x440] sm:$0xff]
    %v570 = vld [vmem:[#allocation6 + $0x474] sm:$0xff]
    %v571 = vld [vmem:[#allocation6 + $0x47c] sm:$0xff]
    %v572 = vld [vmem:[#allocation6 + $0x4b0] sm:$0xff]
    %v573 = vld [vmem:[#allocation6 + $0x4b8] sm:$0xff]
    %v574 = vld [vmem:[#allocation6 + $0x4ec] sm:$0xff]
    %v575 = vld [vmem:[#allocation6 + $0x4f4] sm:$0xff]
    %v576 = vld [vmem:[#allocation6 + $0x528] sm:$0xff]
    %v577 = vld [vmem:[#allocation6 + $0x530] sm:$0xff]
    %v578 = vld [vmem:[#allocation6 + $0x564] sm:$0xff]
    %v579 = vld [vmem:[#allocation6 + $0x56c] sm:$0xff]
    %v580 = vld [vmem:[#allocation6 + $0x5a0] sm:$0xff]
    %v581 = vld [vmem:[#allocation6 + $0x5a8] sm:$0xff]
    %v582 = vld [vmem:[#allocation6 + $0x5dc] sm:$0xff]
    %v583 = vld [vmem:[#allocation6 + $0x5e4] sm:$0xff]
    %v584 = vld [vmem:[#allocation6 + $0x618] sm:$0xff]
    %v585 = vld [vmem:[#allocation6 + $0x620] sm:$0xff]
    %v586 = vld [vmem:[#allocation6 + $0x654] sm:$0xff]
    %v587 = vld [vmem:[#allocation6 + $0x65c] sm:$0xff]
    %v588 = vld [vmem:[#allocation6 + $0x690] sm:$0xff]
    %v589 = vld [vmem:[#allocation6 + $0x698] sm:$0xff]
    %v590 = vld [vmem:[#allocation6 + $0x6cc] sm:$0xff]
    %v591 = vld [vmem:[#allocation6 + $0x6d4] sm:$0xff]
    %v592 = vld [vmem:[#allocation6 + $0x708] sm:$0xff]
    %v593 = vld [vmem:[#allocation6 + $0x710] sm:$0xff]
    %v594 = vld [vmem:[#allocation6 + $0x744] sm:$0xff]
    %v595 = vld [vmem:[#allocation6 + $0x74c] sm:$0xff]
    %v596 = vunpack.c.l.bf16 %v532
    %v597 = vunpack.c.h.bf16 %v532
    %v598 = vunpack.c.l.bf16 %v533
    %v599 = vunpack.c.h.bf16 %v533
    %v600 = vunpack.c.l.bf16 %v534
    %v601 = vunpack.c.h.bf16 %v534
    %v602 = vunpack.c.l.bf16 %v535
    %v603 = vunpack.c.h.bf16 %v535
    %v604 = vunpack.c.l.bf16 %v536
    %v605 = vunpack.c.h.bf16 %v536
    %v606 = vunpack.c.l.bf16 %v537
    %v607 = vunpack.c.h.bf16 %v537
    %v608 = vunpack.c.l.bf16 %v538
    %v609 = vunpack.c.h.bf16 %v538
    %v610 = vunpack.c.l.bf16 %v539
    %v611 = vunpack.c.h.bf16 %v539
    %v612 = vunpack.c.l.bf16 %v540
    %v613 = vunpack.c.h.bf16 %v540
    %v614 = vunpack.c.l.bf16 %v541
    %v615 = vunpack.c.h.bf16 %v541
    %v616 = vunpack.c.l.bf16 %v542
    %v617 = vunpack.c.h.bf16 %v542
    %v618 = vunpack.c.l.bf16 %v543
    %v619 = vunpack.c.h.bf16 %v543
    %v620 = vunpack.c.l.bf16 %v544
    %v621 = vunpack.c.h.bf16 %v544
    %v622 = vunpack.c.l.bf16 %v545
    %v623 = vunpack.c.h.bf16 %v545
    %v624 = vunpack.c.l.bf16 %v546
    %v625 = vunpack.c.h.bf16 %v546
    %v626 = vunpack.c.l.bf16 %v547
    %v627 = vunpack.c.h.bf16 %v547
    %v628 = vunpack.c.l.bf16 %v548
    %v629 = vunpack.c.h.bf16 %v548
    %v630 = vunpack.c.l.bf16 %v549
    %v631 = vunpack.c.h.bf16 %v549
    %v632 = vunpack.c.l.bf16 %v550
    %v633 = vunpack.c.h.bf16 %v550
    %v634 = vunpack.c.l.bf16 %v551
    %v635 = vunpack.c.h.bf16 %v551
    %v636 = vunpack.c.l.bf16 %v552
    %v637 = vunpack.c.h.bf16 %v552
    %v638 = vunpack.c.l.bf16 %v553
    %v639 = vunpack.c.h.bf16 %v553
    %v640 = vunpack.c.l.bf16 %v554
    %v641 = vunpack.c.h.bf16 %v554
    %v642 = vunpack.c.l.bf16 %v555
    %v643 = vunpack.c.h.bf16 %v555
    %v644 = vunpack.c.l.bf16 %v556
    %v645 = vunpack.c.h.bf16 %v556
    %v646 = vunpack.c.l.bf16 %v557
    %v647 = vunpack.c.h.bf16 %v557
    %v648 = vunpack.c.l.bf16 %v558
    %v649 = vunpack.c.h.bf16 %v558
    %v650 = vunpack.c.l.bf16 %v559
    %v651 = vunpack.c.h.bf16 %v559
    %v652 = vunpack.c.l.bf16 %v560
    %v653 = vunpack.c.h.bf16 %v560
    %v654 = vunpack.c.l.bf16 %v561
    %v655 = vunpack.c.h.bf16 %v561
    %v656 = vunpack.c.l.bf16 %v562
    %v657 = vunpack.c.h.bf16 %v562
    %v658 = vunpack.c.l.bf16 %v563
    %v659 = vunpack.c.h.bf16 %v563
    %v660 = vunpack.c.l.bf16 %v564
    %v661 = vunpack.c.h.bf16 %v564
    %v662 = vunpack.c.l.bf16 %v565
    %v663 = vunpack.c.h.bf16 %v565
    %v664 = vunpack.c.l.bf16 %v566
    %v665 = vunpack.c.h.bf16 %v566
    %v666 = vunpack.c.l.bf16 %v567
    %v667 = vunpack.c.h.bf16 %v567
    %v668 = vunpack.c.l.bf16 %v568
    %v669 = vunpack.c.h.bf16 %v568
    %v670 = vunpack.c.l.bf16 %v569
    %v671 = vunpack.c.h.bf16 %v569
    %v672 = vunpack.c.l.bf16 %v570
    %v673 = vunpack.c.h.bf16 %v570
    %v674 = vunpack.c.l.bf16 %v571
    %v675 = vunpack.c.h.bf16 %v571
    %v676 = vunpack.c.l.bf16 %v572
    %v677 = vunpack.c.h.bf16 %v572
    %v678 = vunpack.c.l.bf16 %v573
    %v679 = vunpack.c.h.bf16 %v573
    %v680 = vunpack.c.l.bf16 %v574
    %v681 = vunpack.c.h.bf16 %v574
    %v682 = vunpack.c.l.bf16 %v575
    %v683 = vunpack.c.h.bf16 %v575
    %v684 = vunpack.c.l.bf16 %v576
    %v685 = vunpack.c.h.bf16 %v576
    %v686 = vunpack.c.l.bf16 %v577
    %v687 = vunpack.c.h.bf16 %v577
    %v688 = vunpack.c.l.bf16 %v578
    %v689 = vunpack.c.h.bf16 %v578
    %v690 = vunpack.c.l.bf16 %v579
    %v691 = vunpack.c.h.bf16 %v579
    %v692 = vunpack.c.l.bf16 %v580
    %v693 = vunpack.c.h.bf16 %v580
    %v694 = vunpack.c.l.bf16 %v581
    %v695 = vunpack.c.h.bf16 %v581
    %v696 = vunpack.c.l.bf16 %v582
    %v697 = vunpack.c.h.bf16 %v582
    %v698 = vunpack.c.l.bf16 %v583
    %v699 = vunpack.c.h.bf16 %v583
    %v700 = vunpack.c.l.bf16 %v584
    %v701 = vunpack.c.h.bf16 %v584
    %v702 = vunpack.c.l.bf16 %v585
    %v703 = vunpack.c.h.bf16 %v585
    %v704 = vunpack.c.l.bf16 %v586
    %v705 = vunpack.c.h.bf16 %v586
    %v706 = vunpack.c.l.bf16 %v587
    %v707 = vunpack.c.h.bf16 %v587
    %v708 = vunpack.c.l.bf16 %v588
    %v709 = vunpack.c.h.bf16 %v588
    %v710 = vunpack.c.l.bf16 %v589
    %v711 = vunpack.c.h.bf16 %v589
    %v712 = vunpack.c.l.bf16 %v590
    %v713 = vunpack.c.h.bf16 %v590
    %v714 = vunpack.c.l.bf16 %v591
    %v715 = vunpack.c.h.bf16 %v591
    %v716 = vunpack.c.l.bf16 %v592
    %v717 = vunpack.c.h.bf16 %v592
    %v718 = vunpack.c.l.bf16 %v593
    %v719 = vunpack.c.h.bf16 %v593
    %v720 = vunpack.c.l.bf16 %v594
    %v721 = vunpack.c.h.bf16 %v594
    %v722 = vunpack.c.l.bf16 %v595
    %v723 = vunpack.c.h.bf16 %v595
    %v724 = vld [vmem:[#allocation6 + $0x10] sm:$0xff]
    %v725 = vld [vmem:[#allocation6 + $0x18] sm:$0xff]
    %v726 = vld [vmem:[#allocation6 + $0x4c] sm:$0xff]
    %v727 = vld [vmem:[#allocation6 + $0x54] sm:$0xff]
    %v728 = vld [vmem:[#allocation6 + $0x88] sm:$0xff]
    %v729 = vld [vmem:[#allocation6 + $0x90] sm:$0xff]
    %v730 = vld [vmem:[#allocation6 + $0xc4] sm:$0xff]
    %v731 = vld [vmem:[#allocation6 + $0xcc] sm:$0xff]
    %v732 = vld [vmem:[#allocation6 + $0x100] sm:$0xff]
    %v733 = vld [vmem:[#allocation6 + $0x108] sm:$0xff]
    %v734 = vld [vmem:[#allocation6 + $0x13c] sm:$0xff]
    %v735 = vld [vmem:[#allocation6 + $0x144] sm:$0xff]
    %v736 = vld [vmem:[#allocation6 + $0x178] sm:$0xff]
    %v737 = vld [vmem:[#allocation6 + $0x180] sm:$0xff]
    %v738 = vld [vmem:[#allocation6 + $0x1b4] sm:$0xff]
    %v739 = vld [vmem:[#allocation6 + $0x1bc] sm:$0xff]
    %v740 = vld [vmem:[#allocation6 + $0x1f0] sm:$0xff]
    %v741 = vld [vmem:[#allocation6 + $0x1f8] sm:$0xff]
    %v742 = vld [vmem:[#allocation6 + $0x22c] sm:$0xff]
    %v743 = vld [vmem:[#allocation6 + $0x234] sm:$0xff]
    %v744 = vld [vmem:[#allocation6 + $0x268] sm:$0xff]
    %v745 = vld [vmem:[#allocation6 + $0x270] sm:$0xff]
    %v746 = vld [vmem:[#allocation6 + $0x2a4] sm:$0xff]
    %v747 = vld [vmem:[#allocation6 + $0x2ac] sm:$0xff]
    %v748 = vld [vmem:[#allocation6 + $0x2e0] sm:$0xff]
    %v749 = vld [vmem:[#allocation6 + $0x2e8] sm:$0xff]
    %v750 = vld [vmem:[#allocation6 + $0x31c] sm:$0xff]
    %v751 = vld [vmem:[#allocation6 + $0x324] sm:$0xff]
    %v752 = vld [vmem:[#allocation6 + $0x358] sm:$0xff]
    %v753 = vld [vmem:[#allocation6 + $0x360] sm:$0xff]
    %v754 = vld [vmem:[#allocation6 + $0x394] sm:$0xff]
    %v755 = vld [vmem:[#allocation6 + $0x39c] sm:$0xff]
    %v756 = vld [vmem:[#allocation6 + $0x3d0] sm:$0xff]
    %v757 = vld [vmem:[#allocation6 + $0x3d8] sm:$0xff]
    %v758 = vld [vmem:[#allocation6 + $0x40c] sm:$0xff]
    %v759 = vld [vmem:[#allocation6 + $0x414] sm:$0xff]
    %v760 = vld [vmem:[#allocation6 + $0x448] sm:$0xff]
    %v761 = vld [vmem:[#allocation6 + $0x450] sm:$0xff]
    %v762 = vld [vmem:[#allocation6 + $0x484] sm:$0xff]
    %v763 = vld [vmem:[#allocation6 + $0x48c] sm:$0xff]
    %v764 = vld [vmem:[#allocation6 + $0x4c0] sm:$0xff]
    %v765 = vld [vmem:[#allocation6 + $0x4c8] sm:$0xff]
    %v766 = vld [vmem:[#allocation6 + $0x4fc] sm:$0xff]
    %v767 = vld [vmem:[#allocation6 + $0x504] sm:$0xff]
    %v768 = vld [vmem:[#allocation6 + $0x538] sm:$0xff]
    %v769 = vld [vmem:[#allocation6 + $0x540] sm:$0xff]
    %v770 = vld [vmem:[#allocation6 + $0x574] sm:$0xff]
    %v771 = vld [vmem:[#allocation6 + $0x57c] sm:$0xff]
    %v772 = vld [vmem:[#allocation6 + $0x5b0] sm:$0xff]
    %v773 = vld [vmem:[#allocation6 + $0x5b8] sm:$0xff]
    %v774 = vld [vmem:[#allocation6 + $0x5ec] sm:$0xff]
    %v775 = vld [vmem:[#allocation6 + $0x5f4] sm:$0xff]
    %v776 = vld [vmem:[#allocation6 + $0x628] sm:$0xff]
    %v777 = vld [vmem:[#allocation6 + $0x630] sm:$0xff]
    %v778 = vld [vmem:[#allocation6 + $0x664] sm:$0xff]
    %v779 = vld [vmem:[#allocation6 + $0x66c] sm:$0xff]
    %v780 = vld [vmem:[#allocation6 + $0x6a0] sm:$0xff]
    %v781 = vld [vmem:[#allocation6 + $0x6a8] sm:$0xff]
    %v782 = vld [vmem:[#allocation6 + $0x6dc] sm:$0xff]
    %v783 = vld [vmem:[#allocation6 + $0x6e4] sm:$0xff]
    %v784 = vld [vmem:[#allocation6 + $0x718] sm:$0xff]
    %v785 = vld [vmem:[#allocation6 + $0x720] sm:$0xff]
    %v786 = vld [vmem:[#allocation6 + $0x754] sm:$0xff]
    %v787 = vld [vmem:[#allocation6 + $0x75c] sm:$0xff]
    %v788 = vunpack.c.l.bf16 %v724
    %v789 = vunpack.c.h.bf16 %v724
    %v790 = vunpack.c.l.bf16 %v725
    %v791 = vunpack.c.h.bf16 %v725
    %v792 = vunpack.c.l.bf16 %v726
    %v793 = vunpack.c.h.bf16 %v726
    %v794 = vunpack.c.l.bf16 %v727
    %v795 = vunpack.c.h.bf16 %v727
    %v796 = vunpack.c.l.bf16 %v728
    %v797 = vunpack.c.h.bf16 %v728
    %v798 = vunpack.c.l.bf16 %v729
    %v799 = vunpack.c.h.bf16 %v729
    %v800 = vunpack.c.l.bf16 %v730
    %v801 = vunpack.c.h.bf16 %v730
    %v802 = vunpack.c.l.bf16 %v731
    %v803 = vunpack.c.h.bf16 %v731
    %v804 = vunpack.c.l.bf16 %v732
    %v805 = vunpack.c.h.bf16 %v732
    %v806 = vunpack.c.l.bf16 %v733
    %v807 = vunpack.c.h.bf16 %v733
    %v808 = vunpack.c.l.bf16 %v734
    %v809 = vunpack.c.h.bf16 %v734
    %v810 = vunpack.c.l.bf16 %v735
    %v811 = vunpack.c.h.bf16 %v735
    %v812 = vunpack.c.l.bf16 %v736
    %v813 = vunpack.c.h.bf16 %v736
    %v814 = vunpack.c.l.bf16 %v737
    %v815 = vunpack.c.h.bf16 %v737
    %v816 = vunpack.c.l.bf16 %v738
    %v817 = vunpack.c.h.bf16 %v738
    %v818 = vunpack.c.l.bf16 %v739
    %v819 = vunpack.c.h.bf16 %v739
    %v820 = vunpack.c.l.bf16 %v740
    %v821 = vunpack.c.h.bf16 %v740
    %v822 = vunpack.c.l.bf16 %v741
    %v823 = vunpack.c.h.bf16 %v741
    %v824 = vunpack.c.l.bf16 %v742
    %v825 = vunpack.c.h.bf16 %v742
    %v826 = vunpack.c.l.bf16 %v743
    %v827 = vunpack.c.h.bf16 %v743
    %v828 = vunpack.c.l.bf16 %v744
    %v829 = vunpack.c.h.bf16 %v744
    %v830 = vunpack.c.l.bf16 %v745
    %v831 = vunpack.c.h.bf16 %v745
    %v832 = vunpack.c.l.bf16 %v746
    %v833 = vunpack.c.h.bf16 %v746
    %v834 = vunpack.c.l.bf16 %v747
    %v835 = vunpack.c.h.bf16 %v747
    %v836 = vunpack.c.l.bf16 %v748
    %v837 = vunpack.c.h.bf16 %v748
    %v838 = vunpack.c.l.bf16 %v749
    %v839 = vunpack.c.h.bf16 %v749
    %v840 = vunpack.c.l.bf16 %v750
    %v841 = vunpack.c.h.bf16 %v750
    %v842 = vunpack.c.l.bf16 %v751
    %v843 = vunpack.c.h.bf16 %v751
    %v844 = vunpack.c.l.bf16 %v752
    %v845 = vunpack.c.h.bf16 %v752
    %v846 = vunpack.c.l.bf16 %v753
    %v847 = vunpack.c.h.bf16 %v753
    %v848 = vunpack.c.l.bf16 %v754
    %v849 = vunpack.c.h.bf16 %v754
    %v850 = vunpack.c.l.bf16 %v755
    %v851 = vunpack.c.h.bf16 %v755
    %v852 = vunpack.c.l.bf16 %v756
    %v853 = vunpack.c.h.bf16 %v756
    %v854 = vunpack.c.l.bf16 %v757
    %v855 = vunpack.c.h.bf16 %v757
    %v856 = vunpack.c.l.bf16 %v758
    %v857 = vunpack.c.h.bf16 %v758
    %v858 = vunpack.c.l.bf16 %v759
    %v859 = vunpack.c.h.bf16 %v759
    %v860 = vunpack.c.l.bf16 %v760
    %v861 = vunpack.c.h.bf16 %v760
    %v862 = vunpack.c.l.bf16 %v761
    %v863 = vunpack.c.h.bf16 %v761
    %v864 = vunpack.c.l.bf16 %v762
    %v865 = vunpack.c.h.bf16 %v762
    %v866 = vunpack.c.l.bf16 %v763
    %v867 = vunpack.c.h.bf16 %v763
    %v868 = vunpack.c.l.bf16 %v764
    %v869 = vunpack.c.h.bf16 %v764
    %v870 = vunpack.c.l.bf16 %v765
    %v871 = vunpack.c.h.bf16 %v765
    %v872 = vunpack.c.l.bf16 %v766
    %v873 = vunpack.c.h.bf16 %v766
    %v874 = vunpack.c.l.bf16 %v767
    %v875 = vunpack.c.h.bf16 %v767
    %v876 = vunpack.c.l.bf16 %v768
    %v877 = vunpack.c.h.bf16 %v768
    %v878 = vunpack.c.l.bf16 %v769
    %v879 = vunpack.c.h.bf16 %v769
    %v880 = vunpack.c.l.bf16 %v770
    %v881 = vunpack.c.h.bf16 %v770
    %v882 = vunpack.c.l.bf16 %v771
    %v883 = vunpack.c.h.bf16 %v771
    %v884 = vunpack.c.l.bf16 %v772
    %v885 = vunpack.c.h.bf16 %v772
    %v886 = vunpack.c.l.bf16 %v773
    %v887 = vunpack.c.h.bf16 %v773
    %v888 = vunpack.c.l.bf16 %v774
    %v889 = vunpack.c.h.bf16 %v774
    %v890 = vunpack.c.l.bf16 %v775
    %v891 = vunpack.c.h.bf16 %v775
    %v892 = vunpack.c.l.bf16 %v776
    %v893 = vunpack.c.h.bf16 %v776
    %v894 = vunpack.c.l.bf16 %v777
    %v895 = vunpack.c.h.bf16 %v777
    %v896 = vunpack.c.l.bf16 %v778
    %v897 = vunpack.c.h.bf16 %v778
    %v898 = vunpack.c.l.bf16 %v779
    %v899 = vunpack.c.h.bf16 %v779
    %v900 = vunpack.c.l.bf16 %v780
    %v901 = vunpack.c.h.bf16 %v780
    %v902 = vunpack.c.l.bf16 %v781
    %v903 = vunpack.c.h.bf16 %v781
    %v904 = vunpack.c.l.bf16 %v782
    %v905 = vunpack.c.h.bf16 %v782
    %v906 = vunpack.c.l.bf16 %v783
    %v907 = vunpack.c.h.bf16 %v783
    %v908 = vunpack.c.l.bf16 %v784
    %v909 = vunpack.c.h.bf16 %v784
    %v910 = vunpack.c.l.bf16 %v785
    %v911 = vunpack.c.h.bf16 %v785
    %v912 = vunpack.c.l.bf16 %v786
    %v913 = vunpack.c.h.bf16 %v786
    %v914 = vunpack.c.l.bf16 %v787
    %v915 = vunpack.c.h.bf16 %v787
    %916 = vmatprep.subr.mxu0 %v789
    %917 = vmatpush1.msra.mxu0 %v788
    %918 = vmatprep.subr.mxu0 %v793
    %919 = vmatpush1.msra.mxu0 %v792
    %920 = vmatprep.subr.mxu0 %v797
    %921 = vmatpush1.msra.mxu0 %v796
    %922 = vmatprep.subr.mxu0 %v801
    %923 = vmatpush1.msra.mxu0 %v800
    %924 = vmatprep.subr.mxu0 %v805
    %925 = vmatpush1.msra.mxu0 %v804
    %926 = vmatprep.subr.mxu0 %v809
    %927 = vmatpush1.msra.mxu0 %v808
    %928 = vmatprep.subr.mxu0 %v813
    %929 = vmatpush1.msra.mxu0 %v812
    %930 = vmatprep.subr.mxu0 %v817
    %931 = vmatpush1.msra.mxu0 %v816
    %932 = vmatprep.subr.mxu0 %v821
    %933 = vmatpush1.msra.mxu0 %v820
    %934 = vmatprep.subr.mxu0 %v825
    %935 = vmatpush1.msra.mxu0 %v824
    %936 = vmatprep.subr.mxu0 %v829
    %937 = vmatpush1.msra.mxu0 %v828
    %938 = vmatprep.subr.mxu0 %v833
    %939 = vmatpush1.msra.mxu0 %v832
    %940 = vmatprep.subr.mxu0 %v837
    %941 = vmatpush1.msra.mxu0 %v836
    %942 = vmatprep.subr.mxu0 %v841
    %943 = vmatpush1.msra.mxu0 %v840
    %944 = vmatprep.subr.mxu0 %v845
    %945 = vmatpush1.msra.mxu0 %v844
    %946 = vmatprep.subr.mxu0 %v849
    %947 = vmatpush1.msra.mxu0 %v848
    %948 = vmatprep.subr.mxu0 %v853
    %949 = vmatpush1.msra.mxu0 %v852
    %950 = vmatprep.subr.mxu0 %v857
    %951 = vmatpush1.msra.mxu0 %v856
    %952 = vmatprep.subr.mxu0 %v861
    %953 = vmatpush1.msra.mxu0 %v860
    %954 = vmatprep.subr.mxu0 %v865
    %955 = vmatpush1.msra.mxu0 %v864
    %956 = vmatprep.subr.mxu0 %v869
    %957 = vmatpush1.msra.mxu0 %v868
    %958 = vmatprep.subr.mxu0 %v873
    %959 = vmatpush1.msra.mxu0 %v872
    %960 = vmatprep.subr.mxu0 %v877
    %961 = vmatpush1.msra.mxu0 %v876
    %962 = vmatprep.subr.mxu0 %v881
    %963 = vmatpush1.msra.mxu0 %v880
    %964 = vmatprep.subr.mxu0 %v885
    %965 = vmatpush1.msra.mxu0 %v884
    %966 = vmatprep.subr.mxu0 %v889
    %967 = vmatpush1.msra.mxu0 %v888
    %968 = vmatprep.subr.mxu0 %v893
    %969 = vmatpush1.msra.mxu0 %v892
    %970 = vmatprep.subr.mxu0 %v897
    %971 = vmatpush1.msra.mxu0 %v896
    %972 = vmatprep.subr.mxu0 %v901
    %973 = vmatpush1.msra.mxu0 %v900
    %974 = vmatprep.subr.mxu0 %v905
    %975 = vmatpush1.msra.mxu0 %v904
    %976 = vmatprep.subr.mxu0 %v909
    %977 = vmatpush1.msra.mxu0 %v908
    %978 = vmatprep.subr.mxu0 %v913
    %979 = vmatpush1.msra.mxu0 %v912
    %980 = vmatprep.mubr.f32.mxu0 %v531
    %981 = vmatmul.mubr.f32.gmra.mrb[0].mxu0 %v530
    %v982 = vpop.f32.mrb[0].mxu0
    %v983 = vadd.f32 0.0, %v982
    %v984 = vpop.f32.mrb[0].mxu0
    %v985 = vadd.f32 0.0, %v984
    %986 = vdwg.mxu0
    %987 = vmatprep.subr.mxu0 %v791
    %988 = vmatpush1.msra.mxu0 %v790
    %989 = vmatprep.subr.mxu0 %v795
    %990 = vmatpush1.msra.mxu0 %v794
    %991 = vmatprep.subr.mxu0 %v799
    %992 = vmatpush1.msra.mxu0 %v798
    %993 = vmatprep.subr.mxu0 %v803
    %994 = vmatpush1.msra.mxu0 %v802
    %995 = vmatprep.subr.mxu0 %v807
    %996 = vmatpush1.msra.mxu0 %v806
    %997 = vmatprep.subr.mxu0 %v811
    %998 = vmatpush1.msra.mxu0 %v810
    %999 = vmatprep.subr.mxu0 %v815
    %1000 = vmatpush1.msra.mxu0 %v814
    %1001 = vmatprep.subr.mxu0 %v819
    %1002 = vmatpush1.msra.mxu0 %v818
    %1003 = vmatprep.subr.mxu0 %v823
    %1004 = vmatpush1.msra.mxu0 %v822
    %1005 = vmatprep.subr.mxu0 %v827
    %1006 = vmatpush1.msra.mxu0 %v826
    %1007 = vmatprep.subr.mxu0 %v831
    %1008 = vmatpush1.msra.mxu0 %v830
    %1009 = vmatprep.subr.mxu0 %v835
    %1010 = vmatpush1.msra.mxu0 %v834
    %1011 = vmatprep.subr.mxu0 %v839
    %1012 = vmatpush1.msra.mxu0 %v838
    %1013 = vmatprep.subr.mxu0 %v843
    %1014 = vmatpush1.msra.mxu0 %v842
    %1015 = vmatprep.subr.mxu0 %v847
    %1016 = vmatpush1.msra.mxu0 %v846
    %1017 = vmatprep.subr.mxu0 %v851
    %1018 = vmatpush1.msra.mxu0 %v850
    %1019 = vmatprep.subr.mxu0 %v855
    %1020 = vmatpush1.msra.mxu0 %v854
    %1021 = vmatprep.subr.mxu0 %v859
    %1022 = vmatpush1.msra.mxu0 %v858
    %1023 = vmatprep.subr.mxu0 %v863
    %1024 = vmatpush1.msra.mxu0 %v862
    %1025 = vmatprep.subr.mxu0 %v867
    %1026 = vmatpush1.msra.mxu0 %v866
    %1027 = vmatprep.subr.mxu0 %v871
    %1028 = vmatpush1.msra.mxu0 %v870
    %1029 = vmatprep.subr.mxu0 %v875
    %1030 = vmatpush1.msra.mxu0 %v874
    %1031 = vmatprep.subr.mxu0 %v879
    %1032 = vmatpush1.msra.mxu0 %v878
    %1033 = vmatprep.subr.mxu0 %v883
    %1034 = vmatpush1.msra.mxu0 %v882
    %1035 = vmatprep.subr.mxu0 %v887
    %1036 = vmatpush1.msra.mxu0 %v886
    %1037 = vmatprep.subr.mxu0 %v891
    %1038 = vmatpush1.msra.mxu0 %v890
    %1039 = vmatprep.subr.mxu0 %v895
    %1040 = vmatpush1.msra.mxu0 %v894
    %1041 = vmatprep.subr.mxu0 %v899
    %1042 = vmatpush1.msra.mxu0 %v898
    %1043 = vmatprep.subr.mxu0 %v903
    %1044 = vmatpush1.msra.mxu0 %v902
    %1045 = vmatprep.subr.mxu0 %v907
    %1046 = vmatpush1.msra.mxu0 %v906
    %1047 = vmatprep.subr.mxu0 %v911
    %1048 = vmatpush1.msra.mxu0 %v910
    %1049 = vmatprep.subr.mxu0 %v915
    %1050 = vmatpush1.msra.mxu0 %v914
    %1051 = vmatprep.mubr.f32.mxu0 %v531
    %1052 = vmatmul.mubr.f32.gmra.mrb[0].mxu0 %v530
    %v1053 = vpop.f32.mrb[0].mxu0
    %v1054 = vadd.f32 0.0, %v1053
    %v1055 = vpop.f32.mrb[0].mxu0
    %v1056 = vadd.f32 0.0, %v1055
    %1057 = vdwg.mxu0
    %1058 = vmatprep.subr.mxu0 %v597
    %1059 = vmatpush1.msra.mxu0 %v596
    %1060 = vmatprep.subr.mxu0 %v601
    %1061 = vmatpush1.msra.mxu0 %v600
    %1062 = vmatprep.subr.mxu0 %v605
    %1063 = vmatpush1.msra.mxu0 %v604
    %1064 = vmatprep.subr.mxu0 %v609
    %1065 = vmatpush1.msra.mxu0 %v608
    %1066 = vmatprep.subr.mxu0 %v613
    %1067 = vmatpush1.msra.mxu0 %v612
    %1068 = vmatprep.subr.mxu0 %v617
    %1069 = vmatpush1.msra.mxu0 %v616
    %1070 = vmatprep.subr.mxu0 %v621
    %1071 = vmatpush1.msra.mxu0 %v620
    %1072 = vmatprep.subr.mxu0 %v625
    %1073 = vmatpush1.msra.mxu0 %v624
    %1074 = vmatprep.subr.mxu0 %v629
    %1075 = vmatpush1.msra.mxu0 %v628
    %1076 = vmatprep.subr.mxu0 %v633
    %1077 = vmatpush1.msra.mxu0 %v632
    %1078 = vmatprep.subr.mxu0 %v637
    %1079 = vmatpush1.msra.mxu0 %v636
    %1080 = vmatprep.subr.mxu0 %v641
    %1081 = vmatpush1.msra.mxu0 %v640
    %1082 = vmatprep.subr.mxu0 %v645
    %1083 = vmatpush1.msra.mxu0 %v644
    %1084 = vmatprep.subr.mxu0 %v649
    %1085 = vmatpush1.msra.mxu0 %v648
    %1086 = vmatprep.subr.mxu0 %v653
    %1087 = vmatpush1.msra.mxu0 %v652
    %1088 = vmatprep.subr.mxu0 %v657
    %1089 = vmatpush1.msra.mxu0 %v656
    %1090 = vmatprep.subr.mxu0 %v661
    %1091 = vmatpush1.msra.mxu0 %v660
    %1092 = vmatprep.subr.mxu0 %v665
    %1093 = vmatpush1.msra.mxu0 %v664
    %1094 = vmatprep.subr.mxu0 %v669
    %1095 = vmatpush1.msra.mxu0 %v668
    %1096 = vmatprep.subr.mxu0 %v673
    %1097 = vmatpush1.msra.mxu0 %v672
    %1098 = vmatprep.subr.mxu0 %v677
    %1099 = vmatpush1.msra.mxu0 %v676
    %1100 = vmatprep.subr.mxu0 %v681
    %1101 = vmatpush1.msra.mxu0 %v680
    %1102 = vmatprep.subr.mxu0 %v685
    %1103 = vmatpush1.msra.mxu0 %v684
    %1104 = vmatprep.subr.mxu0 %v689
    %1105 = vmatpush1.msra.mxu0 %v688
    %1106 = vmatprep.subr.mxu0 %v693
    %1107 = vmatpush1.msra.mxu0 %v692
    %1108 = vmatprep.subr.mxu0 %v697
    %1109 = vmatpush1.msra.mxu0 %v696
    %1110 = vmatprep.subr.mxu0 %v701
    %1111 = vmatpush1.msra.mxu0 %v700
    %1112 = vmatprep.subr.mxu0 %v705
    %1113 = vmatpush1.msra.mxu0 %v704
    %1114 = vmatprep.subr.mxu0 %v709
    %1115 = vmatpush1.msra.mxu0 %v708
    %1116 = vmatprep.subr.mxu0 %v713
    %1117 = vmatpush1.msra.mxu0 %v712
    %1118 = vmatprep.subr.mxu0 %v717
    %1119 = vmatpush1.msra.mxu0 %v716
    %1120 = vmatprep.subr.mxu0 %v721
    %1121 = vmatpush1.msra.mxu0 %v720
    %1122 = vmatprep.mubr.f32.mxu0 %v323
    %1123 = vmatmul.mubr.f32.gmra.mrb[0].mxu0 %v322
    %v1124 = vpop.f32.mrb[0].mxu0
    %v1125 = vadd.f32 %v983, %v1124
    %v1126 = vpop.f32.mrb[0].mxu0
    %v1127 = vadd.f32 %v985, %v1126
    %1128 = vdwg.mxu0
    %1129 = vmatprep.subr.mxu0 %v599
    %1130 = vmatpush1.msra.mxu0 %v598
    %1131 = vmatprep.subr.mxu0 %v603
    %1132 = vmatpush1.msra.mxu0 %v602
    %1133 = vmatprep.subr.mxu0 %v607
    %1134 = vmatpush1.msra.mxu0 %v606
    %1135 = vmatprep.subr.mxu0 %v611
    %1136 = vmatpush1.msra.mxu0 %v610
    %1137 = vmatprep.subr.mxu0 %v615
    %1138 = vmatpush1.msra.mxu0 %v614
    %1139 = vmatprep.subr.mxu0 %v619
    %1140 = vmatpush1.msra.mxu0 %v618
    %1141 = vmatprep.subr.mxu0 %v623
    %1142 = vmatpush1.msra.mxu0 %v622
    %1143 = vmatprep.subr.mxu0 %v627
    %1144 = vmatpush1.msra.mxu0 %v626
    %1145 = vmatprep.subr.mxu0 %v631
    %1146 = vmatpush1.msra.mxu0 %v630
    %1147 = vmatprep.subr.mxu0 %v635
    %1148 = vmatpush1.msra.mxu0 %v634
    %1149 = vmatprep.subr.mxu0 %v639
    %1150 = vmatpush1.msra.mxu0 %v638
    %1151 = vmatprep.subr.mxu0 %v643
    %1152 = vmatpush1.msra.mxu0 %v642
    %1153 = vmatprep.subr.mxu0 %v647
    %1154 = vmatpush1.msra.mxu0 %v646
    %1155 = vmatprep.subr.mxu0 %v651
    %1156 = vmatpush1.msra.mxu0 %v650
    %1157 = vmatprep.subr.mxu0 %v655
    %1158 = vmatpush1.msra.mxu0 %v654
    %1159 = vmatprep.subr.mxu0 %v659
    %1160 = vmatpush1.msra.mxu0 %v658
    %1161 = vmatprep.subr.mxu0 %v663
    %1162 = vmatpush1.msra.mxu0 %v662
    %1163 = vmatprep.subr.mxu0 %v667
    %1164 = vmatpush1.msra.mxu0 %v666
    %1165 = vmatprep.subr.mxu0 %v671
    %1166 = vmatpush1.msra.mxu0 %v670
    %1167 = vmatprep.subr.mxu0 %v675
    %1168 = vmatpush1.msra.mxu0 %v674
    %1169 = vmatprep.subr.mxu0 %v679
    %1170 = vmatpush1.msra.mxu0 %v678
    %1171 = vmatprep.subr.mxu0 %v683
    %1172 = vmatpush1.msra.mxu0 %v682
    %1173 = vmatprep.subr.mxu0 %v687
    %1174 = vmatpush1.msra.mxu0 %v686
    %1175 = vmatprep.subr.mxu0 %v691
    %1176 = vmatpush1.msra.mxu0 %v690
    %1177 = vmatprep.subr.mxu0 %v695
    %1178 = vmatpush1.msra.mxu0 %v694
    %1179 = vmatprep.subr.mxu0 %v699
    %1180 = vmatpush1.msra.mxu0 %v698
    %1181 = vmatprep.subr.mxu0 %v703
    %1182 = vmatpush1.msra.mxu0 %v702
    %1183 = vmatprep.subr.mxu0 %v707
    %1184 = vmatpush1.msra.mxu0 %v706
    %1185 = vmatprep.subr.mxu0 %v711
    %1186 = vmatpush1.msra.mxu0 %v710
    %1187 = vmatprep.subr.mxu0 %v715
    %1188 = vmatpush1.msra.mxu0 %v714
    %1189 = vmatprep.subr.mxu0 %v719
    %1190 = vmatpush1.msra.mxu0 %v718
    %1191 = vmatprep.subr.mxu0 %v723
    %1192 = vmatpush1.msra.mxu0 %v722
    %1193 = vmatprep.mubr.f32.mxu0 %v323
    %1194 = vmatmul.mubr.f32.gmra.mrb[0].mxu0 %v322
    %v1195 = vpop.f32.mrb[0].mxu0
    %v1196 = vadd.f32 %v1054, %v1195
    %v1197 = vpop.f32.mrb[0].mxu0
    %v1198 = vadd.f32 %v1056, %v1197
    %1199 = vdwg.mxu0
    %s1200 = scalar_lea.vmem [#allocation2], 1
    %v1201 = vld [vmem:[%s1200] ss:$8 sm:$0xf]
    %v1203 = vlaneseq
    %v1204 = vshrl.u32 %v1203, 7
    %v1205 = vsub.s32 0, %v1204
    %v1206 = vrot.slane %v1201, %v1205
    %v1207 = vlaneseq
    %v1208 = vshrl.u32 %v1207, 7
    %v1209 = vsub.s32 1, %v1208
    %v1210 = vrot.slane %v1201, %v1209
    %v1211 = vlaneseq
    %v1212 = vshrl.u32 %v1211, 7
    %v1213 = vsub.s32 2, %v1212
    %v1214 = vrot.slane %v1201, %v1213
    %v1215 = vlaneseq
    %v1216 = vshrl.u32 %v1215, 7
    %v1217 = vsub.s32 3, %v1216
    %v1218 = vrot.slane %v1201, %v1217
    %v1223 = vadd.f32 %v1125, %v1206
    %v1224 = vadd.f32 %v1127, %v1210
    %v1225 = vadd.f32 %v1196, %v1214
    %v1226 = vadd.f32 %v1198, %v1218
    %v1227 = vsub.f32 0.0, %v1223
    %v1228 = vsub.f32 0.0, %v1224
    %v1229 = vsub.f32 0.0, %v1225
    %v1230 = vsub.f32 0.0, %v1226
    %v1231 = vmul.f32 %v1227, 1.442695
    %v1232 = vpow.pop %v1231
    %v1233 = vmul.f32 %v1228, 1.442695
    %v1234 = vpow.pop %v1233
    %v1235 = vmul.f32 %v1229, 1.442695
    %v1236 = vpow.pop %v1235
    %v1237 = vmul.f32 %v1230, 1.442695
    %v1238 = vpow.pop %v1237
    %v1239 = vadd.f32 %v1232, 1.0
    %v1240 = vadd.f32 %v1234, 1.0
    %v1241 = vadd.f32 %v1236, 1.0
    %v1242 = vadd.f32 %v1238, 1.0
    %v1243 = vrcp.pop %v1239
    %v1244 = vmul.f32 1.0, %v1243
    %v1245 = vrcp.pop %v1240
    %v1246 = vmul.f32 1.0, %v1245
    %v1247 = vrcp.pop %v1241
    %v1248 = vmul.f32 1.0, %v1247
    %v1249 = vrcp.pop %v1242
    %v1250 = vmul.f32 1.0, %v1249
    %v1251 = vmul.f32 %v1223, %v1244
    %v1252 = vmul.f32 %v1224, %v1246
    %v1253 = vmul.f32 %v1225, %v1248
    %v1254 = vmul.f32 %v1226, %v1250
    %v1255 = vld [vmem:[#allocation4] sm:$0xff]
    %v1256 = vld [vmem:[#allocation4 + $0x8] sm:$0xff]
    %v1257 = vld [vmem:[#allocation4 + $0x30] sm:$0xff]
    %v1258 = vld [vmem:[#allocation4 + $0x38] sm:$0xff]
    %v1259 = vld [vmem:[#allocation4 + $0x60] sm:$0xff]
    %v1260 = vld [vmem:[#allocation4 + $0x68] sm:$0xff]
    %v1261 = vld [vmem:[#allocation4 + $0x90] sm:$0xff]
    %v1262 = vld [vmem:[#allocation4 + $0x98] sm:$0xff]
    %v1263 = vld [vmem:[#allocation4 + $0xc0] sm:$0xff]
    %v1264 = vld [vmem:[#allocation4 + $0xc8] sm:$0xff]
    %v1265 = vld [vmem:[#allocation4 + $0xf0] sm:$0xff]
    %v1266 = vld [vmem:[#allocation4 + $0xf8] sm:$0xff]
    %v1267 = vld [vmem:[#allocation4 + $0x120] sm:$0xff]
    %v1268 = vld [vmem:[#allocation4 + $0x128] sm:$0xff]
    %v1269 = vld [vmem:[#allocation4 + $0x150] sm:$0xff]
    %v1270 = vld [vmem:[#allocation4 + $0x158] sm:$0xff]
    %v1271 = vld [vmem:[#allocation4 + $0x180] sm:$0xff]
    %v1272 = vld [vmem:[#allocation4 + $0x188] sm:$0xff]
    %v1273 = vld [vmem:[#allocation4 + $0x1b0] sm:$0xff]
    %v1274 = vld [vmem:[#allocation4 + $0x1b8] sm:$0xff]
    %v1275 = vld [vmem:[#allocation4 + $0x1e0] sm:$0xff]
    %v1276 = vld [vmem:[#allocation4 + $0x1e8] sm:$0xff]
    %v1277 = vld [vmem:[#allocation4 + $0x210] sm:$0xff]
    %v1278 = vld [vmem:[#allocation4 + $0x218] sm:$0xff]
    %v1279 = vld [vmem:[#allocation4 + $0x240] sm:$0xff]
    %v1280 = vld [vmem:[#allocation4 + $0x248] sm:$0xff]
    %v1281 = vld [vmem:[#allocation4 + $0x270] sm:$0xff]
    %v1282 = vld [vmem:[#allocation4 + $0x278] sm:$0xff]
    %v1283 = vld [vmem:[#allocation4 + $0x2a0] sm:$0xff]
    %v1284 = vld [vmem:[#allocation4 + $0x2a8] sm:$0xff]
    %v1285 = vld [vmem:[#allocation4 + $0x2d0] sm:$0xff]
    %v1286 = vld [vmem:[#allocation4 + $0x2d8] sm:$0xff]
    %v1287 = vld [vmem:[#allocation4 + $0x300] sm:$0xff]
    %v1288 = vld [vmem:[#allocation4 + $0x308] sm:$0xff]
    %v1289 = vld [vmem:[#allocation4 + $0x330] sm:$0xff]
    %v1290 = vld [vmem:[#allocation4 + $0x338] sm:$0xff]
    %v1291 = vld [vmem:[#allocation4 + $0x360] sm:$0xff]
    %v1292 = vld [vmem:[#allocation4 + $0x368] sm:$0xff]
    %v1293 = vld [vmem:[#allocation4 + $0x390] sm:$0xff]
    %v1294 = vld [vmem:[#allocation4 + $0x398] sm:$0xff]
    %v1295 = vld [vmem:[#allocation4 + $0x3c0] sm:$0xff]
    %v1296 = vld [vmem:[#allocation4 + $0x3c8] sm:$0xff]
    %v1297 = vld [vmem:[#allocation4 + $0x3f0] sm:$0xff]
    %v1298 = vld [vmem:[#allocation4 + $0x3f8] sm:$0xff]
    %v1299 = vld [vmem:[#allocation4 + $0x420] sm:$0xff]
    %v1300 = vld [vmem:[#allocation4 + $0x428] sm:$0xff]
    %v1301 = vld [vmem:[#allocation4 + $0x450] sm:$0xff]
    %v1302 = vld [vmem:[#allocation4 + $0x458] sm:$0xff]
    %v1303 = vld [vmem:[#allocation4 + $0x480] sm:$0xff]
    %v1304 = vld [vmem:[#allocation4 + $0x488] sm:$0xff]
    %v1305 = vld [vmem:[#allocation4 + $0x4b0] sm:$0xff]
    %v1306 = vld [vmem:[#allocation4 + $0x4b8] sm:$0xff]
    %v1307 = vld [vmem:[#allocation4 + $0x4e0] sm:$0xff]
    %v1308 = vld [vmem:[#allocation4 + $0x4e8] sm:$0xff]
    %v1309 = vld [vmem:[#allocation4 + $0x510] sm:$0xff]
    %v1310 = vld [vmem:[#allocation4 + $0x518] sm:$0xff]
    %v1311 = vld [vmem:[#allocation4 + $0x540] sm:$0xff]
    %v1312 = vld [vmem:[#allocation4 + $0x548] sm:$0xff]
    %v1313 = vld [vmem:[#allocation4 + $0x570] sm:$0xff]
    %v1314 = vld [vmem:[#allocation4 + $0x578] sm:$0xff]
    %v1315 = vld [vmem:[#allocation4 + $0x5a0] sm:$0xff]
    %v1316 = vld [vmem:[#allocation4 + $0x5a8] sm:$0xff]
    %v1317 = vld [vmem:[#allocation4 + $0x5d0] sm:$0xff]
    %v1318 = vld [vmem:[#allocation4 + $0x5d8] sm:$0xff]
    %v1319 = vld [vmem:[#allocation4 + $0x600] sm:$0xff]
    %v1320 = vld [vmem:[#allocation4 + $0x608] sm:$0xff]
    %v1321 = vld [vmem:[#allocation4 + $0x630] sm:$0xff]
    %v1322 = vld [vmem:[#allocation4 + $0x638] sm:$0xff]
    %v1323 = vld [vmem:[#allocation4 + $0x660] sm:$0xff]
    %v1324 = vld [vmem:[#allocation4 + $0x668] sm:$0xff]
    %v1325 = vld [vmem:[#allocation4 + $0x690] sm:$0xff]
    %v1326 = vld [vmem:[#allocation4 + $0x698] sm:$0xff]
    %v1327 = vld [vmem:[#allocation4 + $0x6c0] sm:$0xff]
    %v1328 = vld [vmem:[#allocation4 + $0x6c8] sm:$0xff]
    %v1329 = vld [vmem:[#allocation4 + $0x6f0] sm:$0xff]
    %v1330 = vld [vmem:[#allocation4 + $0x6f8] sm:$0xff]
    %v1331 = vld [vmem:[#allocation4 + $0x720] sm:$0xff]
    %v1332 = vld [vmem:[#allocation4 + $0x728] sm:$0xff]
    %v1333 = vld [vmem:[#allocation4 + $0x750] sm:$0xff]
    %v1334 = vld [vmem:[#allocation4 + $0x758] sm:$0xff]
    %v1335 = vld [vmem:[#allocation4 + $0x780] sm:$0xff]
    %v1336 = vld [vmem:[#allocation4 + $0x788] sm:$0xff]
    %v1337 = vld [vmem:[#allocation4 + $0x7b0] sm:$0xff]
    %v1338 = vld [vmem:[#allocation4 + $0x7b8] sm:$0xff]
    %v1339 = vld [vmem:[#allocation4 + $0x7e0] sm:$0xff]
    %v1340 = vld [vmem:[#allocation4 + $0x7e8] sm:$0xff]
    %v1341 = vld [vmem:[#allocation4 + $0x810] sm:$0xff]
    %v1342 = vld [vmem:[#allocation4 + $0x818] sm:$0xff]
    %v1343 = vld [vmem:[#allocation4 + $0x840] sm:$0xff]
    %v1344 = vld [vmem:[#allocation4 + $0x848] sm:$0xff]
    %v1345 = vld [vmem:[#allocation4 + $0x870] sm:$0xff]
    %v1346 = vld [vmem:[#allocation4 + $0x878] sm:$0xff]
    %v1347 = vld [vmem:[#allocation4 + $0x8a0] sm:$0xff]
    %v1348 = vld [vmem:[#allocation4 + $0x8a8] sm:$0xff]
    %v1349 = vld [vmem:[#allocation4 + $0x8d0] sm:$0xff]
    %v1350 = vld [vmem:[#allocation4 + $0x8d8] sm:$0xff]
    %v1351 = vld [vmem:[#allocation4 + $0x900] sm:$0xff]
    %v1352 = vld [vmem:[#allocation4 + $0x908] sm:$0xff]
    %v1353 = vld [vmem:[#allocation4 + $0x930] sm:$0xff]
    %v1354 = vld [vmem:[#allocation4 + $0x938] sm:$0xff]
    %v1355 = vld [vmem:[#allocation4 + $0x960] sm:$0xff]
    %v1356 = vld [vmem:[#allocation4 + $0x968] sm:$0xff]
    %v1357 = vld [vmem:[#allocation4 + $0x990] sm:$0xff]
    %v1358 = vld [vmem:[#allocation4 + $0x998] sm:$0xff]
    %v1359 = vld [vmem:[#allocation4 + $0x9c0] sm:$0xff]
    %v1360 = vld [vmem:[#allocation4 + $0x9c8] sm:$0xff]
    %v1361 = vld [vmem:[#allocation4 + $0x9f0] sm:$0xff]
    %v1362 = vld [vmem:[#allocation4 + $0x9f8] sm:$0xff]
    %v1363 = vld [vmem:[#allocation4 + $0xa20] sm:$0xff]
    %v1364 = vld [vmem:[#allocation4 + $0xa28] sm:$0xff]
    %v1365 = vld [vmem:[#allocation4 + $0xa50] sm:$0xff]
    %v1366 = vld [vmem:[#allocation4 + $0xa58] sm:$0xff]
    %v1367 = vld [vmem:[#allocation4 + $0xa80] sm:$0xff]
    %v1368 = vld [vmem:[#allocation4 + $0xa88] sm:$0xff]
    %v1369 = vld [vmem:[#allocation4 + $0xab0] sm:$0xff]
    %v1370 = vld [vmem:[#allocation4 + $0xab8] sm:$0xff]
    %v1371 = vld [vmem:[#allocation4 + $0xae0] sm:$0xff]
    %v1372 = vld [vmem:[#allocation4 + $0xae8] sm:$0xff]
    %v1373 = vld [vmem:[#allocation4 + $0xb10] sm:$0xff]
    %v1374 = vld [vmem:[#allocation4 + $0xb18] sm:$0xff]
    %v1375 = vld [vmem:[#allocation4 + $0xb40] sm:$0xff]
    %v1376 = vld [vmem:[#allocation4 + $0xb48] sm:$0xff]
    %v1377 = vld [vmem:[#allocation4 + $0xb70] sm:$0xff]
    %v1378 = vld [vmem:[#allocation4 + $0xb78] sm:$0xff]
    %v1379 = vld [vmem:[#allocation4 + $0xba0] sm:$0xff]
    %v1380 = vld [vmem:[#allocation4 + $0xba8] sm:$0xff]
    %v1381 = vld [vmem:[#allocation4 + $0xbd0] sm:$0xff]
    %v1382 = vld [vmem:[#allocation4 + $0xbd8] sm:$0xff]
    %v1383 = vunpack.c.l.bf16 %v1255
    %v1384 = vunpack.c.h.bf16 %v1255
    %v1385 = vunpack.c.l.bf16 %v1256
    %v1386 = vunpack.c.h.bf16 %v1256
    %v1387 = vunpack.c.l.bf16 %v1257
    %v1388 = vunpack.c.h.bf16 %v1257
    %v1389 = vunpack.c.l.bf16 %v1258
    %v1390 = vunpack.c.h.bf16 %v1258
    %v1391 = vunpack.c.l.bf16 %v1259
    %v1392 = vunpack.c.h.bf16 %v1259
    %v1393 = vunpack.c.l.bf16 %v1260
    %v1394 = vunpack.c.h.bf16 %v1260
    %v1395 = vunpack.c.l.bf16 %v1261
    %v1396 = vunpack.c.h.bf16 %v1261
    %v1397 = vunpack.c.l.bf16 %v1262
    %v1398 = vunpack.c.h.bf16 %v1262
    %v1399 = vunpack.c.l.bf16 %v1263
    %v1400 = vunpack.c.h.bf16 %v1263
    %v1401 = vunpack.c.l.bf16 %v1264
    %v1402 = vunpack.c.h.bf16 %v1264
    %v1403 = vunpack.c.l.bf16 %v1265
    %v1404 = vunpack.c.h.bf16 %v1265
    %v1405 = vunpack.c.l.bf16 %v1266
    %v1406 = vunpack.c.h.bf16 %v1266
    %v1407 = vunpack.c.l.bf16 %v1267
    %v1408 = vunpack.c.h.bf16 %v1267
    %v1409 = vunpack.c.l.bf16 %v1268
    %v1410 = vunpack.c.h.bf16 %v1268
    %v1411 = vunpack.c.l.bf16 %v1269
    %v1412 = vunpack.c.h.bf16 %v1269
    %v1413 = vunpack.c.l.bf16 %v1270
    %v1414 = vunpack.c.h.bf16 %v1270
    %v1415 = vunpack.c.l.bf16 %v1271
    %v1416 = vunpack.c.h.bf16 %v1271
    %v1417 = vunpack.c.l.bf16 %v1272
    %v1418 = vunpack.c.h.bf16 %v1272
    %v1419 = vunpack.c.l.bf16 %v1273
    %v1420 = vunpack.c.h.bf16 %v1273
    %v1421 = vunpack.c.l.bf16 %v1274
    %v1422 = vunpack.c.h.bf16 %v1274
    %v1423 = vunpack.c.l.bf16 %v1275
    %v1424 = vunpack.c.h.bf16 %v1275
    %v1425 = vunpack.c.l.bf16 %v1276
    %v1426 = vunpack.c.h.bf16 %v1276
    %v1427 = vunpack.c.l.bf16 %v1277
    %v1428 = vunpack.c.h.bf16 %v1277
    %v1429 = vunpack.c.l.bf16 %v1278
    %v1430 = vunpack.c.h.bf16 %v1278
    %v1431 = vunpack.c.l.bf16 %v1279
    %v1432 = vunpack.c.h.bf16 %v1279
    %v1433 = vunpack.c.l.bf16 %v1280
    %v1434 = vunpack.c.h.bf16 %v1280
    %v1435 = vunpack.c.l.bf16 %v1281
    %v1436 = vunpack.c.h.bf16 %v1281
    %v1437 = vunpack.c.l.bf16 %v1282
    %v1438 = vunpack.c.h.bf16 %v1282
    %v1439 = vunpack.c.l.bf16 %v1283
    %v1440 = vunpack.c.h.bf16 %v1283
    %v1441 = vunpack.c.l.bf16 %v1284
    %v1442 = vunpack.c.h.bf16 %v1284
    %v1443 = vunpack.c.l.bf16 %v1285
    %v1444 = vunpack.c.h.bf16 %v1285
    %v1445 = vunpack.c.l.bf16 %v1286
    %v1446 = vunpack.c.h.bf16 %v1286
    %v1447 = vunpack.c.l.bf16 %v1287
    %v1448 = vunpack.c.h.bf16 %v1287
    %v1449 = vunpack.c.l.bf16 %v1288
    %v1450 = vunpack.c.h.bf16 %v1288
    %v1451 = vunpack.c.l.bf16 %v1289
    %v1452 = vunpack.c.h.bf16 %v1289
    %v1453 = vunpack.c.l.bf16 %v1290
    %v1454 = vunpack.c.h.bf16 %v1290
    %v1455 = vunpack.c.l.bf16 %v1291
    %v1456 = vunpack.c.h.bf16 %v1291
    %v1457 = vunpack.c.l.bf16 %v1292
    %v1458 = vunpack.c.h.bf16 %v1292
    %v1459 = vunpack.c.l.bf16 %v1293
    %v1460 = vunpack.c.h.bf16 %v1293
    %v1461 = vunpack.c.l.bf16 %v1294
    %v1462 = vunpack.c.h.bf16 %v1294
    %v1463 = vunpack.c.l.bf16 %v1295
    %v1464 = vunpack.c.h.bf16 %v1295
    %v1465 = vunpack.c.l.bf16 %v1296
    %v1466 = vunpack.c.h.bf16 %v1296
    %v1467 = vunpack.c.l.bf16 %v1297
    %v1468 = vunpack.c.h.bf16 %v1297
    %v1469 = vunpack.c.l.bf16 %v1298
    %v1470 = vunpack.c.h.bf16 %v1298
    %v1471 = vunpack.c.l.bf16 %v1299
    %v1472 = vunpack.c.h.bf16 %v1299
    %v1473 = vunpack.c.l.bf16 %v1300
    %v1474 = vunpack.c.h.bf16 %v1300
    %v1475 = vunpack.c.l.bf16 %v1301
    %v1476 = vunpack.c.h.bf16 %v1301
    %v1477 = vunpack.c.l.bf16 %v1302
    %v1478 = vunpack.c.h.bf16 %v1302
    %v1479 = vunpack.c.l.bf16 %v1303
    %v1480 = vunpack.c.h.bf16 %v1303
    %v1481 = vunpack.c.l.bf16 %v1304
    %v1482 = vunpack.c.h.bf16 %v1304
    %v1483 = vunpack.c.l.bf16 %v1305
    %v1484 = vunpack.c.h.bf16 %v1305
    %v1485 = vunpack.c.l.bf16 %v1306
    %v1486 = vunpack.c.h.bf16 %v1306
    %v1487 = vunpack.c.l.bf16 %v1307
    %v1488 = vunpack.c.h.bf16 %v1307
    %v1489 = vunpack.c.l.bf16 %v1308
    %v1490 = vunpack.c.h.bf16 %v1308
    %v1491 = vunpack.c.l.bf16 %v1309
    %v1492 = vunpack.c.h.bf16 %v1309
    %v1493 = vunpack.c.l.bf16 %v1310
    %v1494 = vunpack.c.h.bf16 %v1310
    %v1495 = vunpack.c.l.bf16 %v1311
    %v1496 = vunpack.c.h.bf16 %v1311
    %v1497 = vunpack.c.l.bf16 %v1312
    %v1498 = vunpack.c.h.bf16 %v1312
    %v1499 = vunpack.c.l.bf16 %v1313
    %v1500 = vunpack.c.h.bf16 %v1313
    %v1501 = vunpack.c.l.bf16 %v1314
    %v1502 = vunpack.c.h.bf16 %v1314
    %v1503 = vunpack.c.l.bf16 %v1315
    %v1504 = vunpack.c.h.bf16 %v1315
    %v1505 = vunpack.c.l.bf16 %v1316
    %v1506 = vunpack.c.h.bf16 %v1316
    %v1507 = vunpack.c.l.bf16 %v1317
    %v1508 = vunpack.c.h.bf16 %v1317
    %v1509 = vunpack.c.l.bf16 %v1318
    %v1510 = vunpack.c.h.bf16 %v1318
    %v1511 = vunpack.c.l.bf16 %v1319
    %v1512 = vunpack.c.h.bf16 %v1319
    %v1513 = vunpack.c.l.bf16 %v1320
    %v1514 = vunpack.c.h.bf16 %v1320
    %v1515 = vunpack.c.l.bf16 %v1321
    %v1516 = vunpack.c.h.bf16 %v1321
    %v1517 = vunpack.c.l.bf16 %v1322
    %v1518 = vunpack.c.h.bf16 %v1322
    %v1519 = vunpack.c.l.bf16 %v1323
    %v1520 = vunpack.c.h.bf16 %v1323
    %v1521 = vunpack.c.l.bf16 %v1324
    %v1522 = vunpack.c.h.bf16 %v1324
    %v1523 = vunpack.c.l.bf16 %v1325
    %v1524 = vunpack.c.h.bf16 %v1325
    %v1525 = vunpack.c.l.bf16 %v1326
    %v1526 = vunpack.c.h.bf16 %v1326
    %v1527 = vunpack.c.l.bf16 %v1327
    %v1528 = vunpack.c.h.bf16 %v1327
    %v1529 = vunpack.c.l.bf16 %v1328
    %v1530 = vunpack.c.h.bf16 %v1328
    %v1531 = vunpack.c.l.bf16 %v1329
    %v1532 = vunpack.c.h.bf16 %v1329
    %v1533 = vunpack.c.l.bf16 %v1330
    %v1534 = vunpack.c.h.bf16 %v1330
    %v1535 = vunpack.c.l.bf16 %v1331
    %v1536 = vunpack.c.h.bf16 %v1331
    %v1537 = vunpack.c.l.bf16 %v1332
    %v1538 = vunpack.c.h.bf16 %v1332
    %v1539 = vunpack.c.l.bf16 %v1333
    %v1540 = vunpack.c.h.bf16 %v1333
    %v1541 = vunpack.c.l.bf16 %v1334
    %v1542 = vunpack.c.h.bf16 %v1334
    %v1543 = vunpack.c.l.bf16 %v1335
    %v1544 = vunpack.c.h.bf16 %v1335
    %v1545 = vunpack.c.l.bf16 %v1336
    %v1546 = vunpack.c.h.bf16 %v1336
    %v1547 = vunpack.c.l.bf16 %v1337
    %v1548 = vunpack.c.h.bf16 %v1337
    %v1549 = vunpack.c.l.bf16 %v1338
    %v1550 = vunpack.c.h.bf16 %v1338
    %v1551 = vunpack.c.l.bf16 %v1339
    %v1552 = vunpack.c.h.bf16 %v1339
    %v1553 = vunpack.c.l.bf16 %v1340
    %v1554 = vunpack.c.h.bf16 %v1340
    %v1555 = vunpack.c.l.bf16 %v1341
    %v1556 = vunpack.c.h.bf16 %v1341
    %v1557 = vunpack.c.l.bf16 %v1342
    %v1558 = vunpack.c.h.bf16 %v1342
    %v1559 = vunpack.c.l.bf16 %v1343
    %v1560 = vunpack.c.h.bf16 %v1343
    %v1561 = vunpack.c.l.bf16 %v1344
    %v1562 = vunpack.c.h.bf16 %v1344
    %v1563 = vunpack.c.l.bf16 %v1345
    %v1564 = vunpack.c.h.bf16 %v1345
    %v1565 = vunpack.c.l.bf16 %v1346
    %v1566 = vunpack.c.h.bf16 %v1346
    %v1567 = vunpack.c.l.bf16 %v1347
    %v1568 = vunpack.c.h.bf16 %v1347
    %v1569 = vunpack.c.l.bf16 %v1348
    %v1570 = vunpack.c.h.bf16 %v1348
    %v1571 = vunpack.c.l.bf16 %v1349
    %v1572 = vunpack.c.h.bf16 %v1349
    %v1573 = vunpack.c.l.bf16 %v1350
    %v1574 = vunpack.c.h.bf16 %v1350
    %v1575 = vunpack.c.l.bf16 %v1351
    %v1576 = vunpack.c.h.bf16 %v1351
    %v1577 = vunpack.c.l.bf16 %v1352
    %v1578 = vunpack.c.h.bf16 %v1352
    %v1579 = vunpack.c.l.bf16 %v1353
    %v1580 = vunpack.c.h.bf16 %v1353
    %v1581 = vunpack.c.l.bf16 %v1354
    %v1582 = vunpack.c.h.bf16 %v1354
    %v1583 = vunpack.c.l.bf16 %v1355
    %v1584 = vunpack.c.h.bf16 %v1355
    %v1585 = vunpack.c.l.bf16 %v1356
    %v1586 = vunpack.c.h.bf16 %v1356
    %v1587 = vunpack.c.l.bf16 %v1357
    %v1588 = vunpack.c.h.bf16 %v1357
    %v1589 = vunpack.c.l.bf16 %v1358
    %v1590 = vunpack.c.h.bf16 %v1358
    %v1591 = vunpack.c.l.bf16 %v1359
    %v1592 = vunpack.c.h.bf16 %v1359
    %v1593 = vunpack.c.l.bf16 %v1360
    %v1594 = vunpack.c.h.bf16 %v1360
    %v1595 = vunpack.c.l.bf16 %v1361
    %v1596 = vunpack.c.h.bf16 %v1361
    %v1597 = vunpack.c.l.bf16 %v1362
    %v1598 = vunpack.c.h.bf16 %v1362
    %v1599 = vunpack.c.l.bf16 %v1363
    %v1600 = vunpack.c.h.bf16 %v1363
    %v1601 = vunpack.c.l.bf16 %v1364
    %v1602 = vunpack.c.h.bf16 %v1364
    %v1603 = vunpack.c.l.bf16 %v1365
    %v1604 = vunpack.c.h.bf16 %v1365
    %v1605 = vunpack.c.l.bf16 %v1366
    %v1606 = vunpack.c.h.bf16 %v1366
    %v1607 = vunpack.c.l.bf16 %v1367
    %v1608 = vunpack.c.h.bf16 %v1367
    %v1609 = vunpack.c.l.bf16 %v1368
    %v1610 = vunpack.c.h.bf16 %v1368
    %v1611 = vunpack.c.l.bf16 %v1369
    %v1612 = vunpack.c.h.bf16 %v1369
    %v1613 = vunpack.c.l.bf16 %v1370
    %v1614 = vunpack.c.h.bf16 %v1370
    %v1615 = vunpack.c.l.bf16 %v1371
    %v1616 = vunpack.c.h.bf16 %v1371
    %v1617 = vunpack.c.l.bf16 %v1372
    %v1618 = vunpack.c.h.bf16 %v1372
    %v1619 = vunpack.c.l.bf16 %v1373
    %v1620 = vunpack.c.h.bf16 %v1373
    %v1621 = vunpack.c.l.bf16 %v1374
    %v1622 = vunpack.c.h.bf16 %v1374
    %v1623 = vunpack.c.l.bf16 %v1375
    %v1624 = vunpack.c.h.bf16 %v1375
    %v1625 = vunpack.c.l.bf16 %v1376
    %v1626 = vunpack.c.h.bf16 %v1376
    %v1627 = vunpack.c.l.bf16 %v1377
    %v1628 = vunpack.c.h.bf16 %v1377
    %v1629 = vunpack.c.l.bf16 %v1378
    %v1630 = vunpack.c.h.bf16 %v1378
    %v1631 = vunpack.c.l.bf16 %v1379
    %v1632 = vunpack.c.h.bf16 %v1379
    %v1633 = vunpack.c.l.bf16 %v1380
    %v1634 = vunpack.c.h.bf16 %v1380
    %v1635 = vunpack.c.l.bf16 %v1381
    %v1636 = vunpack.c.h.bf16 %v1381
    %v1637 = vunpack.c.l.bf16 %v1382
    %v1638 = vunpack.c.h.bf16 %v1382
    %s1639 = scalar_lea.vmem [#allocation2], 2
    %v1640 = vld [vmem:[%s1639] ss:$8 sm:$0xf]
    %v1642 = vlaneseq
    %v1643 = vshrl.u32 %v1642, 7
    %v1644 = vsub.s32 0, %v1643
    %v1645 = vrot.slane %v1640, %v1644
    %v1646 = vlaneseq
    %v1647 = vshrl.u32 %v1646, 7
    %v1648 = vsub.s32 1, %v1647
    %v1649 = vrot.slane %v1640, %v1648
    %v1650 = vlaneseq
    %v1651 = vshrl.u32 %v1650, 7
    %v1652 = vsub.s32 2, %v1651
    %v1653 = vrot.slane %v1640, %v1652
    %v1654 = vlaneseq
    %v1655 = vshrl.u32 %v1654, 7
    %v1656 = vsub.s32 3, %v1655
    %v1657 = vrot.slane %v1640, %v1656
    %1662 = vmatprep.subr.mxu0 %v1384
    %1663 = vmatpush1.msra.mxu0 %v1383
    %1664 = vmatprep.subr.mxu0 %v1388
    %1665 = vmatpush1.msra.mxu0 %v1387
    %1666 = vmatprep.subr.mxu0 %v1392
    %1667 = vmatpush1.msra.mxu0 %v1391
    %1668 = vmatprep.subr.mxu0 %v1396
    %1669 = vmatpush1.msra.mxu0 %v1395
    %1670 = vmatprep.subr.mxu0 %v1400
    %1671 = vmatpush1.msra.mxu0 %v1399
    %1672 = vmatprep.subr.mxu0 %v1404
    %1673 = vmatpush1.msra.mxu0 %v1403
    %1674 = vmatprep.subr.mxu0 %v1408
    %1675 = vmatpush1.msra.mxu0 %v1407
    %1676 = vmatprep.subr.mxu0 %v1412
    %1677 = vmatpush1.msra.mxu0 %v1411
    %1678 = vmatprep.subr.mxu0 %v1416
    %1679 = vmatpush1.msra.mxu0 %v1415
    %1680 = vmatprep.subr.mxu0 %v1420
    %1681 = vmatpush1.msra.mxu0 %v1419
    %1682 = vmatprep.subr.mxu0 %v1424
    %1683 = vmatpush1.msra.mxu0 %v1423
    %1684 = vmatprep.subr.mxu0 %v1428
    %1685 = vmatpush1.msra.mxu0 %v1427
    %1686 = vmatprep.subr.mxu0 %v1432
    %1687 = vmatpush1.msra.mxu0 %v1431
    %1688 = vmatprep.subr.mxu0 %v1436
    %1689 = vmatpush1.msra.mxu0 %v1435
    %1690 = vmatprep.subr.mxu0 %v1440
    %1691 = vmatpush1.msra.mxu0 %v1439
    %1692 = vmatprep.subr.mxu0 %v1444
    %1693 = vmatpush1.msra.mxu0 %v1443
    %1694 = vmatprep.subr.mxu0 %v1448
    %1695 = vmatpush1.msra.mxu0 %v1447
    %1696 = vmatprep.subr.mxu0 %v1452
    %1697 = vmatpush1.msra.mxu0 %v1451
    %1698 = vmatprep.subr.mxu0 %v1456
    %1699 = vmatpush1.msra.mxu0 %v1455
    %1700 = vmatprep.subr.mxu0 %v1460
    %1701 = vmatpush1.msra.mxu0 %v1459
    %1702 = vmatprep.subr.mxu0 %v1464
    %1703 = vmatpush1.msra.mxu0 %v1463
    %1704 = vmatprep.subr.mxu0 %v1468
    %1705 = vmatpush1.msra.mxu0 %v1467
    %1706 = vmatprep.subr.mxu0 %v1472
    %1707 = vmatpush1.msra.mxu0 %v1471
    %1708 = vmatprep.subr.mxu0 %v1476
    %1709 = vmatpush1.msra.mxu0 %v1475
    %1710 = vmatprep.subr.mxu0 %v1480
    %1711 = vmatpush1.msra.mxu0 %v1479
    %1712 = vmatprep.subr.mxu0 %v1484
    %1713 = vmatpush1.msra.mxu0 %v1483
    %1714 = vmatprep.subr.mxu0 %v1488
    %1715 = vmatpush1.msra.mxu0 %v1487
    %1716 = vmatprep.subr.mxu0 %v1492
    %1717 = vmatpush1.msra.mxu0 %v1491
    %1718 = vmatprep.subr.mxu0 %v1496
    %1719 = vmatpush1.msra.mxu0 %v1495
    %1720 = vmatprep.subr.mxu0 %v1500
    %1721 = vmatpush1.msra.mxu0 %v1499
    %1722 = vmatprep.subr.mxu0 %v1504
    %1723 = vmatpush1.msra.mxu0 %v1503
    %1724 = vmatprep.subr.mxu0 %v1508
    %1725 = vmatpush1.msra.mxu0 %v1507
    %1726 = vmatprep.mubr.f32.mxu0 %v1252
    %1727 = vmatmul.mubr.f32.gmra.mrb[0].mxu0 %v1251
    %v1728 = vpop.f32.mrb[0].mxu0
    %v1729 = vadd.f32 %v1645, %v1728
    %v1730 = vpop.f32.mrb[0].mxu0
    %v1731 = vadd.f32 %v1649, %v1730
    %1732 = vdwg.mxu0
    %1733 = vmatprep.subr.mxu0 %v1512
    %1734 = vmatpush1.msra.mxu0 %v1511
    %1735 = vmatprep.subr.mxu0 %v1516
    %1736 = vmatpush1.msra.mxu0 %v1515
    %1737 = vmatprep.subr.mxu0 %v1520
    %1738 = vmatpush1.msra.mxu0 %v1519
    %1739 = vmatprep.subr.mxu0 %v1524
    %1740 = vmatpush1.msra.mxu0 %v1523
    %1741 = vmatprep.subr.mxu0 %v1528
    %1742 = vmatpush1.msra.mxu0 %v1527
    %1743 = vmatprep.subr.mxu0 %v1532
    %1744 = vmatpush1.msra.mxu0 %v1531
    %1745 = vmatprep.subr.mxu0 %v1536
    %1746 = vmatpush1.msra.mxu0 %v1535
    %1747 = vmatprep.subr.mxu0 %v1540
    %1748 = vmatpush1.msra.mxu0 %v1539
    %1749 = vmatprep.subr.mxu0 %v1544
    %1750 = vmatpush1.msra.mxu0 %v1543
    %1751 = vmatprep.subr.mxu0 %v1548
    %1752 = vmatpush1.msra.mxu0 %v1547
    %1753 = vmatprep.subr.mxu0 %v1552
    %1754 = vmatpush1.msra.mxu0 %v1551
    %1755 = vmatprep.subr.mxu0 %v1556
    %1756 = vmatpush1.msra.mxu0 %v1555
    %1757 = vmatprep.subr.mxu0 %v1560
    %1758 = vmatpush1.msra.mxu0 %v1559
    %1759 = vmatprep.subr.mxu0 %v1564
    %1760 = vmatpush1.msra.mxu0 %v1563
    %1761 = vmatprep.subr.mxu0 %v1568
    %1762 = vmatpush1.msra.mxu0 %v1567
    %1763 = vmatprep.subr.mxu0 %v1572
    %1764 = vmatpush1.msra.mxu0 %v1571
    %1765 = vmatprep.subr.mxu0 %v1576
    %1766 = vmatpush1.msra.mxu0 %v1575
    %1767 = vmatprep.subr.mxu0 %v1580
    %1768 = vmatpush1.msra.mxu0 %v1579
    %1769 = vmatprep.subr.mxu0 %v1584
    %1770 = vmatpush1.msra.mxu0 %v1583
    %1771 = vmatprep.subr.mxu0 %v1588
    %1772 = vmatpush1.msra.mxu0 %v1587
    %1773 = vmatprep.subr.mxu0 %v1592
    %1774 = vmatpush1.msra.mxu0 %v1591
    %1775 = vmatprep.subr.mxu0 %v1596
    %1776 = vmatpush1.msra.mxu0 %v1595
    %1777 = vmatprep.subr.mxu0 %v1600
    %1778 = vmatpush1.msra.mxu0 %v1599
    %1779 = vmatprep.subr.mxu0 %v1604
    %1780 = vmatpush1.msra.mxu0 %v1603
    %1781 = vmatprep.subr.mxu0 %v1608
    %1782 = vmatpush1.msra.mxu0 %v1607
    %1783 = vmatprep.subr.mxu0 %v1612
    %1784 = vmatpush1.msra.mxu0 %v1611
    %1785 = vmatprep.subr.mxu0 %v1616
    %1786 = vmatpush1.msra.mxu0 %v1615
    %1787 = vmatprep.subr.mxu0 %v1620
    %1788 = vmatpush1.msra.mxu0 %v1619
    %1789 = vmatprep.subr.mxu0 %v1624
    %1790 = vmatpush1.msra.mxu0 %v1623
    %1791 = vmatprep.subr.mxu0 %v1628
    %1792 = vmatpush1.msra.mxu0 %v1627
    %1793 = vmatprep.subr.mxu0 %v1632
    %1794 = vmatpush1.msra.mxu0 %v1631
    %1795 = vmatprep.subr.mxu0 %v1636
    %1796 = vmatpush1.msra.mxu0 %v1635
    %1797 = vmatprep.mubr.f32.mxu0 %v1254
    %1798 = vmatmul.mubr.f32.gmra.mrb[0].mxu0 %v1253
    %v1799 = vpop.f32.mrb[0].mxu0
    %v1800 = vadd.f32 %v1729, %v1799
    %v1801 = vpop.f32.mrb[0].mxu0
    %v1802 = vadd.f32 %v1731, %v1801
    %1803 = vdwg.mxu0
    %1804 = vmatprep.subr.mxu0 %v1386
    %1805 = vmatpush1.msra.mxu0 %v1385
    %1806 = vmatprep.subr.mxu0 %v1390
    %1807 = vmatpush1.msra.mxu0 %v1389
    %1808 = vmatprep.subr.mxu0 %v1394
    %1809 = vmatpush1.msra.mxu0 %v1393
    %1810 = vmatprep.subr.mxu0 %v1398
    %1811 = vmatpush1.msra.mxu0 %v1397
    %1812 = vmatprep.subr.mxu0 %v1402
    %1813 = vmatpush1.msra.mxu0 %v1401
    %1814 = vmatprep.subr.mxu0 %v1406
    %1815 = vmatpush1.msra.mxu0 %v1405
    %1816 = vmatprep.subr.mxu0 %v1410
    %1817 = vmatpush1.msra.mxu0 %v1409
    %1818 = vmatprep.subr.mxu0 %v1414
    %1819 = vmatpush1.msra.mxu0 %v1413
    %1820 = vmatprep.subr.mxu0 %v1418
    %1821 = vmatpush1.msra.mxu0 %v1417
    %1822 = vmatprep.subr.mxu0 %v1422
    %1823 = vmatpush1.msra.mxu0 %v1421
    %1824 = vmatprep.subr.mxu0 %v1426
    %1825 = vmatpush1.msra.mxu0 %v1425
    %1826 = vmatprep.subr.mxu0 %v1430
    %1827 = vmatpush1.msra.mxu0 %v1429
    %1828 = vmatprep.subr.mxu0 %v1434
    %1829 = vmatpush1.msra.mxu0 %v1433
    %1830 = vmatprep.subr.mxu0 %v1438
    %1831 = vmatpush1.msra.mxu0 %v1437
    %1832 = vmatprep.subr.mxu0 %v1442
    %1833 = vmatpush1.msra.mxu0 %v1441
    %1834 = vmatprep.subr.mxu0 %v1446
    %1835 = vmatpush1.msra.mxu0 %v1445
    %1836 = vmatprep.subr.mxu0 %v1450
    %1837 = vmatpush1.msra.mxu0 %v1449
    %1838 = vmatprep.subr.mxu0 %v1454
    %1839 = vmatpush1.msra.mxu0 %v1453
    %1840 = vmatprep.subr.mxu0 %v1458
    %1841 = vmatpush1.msra.mxu0 %v1457
    %1842 = vmatprep.subr.mxu0 %v1462
    %1843 = vmatpush1.msra.mxu0 %v1461
    %1844 = vmatprep.subr.mxu0 %v1466
    %1845 = vmatpush1.msra.mxu0 %v1465
    %1846 = vmatprep.subr.mxu0 %v1470
    %1847 = vmatpush1.msra.mxu0 %v1469
    %1848 = vmatprep.subr.mxu0 %v1474
    %1849 = vmatpush1.msra.mxu0 %v1473
    %1850 = vmatprep.subr.mxu0 %v1478
    %1851 = vmatpush1.msra.mxu0 %v1477
    %1852 = vmatprep.subr.mxu0 %v1482
    %1853 = vmatpush1.msra.mxu0 %v1481
    %1854 = vmatprep.subr.mxu0 %v1486
    %1855 = vmatpush1.msra.mxu0 %v1485
    %1856 = vmatprep.subr.mxu0 %v1490
    %1857 = vmatpush1.msra.mxu0 %v1489
    %1858 = vmatprep.subr.mxu0 %v1494
    %1859 = vmatpush1.msra.mxu0 %v1493
    %1860 = vmatprep.subr.mxu0 %v1498
    %1861 = vmatpush1.msra.mxu0 %v1497
    %1862 = vmatprep.subr.mxu0 %v1502
    %1863 = vmatpush1.msra.mxu0 %v1501
    %1864 = vmatprep.subr.mxu0 %v1506
    %1865 = vmatpush1.msra.mxu0 %v1505
    %1866 = vmatprep.subr.mxu0 %v1510
    %1867 = vmatpush1.msra.mxu0 %v1509
    %1868 = vmatprep.mubr.f32.mxu0 %v1252
    %1869 = vmatmul.mubr.f32.gmra.mrb[0].mxu0 %v1251
    %v1870 = vpop.f32.mrb[0].mxu0
    %v1871 = vadd.f32 %v1653, %v1870
    %v1872 = vpop.f32.mrb[0].mxu0
    %v1873 = vadd.f32 %v1657, %v1872
    %1874 = vdwg.mxu0
    %1875 = vmatprep.subr.mxu0 %v1514
    %1876 = vmatpush1.msra.mxu0 %v1513
    %1877 = vmatprep.subr.mxu0 %v1518
    %1878 = vmatpush1.msra.mxu0 %v1517
    %1879 = vmatprep.subr.mxu0 %v1522
    %1880 = vmatpush1.msra.mxu0 %v1521
    %1881 = vmatprep.subr.mxu0 %v1526
    %1882 = vmatpush1.msra.mxu0 %v1525
    %1883 = vmatprep.subr.mxu0 %v1530
    %1884 = vmatpush1.msra.mxu0 %v1529
    %1885 = vmatprep.subr.mxu0 %v1534
    %1886 = vmatpush1.msra.mxu0 %v1533
    %1887 = vmatprep.subr.mxu0 %v1538
    %1888 = vmatpush1.msra.mxu0 %v1537
    %1889 = vmatprep.subr.mxu0 %v1542
    %1890 = vmatpush1.msra.mxu0 %v1541
    %1891 = vmatprep.subr.mxu0 %v1546
    %1892 = vmatpush1.msra.mxu0 %v1545
    %1893 = vmatprep.subr.mxu0 %v1550
    %1894 = vmatpush1.msra.mxu0 %v1549
    %1895 = vmatprep.subr.mxu0 %v1554
    %1896 = vmatpush1.msra.mxu0 %v1553
    %1897 = vmatprep.subr.mxu0 %v1558
    %1898 = vmatpush1.msra.mxu0 %v1557
    %1899 = vmatprep.subr.mxu0 %v1562
    %1900 = vmatpush1.msra.mxu0 %v1561
    %1901 = vmatprep.subr.mxu0 %v1566
    %1902 = vmatpush1.msra.mxu0 %v1565
    %1903 = vmatprep.subr.mxu0 %v1570
    %1904 = vmatpush1.msra.mxu0 %v1569
    %1905 = vmatprep.subr.mxu0 %v1574
    %1906 = vmatpush1.msra.mxu0 %v1573
    %1907 = vmatprep.subr.mxu0 %v1578
    %1908 = vmatpush1.msra.mxu0 %v1577
    %1909 = vmatprep.subr.mxu0 %v1582
    %1910 = vmatpush1.msra.mxu0 %v1581
    %1911 = vmatprep.subr.mxu0 %v1586
    %1912 = vmatpush1.msra.mxu0 %v1585
    %1913 = vmatprep.subr.mxu0 %v1590
    %1914 = vmatpush1.msra.mxu0 %v1589
    %1915 = vmatprep.subr.mxu0 %v1594
    %1916 = vmatpush1.msra.mxu0 %v1593
    %1917 = vmatprep.subr.mxu0 %v1598
    %1918 = vmatpush1.msra.mxu0 %v1597
    %1919 = vmatprep.subr.mxu0 %v1602
    %1920 = vmatpush1.msra.mxu0 %v1601
    %1921 = vmatprep.subr.mxu0 %v1606
    %1922 = vmatpush1.msra.mxu0 %v1605
    %1923 = vmatprep.subr.mxu0 %v1610
    %1924 = vmatpush1.msra.mxu0 %v1609
    %1925 = vmatprep.subr.mxu0 %v1614
    %1926 = vmatpush1.msra.mxu0 %v1613
    %1927 = vmatprep.subr.mxu0 %v1618
    %1928 = vmatpush1.msra.mxu0 %v1617
    %1929 = vmatprep.subr.mxu0 %v1622
    %1930 = vmatpush1.msra.mxu0 %v1621
    %1931 = vmatprep.subr.mxu0 %v1626
    %1932 = vmatpush1.msra.mxu0 %v1625
    %1933 = vmatprep.subr.mxu0 %v1630
    %1934 = vmatpush1.msra.mxu0 %v1629
    %1935 = vmatprep.subr.mxu0 %v1634
    %1936 = vmatpush1.msra.mxu0 %v1633
    %1937 = vmatprep.subr.mxu0 %v1638
    %1938 = vmatpush1.msra.mxu0 %v1637
    %1939 = vmatprep.mubr.f32.mxu0 %v1254
    %1940 = vmatmul.mubr.f32.gmra.mrb[0].mxu0 %v1253
    %v1941 = vpop.f32.mrb[0].mxu0
    %v1942 = vadd.f32 %v1871, %v1941
    %v1943 = vpop.f32.mrb[0].mxu0
    %v1944 = vadd.f32 %v1873, %v1943
    %1945 = vdwg.mxu0
    %v1946 = vld [vmem:[%s0] sm:$0xff]
    %v1947 = vld [vmem:[#allocation4 + $0x10] sm:$0xf]
    %v1948 = vld [vmem:[#allocation4 + $0x40] sm:$0xf]
    %v1949 = vld [vmem:[#allocation4 + $0x70] sm:$0xf]
    %v1950 = vld [vmem:[#allocation4 + $0xa0] sm:$0xf]
    %v1951 = vld [vmem:[#allocation4 + $0xd0] sm:$0xf]
    %v1952 = vld [vmem:[#allocation4 + $0x100] sm:$0xf]
    %v1953 = vld [vmem:[#allocation4 + $0x130] sm:$0xf]
    %v1954 = vld [vmem:[#allocation4 + $0x160] sm:$0xf]
    %v1955 = vld [vmem:[#allocation4 + $0x190] sm:$0xf]
    %v1956 = vld [vmem:[#allocation4 + $0x1c0] sm:$0xf]
    %v1957 = vld [vmem:[#allocation4 + $0x1f0] sm:$0xf]
    %v1958 = vld [vmem:[#allocation4 + $0x220] sm:$0xf]
    %v1959 = vld [vmem:[#allocation4 + $0x250] sm:$0xf]
    %v1960 = vld [vmem:[#allocation4 + $0x280] sm:$0xf]
    %v1961 = vld [vmem:[#allocation4 + $0x2b0] sm:$0xf]
    %v1962 = vld [vmem:[#allocation4 + $0x2e0] sm:$0xf]
    %v1963 = vld [vmem:[#allocation4 + $0x310] sm:$0xf]
    %v1964 = vld [vmem:[#allocation4 + $0x340] sm:$0xf]
    %v1965 = vld [vmem:[#allocation4 + $0x370] sm:$0xf]
    %v1966 = vld [vmem:[#allocation4 + $0x3a0] sm:$0xf]
    %v1967 = vld [vmem:[#allocation4 + $0x3d0] sm:$0xf]
    %v1968 = vld [vmem:[#allocation4 + $0x400] sm:$0xf]
    %v1969 = vld [vmem:[#allocation4 + $0x430] sm:$0xf]
    %v1970 = vld [vmem:[#allocation4 + $0x460] sm:$0xf]
    %v1971 = vld [vmem:[#allocation4 + $0x490] sm:$0xf]
    %v1972 = vld [vmem:[#allocation4 + $0x4c0] sm:$0xf]
    %v1973 = vld [vmem:[#allocation4 + $0x4f0] sm:$0xf]
    %v1974 = vld [vmem:[#allocation4 + $0x520] sm:$0xf]
    %v1975 = vld [vmem:[#allocation4 + $0x550] sm:$0xf]
    %v1976 = vld [vmem:[#allocation4 + $0x580] sm:$0xf]
    %v1977 = vld [vmem:[#allocation4 + $0x5b0] sm:$0xf]
    %v1978 = vld [vmem:[#allocation4 + $0x5e0] sm:$0xf]
    %v1979 = vld [vmem:[#allocation4 + $0x610] sm:$0xf]
    %v1980 = vld [vmem:[#allocation4 + $0x640] sm:$0xf]
    %v1981 = vld [vmem:[#allocation4 + $0x670] sm:$0xf]
    %v1982 = vld [vmem:[#allocation4 + $0x6a0] sm:$0xf]
    %v1983 = vld [vmem:[#allocation4 + $0x6d0] sm:$0xf]
    %v1984 = vld [vmem:[#allocation4 + $0x700] sm:$0xf]
    %v1985 = vld [vmem:[#allocation4 + $0x730] sm:$0xf]
    %v1986 = vld [vmem:[#allocation4 + $0x760] sm:$0xf]
    %v1987 = vld [vmem:[#allocation4 + $0x790] sm:$0xf]
    %v1988 = vld [vmem:[#allocation4 + $0x7c0] sm:$0xf]
    %v1989 = vld [vmem:[#allocation4 + $0x7f0] sm:$0xf]
    %v1990 = vld [vmem:[#allocation4 + $0x820] sm:$0xf]
    %v1991 = vld [vmem:[#allocation4 + $0x850] sm:$0xf]
    %v1992 = vld [vmem:[#allocation4 + $0x880] sm:$0xf]
    %v1993 = vld [vmem:[#allocation4 + $0x8b0] sm:$0xf]
    %v1994 = vld [vmem:[#allocation4 + $0x8e0] sm:$0xf]
    %v1995 = vld [vmem:[#allocation4 + $0x910] sm:$0xf]
    %v1996 = vld [vmem:[#allocation4 + $0x940] sm:$0xf]
    %v1997 = vld [vmem:[#allocation4 + $0x970] sm:$0xf]
    %v1998 = vld [vmem:[#allocation4 + $0x9a0] sm:$0xf]
    %v1999 = vld [vmem:[#allocation4 + $0x9d0] sm:$0xf]
    %v2000 = vld [vmem:[#allocation4 + $0xa00] sm:$0xf]
    %v2001 = vld [vmem:[#allocation4 + $0xa30] sm:$0xf]
    %v2002 = vld [vmem:[#allocation4 + $0xa60] sm:$0xf]
    %v2003 = vld [vmem:[#allocation4 + $0xa90] sm:$0xf]
    %v2004 = vld [vmem:[#allocation4 + $0xac0] sm:$0xf]
    %v2005 = vld [vmem:[#allocation4 + $0xaf0] sm:$0xf]
    %v2006 = vld [vmem:[#allocation4 + $0xb20] sm:$0xf]
    %v2007 = vld [vmem:[#allocation4 + $0xb50] sm:$0xf]
    %v2008 = vld [vmem:[#allocation4 + $0xb80] sm:$0xf]
    %v2009 = vld [vmem:[#allocation4 + $0xbb0] sm:$0xf]
    %v2010 = vld [vmem:[#allocation4 + $0xbe0] sm:$0xf]
    %v2011 = vunpack.c.l.bf16 %v1947
    %v2012 = vunpack.c.l.bf16 %v1948
    %v2013 = vunpack.c.l.bf16 %v1949
    %v2014 = vunpack.c.l.bf16 %v1950
    %v2015 = vunpack.c.l.bf16 %v1951
    %v2016 = vunpack.c.l.bf16 %v1952
    %v2017 = vunpack.c.l.bf16 %v1953
    %v2018 = vunpack.c.l.bf16 %v1954
    %v2019 = vunpack.c.l.bf16 %v1955
    %v2020 = vunpack.c.l.bf16 %v1956
    %v2021 = vunpack.c.l.bf16 %v1957
    %v2022 = vunpack.c.l.bf16 %v1958
    %v2023 = vunpack.c.l.bf16 %v1959
    %v2024 = vunpack.c.l.bf16 %v1960
    %v2025 = vunpack.c.l.bf16 %v1961
    %v2026 = vunpack.c.l.bf16 %v1962
    %v2027 = vunpack.c.l.bf16 %v1963
    %v2028 = vunpack.c.l.bf16 %v1964
    %v2029 = vunpack.c.l.bf16 %v1965
    %v2030 = vunpack.c.l.bf16 %v1966
    %v2031 = vunpack.c.l.bf16 %v1967
    %v2032 = vunpack.c.l.bf16 %v1968
    %v2033 = vunpack.c.l.bf16 %v1969
    %v2034 = vunpack.c.l.bf16 %v1970
    %v2035 = vunpack.c.l.bf16 %v1971
    %v2036 = vunpack.c.l.bf16 %v1972
    %v2037 = vunpack.c.l.bf16 %v1973
    %v2038 = vunpack.c.l.bf16 %v1974
    %v2039 = vunpack.c.l.bf16 %v1975
    %v2040 = vunpack.c.l.bf16 %v1976
    %v2041 = vunpack.c.l.bf16 %v1977
    %v2042 = vunpack.c.l.bf16 %v1978
    %v2043 = vunpack.c.l.bf16 %v1979
    %v2044 = vunpack.c.l.bf16 %v1980
    %v2045 = vunpack.c.l.bf16 %v1981
    %v2046 = vunpack.c.l.bf16 %v1982
    %v2047 = vunpack.c.l.bf16 %v1983
    %v2048 = vunpack.c.l.bf16 %v1984
    %v2049 = vunpack.c.l.bf16 %v1985
    %v2050 = vunpack.c.l.bf16 %v1986
    %v2051 = vunpack.c.l.bf16 %v1987
    %v2052 = vunpack.c.l.bf16 %v1988
    %v2053 = vunpack.c.l.bf16 %v1989
    %v2054 = vunpack.c.l.bf16 %v1990
    %v2055 = vunpack.c.l.bf16 %v1991
    %v2056 = vunpack.c.l.bf16 %v1992
    %v2057 = vunpack.c.l.bf16 %v1993
    %v2058 = vunpack.c.l.bf16 %v1994
    %v2059 = vunpack.c.l.bf16 %v1995
    %v2060 = vunpack.c.l.bf16 %v1996
    %v2061 = vunpack.c.l.bf16 %v1997
    %v2062 = vunpack.c.l.bf16 %v1998
    %v2063 = vunpack.c.l.bf16 %v1999
    %v2064 = vunpack.c.l.bf16 %v2000
    %v2065 = vunpack.c.l.bf16 %v2001
    %v2066 = vunpack.c.l.bf16 %v2002
    %v2067 = vunpack.c.l.bf16 %v2003
    %v2068 = vunpack.c.l.bf16 %v2004
    %v2069 = vunpack.c.l.bf16 %v2005
    %v2070 = vunpack.c.l.bf16 %v2006
    %v2071 = vunpack.c.l.bf16 %v2007
    %v2072 = vunpack.c.l.bf16 %v2008
    %v2073 = vunpack.c.l.bf16 %v2009
    %v2074 = vunpack.c.l.bf16 %v2010
    %2075 = vmatprep.subr.mxu0 0.0
    %2076 = vmatpush1.msra.mxu0 %v2011
    %2077 = vmatprep.subr.mxu0 0.0
    %2078 = vmatpush1.msra.mxu0 %v2012
    %2079 = vmatprep.subr.mxu0 0.0
    %2080 = vmatpush1.msra.mxu0 %v2013
    %2081 = vmatprep.subr.mxu0 0.0
    %2082 = vmatpush1.msra.mxu0 %v2014
    %2083 = vmatprep.subr.mxu0 0.0
    %2084 = vmatpush1.msra.mxu0 %v2015
    %2085 = vmatprep.subr.mxu0 0.0
    %2086 = vmatpush1.msra.mxu0 %v2016
    %2087 = vmatprep.subr.mxu0 0.0
    %2088 = vmatpush1.msra.mxu0 %v2017
    %2089 = vmatprep.subr.mxu0 0.0
    %2090 = vmatpush1.msra.mxu0 %v2018
    %2091 = vmatprep.subr.mxu0 0.0
    %2092 = vmatpush1.msra.mxu0 %v2019
    %2093 = vmatprep.subr.mxu0 0.0
    %2094 = vmatpush1.msra.mxu0 %v2020
    %2095 = vmatprep.subr.mxu0 0.0
    %2096 = vmatpush1.msra.mxu0 %v2021
    %2097 = vmatprep.subr.mxu0 0.0
    %2098 = vmatpush1.msra.mxu0 %v2022
    %2099 = vmatprep.subr.mxu0 0.0
    %2100 = vmatpush1.msra.mxu0 %v2023
    %2101 = vmatprep.subr.mxu0 0.0
    %2102 = vmatpush1.msra.mxu0 %v2024
    %2103 = vmatprep.subr.mxu0 0.0
    %2104 = vmatpush1.msra.mxu0 %v2025
    %2105 = vmatprep.subr.mxu0 0.0
    %2106 = vmatpush1.msra.mxu0 %v2026
    %2107 = vmatprep.subr.mxu0 0.0
    %2108 = vmatpush1.msra.mxu0 %v2027
    %2109 = vmatprep.subr.mxu0 0.0
    %2110 = vmatpush1.msra.mxu0 %v2028
    %2111 = vmatprep.subr.mxu0 0.0
    %2112 = vmatpush1.msra.mxu0 %v2029
    %2113 = vmatprep.subr.mxu0 0.0
    %2114 = vmatpush1.msra.mxu0 %v2030
    %2115 = vmatprep.subr.mxu0 0.0
    %2116 = vmatpush1.msra.mxu0 %v2031
    %2117 = vmatprep.subr.mxu0 0.0
    %2118 = vmatpush1.msra.mxu0 %v2032
    %2119 = vmatprep.subr.mxu0 0.0
    %2120 = vmatpush1.msra.mxu0 %v2033
    %2121 = vmatprep.subr.mxu0 0.0
    %2122 = vmatpush1.msra.mxu0 %v2034
    %2123 = vmatprep.subr.mxu0 0.0
    %2124 = vmatpush1.msra.mxu0 %v2035
    %2125 = vmatprep.subr.mxu0 0.0
    %2126 = vmatpush1.msra.mxu0 %v2036
    %2127 = vmatprep.subr.mxu0 0.0
    %2128 = vmatpush1.msra.mxu0 %v2037
    %2129 = vmatprep.subr.mxu0 0.0
    %2130 = vmatpush1.msra.mxu0 %v2038
    %2131 = vmatprep.subr.mxu0 0.0
    %2132 = vmatpush1.msra.mxu0 %v2039
    %2133 = vmatprep.subr.mxu0 0.0
    %2134 = vmatpush1.msra.mxu0 %v2040
    %2135 = vmatprep.subr.mxu0 0.0
    %2136 = vmatpush1.msra.mxu0 %v2041
    %2137 = vmatprep.subr.mxu0 0.0
    %2138 = vmatpush1.msra.mxu0 %v2042
    %2139 = vmatprep.mubr.f32.mxu0 %v1802
    %2140 = vmatmul.mubr.f32.gmra.mrb[0].mxu0 %v1800
    %v2141 = vpop.f32.mrb[0].mxu0
    %v2142 = vadd.f32 0.0, %v2141
    %v2143 = vpop.f32.mrb[0].mxu0
    %2144 = vdwg.mxu0
    %2145 = vmatprep.subr.mxu0 0.0
    %2146 = vmatpush1.msra.mxu0 %v2043
    %2147 = vmatprep.subr.mxu0 0.0
    %2148 = vmatpush1.msra.mxu0 %v2044
    %2149 = vmatprep.subr.mxu0 0.0
    %2150 = vmatpush1.msra.mxu0 %v2045
    %2151 = vmatprep.subr.mxu0 0.0
    %2152 = vmatpush1.msra.mxu0 %v2046
    %2153 = vmatprep.subr.mxu0 0.0
    %2154 = vmatpush1.msra.mxu0 %v2047
    %2155 = vmatprep.subr.mxu0 0.0
    %2156 = vmatpush1.msra.mxu0 %v2048
    %2157 = vmatprep.subr.mxu0 0.0
    %2158 = vmatpush1.msra.mxu0 %v2049
    %2159 = vmatprep.subr.mxu0 0.0
    %2160 = vmatpush1.msra.mxu0 %v2050
    %2161 = vmatprep.subr.mxu0 0.0
    %2162 = vmatpush1.msra.mxu0 %v2051
    %2163 = vmatprep.subr.mxu0 0.0
    %2164 = vmatpush1.msra.mxu0 %v2052
    %2165 = vmatprep.subr.mxu0 0.0
    %2166 = vmatpush1.msra.mxu0 %v2053
    %2167 = vmatprep.subr.mxu0 0.0
    %2168 = vmatpush1.msra.mxu0 %v2054
    %2169 = vmatprep.subr.mxu0 0.0
    %2170 = vmatpush1.msra.mxu0 %v2055
    %2171 = vmatprep.subr.mxu0 0.0
    %2172 = vmatpush1.msra.mxu0 %v2056
    %2173 = vmatprep.subr.mxu0 0.0
    %2174 = vmatpush1.msra.mxu0 %v2057
    %2175 = vmatprep.subr.mxu0 0.0
    %2176 = vmatpush1.msra.mxu0 %v2058
    %2177 = vmatprep.subr.mxu0 0.0
    %2178 = vmatpush1.msra.mxu0 %v2059
    %2179 = vmatprep.subr.mxu0 0.0
    %2180 = vmatpush1.msra.mxu0 %v2060
    %2181 = vmatprep.subr.mxu0 0.0
    %2182 = vmatpush1.msra.mxu0 %v2061
    %2183 = vmatprep.subr.mxu0 0.0
    %2184 = vmatpush1.msra.mxu0 %v2062
    %2185 = vmatprep.subr.mxu0 0.0
    %2186 = vmatpush1.msra.mxu0 %v2063
    %2187 = vmatprep.subr.mxu0 0.0
    %2188 = vmatpush1.msra.mxu0 %v2064
    %2189 = vmatprep.subr.mxu0 0.0
    %2190 = vmatpush1.msra.mxu0 %v2065
    %2191 = vmatprep.subr.mxu0 0.0
    %2192 = vmatpush1.msra.mxu0 %v2066
    %2193 = vmatprep.subr.mxu0 0.0
    %2194 = vmatpush1.msra.mxu0 %v2067
    %2195 = vmatprep.subr.mxu0 0.0
    %2196 = vmatpush1.msra.mxu0 %v2068
    %2197 = vmatprep.subr.mxu0 0.0
    %2198 = vmatpush1.msra.mxu0 %v2069
    %2199 = vmatprep.subr.mxu0 0.0
    %2200 = vmatpush1.msra.mxu0 %v2070
    %2201 = vmatprep.subr.mxu0 0.0
    %2202 = vmatpush1.msra.mxu0 %v2071
    %2203 = vmatprep.subr.mxu0 0.0
    %2204 = vmatpush1.msra.mxu0 %v2072
    %2205 = vmatprep.subr.mxu0 0.0
    %2206 = vmatpush1.msra.mxu0 %v2073
    %2207 = vmatprep.subr.mxu0 0.0
    %2208 = vmatpush1.msra.mxu0 %v2074
    %2209 = vmatprep.mubr.f32.mxu0 %v1944
    %2210 = vmatmul.mubr.f32.gmra.mrb[0].mxu0 %v1942
    %v2211 = vpop.f32.mrb[0].mxu0
    %v2212 = vadd.f32 %v2142, %v2211
    %v2213 = vpop.f32.mrb[0].mxu0
    %2214 = vdwg.mxu0
    %v2215 = vadd.f32 %v1946, %v2212
    %v2216 = vld [vmem:[#allocation2 + $0x3] ss:$0 sm:$0xff]
    %v2217 = vadd.f32 %v2215, %v2216
    %v2218 = vld [vmem:[#allocation7] sm:$0xf]
    %v2219 = vld [vmem:[#allocation7 + $0x1c] sm:$0xf]
    %v2220 = vld [vmem:[#allocation7 + $0x38] sm:$0xf]
    %v2221 = vld [vmem:[#allocation7 + $0x54] sm:$0xf]
    %v2222 = vld [vmem:[#allocation7 + $0x70] sm:$0xf]
    %v2223 = vld [vmem:[#allocation7 + $0x8c] sm:$0xf]
    %v2224 = vld [vmem:[#allocation7 + $0xa8] sm:$0xf]
    %v2225 = vld [vmem:[#allocation7 + $0xc4] sm:$0xf]
    %v2226 = vld [vmem:[#allocation7 + $0xe0] sm:$0xf]
    %v2227 = vld [vmem:[#allocation7 + $0xfc] sm:$0xf]
    %v2228 = vld [vmem:[#allocation7 + $0x118] sm:$0xf]
    %v2229 = vld [vmem:[#allocation7 + $0x134] sm:$0xf]
    %v2230 = vld [vmem:[#allocation7 + $0x150] sm:$0xf]
    %v2231 = vld [vmem:[#allocation7 + $0x16c] sm:$0xf]
    %v2232 = vld [vmem:[#allocation7 + $0x188] sm:$0xf]
    %v2233 = vld [vmem:[#allocation7 + $0x1a4] sm:$0xf]
    %v2234 = vunpack.c.l.bf16 %v2218
    %v2235 = vunpack.c.l.bf16 %v2219
    %v2236 = vunpack.c.l.bf16 %v2220
    %v2237 = vunpack.c.l.bf16 %v2221
    %v2238 = vunpack.c.l.bf16 %v2222
    %v2239 = vunpack.c.l.bf16 %v2223
    %v2240 = vunpack.c.l.bf16 %v2224
    %v2241 = vunpack.c.l.bf16 %v2225
    %v2242 = vunpack.c.l.bf16 %v2226
    %v2243 = vunpack.c.l.bf16 %v2227
    %v2244 = vunpack.c.l.bf16 %v2228
    %v2245 = vunpack.c.l.bf16 %v2229
    %v2246 = vunpack.c.l.bf16 %v2230
    %v2247 = vunpack.c.l.bf16 %v2231
    %v2248 = vunpack.c.l.bf16 %v2232
    %v2249 = vunpack.c.l.bf16 %v2233
    %v2250 = vld [vmem:[#allocation2 + $0x21] ss:$0 sm:$0xff]
    %2251 = vmatprep.subr.mxu0 0.0
    %2252 = vmatpush1.msra.mxu0 %v2234
    %2253 = vmatprep.subr.mxu0 0.0
    %2254 = vmatpush1.msra.mxu0 %v2235
    %2255 = vmatprep.subr.mxu0 0.0
    %2256 = vmatpush1.msra.mxu0 %v2236
    %2257 = vmatprep.subr.mxu0 0.0
    %2258 = vmatpush1.msra.mxu0 %v2237
    %2259 = vmatprep.subr.mxu0 0.0
    %2260 = vmatpush1.msra.mxu0 %v2238
    %2261 = vmatprep.subr.mxu0 0.0
    %2262 = vmatpush1.msra.mxu0 %v2239
    %2263 = vmatprep.subr.mxu0 0.0
    %2264 = vmatpush1.msra.mxu0 %v2240
    %2265 = vmatprep.subr.mxu0 0.0
    %2266 = vmatpush1.msra.mxu0 %v2241
    %2267 = vmatprep.subr.mxu0 0.0
    %2268 = vmatpush1.msra.mxu0 %v2242
    %2269 = vmatprep.subr.mxu0 0.0
    %2270 = vmatpush1.msra.mxu0 %v2243
    %2271 = vmatprep.subr.mxu0 0.0
    %2272 = vmatpush1.msra.mxu0 %v2244
    %2273 = vmatprep.subr.mxu0 0.0
    %2274 = vmatpush1.msra.mxu0 %v2245
    %2275 = vmatprep.subr.mxu0 0.0
    %2276 = vmatpush1.msra.mxu0 %v2246
    %2277 = vmatprep.subr.mxu0 0.0
    %2278 = vmatpush1.msra.mxu0 %v2247
    %2279 = vmatprep.subr.mxu0 0.0
    %2280 = vmatpush1.msra.mxu0 %v2248
    %2281 = vmatprep.subr.mxu0 0.0
    %2282 = vmatpush1.msra.mxu0 %v2249
    %2283 = vmatprep.subr.mxu0 0.0
    %2284 = vmatpush1.msra.mxu0 0.0
    %2285 = vmatprep.subr.mxu0 0.0
    %2286 = vmatpush1.msra.mxu0 0.0
    %2287 = vmatprep.subr.mxu0 0.0
    %2288 = vmatpush1.msra.mxu0 0.0
    %2289 = vmatprep.subr.mxu0 0.0
    %2290 = vmatpush1.msra.mxu0 0.0
    %2291 = vmatprep.subr.mxu0 0.0
    %2292 = vmatpush1.msra.mxu0 0.0
    %2293 = vmatprep.subr.mxu0 0.0
    %2294 = vmatpush1.msra.mxu0 0.0
    %2295 = vmatprep.subr.mxu0 0.0
    %2296 = vmatpush1.msra.mxu0 0.0
    %2297 = vmatprep.subr.mxu0 0.0
    %2298 = vmatpush1.msra.mxu0 0.0
    %2299 = vmatprep.subr.mxu0 0.0
    %2300 = vmatpush1.msra.mxu0 0.0
    %2301 = vmatprep.subr.mxu0 0.0
    %2302 = vmatpush1.msra.mxu0 0.0
    %2303 = vmatprep.subr.mxu0 0.0
    %2304 = vmatpush1.msra.mxu0 0.0
    %2305 = vmatprep.subr.mxu0 0.0
    %2306 = vmatpush1.msra.mxu0 0.0
    %2307 = vmatprep.subr.mxu0 0.0
    %2308 = vmatpush1.msra.mxu0 0.0
    %2309 = vmatprep.subr.mxu0 0.0
    %2310 = vmatpush1.msra.mxu0 0.0
    %2311 = vmatprep.subr.mxu0 0.0
    %2312 = vmatpush1.msra.mxu0 0.0
    %2313 = vmatprep.subr.mxu0 0.0
    %2314 = vmatpush1.msra.mxu0 0.0
    %2315 = vmatprep.mubr.f32.mxu0 0.0
    %2316 = vmatmul.mubr.f32.gmra.mrb[0].mxu0 %v2217
    %v2317 = vpop.f32.mrb[0].mxu0
    %v2318 = vadd.f32 %v2250, %v2317
    %v2319 = vpop.f32.mrb[0].mxu0
    %2320 = vdwg.mxu0
    %v2321 = vsub.f32 0.0, %v2318
    %v2322 = vmul.f32 %v2321, 1.442695
    %v2323 = vpow.pop %v2322
    %v2324 = vadd.f32 %v2323, 1.0
    %v2325 = vrcp.pop %v2324
    %v2326 = vmul.f32 1.0, %v2325
    %v2327 = vmul.f32 %v2318, %v2326
    %v2328 = vld [vmem:[#allocation2 + $0x22] ss:$0 sm:$0xff]
    %v2329 = vld [vmem:[#allocation2 + $0x23] ss:$0 sm:$0xff]
    %2330 = vadd.xlane.f32.xlu0 %v2327
    %v2331 = vpop.xlane.xlu0 %2330
    %v2332 = vrcp.pop 128.0
    %v2333 = vmul.f32 %v2331, %v2332
    %v2334 = vsub.f32 %v2327, %v2333
    %v2335 = vmul.f32 %v2334, %v2334
    %2336 = vadd.xlane.f32.xlu0 %v2335
    %v2337 = vpop.xlane.xlu0 %2336
    %v2338 = vmul.f32 %v2337, %v2332
    %v2339 = vadd.f32 %v2338, 1e-05
    %v2340 = vrsqrt.pop %v2339
    %v2341 = vmul.f32 %v2334, %v2340
    %v2342 = vmul.f32 %v2341, %v2328
    %v2343 = vadd.f32 %v2342, %v2329
    %v2344 = vld [vmem:[#allocation4 + $0x14] sm:$0xf]
    %v2345 = vld [vmem:[#allocation4 + $0x44] sm:$0xf]
    %v2346 = vld [vmem:[#allocation4 + $0x74] sm:$0xf]
    %v2347 = vld [vmem:[#allocation4 + $0xa4] sm:$0xf]
    %v2348 = vld [vmem:[#allocation4 + $0xd4] sm:$0xf]
    %v2349 = vld [vmem:[#allocation4 + $0x104] sm:$0xf]
    %v2350 = vld [vmem:[#allocation4 + $0x134] sm:$0xf]
    %v2351 = vld [vmem:[#allocation4 + $0x164] sm:$0xf]
    %v2352 = vld [vmem:[#allocation4 + $0x194] sm:$0xf]
    %v2353 = vld [vmem:[#allocation4 + $0x1c4] sm:$0xf]
    %v2354 = vld [vmem:[#allocation4 + $0x1f4] sm:$0xf]
    %v2355 = vld [vmem:[#allocation4 + $0x224] sm:$0xf]
    %v2356 = vld [vmem:[#allocation4 + $0x254] sm:$0xf]
    %v2357 = vld [vmem:[#allocation4 + $0x284] sm:$0xf]
    %v2358 = vld [vmem:[#allocation4 + $0x2b4] sm:$0xf]
    %v2359 = vld [vmem:[#allocation4 + $0x2e4] sm:$0xf]
    %v2360 = vld [vmem:[#allocation4 + $0x314] sm:$0xf]
    %v2361 = vld [vmem:[#allocation4 + $0x344] sm:$0xf]
    %v2362 = vld [vmem:[#allocation4 + $0x374] sm:$0xf]
    %v2363 = vld [vmem:[#allocation4 + $0x3a4] sm:$0xf]
    %v2364 = vld [vmem:[#allocation4 + $0x3d4] sm:$0xf]
    %v2365 = vld [vmem:[#allocation4 + $0x404] sm:$0xf]
    %v2366 = vld [vmem:[#allocation4 + $0x434] sm:$0xf]
    %v2367 = vld [vmem:[#allocation4 + $0x464] sm:$0xf]
    %v2368 = vld [vmem:[#allocation4 + $0x494] sm:$0xf]
    %v2369 = vld [vmem:[#allocation4 + $0x4c4] sm:$0xf]
    %v2370 = vld [vmem:[#allocation4 + $0x4f4] sm:$0xf]
    %v2371 = vld [vmem:[#allocation4 + $0x524] sm:$0xf]
    %v2372 = vld [vmem:[#allocation4 + $0x554] sm:$0xf]
    %v2373 = vld [vmem:[#allocation4 + $0x584] sm:$0xf]
    %v2374 = vld [vmem:[#allocation4 + $0x5b4] sm:$0xf]
    %v2375 = vld [vmem:[#allocation4 + $0x5e4] sm:$0xf]
    %v2376 = vld [vmem:[#allocation4 + $0x614] sm:$0xf]
    %v2377 = vld [vmem:[#allocation4 + $0x644] sm:$0xf]
    %v2378 = vld [vmem:[#allocation4 + $0x674] sm:$0xf]
    %v2379 = vld [vmem:[#allocation4 + $0x6a4] sm:$0xf]
    %v2380 = vld [vmem:[#allocation4 + $0x6d4] sm:$0xf]
    %v2381 = vld [vmem:[#allocation4 + $0x704] sm:$0xf]
    %v2382 = vld [vmem:[#allocation4 + $0x734] sm:$0xf]
    %v2383 = vld [vmem:[#allocation4 + $0x764] sm:$0xf]
    %v2384 = vld [vmem:[#allocation4 + $0x794] sm:$0xf]
    %v2385 = vld [vmem:[#allocation4 + $0x7c4] sm:$0xf]
    %v2386 = vld [vmem:[#allocation4 + $0x7f4] sm:$0xf]
    %v2387 = vld [vmem:[#allocation4 + $0x824] sm:$0xf]
    %v2388 = vld [vmem:[#allocation4 + $0x854] sm:$0xf]
    %v2389 = vld [vmem:[#allocation4 + $0x884] sm:$0xf]
    %v2390 = vld [vmem:[#allocation4 + $0x8b4] sm:$0xf]
    %v2391 = vld [vmem:[#allocation4 + $0x8e4] sm:$0xf]
    %v2392 = vld [vmem:[#allocation4 + $0x914] sm:$0xf]
    %v2393 = vld [vmem:[#allocation4 + $0x944] sm:$0xf]
    %v2394 = vld [vmem:[#allocation4 + $0x974] sm:$0xf]
    %v2395 = vld [vmem:[#allocation4 + $0x9a4] sm:$0xf]
    %v2396 = vld [vmem:[#allocation4 + $0x9d4] sm:$0xf]
    %v2397 = vld [vmem:[#allocation4 + $0xa04] sm:$0xf]
    %v2398 = vld [vmem:[#allocation4 + $0xa34] sm:$0xf]
    %v2399 = vld [vmem:[#allocation4 + $0xa64] sm:$0xf]
    %v2400 = vld [vmem:[#allocation4 + $0xa94] sm:$0xf]
    %v2401 = vld [vmem:[#allocation4 + $0xac4] sm:$0xf]
    %v2402 = vld [vmem:[#allocation4 + $0xaf4] sm:$0xf]
    %v2403 = vld [vmem:[#allocation4 + $0xb24] sm:$0xf]
    %v2404 = vld [vmem:[#allocation4 + $0xb54] sm:$0xf]
    %v2405 = vld [vmem:[#allocation4 + $0xb84] sm:$0xf]
    %v2406 = vld [vmem:[#allocation4 + $0xbb4] sm:$0xf]
    %v2407 = vld [vmem:[#allocation4 + $0xbe4] sm:$0xf]
    %v2408 = vunpack.c.l.bf16 %v2344
    %v2409 = vunpack.c.l.bf16 %v2345
    %v2410 = vunpack.c.l.bf16 %v2346
    %v2411 = vunpack.c.l.bf16 %v2347
    %v2412 = vunpack.c.l.bf16 %v2348
    %v2413 = vunpack.c.l.bf16 %v2349
    %v2414 = vunpack.c.l.bf16 %v2350
    %v2415 = vunpack.c.l.bf16 %v2351
    %v2416 = vunpack.c.l.bf16 %v2352
    %v2417 = vunpack.c.l.bf16 %v2353
    %v2418 = vunpack.c.l.bf16 %v2354
    %v2419 = vunpack.c.l.bf16 %v2355
    %v2420 = vunpack.c.l.bf16 %v2356
    %v2421 = vunpack.c.l.bf16 %v2357
    %v2422 = vunpack.c.l.bf16 %v2358
    %v2423 = vunpack.c.l.bf16 %v2359
    %v2424 = vunpack.c.l.bf16 %v2360
    %v2425 = vunpack.c.l.bf16 %v2361
    %v2426 = vunpack.c.l.bf16 %v2362
    %v2427 = vunpack.c.l.bf16 %v2363
    %v2428 = vunpack.c.l.bf16 %v2364
    %v2429 = vunpack.c.l.bf16 %v2365
    %v2430 = vunpack.c.l.bf16 %v2366
    %v2431 = vunpack.c.l.bf16 %v2367
    %v2432 = vunpack.c.l.bf16 %v2368
    %v2433 = vunpack.c.l.bf16 %v2369
    %v2434 = vunpack.c.l.bf16 %v2370
    %v2435 = vunpack.c.l.bf16 %v2371
    %v2436 = vunpack.c.l.bf16 %v2372
    %v2437 = vunpack.c.l.bf16 %v2373
    %v2438 = vunpack.c.l.bf16 %v2374
    %v2439 = vunpack.c.l.bf16 %v2375
    %v2440 = vunpack.c.l.bf16 %v2376
    %v2441 = vunpack.c.l.bf16 %v2377
    %v2442 = vunpack.c.l.bf16 %v2378
    %v2443 = vunpack.c.l.bf16 %v2379
    %v2444 = vunpack.c.l.bf16 %v2380
    %v2445 = vunpack.c.l.bf16 %v2381
    %v2446 = vunpack.c.l.bf16 %v2382
    %v2447 = vunpack.c.l.bf16 %v2383
    %v2448 = vunpack.c.l.bf16 %v2384
    %v2449 = vunpack.c.l.bf16 %v2385
    %v2450 = vunpack.c.l.bf16 %v2386
    %v2451 = vunpack.c.l.bf16 %v2387
    %v2452 = vunpack.c.l.bf16 %v2388
    %v2453 = vunpack.c.l.bf16 %v2389
    %v2454 = vunpack.c.l.bf16 %v2390
    %v2455 = vunpack.c.l.bf16 %v2391
    %v2456 = vunpack.c.l.bf16 %v2392
    %v2457 = vunpack.c.l.bf16 %v2393
    %v2458 = vunpack.c.l.bf16 %v2394
    %v2459 = vunpack.c.l.bf16 %v2395
    %v2460 = vunpack.c.l.bf16 %v2396
    %v2461 = vunpack.c.l.bf16 %v2397
    %v2462 = vunpack.c.l.bf16 %v2398
    %v2463 = vunpack.c.l.bf16 %v2399
    %v2464 = vunpack.c.l.bf16 %v2400
    %v2465 = vunpack.c.l.bf16 %v2401
    %v2466 = vunpack.c.l.bf16 %v2402
    %v2467 = vunpack.c.l.bf16 %v2403
    %v2468 = vunpack.c.l.bf16 %v2404
    %v2469 = vunpack.c.l.bf16 %v2405
    %v2470 = vunpack.c.l.bf16 %v2406
    %v2471 = vunpack.c.l.bf16 %v2407
    %2472 = vmatprep.subr.mxu0 0.0
    %2473 = vmatpush1.msra.mxu0 %v2408
    %2474 = vmatprep.subr.mxu0 0.0
    %2475 = vmatpush1.msra.mxu0 %v2409
    %2476 = vmatprep.subr.mxu0 0.0
    %2477 = vmatpush1.msra.mxu0 %v2410
    %2478 = vmatprep.subr.mxu0 0.0
    %2479 = vmatpush1.msra.mxu0 %v2411
    %2480 = vmatprep.subr.mxu0 0.0
    %2481 = vmatpush1.msra.mxu0 %v2412
    %2482 = vmatprep.subr.mxu0 0.0
    %2483 = vmatpush1.msra.mxu0 %v2413
    %2484 = vmatprep.subr.mxu0 0.0
    %2485 = vmatpush1.msra.mxu0 %v2414
    %2486 = vmatprep.subr.mxu0 0.0
    %2487 = vmatpush1.msra.mxu0 %v2415
    %2488 = vmatprep.subr.mxu0 0.0
    %2489 = vmatpush1.msra.mxu0 %v2416
    %2490 = vmatprep.subr.mxu0 0.0
    %2491 = vmatpush1.msra.mxu0 %v2417
    %2492 = vmatprep.subr.mxu0 0.0
    %2493 = vmatpush1.msra.mxu0 %v2418
    %2494 = vmatprep.subr.mxu0 0.0
    %2495 = vmatpush1.msra.mxu0 %v2419
    %2496 = vmatprep.subr.mxu0 0.0
    %2497 = vmatpush1.msra.mxu0 %v2420
    %2498 = vmatprep.subr.mxu0 0.0
    %2499 = vmatpush1.msra.mxu0 %v2421
    %2500 = vmatprep.subr.mxu0 0.0
    %2501 = vmatpush1.msra.mxu0 %v2422
    %2502 = vmatprep.subr.mxu0 0.0
    %2503 = vmatpush1.msra.mxu0 %v2423
    %2504 = vmatprep.subr.mxu0 0.0
    %2505 = vmatpush1.msra.mxu0 %v2424
    %2506 = vmatprep.subr.mxu0 0.0
    %2507 = vmatpush1.msra.mxu0 %v2425
    %2508 = vmatprep.subr.mxu0 0.0
    %2509 = vmatpush1.msra.mxu0 %v2426
    %2510 = vmatprep.subr.mxu0 0.0
    %2511 = vmatpush1.msra.mxu0 %v2427
    %2512 = vmatprep.subr.mxu0 0.0
    %2513 = vmatpush1.msra.mxu0 %v2428
    %2514 = vmatprep.subr.mxu0 0.0
    %2515 = vmatpush1.msra.mxu0 %v2429
    %2516 = vmatprep.subr.mxu0 0.0
    %2517 = vmatpush1.msra.mxu0 %v2430
    %2518 = vmatprep.subr.mxu0 0.0
    %2519 = vmatpush1.msra.mxu0 %v2431
    %2520 = vmatprep.subr.mxu0 0.0
    %2521 = vmatpush1.msra.mxu0 %v2432
    %2522 = vmatprep.subr.mxu0 0.0
    %2523 = vmatpush1.msra.mxu0 %v2433
    %2524 = vmatprep.subr.mxu0 0.0
    %2525 = vmatpush1.msra.mxu0 %v2434
    %2526 = vmatprep.subr.mxu0 0.0
    %2527 = vmatpush1.msra.mxu0 %v2435
    %2528 = vmatprep.subr.mxu0 0.0
    %2529 = vmatpush1.msra.mxu0 %v2436
    %2530 = vmatprep.subr.mxu0 0.0
    %2531 = vmatpush1.msra.mxu0 %v2437
    %2532 = vmatprep.subr.mxu0 0.0
    %2533 = vmatpush1.msra.mxu0 %v2438
    %2534 = vmatprep.subr.mxu0 0.0
    %2535 = vmatpush1.msra.mxu0 %v2439
    %2536 = vmatprep.mubr.f32.mxu0 %v1802
    %2537 = vmatmul.mubr.f32.gmra.mrb[0].mxu0 %v1800
    %v2538 = vpop.f32.mrb[0].mxu0
    %v2539 = vadd.f32 0.0, %v2538
    %v2540 = vpop.f32.mrb[0].mxu0
    %2541 = vdwg.mxu0
    %2542 = vmatprep.subr.mxu0 0.0
    %2543 = vmatpush1.msra.mxu0 %v2440
    %2544 = vmatprep.subr.mxu0 0.0
    %2545 = vmatpush1.msra.mxu0 %v2441
    %2546 = vmatprep.subr.mxu0 0.0
    %2547 = vmatpush1.msra.mxu0 %v2442
    %2548 = vmatprep.subr.mxu0 0.0
    %2549 = vmatpush1.msra.mxu0 %v2443
    %2550 = vmatprep.subr.mxu0 0.0
    %2551 = vmatpush1.msra.mxu0 %v2444
    %2552 = vmatprep.subr.mxu0 0.0
    %2553 = vmatpush1.msra.mxu0 %v2445
    %2554 = vmatprep.subr.mxu0 0.0
    %2555 = vmatpush1.msra.mxu0 %v2446
    %2556 = vmatprep.subr.mxu0 0.0
    %2557 = vmatpush1.msra.mxu0 %v2447
    %2558 = vmatprep.subr.mxu0 0.0
    %2559 = vmatpush1.msra.mxu0 %v2448
    %2560 = vmatprep.subr.mxu0 0.0
    %2561 = vmatpush1.msra.mxu0 %v2449
    %2562 = vmatprep.subr.mxu0 0.0
    %2563 = vmatpush1.msra.mxu0 %v2450
    %2564 = vmatprep.subr.mxu0 0.0
    %2565 = vmatpush1.msra.mxu0 %v2451
    %2566 = vmatprep.subr.mxu0 0.0
    %2567 = vmatpush1.msra.mxu0 %v2452
    %2568 = vmatprep.subr.mxu0 0.0
    %2569 = vmatpush1.msra.mxu0 %v2453
    %2570 = vmatprep.subr.mxu0 0.0
    %2571 = vmatpush1.msra.mxu0 %v2454
    %2572 = vmatprep.subr.mxu0 0.0
    %2573 = vmatpush1.msra.mxu0 %v2455
    %2574 = vmatprep.subr.mxu0 0.0
    %2575 = vmatpush1.msra.mxu0 %v2456
    %2576 = vmatprep.subr.mxu0 0.0
    %2577 = vmatpush1.msra.mxu0 %v2457
    %2578 = vmatprep.subr.mxu0 0.0
    %2579 = vmatpush1.msra.mxu0 %v2458
    %2580 = vmatprep.subr.mxu0 0.0
    %2581 = vmatpush1.msra.mxu0 %v2459
    %2582 = vmatprep.subr.mxu0 0.0
    %2583 = vmatpush1.msra.mxu0 %v2460
    %2584 = vmatprep.subr.mxu0 0.0
    %2585 = vmatpush1.msra.mxu0 %v2461
    %2586 = vmatprep.subr.mxu0 0.0
    %2587 = vmatpush1.msra.mxu0 %v2462
    %2588 = vmatprep.subr.mxu0 0.0
    %2589 = vmatpush1.msra.mxu0 %v2463
    %2590 = vmatprep.subr.mxu0 0.0
    %2591 = vmatpush1.msra.mxu0 %v2464
    %2592 = vmatprep.subr.mxu0 0.0
    %2593 = vmatpush1.msra.mxu0 %v2465
    %2594 = vmatprep.subr.mxu0 0.0
    %2595 = vmatpush1.msra.mxu0 %v2466
    %2596 = vmatprep.subr.mxu0 0.0
    %2597 = vmatpush1.msra.mxu0 %v2467
    %2598 = vmatprep.subr.mxu0 0.0
    %2599 = vmatpush1.msra.mxu0 %v2468
    %2600 = vmatprep.subr.mxu0 0.0
    %2601 = vmatpush1.msra.mxu0 %v2469
    %2602 = vmatprep.subr.mxu0 0.0
    %2603 = vmatpush1.msra.mxu0 %v2470
    %2604 = vmatprep.subr.mxu0 0.0
    %2605 = vmatpush1.msra.mxu0 %v2471
    %2606 = vmatprep.mubr.f32.mxu0 %v1944
    %2607 = vmatmul.mubr.f32.gmra.mrb[0].mxu0 %v1942
    %v2608 = vpop.f32.mrb[0].mxu0
    %v2609 = vadd.f32 %v2539, %v2608
    %v2610 = vpop.f32.mrb[0].mxu0
    %2611 = vdwg.mxu0
    %v2612 = vadd.f32 %v2343, %v2609
    %v2613 = vld [vmem:[#allocation2 + $0x4] ss:$0 sm:$0xff]
    %v2614 = vadd.f32 %v2612, %v2613
    %v2615 = vld [vmem:[#allocation7 + $0x4] sm:$0xff]
    %v2616 = vld [vmem:[#allocation7 + $0x20] sm:$0xff]
    %v2617 = vld [vmem:[#allocation7 + $0x3c] sm:$0xff]
    %v2618 = vld [vmem:[#allocation7 + $0x58] sm:$0xff]
    %v2619 = vld [vmem:[#allocation7 + $0x74] sm:$0xff]
    %v2620 = vld [vmem:[#allocation7 + $0x90] sm:$0xff]
    %v2621 = vld [vmem:[#allocation7 + $0xac] sm:$0xff]
    %v2622 = vld [vmem:[#allocation7 + $0xc8] sm:$0xff]
    %v2623 = vld [vmem:[#allocation7 + $0xe4] sm:$0xff]
    %v2624 = vld [vmem:[#allocation7 + $0x100] sm:$0xff]
    %v2625 = vld [vmem:[#allocation7 + $0x11c] sm:$0xff]
    %v2626 = vld [vmem:[#allocation7 + $0x138] sm:$0xff]
    %v2627 = vld [vmem:[#allocation7 + $0x154] sm:$0xff]
    %v2628 = vld [vmem:[#allocation7 + $0x170] sm:$0xff]
    %v2629 = vld [vmem:[#allocation7 + $0x18c] sm:$0xff]
    %v2630 = vld [vmem:[#allocation7 + $0x1a8] sm:$0xff]
    %v2631 = vunpack.c.l.bf16 %v2615
    %v2632 = vunpack.c.h.bf16 %v2615
    %v2633 = vunpack.c.l.bf16 %v2616
    %v2634 = vunpack.c.h.bf16 %v2616
    %v2635 = vunpack.c.l.bf16 %v2617
    %v2636 = vunpack.c.h.bf16 %v2617
    %v2637 = vunpack.c.l.bf16 %v2618
    %v2638 = vunpack.c.h.bf16 %v2618
    %v2639 = vunpack.c.l.bf16 %v2619
    %v2640 = vunpack.c.h.bf16 %v2619
    %v2641 = vunpack.c.l.bf16 %v2620
    %v2642 = vunpack.c.h.bf16 %v2620
    %v2643 = vunpack.c.l.bf16 %v2621
    %v2644 = vunpack.c.h.bf16 %v2621
    %v2645 = vunpack.c.l.bf16 %v2622
    %v2646 = vunpack.c.h.bf16 %v2622
    %v2647 = vunpack.c.l.bf16 %v2623
    %v2648 = vunpack.c.h.bf16 %v2623
    %v2649 = vunpack.c.l.bf16 %v2624
    %v2650 = vunpack.c.h.bf16 %v2624
    %v2651 = vunpack.c.l.bf16 %v2625
    %v2652 = vunpack.c.h.bf16 %v2625
    %v2653 = vunpack.c.l.bf16 %v2626
    %v2654 = vunpack.c.h.bf16 %v2626
    %v2655 = vunpack.c.l.bf16 %v2627
    %v2656 = vunpack.c.h.bf16 %v2627
    %v2657 = vunpack.c.l.bf16 %v2628
    %v2658 = vunpack.c.h.bf16 %v2628
    %v2659 = vunpack.c.l.bf16 %v2629
    %v2660 = vunpack.c.h.bf16 %v2629
    %v2661 = vunpack.c.l.bf16 %v2630
    %v2662 = vunpack.c.h.bf16 %v2630
    %s2663 = scalar_lea.vmem [#allocation2], 36
    %v2664 = vld [vmem:[%s2663] ss:$8 sm:$0x3]
    %v2666 = vlaneseq
    %v2667 = vshrl.u32 %v2666, 7
    %v2668 = vsub.s32 0, %v2667
    %v2669 = vrot.slane %v2664, %v2668
    %v2670 = vlaneseq
    %v2671 = vshrl.u32 %v2670, 7
    %v2672 = vsub.s32 1, %v2671
    %v2673 = vrot.slane %v2664, %v2672
    %2676 = vmatprep.subr.mxu0 %v2632
    %2677 = vmatpush1.msra.mxu0 %v2631
    %2678 = vmatprep.subr.mxu0 %v2634
    %2679 = vmatpush1.msra.mxu0 %v2633
    %2680 = vmatprep.subr.mxu0 %v2636
    %2681 = vmatpush1.msra.mxu0 %v2635
    %2682 = vmatprep.subr.mxu0 %v2638
    %2683 = vmatpush1.msra.mxu0 %v2637
    %2684 = vmatprep.subr.mxu0 %v2640
    %2685 = vmatpush1.msra.mxu0 %v2639
    %2686 = vmatprep.subr.mxu0 %v2642
    %2687 = vmatpush1.msra.mxu0 %v2641
    %2688 = vmatprep.subr.mxu0 %v2644
    %2689 = vmatpush1.msra.mxu0 %v2643
    %2690 = vmatprep.subr.mxu0 %v2646
    %2691 = vmatpush1.msra.mxu0 %v2645
    %2692 = vmatprep.subr.mxu0 %v2648
    %2693 = vmatpush1.msra.mxu0 %v2647
    %2694 = vmatprep.subr.mxu0 %v2650
    %2695 = vmatpush1.msra.mxu0 %v2649
    %2696 = vmatprep.subr.mxu0 %v2652
    %2697 = vmatpush1.msra.mxu0 %v2651
    %2698 = vmatprep.subr.mxu0 %v2654
    %2699 = vmatpush1.msra.mxu0 %v2653
    %2700 = vmatprep.subr.mxu0 %v2656
    %2701 = vmatpush1.msra.mxu0 %v2655
    %2702 = vmatprep.subr.mxu0 %v2658
    %2703 = vmatpush1.msra.mxu0 %v2657
    %2704 = vmatprep.subr.mxu0 %v2660
    %2705 = vmatpush1.msra.mxu0 %v2659
    %2706 = vmatprep.subr.mxu0 %v2662
    %2707 = vmatpush1.msra.mxu0 %v2661
    %2708 = vmatprep.subr.mxu0 0.0
    %2709 = vmatpush1.msra.mxu0 0.0
    %2710 = vmatprep.subr.mxu0 0.0
    %2711 = vmatpush1.msra.mxu0 0.0
    %2712 = vmatprep.subr.mxu0 0.0
    %2713 = vmatpush1.msra.mxu0 0.0
    %2714 = vmatprep.subr.mxu0 0.0
    %2715 = vmatpush1.msra.mxu0 0.0
    %2716 = vmatprep.subr.mxu0 0.0
    %2717 = vmatpush1.msra.mxu0 0.0
    %2718 = vmatprep.subr.mxu0 0.0
    %2719 = vmatpush1.msra.mxu0 0.0
    %2720 = vmatprep.subr.mxu0 0.0
    %2721 = vmatpush1.msra.mxu0 0.0
    %2722 = vmatprep.subr.mxu0 0.0
    %2723 = vmatpush1.msra.mxu0 0.0
    %2724 = vmatprep.subr.mxu0 0.0
    %2725 = vmatpush1.msra.mxu0 0.0
    %2726 = vmatprep.subr.mxu0 0.0
    %2727 = vmatpush1.msra.mxu0 0.0
    %2728 = vmatprep.subr.mxu0 0.0
    %2729 = vmatpush1.msra.mxu0 0.0
    %2730 = vmatprep.subr.mxu0 0.0
    %2731 = vmatpush1.msra.mxu0 0.0
    %2732 = vmatprep.subr.mxu0 0.0
    %2733 = vmatpush1.msra.mxu0 0.0
    %2734 = vmatprep.subr.mxu0 0.0
    %2735 = vmatpush1.msra.mxu0 0.0
    %2736 = vmatprep.subr.mxu0 0.0
    %2737 = vmatpush1.msra.mxu0 0.0
    %2738 = vmatprep.subr.mxu0 0.0
    %2739 = vmatpush1.msra.mxu0 0.0
    %2740 = vmatprep.mubr.f32.mxu0 0.0
    %2741 = vmatmul.mubr.f32.gmra.mrb[0].mxu0 %v2614
    %v2742 = vpop.f32.mrb[0].mxu0
    %v2743 = vadd.f32 %v2669, %v2742
    %v2744 = vpop.f32.mrb[0].mxu0
    %v2745 = vadd.f32 %v2673, %v2744
    %2746 = vdwg.mxu0
    %v2747 = vsub.f32 0.0, %v2743
    %v2748 = vsub.f32 0.0, %v2745
    %v2749 = vmul.f32 %v2747, 1.442695
    %v2750 = vpow.pop %v2749
    %v2751 = vmul.f32 %v2748, 1.442695
    %v2752 = vpow.pop %v2751
    %v2753 = vadd.f32 %v2750, 1.0
    %v2754 = vadd.f32 %v2752, 1.0
    %v2755 = vrcp.pop %v2753
    %v2756 = vmul.f32 1.0, %v2755
    %v2757 = vrcp.pop %v2754
    %v2758 = vmul.f32 1.0, %v2757
    %v2759 = vmul.f32 %v2743, %v2756
    %v2760 = vmul.f32 %v2745, %v2758
    %s2761 = scalar_lea.vmem [#allocation2], 37
    %v2762 = vld [vmem:[%s2761] ss:$8 sm:$0x3]
    %s2763 = scalar_lea.vmem [#allocation2], 38
    %v2764 = vld [vmem:[%s2763] ss:$8 sm:$0x3]
    %v2765 = vadd.f32 %v2759, %v2760
    %2766 = vadd.xlane.f32.xlu0 %v2765
    %v2767 = vpop.xlane.xlu0 %2766
    %v2768 = vrcp.pop 256.0
    %v2769 = vmul.f32 %v2767, %v2768
    %v2770 = vsub.f32 %v2759, %v2769
    %v2771 = vsub.f32 %v2760, %v2769
    %v2772 = vmul.f32 %v2770, %v2770
    %v2773 = vmul.f32 %v2771, %v2771
    %v2774 = vadd.f32 %v2772, %v2773
    %2775 = vadd.xlane.f32.xlu0 %v2774
    %v2776 = vpop.xlane.xlu0 %2775
    %v2777 = vmul.f32 %v2776, %v2768
    %v2778 = vadd.f32 %v2777, 1e-05
    %v2779 = vrsqrt.pop %v2778
    %v2780 = vmul.f32 %v2770, %v2779
    %v2781 = vmul.f32 %v2771, %v2779
    %v2783 = vlaneseq
    %v2784 = vshrl.u32 %v2783, 7
    %v2785 = vsub.s32 0, %v2784
    %v2786 = vrot.slane %v2762, %v2785
    %v2787 = vlaneseq
    %v2788 = vshrl.u32 %v2787, 7
    %v2789 = vsub.s32 1, %v2788
    %v2790 = vrot.slane %v2762, %v2789
    %v2793 = vmul.f32 %v2780, %v2786
    %v2794 = vmul.f32 %v2781, %v2790
    %v2796 = vlaneseq
    %v2797 = vshrl.u32 %v2796, 7
    %v2798 = vsub.s32 0, %v2797
    %v2799 = vrot.slane %v2764, %v2798
    %v2800 = vlaneseq
    %v2801 = vshrl.u32 %v2800, 7
    %v2802 = vsub.s32 1, %v2801
    %v2803 = vrot.slane %v2764, %v2802
    %v2806 = vadd.f32 %v2793, %v2799
    %v2807 = vadd.f32 %v2794, %v2803
    %v2808 = vld [vmem:[#allocation4 + $0x18] sm:$0xff]
    %v2809 = vld [vmem:[#allocation4 + $0x48] sm:$0xff]
    %v2810 = vld [vmem:[#allocation4 + $0x78] sm:$0xff]
    %v2811 = vld [vmem:[#allocation4 + $0xa8] sm:$0xff]
    %v2812 = vld [vmem:[#allocation4 + $0xd8] sm:$0xff]
    %v2813 = vld [vmem:[#allocation4 + $0x108] sm:$0xff]
    %v2814 = vld [vmem:[#allocation4 + $0x138] sm:$0xff]
    %v2815 = vld [vmem:[#allocation4 + $0x168] sm:$0xff]
    %v2816 = vld [vmem:[#allocation4 + $0x198] sm:$0xff]
    %v2817 = vld [vmem:[#allocation4 + $0x1c8] sm:$0xff]
    %v2818 = vld [vmem:[#allocation4 + $0x1f8] sm:$0xff]
    %v2819 = vld [vmem:[#allocation4 + $0x228] sm:$0xff]
    %v2820 = vld [vmem:[#allocation4 + $0x258] sm:$0xff]
    %v2821 = vld [vmem:[#allocation4 + $0x288] sm:$0xff]
    %v2822 = vld [vmem:[#allocation4 + $0x2b8] sm:$0xff]
    %v2823 = vld [vmem:[#allocation4 + $0x2e8] sm:$0xff]
    %v2824 = vld [vmem:[#allocation4 + $0x318] sm:$0xff]
    %v2825 = vld [vmem:[#allocation4 + $0x348] sm:$0xff]
    %v2826 = vld [vmem:[#allocation4 + $0x378] sm:$0xff]
    %v2827 = vld [vmem:[#allocation4 + $0x3a8] sm:$0xff]
    %v2828 = vld [vmem:[#allocation4 + $0x3d8] sm:$0xff]
    %v2829 = vld [vmem:[#allocation4 + $0x408] sm:$0xff]
    %v2830 = vld [vmem:[#allocation4 + $0x438] sm:$0xff]
    %v2831 = vld [vmem:[#allocation4 + $0x468] sm:$0xff]
    %v2832 = vld [vmem:[#allocation4 + $0x498] sm:$0xff]
    %v2833 = vld [vmem:[#allocation4 + $0x4c8] sm:$0xff]
    %v2834 = vld [vmem:[#allocation4 + $0x4f8] sm:$0xff]
    %v2835 = vld [vmem:[#allocation4 + $0x528] sm:$0xff]
    %v2836 = vld [vmem:[#allocation4 + $0x558] sm:$0xff]
    %v2837 = vld [vmem:[#allocation4 + $0x588] sm:$0xff]
    %v2838 = vld [vmem:[#allocation4 + $0x5b8] sm:$0xff]
    %v2839 = vld [vmem:[#allocation4 + $0x5e8] sm:$0xff]
    %v2840 = vld [vmem:[#allocation4 + $0x618] sm:$0xff]
    %v2841 = vld [vmem:[#allocation4 + $0x648] sm:$0xff]
    %v2842 = vld [vmem:[#allocation4 + $0x678] sm:$0xff]
    %v2843 = vld [vmem:[#allocation4 + $0x6a8] sm:$0xff]
    %v2844 = vld [vmem:[#allocation4 + $0x6d8] sm:$0xff]
    %v2845 = vld [vmem:[#allocation4 + $0x708] sm:$0xff]
    %v2846 = vld [vmem:[#allocation4 + $0x738] sm:$0xff]
    %v2847 = vld [vmem:[#allocation4 + $0x768] sm:$0xff]
    %v2848 = vld [vmem:[#allocation4 + $0x798] sm:$0xff]
    %v2849 = vld [vmem:[#allocation4 + $0x7c8] sm:$0xff]
    %v2850 = vld [vmem:[#allocation4 + $0x7f8] sm:$0xff]
    %v2851 = vld [vmem:[#allocation4 + $0x828] sm:$0xff]
    %v2852 = vld [vmem:[#allocation4 + $0x858] sm:$0xff]
    %v2853 = vld [vmem:[#allocation4 + $0x888] sm:$0xff]
    %v2854 = vld [vmem:[#allocation4 + $0x8b8] sm:$0xff]
    %v2855 = vld [vmem:[#allocation4 + $0x8e8] sm:$0xff]
    %v2856 = vld [vmem:[#allocation4 + $0x918] sm:$0xff]
    %v2857 = vld [vmem:[#allocation4 + $0x948] sm:$0xff]
    %v2858 = vld [vmem:[#allocation4 + $0x978] sm:$0xff]
    %v2859 = vld [vmem:[#allocation4 + $0x9a8] sm:$0xff]
    %v2860 = vld [vmem:[#allocation4 + $0x9d8] sm:$0xff]
    %v2861 = vld [vmem:[#allocation4 + $0xa08] sm:$0xff]
    %v2862 = vld [vmem:[#allocation4 + $0xa38] sm:$0xff]
    %v2863 = vld [vmem:[#allocation4 + $0xa68] sm:$0xff]
    %v2864 = vld [vmem:[#allocation4 + $0xa98] sm:$0xff]
    %v2865 = vld [vmem:[#allocation4 + $0xac8] sm:$0xff]
    %v2866 = vld [vmem:[#allocation4 + $0xaf8] sm:$0xff]
    %v2867 = vld [vmem:[#allocation4 + $0xb28] sm:$0xff]
    %v2868 = vld [vmem:[#allocation4 + $0xb58] sm:$0xff]
    %v2869 = vld [vmem:[#allocation4 + $0xb88] sm:$0xff]
    %v2870 = vld [vmem:[#allocation4 + $0xbb8] sm:$0xff]
    %v2871 = vld [vmem:[#allocation4 + $0xbe8] sm:$0xff]
    %v2872 = vunpack.c.l.bf16 %v2808
    %v2873 = vunpack.c.h.bf16 %v2808
    %v2874 = vunpack.c.l.bf16 %v2809
    %v2875 = vunpack.c.h.bf16 %v2809
    %v2876 = vunpack.c.l.bf16 %v2810
    %v2877 = vunpack.c.h.bf16 %v2810
    %v2878 = vunpack.c.l.bf16 %v2811
    %v2879 = vunpack.c.h.bf16 %v2811
    %v2880 = vunpack.c.l.bf16 %v2812
    %v2881 = vunpack.c.h.bf16 %v2812
    %v2882 = vunpack.c.l.bf16 %v2813
    %v2883 = vunpack.c.h.bf16 %v2813
    %v2884 = vunpack.c.l.bf16 %v2814
    %v2885 = vunpack.c.h.bf16 %v2814
    %v2886 = vunpack.c.l.bf16 %v2815
    %v2887 = vunpack.c.h.bf16 %v2815
    %v2888 = vunpack.c.l.bf16 %v2816
    %v2889 = vunpack.c.h.bf16 %v2816
    %v2890 = vunpack.c.l.bf16 %v2817
    %v2891 = vunpack.c.h.bf16 %v2817
    %v2892 = vunpack.c.l.bf16 %v2818
    %v2893 = vunpack.c.h.bf16 %v2818
    %v2894 = vunpack.c.l.bf16 %v2819
    %v2895 = vunpack.c.h.bf16 %v2819
    %v2896 = vunpack.c.l.bf16 %v2820
    %v2897 = vunpack.c.h.bf16 %v2820
    %v2898 = vunpack.c.l.bf16 %v2821
    %v2899 = vunpack.c.h.bf16 %v2821
    %v2900 = vunpack.c.l.bf16 %v2822
    %v2901 = vunpack.c.h.bf16 %v2822
    %v2902 = vunpack.c.l.bf16 %v2823
    %v2903 = vunpack.c.h.bf16 %v2823
    %v2904 = vunpack.c.l.bf16 %v2824
    %v2905 = vunpack.c.h.bf16 %v2824
    %v2906 = vunpack.c.l.bf16 %v2825
    %v2907 = vunpack.c.h.bf16 %v2825
    %v2908 = vunpack.c.l.bf16 %v2826
    %v2909 = vunpack.c.h.bf16 %v2826
    %v2910 = vunpack.c.l.bf16 %v2827
    %v2911 = vunpack.c.h.bf16 %v2827
    %v2912 = vunpack.c.l.bf16 %v2828
    %v2913 = vunpack.c.h.bf16 %v2828
    %v2914 = vunpack.c.l.bf16 %v2829
    %v2915 = vunpack.c.h.bf16 %v2829
    %v2916 = vunpack.c.l.bf16 %v2830
    %v2917 = vunpack.c.h.bf16 %v2830
    %v2918 = vunpack.c.l.bf16 %v2831
    %v2919 = vunpack.c.h.bf16 %v2831
    %v2920 = vunpack.c.l.bf16 %v2832
    %v2921 = vunpack.c.h.bf16 %v2832
    %v2922 = vunpack.c.l.bf16 %v2833
    %v2923 = vunpack.c.h.bf16 %v2833
    %v2924 = vunpack.c.l.bf16 %v2834
    %v2925 = vunpack.c.h.bf16 %v2834
    %v2926 = vunpack.c.l.bf16 %v2835
    %v2927 = vunpack.c.h.bf16 %v2835
    %v2928 = vunpack.c.l.bf16 %v2836
    %v2929 = vunpack.c.h.bf16 %v2836
    %v2930 = vunpack.c.l.bf16 %v2837
    %v2931 = vunpack.c.h.bf16 %v2837
    %v2932 = vunpack.c.l.bf16 %v2838
    %v2933 = vunpack.c.h.bf16 %v2838
    %v2934 = vunpack.c.l.bf16 %v2839
    %v2935 = vunpack.c.h.bf16 %v2839
    %v2936 = vunpack.c.l.bf16 %v2840
    %v2937 = vunpack.c.h.bf16 %v2840
    %v2938 = vunpack.c.l.bf16 %v2841
    %v2939 = vunpack.c.h.bf16 %v2841
    %v2940 = vunpack.c.l.bf16 %v2842
    %v2941 = vunpack.c.h.bf16 %v2842
    %v2942 = vunpack.c.l.bf16 %v2843
    %v2943 = vunpack.c.h.bf16 %v2843
    %v2944 = vunpack.c.l.bf16 %v2844
    %v2945 = vunpack.c.h.bf16 %v2844
    %v2946 = vunpack.c.l.bf16 %v2845
    %v2947 = vunpack.c.h.bf16 %v2845
    %v2948 = vunpack.c.l.bf16 %v2846
    %v2949 = vunpack.c.h.bf16 %v2846
    %v2950 = vunpack.c.l.bf16 %v2847
    %v2951 = vunpack.c.h.bf16 %v2847
    %v2952 = vunpack.c.l.bf16 %v2848
    %v2953 = vunpack.c.h.bf16 %v2848
    %v2954 = vunpack.c.l.bf16 %v2849
    %v2955 = vunpack.c.h.bf16 %v2849
    %v2956 = vunpack.c.l.bf16 %v2850
    %v2957 = vunpack.c.h.bf16 %v2850
    %v2958 = vunpack.c.l.bf16 %v2851
    %v2959 = vunpack.c.h.bf16 %v2851
    %v2960 = vunpack.c.l.bf16 %v2852
    %v2961 = vunpack.c.h.bf16 %v2852
    %v2962 = vunpack.c.l.bf16 %v2853
    %v2963 = vunpack.c.h.bf16 %v2853
    %v2964 = vunpack.c.l.bf16 %v2854
    %v2965 = vunpack.c.h.bf16 %v2854
    %v2966 = vunpack.c.l.bf16 %v2855
    %v2967 = vunpack.c.h.bf16 %v2855
    %v2968 = vunpack.c.l.bf16 %v2856
    %v2969 = vunpack.c.h.bf16 %v2856
    %v2970 = vunpack.c.l.bf16 %v2857
    %v2971 = vunpack.c.h.bf16 %v2857
    %v2972 = vunpack.c.l.bf16 %v2858
    %v2973 = vunpack.c.h.bf16 %v2858
    %v2974 = vunpack.c.l.bf16 %v2859
    %v2975 = vunpack.c.h.bf16 %v2859
    %v2976 = vunpack.c.l.bf16 %v2860
    %v2977 = vunpack.c.h.bf16 %v2860
    %v2978 = vunpack.c.l.bf16 %v2861
    %v2979 = vunpack.c.h.bf16 %v2861
    %v2980 = vunpack.c.l.bf16 %v2862
    %v2981 = vunpack.c.h.bf16 %v2862
    %v2982 = vunpack.c.l.bf16 %v2863
    %v2983 = vunpack.c.h.bf16 %v2863
    %v2984 = vunpack.c.l.bf16 %v2864
    %v2985 = vunpack.c.h.bf16 %v2864
    %v2986 = vunpack.c.l.bf16 %v2865
    %v2987 = vunpack.c.h.bf16 %v2865
    %v2988 = vunpack.c.l.bf16 %v2866
    %v2989 = vunpack.c.h.bf16 %v2866
    %v2990 = vunpack.c.l.bf16 %v2867
    %v2991 = vunpack.c.h.bf16 %v2867
    %v2992 = vunpack.c.l.bf16 %v2868
    %v2993 = vunpack.c.h.bf16 %v2868
    %v2994 = vunpack.c.l.bf16 %v2869
    %v2995 = vunpack.c.h.bf16 %v2869
    %v2996 = vunpack.c.l.bf16 %v2870
    %v2997 = vunpack.c.h.bf16 %v2870
    %v2998 = vunpack.c.l.bf16 %v2871
    %v2999 = vunpack.c.h.bf16 %v2871
    %3000 = vmatprep.subr.mxu0 %v2873
    %3001 = vmatpush1.msra.mxu0 %v2872
    %3002 = vmatprep.subr.mxu0 %v2875
    %3003 = vmatpush1.msra.mxu0 %v2874
    %3004 = vmatprep.subr.mxu0 %v2877
    %3005 = vmatpush1.msra.mxu0 %v2876
    %3006 = vmatprep.subr.mxu0 %v2879
    %3007 = vmatpush1.msra.mxu0 %v2878
    %3008 = vmatprep.subr.mxu0 %v2881
    %3009 = vmatpush1.msra.mxu0 %v2880
    %3010 = vmatprep.subr.mxu0 %v2883
    %3011 = vmatpush1.msra.mxu0 %v2882
    %3012 = vmatprep.subr.mxu0 %v2885
    %3013 = vmatpush1.msra.mxu0 %v2884
    %3014 = vmatprep.subr.mxu0 %v2887
    %3015 = vmatpush1.msra.mxu0 %v2886
    %3016 = vmatprep.subr.mxu0 %v2889
    %3017 = vmatpush1.msra.mxu0 %v2888
    %3018 = vmatprep.subr.mxu0 %v2891
    %3019 = vmatpush1.msra.mxu0 %v2890
    %3020 = vmatprep.subr.mxu0 %v2893
    %3021 = vmatpush1.msra.mxu0 %v2892
    %3022 = vmatprep.subr.mxu0 %v2895
    %3023 = vmatpush1.msra.mxu0 %v2894
    %3024 = vmatprep.subr.mxu0 %v2897
    %3025 = vmatpush1.msra.mxu0 %v2896
    %3026 = vmatprep.subr.mxu0 %v2899
    %3027 = vmatpush1.msra.mxu0 %v2898
    %3028 = vmatprep.subr.mxu0 %v2901
    %3029 = vmatpush1.msra.mxu0 %v2900
    %3030 = vmatprep.subr.mxu0 %v2903
    %3031 = vmatpush1.msra.mxu0 %v2902
    %3032 = vmatprep.subr.mxu0 %v2905
    %3033 = vmatpush1.msra.mxu0 %v2904
    %3034 = vmatprep.subr.mxu0 %v2907
    %3035 = vmatpush1.msra.mxu0 %v2906
    %3036 = vmatprep.subr.mxu0 %v2909
    %3037 = vmatpush1.msra.mxu0 %v2908
    %3038 = vmatprep.subr.mxu0 %v2911
    %3039 = vmatpush1.msra.mxu0 %v2910
    %3040 = vmatprep.subr.mxu0 %v2913
    %3041 = vmatpush1.msra.mxu0 %v2912
    %3042 = vmatprep.subr.mxu0 %v2915
    %3043 = vmatpush1.msra.mxu0 %v2914
    %3044 = vmatprep.subr.mxu0 %v2917
    %3045 = vmatpush1.msra.mxu0 %v2916
    %3046 = vmatprep.subr.mxu0 %v2919
    %3047 = vmatpush1.msra.mxu0 %v2918
    %3048 = vmatprep.subr.mxu0 %v2921
    %3049 = vmatpush1.msra.mxu0 %v2920
    %3050 = vmatprep.subr.mxu0 %v2923
    %3051 = vmatpush1.msra.mxu0 %v2922
    %3052 = vmatprep.subr.mxu0 %v2925
    %3053 = vmatpush1.msra.mxu0 %v2924
    %3054 = vmatprep.subr.mxu0 %v2927
    %3055 = vmatpush1.msra.mxu0 %v2926
    %3056 = vmatprep.subr.mxu0 %v2929
    %3057 = vmatpush1.msra.mxu0 %v2928
    %3058 = vmatprep.subr.mxu0 %v2931
    %3059 = vmatpush1.msra.mxu0 %v2930
    %3060 = vmatprep.subr.mxu0 %v2933
    %3061 = vmatpush1.msra.mxu0 %v2932
    %3062 = vmatprep.subr.mxu0 %v2935
    %3063 = vmatpush1.msra.mxu0 %v2934
    %3064 = vmatprep.mubr.f32.mxu0 %v1802
    %3065 = vmatmul.mubr.f32.gmra.mrb[0].mxu0 %v1800
    %v3066 = vpop.f32.mrb[0].mxu0
    %v3067 = vadd.f32 0.0, %v3066
    %v3068 = vpop.f32.mrb[0].mxu0
    %v3069 = vadd.f32 0.0, %v3068
    %3070 = vdwg.mxu0
    %3071 = vmatprep.subr.mxu0 %v2937
    %3072 = vmatpush1.msra.mxu0 %v2936
    %3073 = vmatprep.subr.mxu0 %v2939
    %3074 = vmatpush1.msra.mxu0 %v2938
    %3075 = vmatprep.subr.mxu0 %v2941
    %3076 = vmatpush1.msra.mxu0 %v2940
    %3077 = vmatprep.subr.mxu0 %v2943
    %3078 = vmatpush1.msra.mxu0 %v2942
    %3079 = vmatprep.subr.mxu0 %v2945
    %3080 = vmatpush1.msra.mxu0 %v2944
    %3081 = vmatprep.subr.mxu0 %v2947
    %3082 = vmatpush1.msra.mxu0 %v2946
    %3083 = vmatprep.subr.mxu0 %v2949
    %3084 = vmatpush1.msra.mxu0 %v2948
    %3085 = vmatprep.subr.mxu0 %v2951
    %3086 = vmatpush1.msra.mxu0 %v2950
    %3087 = vmatprep.subr.mxu0 %v2953
    %3088 = vmatpush1.msra.mxu0 %v2952
    %3089 = vmatprep.subr.mxu0 %v2955
    %3090 = vmatpush1.msra.mxu0 %v2954
    %3091 = vmatprep.subr.mxu0 %v2957
    %3092 = vmatpush1.msra.mxu0 %v2956
    %3093 = vmatprep.subr.mxu0 %v2959
    %3094 = vmatpush1.msra.mxu0 %v2958
    %3095 = vmatprep.subr.mxu0 %v2961
    %3096 = vmatpush1.msra.mxu0 %v2960
    %3097 = vmatprep.subr.mxu0 %v2963
    %3098 = vmatpush1.msra.mxu0 %v2962
    %3099 = vmatprep.subr.mxu0 %v2965
    %3100 = vmatpush1.msra.mxu0 %v2964
    %3101 = vmatprep.subr.mxu0 %v2967
    %3102 = vmatpush1.msra.mxu0 %v2966
    %3103 = vmatprep.subr.mxu0 %v2969
    %3104 = vmatpush1.msra.mxu0 %v2968
    %3105 = vmatprep.subr.mxu0 %v2971
    %3106 = vmatpush1.msra.mxu0 %v2970
    %3107 = vmatprep.subr.mxu0 %v2973
    %3108 = vmatpush1.msra.mxu0 %v2972
    %3109 = vmatprep.subr.mxu0 %v2975
    %3110 = vmatpush1.msra.mxu0 %v2974
    %3111 = vmatprep.subr.mxu0 %v2977
    %3112 = vmatpush1.msra.mxu0 %v2976
    %3113 = vmatprep.subr.mxu0 %v2979
    %3114 = vmatpush1.msra.mxu0 %v2978
    %3115 = vmatprep.subr.mxu0 %v2981
    %3116 = vmatpush1.msra.mxu0 %v2980
    %3117 = vmatprep.subr.mxu0 %v2983
    %3118 = vmatpush1.msra.mxu0 %v2982
    %3119 = vmatprep.subr.mxu0 %v2985
    %3120 = vmatpush1.msra.mxu0 %v2984
    %3121 = vmatprep.subr.mxu0 %v2987
    %3122 = vmatpush1.msra.mxu0 %v2986
    %3123 = vmatprep.subr.mxu0 %v2989
    %3124 = vmatpush1.msra.mxu0 %v2988
    %3125 = vmatprep.subr.mxu0 %v2991
    %3126 = vmatpush1.msra.mxu0 %v2990
    %3127 = vmatprep.subr.mxu0 %v2993
    %3128 = vmatpush1.msra.mxu0 %v2992
    %3129 = vmatprep.subr.mxu0 %v2995
    %3130 = vmatpush1.msra.mxu0 %v2994
    %3131 = vmatprep.subr.mxu0 %v2997
    %3132 = vmatpush1.msra.mxu0 %v2996
    %3133 = vmatprep.subr.mxu0 %v2999
    %3134 = vmatpush1.msra.mxu0 %v2998
    %3135 = vmatprep.mubr.f32.mxu0 %v1944
    %3136 = vmatmul.mubr.f32.gmra.mrb[0].mxu0 %v1942
    %v3137 = vpop.f32.mrb[0].mxu0
    %v3138 = vadd.f32 %v3067, %v3137
    %v3139 = vpop.f32.mrb[0].mxu0
    %v3140 = vadd.f32 %v3069, %v3139
    %3141 = vdwg.mxu0
    %v3142 = vadd.f32 %v2806, %v3138
    %v3143 = vadd.f32 %v2807, %v3140
    %s3144 = scalar_lea.vmem [#allocation2], 5
    %v3145 = vld [vmem:[%s3144] ss:$8 sm:$0x3]
    %v3147 = vlaneseq
    %v3148 = vshrl.u32 %v3147, 7
    %v3149 = vsub.s32 0, %v3148
    %v3150 = vrot.slane %v3145, %v3149
    %v3151 = vlaneseq
    %v3152 = vshrl.u32 %v3151, 7
    %v3153 = vsub.s32 1, %v3152
    %v3154 = vrot.slane %v3145, %v3153
    %v3157 = vadd.f32 %v3142, %v3150
    %v3158 = vadd.f32 %v3143, %v3154
    %v3159 = vld [vmem:[#allocation6 + $0x20] sm:$0xff]
    %v3160 = vld [vmem:[#allocation6 + $0x5c] sm:$0xff]
    %v3161 = vld [vmem:[#allocation6 + $0x98] sm:$0xff]
    %v3162 = vld [vmem:[#allocation6 + $0xd4] sm:$0xff]
    %v3163 = vld [vmem:[#allocation6 + $0x110] sm:$0xff]
    %v3164 = vld [vmem:[#allocation6 + $0x14c] sm:$0xff]
    %v3165 = vld [vmem:[#allocation6 + $0x188] sm:$0xff]
    %v3166 = vld [vmem:[#allocation6 + $0x1c4] sm:$0xff]
    %v3167 = vld [vmem:[#allocation6 + $0x200] sm:$0xff]
    %v3168 = vld [vmem:[#allocation6 + $0x23c] sm:$0xff]
    %v3169 = vld [vmem:[#allocation6 + $0x278] sm:$0xff]
    %v3170 = vld [vmem:[#allocation6 + $0x2b4] sm:$0xff]
    %v3171 = vld [vmem:[#allocation6 + $0x2f0] sm:$0xff]
    %v3172 = vld [vmem:[#allocation6 + $0x32c] sm:$0xff]
    %v3173 = vld [vmem:[#allocation6 + $0x368] sm:$0xff]
    %v3174 = vld [vmem:[#allocation6 + $0x3a4] sm:$0xff]
    %v3175 = vld [vmem:[#allocation6 + $0x3e0] sm:$0xff]
    %v3176 = vld [vmem:[#allocation6 + $0x41c] sm:$0xff]
    %v3177 = vld [vmem:[#allocation6 + $0x458] sm:$0xff]
    %v3178 = vld [vmem:[#allocation6 + $0x494] sm:$0xff]
    %v3179 = vld [vmem:[#allocation6 + $0x4d0] sm:$0xff]
    %v3180 = vld [vmem:[#allocation6 + $0x50c] sm:$0xff]
    %v3181 = vld [vmem:[#allocation6 + $0x548] sm:$0xff]
    %v3182 = vld [vmem:[#allocation6 + $0x584] sm:$0xff]
    %v3183 = vld [vmem:[#allocation6 + $0x5c0] sm:$0xff]
    %v3184 = vld [vmem:[#allocation6 + $0x5fc] sm:$0xff]
    %v3185 = vld [vmem:[#allocation6 + $0x638] sm:$0xff]
    %v3186 = vld [vmem:[#allocation6 + $0x674] sm:$0xff]
    %v3187 = vld [vmem:[#allocation6 + $0x6b0] sm:$0xff]
    %v3188 = vld [vmem:[#allocation6 + $0x6ec] sm:$0xff]
    %v3189 = vld [vmem:[#allocation6 + $0x728] sm:$0xff]
    %v3190 = vld [vmem:[#allocation6 + $0x764] sm:$0xff]
    %v3191 = vunpack.c.l.bf16 %v3159
    %v3192 = vunpack.c.h.bf16 %v3159
    %v3193 = vunpack.c.l.bf16 %v3160
    %v3194 = vunpack.c.h.bf16 %v3160
    %v3195 = vunpack.c.l.bf16 %v3161
    %v3196 = vunpack.c.h.bf16 %v3161
    %v3197 = vunpack.c.l.bf16 %v3162
    %v3198 = vunpack.c.h.bf16 %v3162
    %v3199 = vunpack.c.l.bf16 %v3163
    %v3200 = vunpack.c.h.bf16 %v3163
    %v3201 = vunpack.c.l.bf16 %v3164
    %v3202 = vunpack.c.h.bf16 %v3164
    %v3203 = vunpack.c.l.bf16 %v3165
    %v3204 = vunpack.c.h.bf16 %v3165
    %v3205 = vunpack.c.l.bf16 %v3166
    %v3206 = vunpack.c.h.bf16 %v3166
    %v3207 = vunpack.c.l.bf16 %v3167
    %v3208 = vunpack.c.h.bf16 %v3167
    %v3209 = vunpack.c.l.bf16 %v3168
    %v3210 = vunpack.c.h.bf16 %v3168
    %v3211 = vunpack.c.l.bf16 %v3169
    %v3212 = vunpack.c.h.bf16 %v3169
    %v3213 = vunpack.c.l.bf16 %v3170
    %v3214 = vunpack.c.h.bf16 %v3170
    %v3215 = vunpack.c.l.bf16 %v3171
    %v3216 = vunpack.c.h.bf16 %v3171
    %v3217 = vunpack.c.l.bf16 %v3172
    %v3218 = vunpack.c.h.bf16 %v3172
    %v3219 = vunpack.c.l.bf16 %v3173
    %v3220 = vunpack.c.h.bf16 %v3173
    %v3221 = vunpack.c.l.bf16 %v3174
    %v3222 = vunpack.c.h.bf16 %v3174
    %v3223 = vunpack.c.l.bf16 %v3175
    %v3224 = vunpack.c.h.bf16 %v3175
    %v3225 = vunpack.c.l.bf16 %v3176
    %v3226 = vunpack.c.h.bf16 %v3176
    %v3227 = vunpack.c.l.bf16 %v3177
    %v3228 = vunpack.c.h.bf16 %v3177
    %v3229 = vunpack.c.l.bf16 %v3178
    %v3230 = vunpack.c.h.bf16 %v3178
    %v3231 = vunpack.c.l.bf16 %v3179
    %v3232 = vunpack.c.h.bf16 %v3179
    %v3233 = vunpack.c.l.bf16 %v3180
    %v3234 = vunpack.c.h.bf16 %v3180
    %v3235 = vunpack.c.l.bf16 %v3181
    %v3236 = vunpack.c.h.bf16 %v3181
    %v3237 = vunpack.c.l.bf16 %v3182
    %v3238 = vunpack.c.h.bf16 %v3182
    %v3239 = vunpack.c.l.bf16 %v3183
    %v3240 = vunpack.c.h.bf16 %v3183
    %v3241 = vunpack.c.l.bf16 %v3184
    %v3242 = vunpack.c.h.bf16 %v3184
    %v3243 = vunpack.c.l.bf16 %v3185
    %v3244 = vunpack.c.h.bf16 %v3185
    %v3245 = vunpack.c.l.bf16 %v3186
    %v3246 = vunpack.c.h.bf16 %v3186
    %v3247 = vunpack.c.l.bf16 %v3187
    %v3248 = vunpack.c.h.bf16 %v3187
    %v3249 = vunpack.c.l.bf16 %v3188
    %v3250 = vunpack.c.h.bf16 %v3188
    %v3251 = vunpack.c.l.bf16 %v3189
    %v3252 = vunpack.c.h.bf16 %v3189
    %v3253 = vunpack.c.l.bf16 %v3190
    %v3254 = vunpack.c.h.bf16 %v3190
    %s3255 = scalar_lea.vmem [#allocation2], 39
    %v3256 = vld [vmem:[%s3255] ss:$8 sm:$0x3]
    %v3258 = vlaneseq
    %v3259 = vshrl.u32 %v3258, 7
    %v3260 = vsub.s32 0, %v3259
    %v3261 = vrot.slane %v3256, %v3260
    %v3262 = vlaneseq
    %v3263 = vshrl.u32 %v3262, 7
    %v3264 = vsub.s32 1, %v3263
    %v3265 = vrot.slane %v3256, %v3264
    %3268 = vmatprep.subr.mxu0 %v3192
    %3269 = vmatpush1.msra.mxu0 %v3191
    %3270 = vmatprep.subr.mxu0 %v3194
    %3271 = vmatpush1.msra.mxu0 %v3193
    %3272 = vmatprep.subr.mxu0 %v3196
    %3273 = vmatpush1.msra.mxu0 %v3195
    %3274 = vmatprep.subr.mxu0 %v3198
    %3275 = vmatpush1.msra.mxu0 %v3197
    %3276 = vmatprep.subr.mxu0 %v3200
    %3277 = vmatpush1.msra.mxu0 %v3199
    %3278 = vmatprep.subr.mxu0 %v3202
    %3279 = vmatpush1.msra.mxu0 %v3201
    %3280 = vmatprep.subr.mxu0 %v3204
    %3281 = vmatpush1.msra.mxu0 %v3203
    %3282 = vmatprep.subr.mxu0 %v3206
    %3283 = vmatpush1.msra.mxu0 %v3205
    %3284 = vmatprep.subr.mxu0 %v3208
    %3285 = vmatpush1.msra.mxu0 %v3207
    %3286 = vmatprep.subr.mxu0 %v3210
    %3287 = vmatpush1.msra.mxu0 %v3209
    %3288 = vmatprep.subr.mxu0 %v3212
    %3289 = vmatpush1.msra.mxu0 %v3211
    %3290 = vmatprep.subr.mxu0 %v3214
    %3291 = vmatpush1.msra.mxu0 %v3213
    %3292 = vmatprep.subr.mxu0 %v3216
    %3293 = vmatpush1.msra.mxu0 %v3215
    %3294 = vmatprep.subr.mxu0 %v3218
    %3295 = vmatpush1.msra.mxu0 %v3217
    %3296 = vmatprep.subr.mxu0 %v3220
    %3297 = vmatpush1.msra.mxu0 %v3219
    %3298 = vmatprep.subr.mxu0 %v3222
    %3299 = vmatpush1.msra.mxu0 %v3221
    %3300 = vmatprep.subr.mxu0 %v3224
    %3301 = vmatpush1.msra.mxu0 %v3223
    %3302 = vmatprep.subr.mxu0 %v3226
    %3303 = vmatpush1.msra.mxu0 %v3225
    %3304 = vmatprep.subr.mxu0 %v3228
    %3305 = vmatpush1.msra.mxu0 %v3227
    %3306 = vmatprep.subr.mxu0 %v3230
    %3307 = vmatpush1.msra.mxu0 %v3229
    %3308 = vmatprep.subr.mxu0 %v3232
    %3309 = vmatpush1.msra.mxu0 %v3231
    %3310 = vmatprep.subr.mxu0 %v3234
    %3311 = vmatpush1.msra.mxu0 %v3233
    %3312 = vmatprep.subr.mxu0 %v3236
    %3313 = vmatpush1.msra.mxu0 %v3235
    %3314 = vmatprep.subr.mxu0 %v3238
    %3315 = vmatpush1.msra.mxu0 %v3237
    %3316 = vmatprep.subr.mxu0 %v3240
    %3317 = vmatpush1.msra.mxu0 %v3239
    %3318 = vmatprep.subr.mxu0 %v3242
    %3319 = vmatpush1.msra.mxu0 %v3241
    %3320 = vmatprep.subr.mxu0 %v3244
    %3321 = vmatpush1.msra.mxu0 %v3243
    %3322 = vmatprep.subr.mxu0 %v3246
    %3323 = vmatpush1.msra.mxu0 %v3245
    %3324 = vmatprep.subr.mxu0 %v3248
    %3325 = vmatpush1.msra.mxu0 %v3247
    %3326 = vmatprep.subr.mxu0 %v3250
    %3327 = vmatpush1.msra.mxu0 %v3249
    %3328 = vmatprep.subr.mxu0 %v3252
    %3329 = vmatpush1.msra.mxu0 %v3251
    %3330 = vmatprep.subr.mxu0 %v3254
    %3331 = vmatpush1.msra.mxu0 %v3253
    %3332 = vmatprep.mubr.f32.mxu0 %v3158
    %3333 = vmatmul.mubr.f32.gmra.mrb[0].mxu0 %v3157
    %v3334 = vpop.f32.mrb[0].mxu0
    %v3335 = vadd.f32 %v3261, %v3334
    %v3336 = vpop.f32.mrb[0].mxu0
    %v3337 = vadd.f32 %v3265, %v3336
    %3338 = vdwg.mxu0
    %v3339 = vsub.f32 0.0, %v3335
    %v3340 = vsub.f32 0.0, %v3337
    %v3341 = vmul.f32 %v3339, 1.442695
    %v3342 = vpow.pop %v3341
    %v3343 = vmul.f32 %v3340, 1.442695
    %v3344 = vpow.pop %v3343
    %v3345 = vadd.f32 %v3342, 1.0
    %v3346 = vadd.f32 %v3344, 1.0
    %v3347 = vrcp.pop %v3345
    %v3348 = vmul.f32 1.0, %v3347
    %v3349 = vrcp.pop %v3346
    %v3350 = vmul.f32 1.0, %v3349
    %v3351 = vmul.f32 %v3335, %v3348
    %v3352 = vmul.f32 %v3337, %v3350
    %s3353 = scalar_lea.vmem [#allocation2], 64
    %v3354 = vld [vmem:[%s3353] ss:$8 sm:$0x3]
    %s3355 = scalar_lea.vmem [#allocation2], 65
    %v3356 = vld [vmem:[%s3355] ss:$8 sm:$0x3]
    %v3357 = vadd.f32 %v3351, %v3352
    %3358 = vadd.xlane.f32.xlu0 %v3357
    %v3359 = vpop.xlane.xlu0 %3358
    %v3360 = vmul.f32 %v3359, %v2768
    %v3361 = vsub.f32 %v3351, %v3360
    %v3362 = vsub.f32 %v3352, %v3360
    %v3363 = vmul.f32 %v3361, %v3361
    %v3364 = vmul.f32 %v3362, %v3362
    %v3365 = vadd.f32 %v3363, %v3364
    %3366 = vadd.xlane.f32.xlu0 %v3365
    %v3367 = vpop.xlane.xlu0 %3366
    %v3368 = vmul.f32 %v3367, %v2768
    %v3369 = vadd.f32 %v3368, 1e-05
    %v3370 = vrsqrt.pop %v3369
    %v3371 = vmul.f32 %v3361, %v3370
    %v3372 = vmul.f32 %v3362, %v3370
    %v3374 = vlaneseq
    %v3375 = vshrl.u32 %v3374, 7
    %v3376 = vsub.s32 0, %v3375
    %v3377 = vrot.slane %v3354, %v3376
    %v3378 = vlaneseq
    %v3379 = vshrl.u32 %v3378, 7
    %v3380 = vsub.s32 1, %v3379
    %v3381 = vrot.slane %v3354, %v3380
    %v3384 = vmul.f32 %v3371, %v3377
    %v3385 = vmul.f32 %v3372, %v3381
    %v3387 = vlaneseq
    %v3388 = vshrl.u32 %v3387, 7
    %v3389 = vsub.s32 0, %v3388
    %v3390 = vrot.slane %v3356, %v3389
    %v3391 = vlaneseq
    %v3392 = vshrl.u32 %v3391, 7
    %v3393 = vsub.s32 1, %v3392
    %v3394 = vrot.slane %v3356, %v3393
    %v3397 = vadd.f32 %v3384, %v3390
    %v3398 = vadd.f32 %v3385, %v3394
    %v3399 = vld [vmem:[#allocation4 + $0x20] sm:$0xff]
    %v3400 = vld [vmem:[#allocation4 + $0x50] sm:$0xff]
    %v3401 = vld [vmem:[#allocation4 + $0x80] sm:$0xff]
    %v3402 = vld [vmem:[#allocation4 + $0xb0] sm:$0xff]
    %v3403 = vld [vmem:[#allocation4 + $0xe0] sm:$0xff]
    %v3404 = vld [vmem:[#allocation4 + $0x110] sm:$0xff]
    %v3405 = vld [vmem:[#allocation4 + $0x140] sm:$0xff]
    %v3406 = vld [vmem:[#allocation4 + $0x170] sm:$0xff]
    %v3407 = vld [vmem:[#allocation4 + $0x1a0] sm:$0xff]
    %v3408 = vld [vmem:[#allocation4 + $0x1d0] sm:$0xff]
    %v3409 = vld [vmem:[#allocation4 + $0x200] sm:$0xff]
    %v3410 = vld [vmem:[#allocation4 + $0x230] sm:$0xff]
    %v3411 = vld [vmem:[#allocation4 + $0x260] sm:$0xff]
    %v3412 = vld [vmem:[#allocation4 + $0x290] sm:$0xff]
    %v3413 = vld [vmem:[#allocation4 + $0x2c0] sm:$0xff]
    %v3414 = vld [vmem:[#allocation4 + $0x2f0] sm:$0xff]
    %v3415 = vld [vmem:[#allocation4 + $0x320] sm:$0xff]
    %v3416 = vld [vmem:[#allocation4 + $0x350] sm:$0xff]
    %v3417 = vld [vmem:[#allocation4 + $0x380] sm:$0xff]
    %v3418 = vld [vmem:[#allocation4 + $0x3b0] sm:$0xff]
    %v3419 = vld [vmem:[#allocation4 + $0x3e0] sm:$0xff]
    %v3420 = vld [vmem:[#allocation4 + $0x410] sm:$0xff]
    %v3421 = vld [vmem:[#allocation4 + $0x440] sm:$0xff]
    %v3422 = vld [vmem:[#allocation4 + $0x470] sm:$0xff]
    %v3423 = vld [vmem:[#allocation4 + $0x4a0] sm:$0xff]
    %v3424 = vld [vmem:[#allocation4 + $0x4d0] sm:$0xff]
    %v3425 = vld [vmem:[#allocation4 + $0x500] sm:$0xff]
    %v3426 = vld [vmem:[#allocation4 + $0x530] sm:$0xff]
    %v3427 = vld [vmem:[#allocation4 + $0x560] sm:$0xff]
    %v3428 = vld [vmem:[#allocation4 + $0x590] sm:$0xff]
    %v3429 = vld [vmem:[#allocation4 + $0x5c0] sm:$0xff]
    %v3430 = vld [vmem:[#allocation4 + $0x5f0] sm:$0xff]
    %v3431 = vld [vmem:[#allocation4 + $0x620] sm:$0xff]
    %v3432 = vld [vmem:[#allocation4 + $0x650] sm:$0xff]
    %v3433 = vld [vmem:[#allocation4 + $0x680] sm:$0xff]
    %v3434 = vld [vmem:[#allocation4 + $0x6b0] sm:$0xff]
    %v3435 = vld [vmem:[#allocation4 + $0x6e0] sm:$0xff]
    %v3436 = vld [vmem:[#allocation4 + $0x710] sm:$0xff]
    %v3437 = vld [vmem:[#allocation4 + $0x740] sm:$0xff]
    %v3438 = vld [vmem:[#allocation4 + $0x770] sm:$0xff]
    %v3439 = vld [vmem:[#allocation4 + $0x7a0] sm:$0xff]
    %v3440 = vld [vmem:[#allocation4 + $0x7d0] sm:$0xff]
    %v3441 = vld [vmem:[#allocation4 + $0x800] sm:$0xff]
    %v3442 = vld [vmem:[#allocation4 + $0x830] sm:$0xff]
    %v3443 = vld [vmem:[#allocation4 + $0x860] sm:$0xff]
    %v3444 = vld [vmem:[#allocation4 + $0x890] sm:$0xff]
    %v3445 = vld [vmem:[#allocation4 + $0x8c0] sm:$0xff]
    %v3446 = vld [vmem:[#allocation4 + $0x8f0] sm:$0xff]
    %v3447 = vld [vmem:[#allocation4 + $0x920] sm:$0xff]
    %v3448 = vld [vmem:[#allocation4 + $0x950] sm:$0xff]
    %v3449 = vld [vmem:[#allocation4 + $0x980] sm:$0xff]
    %v3450 = vld [vmem:[#allocation4 + $0x9b0] sm:$0xff]
    %v3451 = vld [vmem:[#allocation4 + $0x9e0] sm:$0xff]
    %v3452 = vld [vmem:[#allocation4 + $0xa10] sm:$0xff]
    %v3453 = vld [vmem:[#allocation4 + $0xa40] sm:$0xff]
    %v3454 = vld [vmem:[#allocation4 + $0xa70] sm:$0xff]
    %v3455 = vld [vmem:[#allocation4 + $0xaa0] sm:$0xff]
    %v3456 = vld [vmem:[#allocation4 + $0xad0] sm:$0xff]
    %v3457 = vld [vmem:[#allocation4 + $0xb00] sm:$0xff]
    %v3458 = vld [vmem:[#allocation4 + $0xb30] sm:$0xff]
    %v3459 = vld [vmem:[#allocation4 + $0xb60] sm:$0xff]
    %v3460 = vld [vmem:[#allocation4 + $0xb90] sm:$0xff]
    %v3461 = vld [vmem:[#allocation4 + $0xbc0] sm:$0xff]
    %v3462 = vld [vmem:[#allocation4 + $0xbf0] sm:$0xff]
    %v3463 = vunpack.c.l.bf16 %v3399
    %v3464 = vunpack.c.h.bf16 %v3399
    %v3465 = vunpack.c.l.bf16 %v3400
    %v3466 = vunpack.c.h.bf16 %v3400
    %v3467 = vunpack.c.l.bf16 %v3401
    %v3468 = vunpack.c.h.bf16 %v3401
    %v3469 = vunpack.c.l.bf16 %v3402
    %v3470 = vunpack.c.h.bf16 %v3402
    %v3471 = vunpack.c.l.bf16 %v3403
    %v3472 = vunpack.c.h.bf16 %v3403
    %v3473 = vunpack.c.l.bf16 %v3404
    %v3474 = vunpack.c.h.bf16 %v3404
    %v3475 = vunpack.c.l.bf16 %v3405
    %v3476 = vunpack.c.h.bf16 %v3405
    %v3477 = vunpack.c.l.bf16 %v3406
    %v3478 = vunpack.c.h.bf16 %v3406
    %v3479 = vunpack.c.l.bf16 %v3407
    %v3480 = vunpack.c.h.bf16 %v3407
    %v3481 = vunpack.c.l.bf16 %v3408
    %v3482 = vunpack.c.h.bf16 %v3408
    %v3483 = vunpack.c.l.bf16 %v3409
    %v3484 = vunpack.c.h.bf16 %v3409
    %v3485 = vunpack.c.l.bf16 %v3410
    %v3486 = vunpack.c.h.bf16 %v3410
    %v3487 = vunpack.c.l.bf16 %v3411
    %v3488 = vunpack.c.h.bf16 %v3411
    %v3489 = vunpack.c.l.bf16 %v3412
    %v3490 = vunpack.c.h.bf16 %v3412
    %v3491 = vunpack.c.l.bf16 %v3413
    %v3492 = vunpack.c.h.bf16 %v3413
    %v3493 = vunpack.c.l.bf16 %v3414
    %v3494 = vunpack.c.h.bf16 %v3414
    %v3495 = vunpack.c.l.bf16 %v3415
    %v3496 = vunpack.c.h.bf16 %v3415
    %v3497 = vunpack.c.l.bf16 %v3416
    %v3498 = vunpack.c.h.bf16 %v3416
    %v3499 = vunpack.c.l.bf16 %v3417
    %v3500 = vunpack.c.h.bf16 %v3417
    %v3501 = vunpack.c.l.bf16 %v3418
    %v3502 = vunpack.c.h.bf16 %v3418
    %v3503 = vunpack.c.l.bf16 %v3419
    %v3504 = vunpack.c.h.bf16 %v3419
    %v3505 = vunpack.c.l.bf16 %v3420
    %v3506 = vunpack.c.h.bf16 %v3420
    %v3507 = vunpack.c.l.bf16 %v3421
    %v3508 = vunpack.c.h.bf16 %v3421
    %v3509 = vunpack.c.l.bf16 %v3422
    %v3510 = vunpack.c.h.bf16 %v3422
    %v3511 = vunpack.c.l.bf16 %v3423
    %v3512 = vunpack.c.h.bf16 %v3423
    %v3513 = vunpack.c.l.bf16 %v3424
    %v3514 = vunpack.c.h.bf16 %v3424
    %v3515 = vunpack.c.l.bf16 %v3425
    %v3516 = vunpack.c.h.bf16 %v3425
    %v3517 = vunpack.c.l.bf16 %v3426
    %v3518 = vunpack.c.h.bf16 %v3426
    %v3519 = vunpack.c.l.bf16 %v3427
    %v3520 = vunpack.c.h.bf16 %v3427
    %v3521 = vunpack.c.l.bf16 %v3428
    %v3522 = vunpack.c.h.bf16 %v3428
    %v3523 = vunpack.c.l.bf16 %v3429
    %v3524 = vunpack.c.h.bf16 %v3429
    %v3525 = vunpack.c.l.bf16 %v3430
    %v3526 = vunpack.c.h.bf16 %v3430
    %v3527 = vunpack.c.l.bf16 %v3431
    %v3528 = vunpack.c.h.bf16 %v3431
    %v3529 = vunpack.c.l.bf16 %v3432
    %v3530 = vunpack.c.h.bf16 %v3432
    %v3531 = vunpack.c.l.bf16 %v3433
    %v3532 = vunpack.c.h.bf16 %v3433
    %v3533 = vunpack.c.l.bf16 %v3434
    %v3534 = vunpack.c.h.bf16 %v3434
    %v3535 = vunpack.c.l.bf16 %v3435
    %v3536 = vunpack.c.h.bf16 %v3435
    %v3537 = vunpack.c.l.bf16 %v3436
    %v3538 = vunpack.c.h.bf16 %v3436
    %v3539 = vunpack.c.l.bf16 %v3437
    %v3540 = vunpack.c.h.bf16 %v3437
    %v3541 = vunpack.c.l.bf16 %v3438
    %v3542 = vunpack.c.h.bf16 %v3438
    %v3543 = vunpack.c.l.bf16 %v3439
    %v3544 = vunpack.c.h.bf16 %v3439
    %v3545 = vunpack.c.l.bf16 %v3440
    %v3546 = vunpack.c.h.bf16 %v3440
    %v3547 = vunpack.c.l.bf16 %v3441
    %v3548 = vunpack.c.h.bf16 %v3441
    %v3549 = vunpack.c.l.bf16 %v3442
    %v3550 = vunpack.c.h.bf16 %v3442
    %v3551 = vunpack.c.l.bf16 %v3443
    %v3552 = vunpack.c.h.bf16 %v3443
    %v3553 = vunpack.c.l.bf16 %v3444
    %v3554 = vunpack.c.h.bf16 %v3444
    %v3555 = vunpack.c.l.bf16 %v3445
    %v3556 = vunpack.c.h.bf16 %v3445
    %v3557 = vunpack.c.l.bf16 %v3446
    %v3558 = vunpack.c.h.bf16 %v3446
    %v3559 = vunpack.c.l.bf16 %v3447
    %v3560 = vunpack.c.h.bf16 %v3447
    %v3561 = vunpack.c.l.bf16 %v3448
    %v3562 = vunpack.c.h.bf16 %v3448
    %v3563 = vunpack.c.l.bf16 %v3449
    %v3564 = vunpack.c.h.bf16 %v3449
    %v3565 = vunpack.c.l.bf16 %v3450
    %v3566 = vunpack.c.h.bf16 %v3450
    %v3567 = vunpack.c.l.bf16 %v3451
    %v3568 = vunpack.c.h.bf16 %v3451
    %v3569 = vunpack.c.l.bf16 %v3452
    %v3570 = vunpack.c.h.bf16 %v3452
    %v3571 = vunpack.c.l.bf16 %v3453
    %v3572 = vunpack.c.h.bf16 %v3453
    %v3573 = vunpack.c.l.bf16 %v3454
    %v3574 = vunpack.c.h.bf16 %v3454
    %v3575 = vunpack.c.l.bf16 %v3455
    %v3576 = vunpack.c.h.bf16 %v3455
    %v3577 = vunpack.c.l.bf16 %v3456
    %v3578 = vunpack.c.h.bf16 %v3456
    %v3579 = vunpack.c.l.bf16 %v3457
    %v3580 = vunpack.c.h.bf16 %v3457
    %v3581 = vunpack.c.l.bf16 %v3458
    %v3582 = vunpack.c.h.bf16 %v3458
    %v3583 = vunpack.c.l.bf16 %v3459
    %v3584 = vunpack.c.h.bf16 %v3459
    %v3585 = vunpack.c.l.bf16 %v3460
    %v3586 = vunpack.c.h.bf16 %v3460
    %v3587 = vunpack.c.l.bf16 %v3461
    %v3588 = vunpack.c.h.bf16 %v3461
    %v3589 = vunpack.c.l.bf16 %v3462
    %v3590 = vunpack.c.h.bf16 %v3462
    %3591 = vmatprep.subr.mxu0 %v3464
    %3592 = vmatpush1.msra.mxu0 %v3463
    %3593 = vmatprep.subr.mxu0 %v3466
    %3594 = vmatpush1.msra.mxu0 %v3465
    %3595 = vmatprep.subr.mxu0 %v3468
    %3596 = vmatpush1.msra.mxu0 %v3467
    %3597 = vmatprep.subr.mxu0 %v3470
    %3598 = vmatpush1.msra.mxu0 %v3469
    %3599 = vmatprep.subr.mxu0 %v3472
    %3600 = vmatpush1.msra.mxu0 %v3471
    %3601 = vmatprep.subr.mxu0 %v3474
    %3602 = vmatpush1.msra.mxu0 %v3473
    %3603 = vmatprep.subr.mxu0 %v3476
    %3604 = vmatpush1.msra.mxu0 %v3475
    %3605 = vmatprep.subr.mxu0 %v3478
    %3606 = vmatpush1.msra.mxu0 %v3477
    %3607 = vmatprep.subr.mxu0 %v3480
    %3608 = vmatpush1.msra.mxu0 %v3479
    %3609 = vmatprep.subr.mxu0 %v3482
    %3610 = vmatpush1.msra.mxu0 %v3481
    %3611 = vmatprep.subr.mxu0 %v3484
    %3612 = vmatpush1.msra.mxu0 %v3483
    %3613 = vmatprep.subr.mxu0 %v3486
    %3614 = vmatpush1.msra.mxu0 %v3485
    %3615 = vmatprep.subr.mxu0 %v3488
    %3616 = vmatpush1.msra.mxu0 %v3487
    %3617 = vmatprep.subr.mxu0 %v3490
    %3618 = vmatpush1.msra.mxu0 %v3489
    %3619 = vmatprep.subr.mxu0 %v3492
    %3620 = vmatpush1.msra.mxu0 %v3491
    %3621 = vmatprep.subr.mxu0 %v3494
    %3622 = vmatpush1.msra.mxu0 %v3493
    %3623 = vmatprep.subr.mxu0 %v3496
    %3624 = vmatpush1.msra.mxu0 %v3495
    %3625 = vmatprep.subr.mxu0 %v3498
    %3626 = vmatpush1.msra.mxu0 %v3497
    %3627 = vmatprep.subr.mxu0 %v3500
    %3628 = vmatpush1.msra.mxu0 %v3499
    %3629 = vmatprep.subr.mxu0 %v3502
    %3630 = vmatpush1.msra.mxu0 %v3501
    %3631 = vmatprep.subr.mxu0 %v3504
    %3632 = vmatpush1.msra.mxu0 %v3503
    %3633 = vmatprep.subr.mxu0 %v3506
    %3634 = vmatpush1.msra.mxu0 %v3505
    %3635 = vmatprep.subr.mxu0 %v3508
    %3636 = vmatpush1.msra.mxu0 %v3507
    %3637 = vmatprep.subr.mxu0 %v3510
    %3638 = vmatpush1.msra.mxu0 %v3509
    %3639 = vmatprep.subr.mxu0 %v3512
    %3640 = vmatpush1.msra.mxu0 %v3511
    %3641 = vmatprep.subr.mxu0 %v3514
    %3642 = vmatpush1.msra.mxu0 %v3513
    %3643 = vmatprep.subr.mxu0 %v3516
    %3644 = vmatpush1.msra.mxu0 %v3515
    %3645 = vmatprep.subr.mxu0 %v3518
    %3646 = vmatpush1.msra.mxu0 %v3517
    %3647 = vmatprep.subr.mxu0 %v3520
    %3648 = vmatpush1.msra.mxu0 %v3519
    %3649 = vmatprep.subr.mxu0 %v3522
    %3650 = vmatpush1.msra.mxu0 %v3521
    %3651 = vmatprep.subr.mxu0 %v3524
    %3652 = vmatpush1.msra.mxu0 %v3523
    %3653 = vmatprep.subr.mxu0 %v3526
    %3654 = vmatpush1.msra.mxu0 %v3525
    %3655 = vmatprep.mubr.f32.mxu0 %v1802
    %3656 = vmatmul.mubr.f32.gmra.mrb[0].mxu0 %v1800
    %v3657 = vpop.f32.mrb[0].mxu0
    %v3658 = vadd.f32 0.0, %v3657
    %v3659 = vpop.f32.mrb[0].mxu0
    %v3660 = vadd.f32 0.0, %v3659
    %3661 = vdwg.mxu0
    %3662 = vmatprep.subr.mxu0 %v3528
    %3663 = vmatpush1.msra.mxu0 %v3527
    %3664 = vmatprep.subr.mxu0 %v3530
    %3665 = vmatpush1.msra.mxu0 %v3529
    %3666 = vmatprep.subr.mxu0 %v3532
    %3667 = vmatpush1.msra.mxu0 %v3531
    %3668 = vmatprep.subr.mxu0 %v3534
    %3669 = vmatpush1.msra.mxu0 %v3533
    %3670 = vmatprep.subr.mxu0 %v3536
    %3671 = vmatpush1.msra.mxu0 %v3535
    %3672 = vmatprep.subr.mxu0 %v3538
    %3673 = vmatpush1.msra.mxu0 %v3537
    %3674 = vmatprep.subr.mxu0 %v3540
    %3675 = vmatpush1.msra.mxu0 %v3539
    %3676 = vmatprep.subr.mxu0 %v3542
    %3677 = vmatpush1.msra.mxu0 %v3541
    %3678 = vmatprep.subr.mxu0 %v3544
    %3679 = vmatpush1.msra.mxu0 %v3543
    %3680 = vmatprep.subr.mxu0 %v3546
    %3681 = vmatpush1.msra.mxu0 %v3545
    %3682 = vmatprep.subr.mxu0 %v3548
    %3683 = vmatpush1.msra.mxu0 %v3547
    %3684 = vmatprep.subr.mxu0 %v3550
    %3685 = vmatpush1.msra.mxu0 %v3549
    %3686 = vmatprep.subr.mxu0 %v3552
    %3687 = vmatpush1.msra.mxu0 %v3551
    %3688 = vmatprep.subr.mxu0 %v3554
    %3689 = vmatpush1.msra.mxu0 %v3553
    %3690 = vmatprep.subr.mxu0 %v3556
    %3691 = vmatpush1.msra.mxu0 %v3555
    %3692 = vmatprep.subr.mxu0 %v3558
    %3693 = vmatpush1.msra.mxu0 %v3557
    %3694 = vmatprep.subr.mxu0 %v3560
    %3695 = vmatpush1.msra.mxu0 %v3559
    %3696 = vmatprep.subr.mxu0 %v3562
    %3697 = vmatpush1.msra.mxu0 %v3561
    %3698 = vmatprep.subr.mxu0 %v3564
    %3699 = vmatpush1.msra.mxu0 %v3563
    %3700 = vmatprep.subr.mxu0 %v3566
    %3701 = vmatpush1.msra.mxu0 %v3565
    %3702 = vmatprep.subr.mxu0 %v3568
    %3703 = vmatpush1.msra.mxu0 %v3567
    %3704 = vmatprep.subr.mxu0 %v3570
    %3705 = vmatpush1.msra.mxu0 %v3569
    %3706 = vmatprep.subr.mxu0 %v3572
    %3707 = vmatpush1.msra.mxu0 %v3571
    %3708 = vmatprep.subr.mxu0 %v3574
    %3709 = vmatpush1.msra.mxu0 %v3573
    %3710 = vmatprep.subr.mxu0 %v3576
    %3711 = vmatpush1.msra.mxu0 %v3575
    %3712 = vmatprep.subr.mxu0 %v3578
    %3713 = vmatpush1.msra.mxu0 %v3577
    %3714 = vmatprep.subr.mxu0 %v3580
    %3715 = vmatpush1.msra.mxu0 %v3579
    %3716 = vmatprep.subr.mxu0 %v3582
    %3717 = vmatpush1.msra.mxu0 %v3581
    %3718 = vmatprep.subr.mxu0 %v3584
    %3719 = vmatpush1.msra.mxu0 %v3583
    %3720 = vmatprep.subr.mxu0 %v3586
    %3721 = vmatpush1.msra.mxu0 %v3585
    %3722 = vmatprep.subr.mxu0 %v3588
    %3723 = vmatpush1.msra.mxu0 %v3587
    %3724 = vmatprep.subr.mxu0 %v3590
    %3725 = vmatpush1.msra.mxu0 %v3589
    %3726 = vmatprep.mubr.f32.mxu0 %v1944
    %3727 = vmatmul.mubr.f32.gmra.mrb[0].mxu0 %v1942
    %v3728 = vpop.f32.mrb[0].mxu0
    %v3729 = vadd.f32 %v3658, %v3728
    %v3730 = vpop.f32.mrb[0].mxu0
    %v3731 = vadd.f32 %v3660, %v3730
    %3732 = vdwg.mxu0
    %v3733 = vadd.f32 %v3397, %v3729
    %v3734 = vadd.f32 %v3398, %v3731
    %s3735 = scalar_lea.vmem [#allocation2], 6
    %v3736 = vld [vmem:[%s3735] ss:$8 sm:$0x3]
    %v3738 = vlaneseq
    %v3739 = vshrl.u32 %v3738, 7
    %v3740 = vsub.s32 0, %v3739
    %v3741 = vrot.slane %v3736, %v3740
    %v3742 = vlaneseq
    %v3743 = vshrl.u32 %v3742, 7
    %v3744 = vsub.s32 1, %v3743
    %v3745 = vrot.slane %v3736, %v3744
    %v3748 = vadd.f32 %v3733, %v3741
    %v3749 = vadd.f32 %v3734, %v3745
    %v3750 = vld [vmem:[#allocation6 + $0x28] sm:$0xff]
    %v3751 = vld [vmem:[#allocation6 + $0x64] sm:$0xff]
    %v3752 = vld [vmem:[#allocation6 + $0xa0] sm:$0xff]
    %v3753 = vld [vmem:[#allocation6 + $0xdc] sm:$0xff]
    %v3754 = vld [vmem:[#allocation6 + $0x118] sm:$0xff]
    %v3755 = vld [vmem:[#allocation6 + $0x154] sm:$0xff]
    %v3756 = vld [vmem:[#allocation6 + $0x190] sm:$0xff]
    %v3757 = vld [vmem:[#allocation6 + $0x1cc] sm:$0xff]
    %v3758 = vld [vmem:[#allocation6 + $0x208] sm:$0xff]
    %v3759 = vld [vmem:[#allocation6 + $0x244] sm:$0xff]
    %v3760 = vld [vmem:[#allocation6 + $0x280] sm:$0xff]
    %v3761 = vld [vmem:[#allocation6 + $0x2bc] sm:$0xff]
    %v3762 = vld [vmem:[#allocation6 + $0x2f8] sm:$0xff]
    %v3763 = vld [vmem:[#allocation6 + $0x334] sm:$0xff]
    %v3764 = vld [vmem:[#allocation6 + $0x370] sm:$0xff]
    %v3765 = vld [vmem:[#allocation6 + $0x3ac] sm:$0xff]
    %v3766 = vld [vmem:[#allocation6 + $0x3e8] sm:$0xff]
    %v3767 = vld [vmem:[#allocation6 + $0x424] sm:$0xff]
    %v3768 = vld [vmem:[#allocation6 + $0x460] sm:$0xff]
    %v3769 = vld [vmem:[#allocation6 + $0x49c] sm:$0xff]
    %v3770 = vld [vmem:[#allocation6 + $0x4d8] sm:$0xff]
    %v3771 = vld [vmem:[#allocation6 + $0x514] sm:$0xff]
    %v3772 = vld [vmem:[#allocation6 + $0x550] sm:$0xff]
    %v3773 = vld [vmem:[#allocation6 + $0x58c] sm:$0xff]
    %v3774 = vld [vmem:[#allocation6 + $0x5c8] sm:$0xff]
    %v3775 = vld [vmem:[#allocation6 + $0x604] sm:$0xff]
    %v3776 = vld [vmem:[#allocation6 + $0x640] sm:$0xff]
    %v3777 = vld [vmem:[#allocation6 + $0x67c] sm:$0xff]
    %v3778 = vld [vmem:[#allocation6 + $0x6b8] sm:$0xff]
    %v3779 = vld [vmem:[#allocation6 + $0x6f4] sm:$0xff]
    %v3780 = vld [vmem:[#allocation6 + $0x730] sm:$0xff]
    %v3781 = vld [vmem:[#allocation6 + $0x76c] sm:$0xff]
    %v3782 = vunpack.c.l.bf16 %v3750
    %v3783 = vunpack.c.h.bf16 %v3750
    %v3784 = vunpack.c.l.bf16 %v3751
    %v3785 = vunpack.c.h.bf16 %v3751
    %v3786 = vunpack.c.l.bf16 %v3752
    %v3787 = vunpack.c.h.bf16 %v3752
    %v3788 = vunpack.c.l.bf16 %v3753
    %v3789 = vunpack.c.h.bf16 %v3753
    %v3790 = vunpack.c.l.bf16 %v3754
    %v3791 = vunpack.c.h.bf16 %v3754
    %v3792 = vunpack.c.l.bf16 %v3755
    %v3793 = vunpack.c.h.bf16 %v3755
    %v3794 = vunpack.c.l.bf16 %v3756
    %v3795 = vunpack.c.h.bf16 %v3756
    %v3796 = vunpack.c.l.bf16 %v3757
    %v3797 = vunpack.c.h.bf16 %v3757
    %v3798 = vunpack.c.l.bf16 %v3758
    %v3799 = vunpack.c.h.bf16 %v3758
    %v3800 = vunpack.c.l.bf16 %v3759
    %v3801 = vunpack.c.h.bf16 %v3759
    %v3802 = vunpack.c.l.bf16 %v3760
    %v3803 = vunpack.c.h.bf16 %v3760
    %v3804 = vunpack.c.l.bf16 %v3761
    %v3805 = vunpack.c.h.bf16 %v3761
    %v3806 = vunpack.c.l.bf16 %v3762
    %v3807 = vunpack.c.h.bf16 %v3762
    %v3808 = vunpack.c.l.bf16 %v3763
    %v3809 = vunpack.c.h.bf16 %v3763
    %v3810 = vunpack.c.l.bf16 %v3764
    %v3811 = vunpack.c.h.bf16 %v3764
    %v3812 = vunpack.c.l.bf16 %v3765
    %v3813 = vunpack.c.h.bf16 %v3765
    %v3814 = vunpack.c.l.bf16 %v3766
    %v3815 = vunpack.c.h.bf16 %v3766
    %v3816 = vunpack.c.l.bf16 %v3767
    %v3817 = vunpack.c.h.bf16 %v3767
    %v3818 = vunpack.c.l.bf16 %v3768
    %v3819 = vunpack.c.h.bf16 %v3768
    %v3820 = vunpack.c.l.bf16 %v3769
    %v3821 = vunpack.c.h.bf16 %v3769
    %v3822 = vunpack.c.l.bf16 %v3770
    %v3823 = vunpack.c.h.bf16 %v3770
    %v3824 = vunpack.c.l.bf16 %v3771
    %v3825 = vunpack.c.h.bf16 %v3771
    %v3826 = vunpack.c.l.bf16 %v3772
    %v3827 = vunpack.c.h.bf16 %v3772
    %v3828 = vunpack.c.l.bf16 %v3773
    %v3829 = vunpack.c.h.bf16 %v3773
    %v3830 = vunpack.c.l.bf16 %v3774
    %v3831 = vunpack.c.h.bf16 %v3774
    %v3832 = vunpack.c.l.bf16 %v3775
    %v3833 = vunpack.c.h.bf16 %v3775
    %v3834 = vunpack.c.l.bf16 %v3776
    %v3835 = vunpack.c.h.bf16 %v3776
    %v3836 = vunpack.c.l.bf16 %v3777
    %v3837 = vunpack.c.h.bf16 %v3777
    %v3838 = vunpack.c.l.bf16 %v3778
    %v3839 = vunpack.c.h.bf16 %v3778
    %v3840 = vunpack.c.l.bf16 %v3779
    %v3841 = vunpack.c.h.bf16 %v3779
    %v3842 = vunpack.c.l.bf16 %v3780
    %v3843 = vunpack.c.h.bf16 %v3780
    %v3844 = vunpack.c.l.bf16 %v3781
    %v3845 = vunpack.c.h.bf16 %v3781
    %v3846 = vld [vmem:[#allocation6 + $0x30] sm:$0xff]
    %v3847 = vld [vmem:[#allocation6 + $0x6c] sm:$0xff]
    %v3848 = vld [vmem:[#allocation6 + $0xa8] sm:$0xff]
    %v3849 = vld [vmem:[#allocation6 + $0xe4] sm:$0xff]
    %v3850 = vld [vmem:[#allocation6 + $0x120] sm:$0xff]
    %v3851 = vld [vmem:[#allocation6 + $0x15c] sm:$0xff]
    %v3852 = vld [vmem:[#allocation6 + $0x198] sm:$0xff]
    %v3853 = vld [vmem:[#allocation6 + $0x1d4] sm:$0xff]
    %v3854 = vld [vmem:[#allocation6 + $0x210] sm:$0xff]
    %v3855 = vld [vmem:[#allocation6 + $0x24c] sm:$0xff]
    %v3856 = vld [vmem:[#allocation6 + $0x288] sm:$0xff]
    %v3857 = vld [vmem:[#allocation6 + $0x2c4] sm:$0xff]
    %v3858 = vld [vmem:[#allocation6 + $0x300] sm:$0xff]
    %v3859 = vld [vmem:[#allocation6 + $0x33c] sm:$0xff]
    %v3860 = vld [vmem:[#allocation6 + $0x378] sm:$0xff]
    %v3861 = vld [vmem:[#allocation6 + $0x3b4] sm:$0xff]
    %v3862 = vld [vmem:[#allocation6 + $0x3f0] sm:$0xff]
    %v3863 = vld [vmem:[#allocation6 + $0x42c] sm:$0xff]
    %v3864 = vld [vmem:[#allocation6 + $0x468] sm:$0xff]
    %v3865 = vld [vmem:[#allocation6 + $0x4a4] sm:$0xff]
    %v3866 = vld [vmem:[#allocation6 + $0x4e0] sm:$0xff]
    %v3867 = vld [vmem:[#allocation6 + $0x51c] sm:$0xff]
    %v3868 = vld [vmem:[#allocation6 + $0x558] sm:$0xff]
    %v3869 = vld [vmem:[#allocation6 + $0x594] sm:$0xff]
    %v3870 = vld [vmem:[#allocation6 + $0x5d0] sm:$0xff]
    %v3871 = vld [vmem:[#allocation6 + $0x60c] sm:$0xff]
    %v3872 = vld [vmem:[#allocation6 + $0x648] sm:$0xff]
    %v3873 = vld [vmem:[#allocation6 + $0x684] sm:$0xff]
    %v3874 = vld [vmem:[#allocation6 + $0x6c0] sm:$0xff]
    %v3875 = vld [vmem:[#allocation6 + $0x6fc] sm:$0xff]
    %v3876 = vld [vmem:[#allocation6 + $0x738] sm:$0xff]
    %v3877 = vld [vmem:[#allocation6 + $0x774] sm:$0xff]
    %v3878 = vunpack.c.l.bf16 %v3846
    %v3879 = vunpack.c.h.bf16 %v3846
    %v3880 = vunpack.c.l.bf16 %v3847
    %v3881 = vunpack.c.h.bf16 %v3847
    %v3882 = vunpack.c.l.bf16 %v3848
    %v3883 = vunpack.c.h.bf16 %v3848
    %v3884 = vunpack.c.l.bf16 %v3849
    %v3885 = vunpack.c.h.bf16 %v3849
    %v3886 = vunpack.c.l.bf16 %v3850
    %v3887 = vunpack.c.h.bf16 %v3850
    %v3888 = vunpack.c.l.bf16 %v3851
    %v3889 = vunpack.c.h.bf16 %v3851
    %v3890 = vunpack.c.l.bf16 %v3852
    %v3891 = vunpack.c.h.bf16 %v3852
    %v3892 = vunpack.c.l.bf16 %v3853
    %v3893 = vunpack.c.h.bf16 %v3853
    %v3894 = vunpack.c.l.bf16 %v3854
    %v3895 = vunpack.c.h.bf16 %v3854
    %v3896 = vunpack.c.l.bf16 %v3855
    %v3897 = vunpack.c.h.bf16 %v3855
    %v3898 = vunpack.c.l.bf16 %v3856
    %v3899 = vunpack.c.h.bf16 %v3856
    %v3900 = vunpack.c.l.bf16 %v3857
    %v3901 = vunpack.c.h.bf16 %v3857
    %v3902 = vunpack.c.l.bf16 %v3858
    %v3903 = vunpack.c.h.bf16 %v3858
    %v3904 = vunpack.c.l.bf16 %v3859
    %v3905 = vunpack.c.h.bf16 %v3859
    %v3906 = vunpack.c.l.bf16 %v3860
    %v3907 = vunpack.c.h.bf16 %v3860
    %v3908 = vunpack.c.l.bf16 %v3861
    %v3909 = vunpack.c.h.bf16 %v3861
    %v3910 = vunpack.c.l.bf16 %v3862
    %v3911 = vunpack.c.h.bf16 %v3862
    %v3912 = vunpack.c.l.bf16 %v3863
    %v3913 = vunpack.c.h.bf16 %v3863
    %v3914 = vunpack.c.l.bf16 %v3864
    %v3915 = vunpack.c.h.bf16 %v3864
    %v3916 = vunpack.c.l.bf16 %v3865
    %v3917 = vunpack.c.h.bf16 %v3865
    %v3918 = vunpack.c.l.bf16 %v3866
    %v3919 = vunpack.c.h.bf16 %v3866
    %v3920 = vunpack.c.l.bf16 %v3867
    %v3921 = vunpack.c.h.bf16 %v3867
    %v3922 = vunpack.c.l.bf16 %v3868
    %v3923 = vunpack.c.h.bf16 %v3868
    %v3924 = vunpack.c.l.bf16 %v3869
    %v3925 = vunpack.c.h.bf16 %v3869
    %v3926 = vunpack.c.l.bf16 %v3870
    %v3927 = vunpack.c.h.bf16 %v3870
    %v3928 = vunpack.c.l.bf16 %v3871
    %v3929 = vunpack.c.h.bf16 %v3871
    %v3930 = vunpack.c.l.bf16 %v3872
    %v3931 = vunpack.c.h.bf16 %v3872
    %v3932 = vunpack.c.l.bf16 %v3873
    %v3933 = vunpack.c.h.bf16 %v3873
    %v3934 = vunpack.c.l.bf16 %v3874
    %v3935 = vunpack.c.h.bf16 %v3874
    %v3936 = vunpack.c.l.bf16 %v3875
    %v3937 = vunpack.c.h.bf16 %v3875
    %v3938 = vunpack.c.l.bf16 %v3876
    %v3939 = vunpack.c.h.bf16 %v3876
    %v3940 = vunpack.c.l.bf16 %v3877
    %v3941 = vunpack.c.h.bf16 %v3877
    %3942 = vmatprep.subr.mxu0 %v3879
    %3943 = vmatpush1.msra.mxu0 %v3878
    %3944 = vmatprep.subr.mxu0 %v3881
    %3945 = vmatpush1.msra.mxu0 %v3880
    %3946 = vmatprep.subr.mxu0 %v3883
    %3947 = vmatpush1.msra.mxu0 %v3882
    %3948 = vmatprep.subr.mxu0 %v3885
    %3949 = vmatpush1.msra.mxu0 %v3884
    %3950 = vmatprep.subr.mxu0 %v3887
    %3951 = vmatpush1.msra.mxu0 %v3886
    %3952 = vmatprep.subr.mxu0 %v3889
    %3953 = vmatpush1.msra.mxu0 %v3888
    %3954 = vmatprep.subr.mxu0 %v3891
    %3955 = vmatpush1.msra.mxu0 %v3890
    %3956 = vmatprep.subr.mxu0 %v3893
    %3957 = vmatpush1.msra.mxu0 %v3892
    %3958 = vmatprep.subr.mxu0 %v3895
    %3959 = vmatpush1.msra.mxu0 %v3894
    %3960 = vmatprep.subr.mxu0 %v3897
    %3961 = vmatpush1.msra.mxu0 %v3896
    %3962 = vmatprep.subr.mxu0 %v3899
    %3963 = vmatpush1.msra.mxu0 %v3898
    %3964 = vmatprep.subr.mxu0 %v3901
    %3965 = vmatpush1.msra.mxu0 %v3900
    %3966 = vmatprep.subr.mxu0 %v3903
    %3967 = vmatpush1.msra.mxu0 %v3902
    %3968 = vmatprep.subr.mxu0 %v3905
    %3969 = vmatpush1.msra.mxu0 %v3904
    %3970 = vmatprep.subr.mxu0 %v3907
    %3971 = vmatpush1.msra.mxu0 %v3906
    %3972 = vmatprep.subr.mxu0 %v3909
    %3973 = vmatpush1.msra.mxu0 %v3908
    %3974 = vmatprep.subr.mxu0 %v3911
    %3975 = vmatpush1.msra.mxu0 %v3910
    %3976 = vmatprep.subr.mxu0 %v3913
    %3977 = vmatpush1.msra.mxu0 %v3912
    %3978 = vmatprep.subr.mxu0 %v3915
    %3979 = vmatpush1.msra.mxu0 %v3914
    %3980 = vmatprep.subr.mxu0 %v3917
    %3981 = vmatpush1.msra.mxu0 %v3916
    %3982 = vmatprep.subr.mxu0 %v3919
    %3983 = vmatpush1.msra.mxu0 %v3918
    %3984 = vmatprep.subr.mxu0 %v3921
    %3985 = vmatpush1.msra.mxu0 %v3920
    %3986 = vmatprep.subr.mxu0 %v3923
    %3987 = vmatpush1.msra.mxu0 %v3922
    %3988 = vmatprep.subr.mxu0 %v3925
    %3989 = vmatpush1.msra.mxu0 %v3924
    %3990 = vmatprep.subr.mxu0 %v3927
    %3991 = vmatpush1.msra.mxu0 %v3926
    %3992 = vmatprep.subr.mxu0 %v3929
    %3993 = vmatpush1.msra.mxu0 %v3928
    %3994 = vmatprep.subr.mxu0 %v3931
    %3995 = vmatpush1.msra.mxu0 %v3930
    %3996 = vmatprep.subr.mxu0 %v3933
    %3997 = vmatpush1.msra.mxu0 %v3932
    %3998 = vmatprep.subr.mxu0 %v3935
    %3999 = vmatpush1.msra.mxu0 %v3934
    %4000 = vmatprep.subr.mxu0 %v3937
    %4001 = vmatpush1.msra.mxu0 %v3936
    %4002 = vmatprep.subr.mxu0 %v3939
    %4003 = vmatpush1.msra.mxu0 %v3938
    %4004 = vmatprep.subr.mxu0 %v3941
    %4005 = vmatpush1.msra.mxu0 %v3940
    %4006 = vmatprep.mubr.f32.mxu0 %v2807
    %4007 = vmatmul.mubr.f32.gmra.mrb[0].mxu0 %v2806
    %v4008 = vpop.f32.mrb[0].mxu0
    %v4009 = vadd.f32 0.0, %v4008
    %v4010 = vpop.f32.mrb[0].mxu0
    %v4011 = vadd.f32 0.0, %v4010
    %4012 = vdwg.mxu0
    %4013 = vmatprep.subr.mxu0 %v3783
    %4014 = vmatpush1.msra.mxu0 %v3782
    %4015 = vmatprep.subr.mxu0 %v3785
    %4016 = vmatpush1.msra.mxu0 %v3784
    %4017 = vmatprep.subr.mxu0 %v3787
    %4018 = vmatpush1.msra.mxu0 %v3786
    %4019 = vmatprep.subr.mxu0 %v3789
    %4020 = vmatpush1.msra.mxu0 %v3788
    %4021 = vmatprep.subr.mxu0 %v3791
    %4022 = vmatpush1.msra.mxu0 %v3790
    %4023 = vmatprep.subr.mxu0 %v3793
    %4024 = vmatpush1.msra.mxu0 %v3792
    %4025 = vmatprep.subr.mxu0 %v3795
    %4026 = vmatpush1.msra.mxu0 %v3794
    %4027 = vmatprep.subr.mxu0 %v3797
    %4028 = vmatpush1.msra.mxu0 %v3796
    %4029 = vmatprep.subr.mxu0 %v3799
    %4030 = vmatpush1.msra.mxu0 %v3798
    %4031 = vmatprep.subr.mxu0 %v3801
    %4032 = vmatpush1.msra.mxu0 %v3800
    %4033 = vmatprep.subr.mxu0 %v3803
    %4034 = vmatpush1.msra.mxu0 %v3802
    %4035 = vmatprep.subr.mxu0 %v3805
    %4036 = vmatpush1.msra.mxu0 %v3804
    %4037 = vmatprep.subr.mxu0 %v3807
    %4038 = vmatpush1.msra.mxu0 %v3806
    %4039 = vmatprep.subr.mxu0 %v3809
    %4040 = vmatpush1.msra.mxu0 %v3808
    %4041 = vmatprep.subr.mxu0 %v3811
    %4042 = vmatpush1.msra.mxu0 %v3810
    %4043 = vmatprep.subr.mxu0 %v3813
    %4044 = vmatpush1.msra.mxu0 %v3812
    %4045 = vmatprep.subr.mxu0 %v3815
    %4046 = vmatpush1.msra.mxu0 %v3814
    %4047 = vmatprep.subr.mxu0 %v3817
    %4048 = vmatpush1.msra.mxu0 %v3816
    %4049 = vmatprep.subr.mxu0 %v3819
    %4050 = vmatpush1.msra.mxu0 %v3818
    %4051 = vmatprep.subr.mxu0 %v3821
    %4052 = vmatpush1.msra.mxu0 %v3820
    %4053 = vmatprep.subr.mxu0 %v3823
    %4054 = vmatpush1.msra.mxu0 %v3822
    %4055 = vmatprep.subr.mxu0 %v3825
    %4056 = vmatpush1.msra.mxu0 %v3824
    %4057 = vmatprep.subr.mxu0 %v3827
    %4058 = vmatpush1.msra.mxu0 %v3826
    %4059 = vmatprep.subr.mxu0 %v3829
    %4060 = vmatpush1.msra.mxu0 %v3828
    %4061 = vmatprep.subr.mxu0 %v3831
    %4062 = vmatpush1.msra.mxu0 %v3830
    %4063 = vmatprep.subr.mxu0 %v3833
    %4064 = vmatpush1.msra.mxu0 %v3832
    %4065 = vmatprep.subr.mxu0 %v3835
    %4066 = vmatpush1.msra.mxu0 %v3834
    %4067 = vmatprep.subr.mxu0 %v3837
    %4068 = vmatpush1.msra.mxu0 %v3836
    %4069 = vmatprep.subr.mxu0 %v3839
    %4070 = vmatpush1.msra.mxu0 %v3838
    %4071 = vmatprep.subr.mxu0 %v3841
    %4072 = vmatpush1.msra.mxu0 %v3840
    %4073 = vmatprep.subr.mxu0 %v3843
    %4074 = vmatpush1.msra.mxu0 %v3842
    %4075 = vmatprep.subr.mxu0 %v3845
    %4076 = vmatpush1.msra.mxu0 %v3844
    %4077 = vmatprep.mubr.f32.mxu0 %v3749
    %4078 = vmatmul.mubr.f32.gmra.mrb[0].mxu0 %v3748
    %v4079 = vpop.f32.mrb[0].mxu0
    %v4080 = vadd.f32 %v4009, %v4079
    %v4081 = vpop.f32.mrb[0].mxu0
    %v4082 = vadd.f32 %v4011, %v4081
    %4083 = vdwg.mxu0
    %s4084 = scalar_lea.vmem [#allocation2], 66
    %v4085 = vld [vmem:[%s4084] ss:$8 sm:$0x3]
    %v4087 = vlaneseq
    %v4088 = vshrl.u32 %v4087, 7
    %v4089 = vsub.s32 0, %v4088
    %v4090 = vrot.slane %v4085, %v4089
    %v4091 = vlaneseq
    %v4092 = vshrl.u32 %v4091, 7
    %v4093 = vsub.s32 1, %v4092
    %v4094 = vrot.slane %v4085, %v4093
    %v4097 = vadd.f32 %v4080, %v4090
    %v4098 = vadd.f32 %v4082, %v4094
    %v4099 = vsub.f32 0.0, %v4097
    %v4100 = vsub.f32 0.0, %v4098
    %v4101 = vmul.f32 %v4099, 1.442695
    %v4102 = vpow.pop %v4101
    %v4103 = vmul.f32 %v4100, 1.442695
    %v4104 = vpow.pop %v4103
    %v4105 = vadd.f32 %v4102, 1.0
    %v4106 = vadd.f32 %v4104, 1.0
    %v4107 = vrcp.pop %v4105
    %v4108 = vmul.f32 1.0, %v4107
    %v4109 = vrcp.pop %v4106
    %v4110 = vmul.f32 1.0, %v4109
    %v4111 = vmul.f32 %v4097, %v4108
    %v4112 = vmul.f32 %v4098, %v4110
    %s4113 = scalar_lea.vmem [#allocation2], 67
    %v4114 = vld [vmem:[%s4113] ss:$8 sm:$0x3]
    %s4115 = scalar_lea.vmem [#allocation2], 68
    %v4116 = vld [vmem:[%s4115] ss:$8 sm:$0x3]
    %v4117 = vadd.f32 %v4111, %v4112
    %4118 = vadd.xlane.f32.xlu0 %v4117
    %v4119 = vpop.xlane.xlu0 %4118
    %v4120 = vmul.f32 %v4119, %v2768
    %v4121 = vsub.f32 %v4111, %v4120
    %v4122 = vsub.f32 %v4112, %v4120
    %v4123 = vmul.f32 %v4121, %v4121
    %v4124 = vmul.f32 %v4122, %v4122
    %v4125 = vadd.f32 %v4123, %v4124
    %4126 = vadd.xlane.f32.xlu0 %v4125
    %v4127 = vpop.xlane.xlu0 %4126
    %v4128 = vmul.f32 %v4127, %v2768
    %v4129 = vadd.f32 %v4128, 1e-05
    %v4130 = vrsqrt.pop %v4129
    %v4131 = vmul.f32 %v4121, %v4130
    %v4132 = vmul.f32 %v4122, %v4130
    %v4134 = vlaneseq
    %v4135 = vshrl.u32 %v4134, 7
    %v4136 = vsub.s32 0, %v4135
    %v4137 = vrot.slane %v4114, %v4136
    %v4138 = vlaneseq
    %v4139 = vshrl.u32 %v4138, 7
    %v4140 = vsub.s32 1, %v4139
    %v4141 = vrot.slane %v4114, %v4140
    %v4144 = vmul.f32 %v4131, %v4137
    %v4145 = vmul.f32 %v4132, %v4141
    %v4147 = vlaneseq
    %v4148 = vshrl.u32 %v4147, 7
    %v4149 = vsub.s32 0, %v4148
    %v4150 = vrot.slane %v4116, %v4149
    %v4151 = vlaneseq
    %v4152 = vshrl.u32 %v4151, 7
    %v4153 = vsub.s32 1, %v4152
    %v4154 = vrot.slane %v4116, %v4153
    %v4157 = vadd.f32 %v4144, %v4150
    %v4158 = vadd.f32 %v4145, %v4154
    %v4159 = vld [vmem:[#allocation6 + $0x38] sm:$0xf]
    %v4160 = vld [vmem:[#allocation6 + $0x74] sm:$0xf]
    %v4161 = vld [vmem:[#allocation6 + $0xb0] sm:$0xf]
    %v4162 = vld [vmem:[#allocation6 + $0xec] sm:$0xf]
    %v4163 = vld [vmem:[#allocation6 + $0x128] sm:$0xf]
    %v4164 = vld [vmem:[#allocation6 + $0x164] sm:$0xf]
    %v4165 = vld [vmem:[#allocation6 + $0x1a0] sm:$0xf]
    %v4166 = vld [vmem:[#allocation6 + $0x1dc] sm:$0xf]
    %v4167 = vld [vmem:[#allocation6 + $0x218] sm:$0xf]
    %v4168 = vld [vmem:[#allocation6 + $0x254] sm:$0xf]
    %v4169 = vld [vmem:[#allocation6 + $0x290] sm:$0xf]
    %v4170 = vld [vmem:[#allocation6 + $0x2cc] sm:$0xf]
    %v4171 = vld [vmem:[#allocation6 + $0x308] sm:$0xf]
    %v4172 = vld [vmem:[#allocation6 + $0x344] sm:$0xf]
    %v4173 = vld [vmem:[#allocation6 + $0x380] sm:$0xf]
    %v4174 = vld [vmem:[#allocation6 + $0x3bc] sm:$0xf]
    %v4175 = vld [vmem:[#allocation6 + $0x3f8] sm:$0xf]
    %v4176 = vld [vmem:[#allocation6 + $0x434] sm:$0xf]
    %v4177 = vld [vmem:[#allocation6 + $0x470] sm:$0xf]
    %v4178 = vld [vmem:[#allocation6 + $0x4ac] sm:$0xf]
    %v4179 = vld [vmem:[#allocation6 + $0x4e8] sm:$0xf]
    %v4180 = vld [vmem:[#allocation6 + $0x524] sm:$0xf]
    %v4181 = vld [vmem:[#allocation6 + $0x560] sm:$0xf]
    %v4182 = vld [vmem:[#allocation6 + $0x59c] sm:$0xf]
    %v4183 = vld [vmem:[#allocation6 + $0x5d8] sm:$0xf]
    %v4184 = vld [vmem:[#allocation6 + $0x614] sm:$0xf]
    %v4185 = vld [vmem:[#allocation6 + $0x650] sm:$0xf]
    %v4186 = vld [vmem:[#allocation6 + $0x68c] sm:$0xf]
    %v4187 = vld [vmem:[#allocation6 + $0x6c8] sm:$0xf]
    %v4188 = vld [vmem:[#allocation6 + $0x704] sm:$0xf]
    %v4189 = vld [vmem:[#allocation6 + $0x740] sm:$0xf]
    %v4190 = vld [vmem:[#allocation6 + $0x77c] sm:$0xf]
    %v4191 = vunpack.c.l.bf16 %v4159
    %v4192 = vunpack.c.l.bf16 %v4160
    %v4193 = vunpack.c.l.bf16 %v4161
    %v4194 = vunpack.c.l.bf16 %v4162
    %v4195 = vunpack.c.l.bf16 %v4163
    %v4196 = vunpack.c.l.bf16 %v4164
    %v4197 = vunpack.c.l.bf16 %v4165
    %v4198 = vunpack.c.l.bf16 %v4166
    %v4199 = vunpack.c.l.bf16 %v4167
    %v4200 = vunpack.c.l.bf16 %v4168
    %v4201 = vunpack.c.l.bf16 %v4169
    %v4202 = vunpack.c.l.bf16 %v4170
    %v4203 = vunpack.c.l.bf16 %v4171
    %v4204 = vunpack.c.l.bf16 %v4172
    %v4205 = vunpack.c.l.bf16 %v4173
    %v4206 = vunpack.c.l.bf16 %v4174
    %v4207 = vunpack.c.l.bf16 %v4175
    %v4208 = vunpack.c.l.bf16 %v4176
    %v4209 = vunpack.c.l.bf16 %v4177
    %v4210 = vunpack.c.l.bf16 %v4178
    %v4211 = vunpack.c.l.bf16 %v4179
    %v4212 = vunpack.c.l.bf16 %v4180
    %v4213 = vunpack.c.l.bf16 %v4181
    %v4214 = vunpack.c.l.bf16 %v4182
    %v4215 = vunpack.c.l.bf16 %v4183
    %v4216 = vunpack.c.l.bf16 %v4184
    %v4217 = vunpack.c.l.bf16 %v4185
    %v4218 = vunpack.c.l.bf16 %v4186
    %v4219 = vunpack.c.l.bf16 %v4187
    %v4220 = vunpack.c.l.bf16 %v4188
    %v4221 = vunpack.c.l.bf16 %v4189
    %v4222 = vunpack.c.l.bf16 %v4190
    %v4223 = vld [vmem:[#allocation2 + $0x45] ss:$0 sm:$0xff]
    %4224 = vmatprep.subr.mxu0 0.0
    %4225 = vmatpush1.msra.mxu0 %v4191
    %4226 = vmatprep.subr.mxu0 0.0
    %4227 = vmatpush1.msra.mxu0 %v4192
    %4228 = vmatprep.subr.mxu0 0.0
    %4229 = vmatpush1.msra.mxu0 %v4193
    %4230 = vmatprep.subr.mxu0 0.0
    %4231 = vmatpush1.msra.mxu0 %v4194
    %4232 = vmatprep.subr.mxu0 0.0
    %4233 = vmatpush1.msra.mxu0 %v4195
    %4234 = vmatprep.subr.mxu0 0.0
    %4235 = vmatpush1.msra.mxu0 %v4196
    %4236 = vmatprep.subr.mxu0 0.0
    %4237 = vmatpush1.msra.mxu0 %v4197
    %4238 = vmatprep.subr.mxu0 0.0
    %4239 = vmatpush1.msra.mxu0 %v4198
    %4240 = vmatprep.subr.mxu0 0.0
    %4241 = vmatpush1.msra.mxu0 %v4199
    %4242 = vmatprep.subr.mxu0 0.0
    %4243 = vmatpush1.msra.mxu0 %v4200
    %4244 = vmatprep.subr.mxu0 0.0
    %4245 = vmatpush1.msra.mxu0 %v4201
    %4246 = vmatprep.subr.mxu0 0.0
    %4247 = vmatpush1.msra.mxu0 %v4202
    %4248 = vmatprep.subr.mxu0 0.0
    %4249 = vmatpush1.msra.mxu0 %v4203
    %4250 = vmatprep.subr.mxu0 0.0
    %4251 = vmatpush1.msra.mxu0 %v4204
    %4252 = vmatprep.subr.mxu0 0.0
    %4253 = vmatpush1.msra.mxu0 %v4205
    %4254 = vmatprep.subr.mxu0 0.0
    %4255 = vmatpush1.msra.mxu0 %v4206
    %4256 = vmatprep.subr.mxu0 0.0
    %4257 = vmatpush1.msra.mxu0 %v4207
    %4258 = vmatprep.subr.mxu0 0.0
    %4259 = vmatpush1.msra.mxu0 %v4208
    %4260 = vmatprep.subr.mxu0 0.0
    %4261 = vmatpush1.msra.mxu0 %v4209
    %4262 = vmatprep.subr.mxu0 0.0
    %4263 = vmatpush1.msra.mxu0 %v4210
    %4264 = vmatprep.subr.mxu0 0.0
    %4265 = vmatpush1.msra.mxu0 %v4211
    %4266 = vmatprep.subr.mxu0 0.0
    %4267 = vmatpush1.msra.mxu0 %v4212
    %4268 = vmatprep.subr.mxu0 0.0
    %4269 = vmatpush1.msra.mxu0 %v4213
    %4270 = vmatprep.subr.mxu0 0.0
    %4271 = vmatpush1.msra.mxu0 %v4214
    %4272 = vmatprep.subr.mxu0 0.0
    %4273 = vmatpush1.msra.mxu0 %v4215
    %4274 = vmatprep.subr.mxu0 0.0
    %4275 = vmatpush1.msra.mxu0 %v4216
    %4276 = vmatprep.subr.mxu0 0.0
    %4277 = vmatpush1.msra.mxu0 %v4217
    %4278 = vmatprep.subr.mxu0 0.0
    %4279 = vmatpush1.msra.mxu0 %v4218
    %4280 = vmatprep.subr.mxu0 0.0
    %4281 = vmatpush1.msra.mxu0 %v4219
    %4282 = vmatprep.subr.mxu0 0.0
    %4283 = vmatpush1.msra.mxu0 %v4220
    %4284 = vmatprep.subr.mxu0 0.0
    %4285 = vmatpush1.msra.mxu0 %v4221
    %4286 = vmatprep.subr.mxu0 0.0
    %4287 = vmatpush1.msra.mxu0 %v4222
    %4288 = vmatprep.mubr.f32.mxu0 %v4158
    %4289 = vmatmul.mubr.f32.gmra.mrb[0].mxu0 %v4157
    %v4290 = vpop.f32.mrb[0].mxu0
    %v4291 = vadd.f32 %v4223, %v4290
    %v4292 = vpop.f32.mrb[0].mxu0
    %4293 = vdwg.mxu0
    %v4294 = vld [vmem:[#allocation4 + $0x28] sm:$0xf]
    %v4295 = vld [vmem:[#allocation4 + $0x58] sm:$0xf]
    %v4296 = vld [vmem:[#allocation4 + $0x88] sm:$0xf]
    %v4297 = vld [vmem:[#allocation4 + $0xb8] sm:$0xf]
    %v4298 = vld [vmem:[#allocation4 + $0xe8] sm:$0xf]
    %v4299 = vld [vmem:[#allocation4 + $0x118] sm:$0xf]
    %v4300 = vld [vmem:[#allocation4 + $0x148] sm:$0xf]
    %v4301 = vld [vmem:[#allocation4 + $0x178] sm:$0xf]
    %v4302 = vld [vmem:[#allocation4 + $0x1a8] sm:$0xf]
    %v4303 = vld [vmem:[#allocation4 + $0x1d8] sm:$0xf]
    %v4304 = vld [vmem:[#allocation4 + $0x208] sm:$0xf]
    %v4305 = vld [vmem:[#allocation4 + $0x238] sm:$0xf]
    %v4306 = vld [vmem:[#allocation4 + $0x268] sm:$0xf]
    %v4307 = vld [vmem:[#allocation4 + $0x298] sm:$0xf]
    %v4308 = vld [vmem:[#allocation4 + $0x2c8] sm:$0xf]
    %v4309 = vld [vmem:[#allocation4 + $0x2f8] sm:$0xf]
    %v4310 = vld [vmem:[#allocation4 + $0x328] sm:$0xf]
    %v4311 = vld [vmem:[#allocation4 + $0x358] sm:$0xf]
    %v4312 = vld [vmem:[#allocation4 + $0x388] sm:$0xf]
    %v4313 = vld [vmem:[#allocation4 + $0x3b8] sm:$0xf]
    %v4314 = vld [vmem:[#allocation4 + $0x3e8] sm:$0xf]
    %v4315 = vld [vmem:[#allocation4 + $0x418] sm:$0xf]
    %v4316 = vld [vmem:[#allocation4 + $0x448] sm:$0xf]
    %v4317 = vld [vmem:[#allocation4 + $0x478] sm:$0xf]
    %v4318 = vld [vmem:[#allocation4 + $0x4a8] sm:$0xf]
    %v4319 = vld [vmem:[#allocation4 + $0x4d8] sm:$0xf]
    %v4320 = vld [vmem:[#allocation4 + $0x508] sm:$0xf]
    %v4321 = vld [vmem:[#allocation4 + $0x538] sm:$0xf]
    %v4322 = vld [vmem:[#allocation4 + $0x568] sm:$0xf]
    %v4323 = vld [vmem:[#allocation4 + $0x598] sm:$0xf]
    %v4324 = vld [vmem:[#allocation4 + $0x5c8] sm:$0xf]
    %v4325 = vld [vmem:[#allocation4 + $0x5f8] sm:$0xf]
    %v4326 = vld [vmem:[#allocation4 + $0x628] sm:$0xf]
    %v4327 = vld [vmem:[#allocation4 + $0x658] sm:$0xf]
    %v4328 = vld [vmem:[#allocation4 + $0x688] sm:$0xf]
    %v4329 = vld [vmem:[#allocation4 + $0x6b8] sm:$0xf]
    %v4330 = vld [vmem:[#allocation4 + $0x6e8] sm:$0xf]
    %v4331 = vld [vmem:[#allocation4 + $0x718] sm:$0xf]
    %v4332 = vld [vmem:[#allocation4 + $0x748] sm:$0xf]
    %v4333 = vld [vmem:[#allocation4 + $0x778] sm:$0xf]
    %v4334 = vld [vmem:[#allocation4 + $0x7a8] sm:$0xf]
    %v4335 = vld [vmem:[#allocation4 + $0x7d8] sm:$0xf]
    %v4336 = vld [vmem:[#allocation4 + $0x808] sm:$0xf]
    %v4337 = vld [vmem:[#allocation4 + $0x838] sm:$0xf]
    %v4338 = vld [vmem:[#allocation4 + $0x868] sm:$0xf]
    %v4339 = vld [vmem:[#allocation4 + $0x898] sm:$0xf]
    %v4340 = vld [vmem:[#allocation4 + $0x8c8] sm:$0xf]
    %v4341 = vld [vmem:[#allocation4 + $0x8f8] sm:$0xf]
    %v4342 = vld [vmem:[#allocation4 + $0x928] sm:$0xf]
    %v4343 = vld [vmem:[#allocation4 + $0x958] sm:$0xf]
    %v4344 = vld [vmem:[#allocation4 + $0x988] sm:$0xf]
    %v4345 = vld [vmem:[#allocation4 + $0x9b8] sm:$0xf]
    %v4346 = vld [vmem:[#allocation4 + $0x9e8] sm:$0xf]
    %v4347 = vld [vmem:[#allocation4 + $0xa18] sm:$0xf]
    %v4348 = vld [vmem:[#allocation4 + $0xa48] sm:$0xf]
    %v4349 = vld [vmem:[#allocation4 + $0xa78] sm:$0xf]
    %v4350 = vld [vmem:[#allocation4 + $0xaa8] sm:$0xf]
    %v4351 = vld [vmem:[#allocation4 + $0xad8] sm:$0xf]
    %v4352 = vld [vmem:[#allocation4 + $0xb08] sm:$0xf]
    %v4353 = vld [vmem:[#allocation4 + $0xb38] sm:$0xf]
    %v4354 = vld [vmem:[#allocation4 + $0xb68] sm:$0xf]
    %v4355 = vld [vmem:[#allocation4 + $0xb98] sm:$0xf]
    %v4356 = vld [vmem:[#allocation4 + $0xbc8] sm:$0xf]
    %v4357 = vld [vmem:[#allocation4 + $0xbf8] sm:$0xf]
    %v4358 = vunpack.c.l.bf16 %v4294
    %v4359 = vunpack.c.l.bf16 %v4295
    %v4360 = vunpack.c.l.bf16 %v4296
    %v4361 = vunpack.c.l.bf16 %v4297
    %v4362 = vunpack.c.l.bf16 %v4298
    %v4363 = vunpack.c.l.bf16 %v4299
    %v4364 = vunpack.c.l.bf16 %v4300
    %v4365 = vunpack.c.l.bf16 %v4301
    %v4366 = vunpack.c.l.bf16 %v4302
    %v4367 = vunpack.c.l.bf16 %v4303
    %v4368 = vunpack.c.l.bf16 %v4304
    %v4369 = vunpack.c.l.bf16 %v4305
    %v4370 = vunpack.c.l.bf16 %v4306
    %v4371 = vunpack.c.l.bf16 %v4307
    %v4372 = vunpack.c.l.bf16 %v4308
    %v4373 = vunpack.c.l.bf16 %v4309
    %v4374 = vunpack.c.l.bf16 %v4310
    %v4375 = vunpack.c.l.bf16 %v4311
    %v4376 = vunpack.c.l.bf16 %v4312
    %v4377 = vunpack.c.l.bf16 %v4313
    %v4378 = vunpack.c.l.bf16 %v4314
    %v4379 = vunpack.c.l.bf16 %v4315
    %v4380 = vunpack.c.l.bf16 %v4316
    %v4381 = vunpack.c.l.bf16 %v4317
    %v4382 = vunpack.c.l.bf16 %v4318
    %v4383 = vunpack.c.l.bf16 %v4319
    %v4384 = vunpack.c.l.bf16 %v4320
    %v4385 = vunpack.c.l.bf16 %v4321
    %v4386 = vunpack.c.l.bf16 %v4322
    %v4387 = vunpack.c.l.bf16 %v4323
    %v4388 = vunpack.c.l.bf16 %v4324
    %v4389 = vunpack.c.l.bf16 %v4325
    %v4390 = vunpack.c.l.bf16 %v4326
    %v4391 = vunpack.c.l.bf16 %v4327
    %v4392 = vunpack.c.l.bf16 %v4328
    %v4393 = vunpack.c.l.bf16 %v4329
    %v4394 = vunpack.c.l.bf16 %v4330
    %v4395 = vunpack.c.l.bf16 %v4331
    %v4396 = vunpack.c.l.bf16 %v4332
    %v4397 = vunpack.c.l.bf16 %v4333
    %v4398 = vunpack.c.l.bf16 %v4334
    %v4399 = vunpack.c.l.bf16 %v4335
    %v4400 = vunpack.c.l.bf16 %v4336
    %v4401 = vunpack.c.l.bf16 %v4337
    %v4402 = vunpack.c.l.bf16 %v4338
    %v4403 = vunpack.c.l.bf16 %v4339
    %v4404 = vunpack.c.l.bf16 %v4340
    %v4405 = vunpack.c.l.bf16 %v4341
    %v4406 = vunpack.c.l.bf16 %v4342
    %v4407 = vunpack.c.l.bf16 %v4343
    %v4408 = vunpack.c.l.bf16 %v4344
    %v4409 = vunpack.c.l.bf16 %v4345
    %v4410 = vunpack.c.l.bf16 %v4346
    %v4411 = vunpack.c.l.bf16 %v4347
    %v4412 = vunpack.c.l.bf16 %v4348
    %v4413 = vunpack.c.l.bf16 %v4349
    %v4414 = vunpack.c.l.bf16 %v4350
    %v4415 = vunpack.c.l.bf16 %v4351
    %v4416 = vunpack.c.l.bf16 %v4352
    %v4417 = vunpack.c.l.bf16 %v4353
    %v4418 = vunpack.c.l.bf16 %v4354
    %v4419 = vunpack.c.l.bf16 %v4355
    %v4420 = vunpack.c.l.bf16 %v4356
    %v4421 = vunpack.c.l.bf16 %v4357
    %4422 = vmatprep.subr.mxu0 0.0
    %4423 = vmatpush1.msra.mxu0 %v4358
    %4424 = vmatprep.subr.mxu0 0.0
    %4425 = vmatpush1.msra.mxu0 %v4359
    %4426 = vmatprep.subr.mxu0 0.0
    %4427 = vmatpush1.msra.mxu0 %v4360
    %4428 = vmatprep.subr.mxu0 0.0
    %4429 = vmatpush1.msra.mxu0 %v4361
    %4430 = vmatprep.subr.mxu0 0.0
    %4431 = vmatpush1.msra.mxu0 %v4362
    %4432 = vmatprep.subr.mxu0 0.0
    %4433 = vmatpush1.msra.mxu0 %v4363
    %4434 = vmatprep.subr.mxu0 0.0
    %4435 = vmatpush1.msra.mxu0 %v4364
    %4436 = vmatprep.subr.mxu0 0.0
    %4437 = vmatpush1.msra.mxu0 %v4365
    %4438 = vmatprep.subr.mxu0 0.0
    %4439 = vmatpush1.msra.mxu0 %v4366
    %4440 = vmatprep.subr.mxu0 0.0
    %4441 = vmatpush1.msra.mxu0 %v4367
    %4442 = vmatprep.subr.mxu0 0.0
    %4443 = vmatpush1.msra.mxu0 %v4368
    %4444 = vmatprep.subr.mxu0 0.0
    %4445 = vmatpush1.msra.mxu0 %v4369
    %4446 = vmatprep.subr.mxu0 0.0
    %4447 = vmatpush1.msra.mxu0 %v4370
    %4448 = vmatprep.subr.mxu0 0.0
    %4449 = vmatpush1.msra.mxu0 %v4371
    %4450 = vmatprep.subr.mxu0 0.0
    %4451 = vmatpush1.msra.mxu0 %v4372
    %4452 = vmatprep.subr.mxu0 0.0
    %4453 = vmatpush1.msra.mxu0 %v4373
    %4454 = vmatprep.subr.mxu0 0.0
    %4455 = vmatpush1.msra.mxu0 %v4374
    %4456 = vmatprep.subr.mxu0 0.0
    %4457 = vmatpush1.msra.mxu0 %v4375
    %4458 = vmatprep.subr.mxu0 0.0
    %4459 = vmatpush1.msra.mxu0 %v4376
    %4460 = vmatprep.subr.mxu0 0.0
    %4461 = vmatpush1.msra.mxu0 %v4377
    %4462 = vmatprep.subr.mxu0 0.0
    %4463 = vmatpush1.msra.mxu0 %v4378
    %4464 = vmatprep.subr.mxu0 0.0
    %4465 = vmatpush1.msra.mxu0 %v4379
    %4466 = vmatprep.subr.mxu0 0.0
    %4467 = vmatpush1.msra.mxu0 %v4380
    %4468 = vmatprep.subr.mxu0 0.0
    %4469 = vmatpush1.msra.mxu0 %v4381
    %4470 = vmatprep.subr.mxu0 0.0
    %4471 = vmatpush1.msra.mxu0 %v4382
    %4472 = vmatprep.subr.mxu0 0.0
    %4473 = vmatpush1.msra.mxu0 %v4383
    %4474 = vmatprep.subr.mxu0 0.0
    %4475 = vmatpush1.msra.mxu0 %v4384
    %4476 = vmatprep.subr.mxu0 0.0
    %4477 = vmatpush1.msra.mxu0 %v4385
    %4478 = vmatprep.subr.mxu0 0.0
    %4479 = vmatpush1.msra.mxu0 %v4386
    %4480 = vmatprep.subr.mxu0 0.0
    %4481 = vmatpush1.msra.mxu0 %v4387
    %4482 = vmatprep.subr.mxu0 0.0
    %4483 = vmatpush1.msra.mxu0 %v4388
    %4484 = vmatprep.subr.mxu0 0.0
    %4485 = vmatpush1.msra.mxu0 %v4389
    %4486 = vmatprep.mubr.f32.mxu0 %v1802
    %4487 = vmatmul.mubr.f32.gmra.mrb[0].mxu0 %v1800
    %v4488 = vpop.f32.mrb[0].mxu0
    %v4489 = vadd.f32 0.0, %v4488
    %v4490 = vpop.f32.mrb[0].mxu0
    %4491 = vdwg.mxu0
    %4492 = vmatprep.subr.mxu0 0.0
    %4493 = vmatpush1.msra.mxu0 %v4390
    %4494 = vmatprep.subr.mxu0 0.0
    %4495 = vmatpush1.msra.mxu0 %v4391
    %4496 = vmatprep.subr.mxu0 0.0
    %4497 = vmatpush1.msra.mxu0 %v4392
    %4498 = vmatprep.subr.mxu0 0.0
    %4499 = vmatpush1.msra.mxu0 %v4393
    %4500 = vmatprep.subr.mxu0 0.0
    %4501 = vmatpush1.msra.mxu0 %v4394
    %4502 = vmatprep.subr.mxu0 0.0
    %4503 = vmatpush1.msra.mxu0 %v4395
    %4504 = vmatprep.subr.mxu0 0.0
    %4505 = vmatpush1.msra.mxu0 %v4396
    %4506 = vmatprep.subr.mxu0 0.0
    %4507 = vmatpush1.msra.mxu0 %v4397
    %4508 = vmatprep.subr.mxu0 0.0
    %4509 = vmatpush1.msra.mxu0 %v4398
    %4510 = vmatprep.subr.mxu0 0.0
    %4511 = vmatpush1.msra.mxu0 %v4399
    %4512 = vmatprep.subr.mxu0 0.0
    %4513 = vmatpush1.msra.mxu0 %v4400
    %4514 = vmatprep.subr.mxu0 0.0
    %4515 = vmatpush1.msra.mxu0 %v4401
    %4516 = vmatprep.subr.mxu0 0.0
    %4517 = vmatpush1.msra.mxu0 %v4402
    %4518 = vmatprep.subr.mxu0 0.0
    %4519 = vmatpush1.msra.mxu0 %v4403
    %4520 = vmatprep.subr.mxu0 0.0
    %4521 = vmatpush1.msra.mxu0 %v4404
    %4522 = vmatprep.subr.mxu0 0.0
    %4523 = vmatpush1.msra.mxu0 %v4405
    %4524 = vmatprep.subr.mxu0 0.0
    %4525 = vmatpush1.msra.mxu0 %v4406
    %4526 = vmatprep.subr.mxu0 0.0
    %4527 = vmatpush1.msra.mxu0 %v4407
    %4528 = vmatprep.subr.mxu0 0.0
    %4529 = vmatpush1.msra.mxu0 %v4408
    %4530 = vmatprep.subr.mxu0 0.0
    %4531 = vmatpush1.msra.mxu0 %v4409
    %4532 = vmatprep.subr.mxu0 0.0
    %4533 = vmatpush1.msra.mxu0 %v4410
    %4534 = vmatprep.subr.mxu0 0.0
    %4535 = vmatpush1.msra.mxu0 %v4411
    %4536 = vmatprep.subr.mxu0 0.0
    %4537 = vmatpush1.msra.mxu0 %v4412
    %4538 = vmatprep.subr.mxu0 0.0
    %4539 = vmatpush1.msra.mxu0 %v4413
    %4540 = vmatprep.subr.mxu0 0.0
    %4541 = vmatpush1.msra.mxu0 %v4414
    %4542 = vmatprep.subr.mxu0 0.0
    %4543 = vmatpush1.msra.mxu0 %v4415
    %4544 = vmatprep.subr.mxu0 0.0
    %4545 = vmatpush1.msra.mxu0 %v4416
    %4546 = vmatprep.subr.mxu0 0.0
    %4547 = vmatpush1.msra.mxu0 %v4417
    %4548 = vmatprep.subr.mxu0 0.0
    %4549 = vmatpush1.msra.mxu0 %v4418
    %4550 = vmatprep.subr.mxu0 0.0
    %4551 = vmatpush1.msra.mxu0 %v4419
    %4552 = vmatprep.subr.mxu0 0.0
    %4553 = vmatpush1.msra.mxu0 %v4420
    %4554 = vmatprep.subr.mxu0 0.0
    %4555 = vmatpush1.msra.mxu0 %v4421
    %4556 = vmatprep.mubr.f32.mxu0 %v1944
    %4557 = vmatmul.mubr.f32.gmra.mrb[0].mxu0 %v1942
    %v4558 = vpop.f32.mrb[0].mxu0
    %v4559 = vadd.f32 %v4489, %v4558
    %v4560 = vpop.f32.mrb[0].mxu0
    %4561 = vdwg.mxu0
    %v4562 = vadd.f32 %v4291, %v4559
    %v4563 = vld [vmem:[#allocation2 + $0x7] ss:$0 sm:$0xff]
    %v4564 = vadd.f32 %v4562, %v4563
    %v4565 = vld [vmem:[#allocation7 + $0xc] sm:$0xf]
    %v4566 = vld [vmem:[#allocation7 + $0x28] sm:$0xf]
    %v4567 = vld [vmem:[#allocation7 + $0x44] sm:$0xf]
    %v4568 = vld [vmem:[#allocation7 + $0x60] sm:$0xf]
    %v4569 = vld [vmem:[#allocation7 + $0x7c] sm:$0xf]
    %v4570 = vld [vmem:[#allocation7 + $0x98] sm:$0xf]
    %v4571 = vld [vmem:[#allocation7 + $0xb4] sm:$0xf]
    %v4572 = vld [vmem:[#allocation7 + $0xd0] sm:$0xf]
    %v4573 = vld [vmem:[#allocation7 + $0xec] sm:$0xf]
    %v4574 = vld [vmem:[#allocation7 + $0x108] sm:$0xf]
    %v4575 = vld [vmem:[#allocation7 + $0x124] sm:$0xf]
    %v4576 = vld [vmem:[#allocation7 + $0x140] sm:$0xf]
    %v4577 = vld [vmem:[#allocation7 + $0x15c] sm:$0xf]
    %v4578 = vld [vmem:[#allocation7 + $0x178] sm:$0xf]
    %v4579 = vld [vmem:[#allocation7 + $0x194] sm:$0xf]
    %v4580 = vld [vmem:[#allocation7 + $0x1b0] sm:$0xf]
    %v4581 = vunpack.c.l.bf16 %v4565
    %v4582 = vunpack.c.l.bf16 %v4566
    %v4583 = vunpack.c.l.bf16 %v4567
    %v4584 = vunpack.c.l.bf16 %v4568
    %v4585 = vunpack.c.l.bf16 %v4569
    %v4586 = vunpack.c.l.bf16 %v4570
    %v4587 = vunpack.c.l.bf16 %v4571
    %v4588 = vunpack.c.l.bf16 %v4572
    %v4589 = vunpack.c.l.bf16 %v4573
    %v4590 = vunpack.c.l.bf16 %v4574
    %v4591 = vunpack.c.l.bf16 %v4575
    %v4592 = vunpack.c.l.bf16 %v4576
    %v4593 = vunpack.c.l.bf16 %v4577
    %v4594 = vunpack.c.l.bf16 %v4578
    %v4595 = vunpack.c.l.bf16 %v4579
    %v4596 = vunpack.c.l.bf16 %v4580
    %v4597 = vld [vmem:[#allocation7 + $0x10] sm:$0xf]
    %v4598 = vld [vmem:[#allocation7 + $0x2c] sm:$0xf]
    %v4599 = vld [vmem:[#allocation7 + $0x48] sm:$0xf]
    %v4600 = vld [vmem:[#allocation7 + $0x64] sm:$0xf]
    %v4601 = vld [vmem:[#allocation7 + $0x80] sm:$0xf]
    %v4602 = vld [vmem:[#allocation7 + $0x9c] sm:$0xf]
    %v4603 = vld [vmem:[#allocation7 + $0xb8] sm:$0xf]
    %v4604 = vld [vmem:[#allocation7 + $0xd4] sm:$0xf]
    %v4605 = vld [vmem:[#allocation7 + $0xf0] sm:$0xf]
    %v4606 = vld [vmem:[#allocation7 + $0x10c] sm:$0xf]
    %v4607 = vld [vmem:[#allocation7 + $0x128] sm:$0xf]
    %v4608 = vld [vmem:[#allocation7 + $0x144] sm:$0xf]
    %v4609 = vld [vmem:[#allocation7 + $0x160] sm:$0xf]
    %v4610 = vld [vmem:[#allocation7 + $0x17c] sm:$0xf]
    %v4611 = vld [vmem:[#allocation7 + $0x198] sm:$0xf]
    %v4612 = vld [vmem:[#allocation7 + $0x1b4] sm:$0xf]
    %v4613 = vunpack.c.l.bf16 %v4597
    %v4614 = vunpack.c.l.bf16 %v4598
    %v4615 = vunpack.c.l.bf16 %v4599
    %v4616 = vunpack.c.l.bf16 %v4600
    %v4617 = vunpack.c.l.bf16 %v4601
    %v4618 = vunpack.c.l.bf16 %v4602
    %v4619 = vunpack.c.l.bf16 %v4603
    %v4620 = vunpack.c.l.bf16 %v4604
    %v4621 = vunpack.c.l.bf16 %v4605
    %v4622 = vunpack.c.l.bf16 %v4606
    %v4623 = vunpack.c.l.bf16 %v4607
    %v4624 = vunpack.c.l.bf16 %v4608
    %v4625 = vunpack.c.l.bf16 %v4609
    %v4626 = vunpack.c.l.bf16 %v4610
    %v4627 = vunpack.c.l.bf16 %v4611
    %v4628 = vunpack.c.l.bf16 %v4612
    %4629 = vmatprep.subr.mxu0 0.0
    %4630 = vmatpush1.msra.mxu0 %v4613
    %4631 = vmatprep.subr.mxu0 0.0
    %4632 = vmatpush1.msra.mxu0 %v4614
    %4633 = vmatprep.subr.mxu0 0.0
    %4634 = vmatpush1.msra.mxu0 %v4615
    %4635 = vmatprep.subr.mxu0 0.0
    %4636 = vmatpush1.msra.mxu0 %v4616
    %4637 = vmatprep.subr.mxu0 0.0
    %4638 = vmatpush1.msra.mxu0 %v4617
    %4639 = vmatprep.subr.mxu0 0.0
    %4640 = vmatpush1.msra.mxu0 %v4618
    %4641 = vmatprep.subr.mxu0 0.0
    %4642 = vmatpush1.msra.mxu0 %v4619
    %4643 = vmatprep.subr.mxu0 0.0
    %4644 = vmatpush1.msra.mxu0 %v4620
    %4645 = vmatprep.subr.mxu0 0.0
    %4646 = vmatpush1.msra.mxu0 %v4621
    %4647 = vmatprep.subr.mxu0 0.0
    %4648 = vmatpush1.msra.mxu0 %v4622
    %4649 = vmatprep.subr.mxu0 0.0
    %4650 = vmatpush1.msra.mxu0 %v4623
    %4651 = vmatprep.subr.mxu0 0.0
    %4652 = vmatpush1.msra.mxu0 %v4624
    %4653 = vmatprep.subr.mxu0 0.0
    %4654 = vmatpush1.msra.mxu0 %v4625
    %4655 = vmatprep.subr.mxu0 0.0
    %4656 = vmatpush1.msra.mxu0 %v4626
    %4657 = vmatprep.subr.mxu0 0.0
    %4658 = vmatpush1.msra.mxu0 %v4627
    %4659 = vmatprep.subr.mxu0 0.0
    %4660 = vmatpush1.msra.mxu0 %v4628
    %4661 = vmatprep.subr.mxu0 0.0
    %4662 = vmatpush1.msra.mxu0 0.0
    %4663 = vmatprep.subr.mxu0 0.0
    %4664 = vmatpush1.msra.mxu0 0.0
    %4665 = vmatprep.subr.mxu0 0.0
    %4666 = vmatpush1.msra.mxu0 0.0
    %4667 = vmatprep.subr.mxu0 0.0
    %4668 = vmatpush1.msra.mxu0 0.0
    %4669 = vmatprep.subr.mxu0 0.0
    %4670 = vmatpush1.msra.mxu0 0.0
    %4671 = vmatprep.subr.mxu0 0.0
    %4672 = vmatpush1.msra.mxu0 0.0
    %4673 = vmatprep.subr.mxu0 0.0
    %4674 = vmatpush1.msra.mxu0 0.0
    %4675 = vmatprep.subr.mxu0 0.0
    %4676 = vmatpush1.msra.mxu0 0.0
    %4677 = vmatprep.subr.mxu0 0.0
    %4678 = vmatpush1.msra.mxu0 0.0
    %4679 = vmatprep.subr.mxu0 0.0
    %4680 = vmatpush1.msra.mxu0 0.0
    %4681 = vmatprep.subr.mxu0 0.0
    %4682 = vmatpush1.msra.mxu0 0.0
    %4683 = vmatprep.subr.mxu0 0.0
    %4684 = vmatpush1.msra.mxu0 0.0
    %4685 = vmatprep.subr.mxu0 0.0
    %4686 = vmatpush1.msra.mxu0 0.0
    %4687 = vmatprep.subr.mxu0 0.0
    %4688 = vmatpush1.msra.mxu0 0.0
    %4689 = vmatprep.subr.mxu0 0.0
    %4690 = vmatpush1.msra.mxu0 0.0
    %4691 = vmatprep.subr.mxu0 0.0
    %4692 = vmatpush1.msra.mxu0 0.0
    %4693 = vmatprep.mubr.f32.mxu0 0.0
    %4694 = vmatmul.mubr.f32.gmra.mrb[0].mxu0 %v2343
    %v4695 = vpop.f32.mrb[0].mxu0
    %v4696 = vadd.f32 0.0, %v4695
    %v4697 = vpop.f32.mrb[0].mxu0
    %4698 = vdwg.mxu0
    %4699 = vmatprep.subr.mxu0 0.0
    %4700 = vmatpush1.msra.mxu0 %v4581
    %4701 = vmatprep.subr.mxu0 0.0
    %4702 = vmatpush1.msra.mxu0 %v4582
    %4703 = vmatprep.subr.mxu0 0.0
    %4704 = vmatpush1.msra.mxu0 %v4583
    %4705 = vmatprep.subr.mxu0 0.0
    %4706 = vmatpush1.msra.mxu0 %v4584
    %4707 = vmatprep.subr.mxu0 0.0
    %4708 = vmatpush1.msra.mxu0 %v4585
    %4709 = vmatprep.subr.mxu0 0.0
    %4710 = vmatpush1.msra.mxu0 %v4586
    %4711 = vmatprep.subr.mxu0 0.0
    %4712 = vmatpush1.msra.mxu0 %v4587
    %4713 = vmatprep.subr.mxu0 0.0
    %4714 = vmatpush1.msra.mxu0 %v4588
    %4715 = vmatprep.subr.mxu0 0.0
    %4716 = vmatpush1.msra.mxu0 %v4589
    %4717 = vmatprep.subr.mxu0 0.0
    %4718 = vmatpush1.msra.mxu0 %v4590
    %4719 = vmatprep.subr.mxu0 0.0
    %4720 = vmatpush1.msra.mxu0 %v4591
    %4721 = vmatprep.subr.mxu0 0.0
    %4722 = vmatpush1.msra.mxu0 %v4592
    %4723 = vmatprep.subr.mxu0 0.0
    %4724 = vmatpush1.msra.mxu0 %v4593
    %4725 = vmatprep.subr.mxu0 0.0
    %4726 = vmatpush1.msra.mxu0 %v4594
    %4727 = vmatprep.subr.mxu0 0.0
    %4728 = vmatpush1.msra.mxu0 %v4595
    %4729 = vmatprep.subr.mxu0 0.0
    %4730 = vmatpush1.msra.mxu0 %v4596
    %4731 = vmatprep.subr.mxu0 0.0
    %4732 = vmatpush1.msra.mxu0 0.0
    %4733 = vmatprep.subr.mxu0 0.0
    %4734 = vmatpush1.msra.mxu0 0.0
    %4735 = vmatprep.subr.mxu0 0.0
    %4736 = vmatpush1.msra.mxu0 0.0
    %4737 = vmatprep.subr.mxu0 0.0
    %4738 = vmatpush1.msra.mxu0 0.0
    %4739 = vmatprep.subr.mxu0 0.0
    %4740 = vmatpush1.msra.mxu0 0.0
    %4741 = vmatprep.subr.mxu0 0.0
    %4742 = vmatpush1.msra.mxu0 0.0
    %4743 = vmatprep.subr.mxu0 0.0
    %4744 = vmatpush1.msra.mxu0 0.0
    %4745 = vmatprep.subr.mxu0 0.0
    %4746 = vmatpush1.msra.mxu0 0.0
    %4747 = vmatprep.subr.mxu0 0.0
    %4748 = vmatpush1.msra.mxu0 0.0
    %4749 = vmatprep.subr.mxu0 0.0
    %4750 = vmatpush1.msra.mxu0 0.0
    %4751 = vmatprep.subr.mxu0 0.0
    %4752 = vmatpush1.msra.mxu0 0.0
    %4753 = vmatprep.subr.mxu0 0.0
    %4754 = vmatpush1.msra.mxu0 0.0
    %4755 = vmatprep.subr.mxu0 0.0
    %4756 = vmatpush1.msra.mxu0 0.0
    %4757 = vmatprep.subr.mxu0 0.0
    %4758 = vmatpush1.msra.mxu0 0.0
    %4759 = vmatprep.subr.mxu0 0.0
    %4760 = vmatpush1.msra.mxu0 0.0
    %4761 = vmatprep.subr.mxu0 0.0
    %4762 = vmatpush1.msra.mxu0 0.0
    %4763 = vmatprep.mubr.f32.mxu0 0.0
    %4764 = vmatmul.mubr.f32.gmra.mrb[0].mxu0 %v4564
    %v4765 = vpop.f32.mrb[0].mxu0
    %v4766 = vadd.f32 %v4696, %v4765
    %v4767 = vpop.f32.mrb[0].mxu0
    %4768 = vdwg.mxu0
    %v4769 = vld [vmem:[#allocation2 + $0x46] ss:$0 sm:$0xff]
    %v4770 = vadd.f32 %v4766, %v4769
    %v4771 = vsub.f32 0.0, %v4770
    %v4772 = vmul.f32 %v4771, 1.442695
    %v4773 = vpow.pop %v4772
    %v4774 = vadd.f32 %v4773, 1.0
    %v4775 = vrcp.pop %v4774
    %v4776 = vmul.f32 1.0, %v4775
    %v4777 = vmul.f32 %v4770, %v4776
    %v4778 = vld [vmem:[#allocation2 + $0x47] ss:$0 sm:$0xff]
    %v4779 = vld [vmem:[#allocation2 + $0x60] ss:$0 sm:$0xff]
    %4780 = vadd.xlane.f32.xlu0 %v4777
    %v4781 = vpop.xlane.xlu0 %4780
    %v4782 = vmul.f32 %v4781, %v2332
    %v4783 = vsub.f32 %v4777, %v4782
    %v4784 = vmul.f32 %v4783, %v4783
    %4785 = vadd.xlane.f32.xlu0 %v4784
    %v4786 = vpop.xlane.xlu0 %4785
    %v4787 = vmul.f32 %v4786, %v2332
    %v4788 = vadd.f32 %v4787, 1e-05
    %v4789 = vrsqrt.pop %v4788
    %v4790 = vmul.f32 %v4783, %v4789
    %v4791 = vmul.f32 %v4790, %v4778
    %v4792 = vadd.f32 %v4791, %v4779
    %v4793 = vld [vmem:[#allocation4 + $0x2c] sm:$0xf]
    %v4794 = vld [vmem:[#allocation4 + $0x5c] sm:$0xf]
    %v4795 = vld [vmem:[#allocation4 + $0x8c] sm:$0xf]
    %v4796 = vld [vmem:[#allocation4 + $0xbc] sm:$0xf]
    %v4797 = vld [vmem:[#allocation4 + $0xec] sm:$0xf]
    %v4798 = vld [vmem:[#allocation4 + $0x11c] sm:$0xf]
    %v4799 = vld [vmem:[#allocation4 + $0x14c] sm:$0xf]
    %v4800 = vld [vmem:[#allocation4 + $0x17c] sm:$0xf]
    %v4801 = vld [vmem:[#allocation4 + $0x1ac] sm:$0xf]
    %v4802 = vld [vmem:[#allocation4 + $0x1dc] sm:$0xf]
    %v4803 = vld [vmem:[#allocation4 + $0x20c] sm:$0xf]
    %v4804 = vld [vmem:[#allocation4 + $0x23c] sm:$0xf]
    %v4805 = vld [vmem:[#allocation4 + $0x26c] sm:$0xf]
    %v4806 = vld [vmem:[#allocation4 + $0x29c] sm:$0xf]
    %v4807 = vld [vmem:[#allocation4 + $0x2cc] sm:$0xf]
    %v4808 = vld [vmem:[#allocation4 + $0x2fc] sm:$0xf]
    %v4809 = vld [vmem:[#allocation4 + $0x32c] sm:$0xf]
    %v4810 = vld [vmem:[#allocation4 + $0x35c] sm:$0xf]
    %v4811 = vld [vmem:[#allocation4 + $0x38c] sm:$0xf]
    %v4812 = vld [vmem:[#allocation4 + $0x3bc] sm:$0xf]
    %v4813 = vld [vmem:[#allocation4 + $0x3ec] sm:$0xf]
    %v4814 = vld [vmem:[#allocation4 + $0x41c] sm:$0xf]
    %v4815 = vld [vmem:[#allocation4 + $0x44c] sm:$0xf]
    %v4816 = vld [vmem:[#allocation4 + $0x47c] sm:$0xf]
    %v4817 = vld [vmem:[#allocation4 + $0x4ac] sm:$0xf]
    %v4818 = vld [vmem:[#allocation4 + $0x4dc] sm:$0xf]
    %v4819 = vld [vmem:[#allocation4 + $0x50c] sm:$0xf]
    %v4820 = vld [vmem:[#allocation4 + $0x53c] sm:$0xf]
    %v4821 = vld [vmem:[#allocation4 + $0x56c] sm:$0xf]
    %v4822 = vld [vmem:[#allocation4 + $0x59c] sm:$0xf]
    %v4823 = vld [vmem:[#allocation4 + $0x5cc] sm:$0xf]
    %v4824 = vld [vmem:[#allocation4 + $0x5fc] sm:$0xf]
    %v4825 = vld [vmem:[#allocation4 + $0x62c] sm:$0xf]
    %v4826 = vld [vmem:[#allocation4 + $0x65c] sm:$0xf]
    %v4827 = vld [vmem:[#allocation4 + $0x68c] sm:$0xf]
    %v4828 = vld [vmem:[#allocation4 + $0x6bc] sm:$0xf]
    %v4829 = vld [vmem:[#allocation4 + $0x6ec] sm:$0xf]
    %v4830 = vld [vmem:[#allocation4 + $0x71c] sm:$0xf]
    %v4831 = vld [vmem:[#allocation4 + $0x74c] sm:$0xf]
    %v4832 = vld [vmem:[#allocation4 + $0x77c] sm:$0xf]
    %v4833 = vld [vmem:[#allocation4 + $0x7ac] sm:$0xf]
    %v4834 = vld [vmem:[#allocation4 + $0x7dc] sm:$0xf]
    %v4835 = vld [vmem:[#allocation4 + $0x80c] sm:$0xf]
    %v4836 = vld [vmem:[#allocation4 + $0x83c] sm:$0xf]
    %v4837 = vld [vmem:[#allocation4 + $0x86c] sm:$0xf]
    %v4838 = vld [vmem:[#allocation4 + $0x89c] sm:$0xf]
    %v4839 = vld [vmem:[#allocation4 + $0x8cc] sm:$0xf]
    %v4840 = vld [vmem:[#allocation4 + $0x8fc] sm:$0xf]
    %v4841 = vld [vmem:[#allocation4 + $0x92c] sm:$0xf]
    %v4842 = vld [vmem:[#allocation4 + $0x95c] sm:$0xf]
    %v4843 = vld [vmem:[#allocation4 + $0x98c] sm:$0xf]
    %v4844 = vld [vmem:[#allocation4 + $0x9bc] sm:$0xf]
    %v4845 = vld [vmem:[#allocation4 + $0x9ec] sm:$0xf]
    %v4846 = vld [vmem:[#allocation4 + $0xa1c] sm:$0xf]
    %v4847 = vld [vmem:[#allocation4 + $0xa4c] sm:$0xf]
    %v4848 = vld [vmem:[#allocation4 + $0xa7c] sm:$0xf]
    %v4849 = vld [vmem:[#allocation4 + $0xaac] sm:$0xf]
    %v4850 = vld [vmem:[#allocation4 + $0xadc] sm:$0xf]
    %v4851 = vld [vmem:[#allocation4 + $0xb0c] sm:$0xf]
    %v4852 = vld [vmem:[#allocation4 + $0xb3c] sm:$0xf]
    %v4853 = vld [vmem:[#allocation4 + $0xb6c] sm:$0xf]
    %v4854 = vld [vmem:[#allocation4 + $0xb9c] sm:$0xf]
    %v4855 = vld [vmem:[#allocation4 + $0xbcc] sm:$0xf]
    %v4856 = vld [vmem:[#allocation4 + $0xbfc] sm:$0xf]
    %v4857 = vunpack.c.l.bf16 %v4793
    %v4858 = vunpack.c.l.bf16 %v4794
    %v4859 = vunpack.c.l.bf16 %v4795
    %v4860 = vunpack.c.l.bf16 %v4796
    %v4861 = vunpack.c.l.bf16 %v4797
    %v4862 = vunpack.c.l.bf16 %v4798
    %v4863 = vunpack.c.l.bf16 %v4799
    %v4864 = vunpack.c.l.bf16 %v4800
    %v4865 = vunpack.c.l.bf16 %v4801
    %v4866 = vunpack.c.l.bf16 %v4802
    %v4867 = vunpack.c.l.bf16 %v4803
    %v4868 = vunpack.c.l.bf16 %v4804
    %v4869 = vunpack.c.l.bf16 %v4805
    %v4870 = vunpack.c.l.bf16 %v4806
    %v4871 = vunpack.c.l.bf16 %v4807
    %v4872 = vunpack.c.l.bf16 %v4808
    %v4873 = vunpack.c.l.bf16 %v4809
    %v4874 = vunpack.c.l.bf16 %v4810
    %v4875 = vunpack.c.l.bf16 %v4811
    %v4876 = vunpack.c.l.bf16 %v4812
    %v4877 = vunpack.c.l.bf16 %v4813
    %v4878 = vunpack.c.l.bf16 %v4814
    %v4879 = vunpack.c.l.bf16 %v4815
    %v4880 = vunpack.c.l.bf16 %v4816
    %v4881 = vunpack.c.l.bf16 %v4817
    %v4882 = vunpack.c.l.bf16 %v4818
    %v4883 = vunpack.c.l.bf16 %v4819
    %v4884 = vunpack.c.l.bf16 %v4820
    %v4885 = vunpack.c.l.bf16 %v4821
    %v4886 = vunpack.c.l.bf16 %v4822
    %v4887 = vunpack.c.l.bf16 %v4823
    %v4888 = vunpack.c.l.bf16 %v4824
    %v4889 = vunpack.c.l.bf16 %v4825
    %v4890 = vunpack.c.l.bf16 %v4826
    %v4891 = vunpack.c.l.bf16 %v4827
    %v4892 = vunpack.c.l.bf16 %v4828
    %v4893 = vunpack.c.l.bf16 %v4829
    %v4894 = vunpack.c.l.bf16 %v4830
    %v4895 = vunpack.c.l.bf16 %v4831
    %v4896 = vunpack.c.l.bf16 %v4832
    %v4897 = vunpack.c.l.bf16 %v4833
    %v4898 = vunpack.c.l.bf16 %v4834
    %v4899 = vunpack.c.l.bf16 %v4835
    %v4900 = vunpack.c.l.bf16 %v4836
    %v4901 = vunpack.c.l.bf16 %v4837
    %v4902 = vunpack.c.l.bf16 %v4838
    %v4903 = vunpack.c.l.bf16 %v4839
    %v4904 = vunpack.c.l.bf16 %v4840
    %v4905 = vunpack.c.l.bf16 %v4841
    %v4906 = vunpack.c.l.bf16 %v4842
    %v4907 = vunpack.c.l.bf16 %v4843
    %v4908 = vunpack.c.l.bf16 %v4844
    %v4909 = vunpack.c.l.bf16 %v4845
    %v4910 = vunpack.c.l.bf16 %v4846
    %v4911 = vunpack.c.l.bf16 %v4847
    %v4912 = vunpack.c.l.bf16 %v4848
    %v4913 = vunpack.c.l.bf16 %v4849
    %v4914 = vunpack.c.l.bf16 %v4850
    %v4915 = vunpack.c.l.bf16 %v4851
    %v4916 = vunpack.c.l.bf16 %v4852
    %v4917 = vunpack.c.l.bf16 %v4853
    %v4918 = vunpack.c.l.bf16 %v4854
    %v4919 = vunpack.c.l.bf16 %v4855
    %v4920 = vunpack.c.l.bf16 %v4856
    %4921 = vmatprep.subr.mxu0 0.0
    %4922 = vmatpush1.msra.mxu0 %v4857
    %4923 = vmatprep.subr.mxu0 0.0
    %4924 = vmatpush1.msra.mxu0 %v4858
    %4925 = vmatprep.subr.mxu0 0.0
    %4926 = vmatpush1.msra.mxu0 %v4859
    %4927 = vmatprep.subr.mxu0 0.0
    %4928 = vmatpush1.msra.mxu0 %v4860
    %4929 = vmatprep.subr.mxu0 0.0
    %4930 = vmatpush1.msra.mxu0 %v4861
    %4931 = vmatprep.subr.mxu0 0.0
    %4932 = vmatpush1.msra.mxu0 %v4862
    %4933 = vmatprep.subr.mxu0 0.0
    %4934 = vmatpush1.msra.mxu0 %v4863
    %4935 = vmatprep.subr.mxu0 0.0
    %4936 = vmatpush1.msra.mxu0 %v4864
    %4937 = vmatprep.subr.mxu0 0.0
    %4938 = vmatpush1.msra.mxu0 %v4865
    %4939 = vmatprep.subr.mxu0 0.0
    %4940 = vmatpush1.msra.mxu0 %v4866
    %4941 = vmatprep.subr.mxu0 0.0
    %4942 = vmatpush1.msra.mxu0 %v4867
    %4943 = vmatprep.subr.mxu0 0.0
    %4944 = vmatpush1.msra.mxu0 %v4868
    %4945 = vmatprep.subr.mxu0 0.0
    %4946 = vmatpush1.msra.mxu0 %v4869
    %4947 = vmatprep.subr.mxu0 0.0
    %4948 = vmatpush1.msra.mxu0 %v4870
    %4949 = vmatprep.subr.mxu0 0.0
    %4950 = vmatpush1.msra.mxu0 %v4871
    %4951 = vmatprep.subr.mxu0 0.0
    %4952 = vmatpush1.msra.mxu0 %v4872
    %4953 = vmatprep.subr.mxu0 0.0
    %4954 = vmatpush1.msra.mxu0 %v4873
    %4955 = vmatprep.subr.mxu0 0.0
    %4956 = vmatpush1.msra.mxu0 %v4874
    %4957 = vmatprep.subr.mxu0 0.0
    %4958 = vmatpush1.msra.mxu0 %v4875
    %4959 = vmatprep.subr.mxu0 0.0
    %4960 = vmatpush1.msra.mxu0 %v4876
    %4961 = vmatprep.subr.mxu0 0.0
    %4962 = vmatpush1.msra.mxu0 %v4877
    %4963 = vmatprep.subr.mxu0 0.0
    %4964 = vmatpush1.msra.mxu0 %v4878
    %4965 = vmatprep.subr.mxu0 0.0
    %4966 = vmatpush1.msra.mxu0 %v4879
    %4967 = vmatprep.subr.mxu0 0.0
    %4968 = vmatpush1.msra.mxu0 %v4880
    %4969 = vmatprep.subr.mxu0 0.0
    %4970 = vmatpush1.msra.mxu0 %v4881
    %4971 = vmatprep.subr.mxu0 0.0
    %4972 = vmatpush1.msra.mxu0 %v4882
    %4973 = vmatprep.subr.mxu0 0.0
    %4974 = vmatpush1.msra.mxu0 %v4883
    %4975 = vmatprep.subr.mxu0 0.0
    %4976 = vmatpush1.msra.mxu0 %v4884
    %4977 = vmatprep.subr.mxu0 0.0
    %4978 = vmatpush1.msra.mxu0 %v4885
    %4979 = vmatprep.subr.mxu0 0.0
    %4980 = vmatpush1.msra.mxu0 %v4886
    %4981 = vmatprep.subr.mxu0 0.0
    %4982 = vmatpush1.msra.mxu0 %v4887
    %4983 = vmatprep.subr.mxu0 0.0
    %4984 = vmatpush1.msra.mxu0 %v4888
    %4985 = vmatprep.mubr.f32.mxu0 %v1802
    %4986 = vmatmul.mubr.f32.gmra.mrb[0].mxu0 %v1800
    %v4987 = vpop.f32.mrb[0].mxu0
    %v4988 = vadd.f32 0.0, %v4987
    %v4989 = vpop.f32.mrb[0].mxu0
    %4990 = vdwg.mxu0
    %4991 = vmatprep.subr.mxu0 0.0
    %4992 = vmatpush1.msra.mxu0 %v4889
    %4993 = vmatprep.subr.mxu0 0.0
    %4994 = vmatpush1.msra.mxu0 %v4890
    %4995 = vmatprep.subr.mxu0 0.0
    %4996 = vmatpush1.msra.mxu0 %v4891
    %4997 = vmatprep.subr.mxu0 0.0
    %4998 = vmatpush1.msra.mxu0 %v4892
    %4999 = vmatprep.subr.mxu0 0.0
    %5000 = vmatpush1.msra.mxu0 %v4893
    %5001 = vmatprep.subr.mxu0 0.0
    %5002 = vmatpush1.msra.mxu0 %v4894
    %5003 = vmatprep.subr.mxu0 0.0
    %5004 = vmatpush1.msra.mxu0 %v4895
    %5005 = vmatprep.subr.mxu0 0.0
    %5006 = vmatpush1.msra.mxu0 %v4896
    %5007 = vmatprep.subr.mxu0 0.0
    %5008 = vmatpush1.msra.mxu0 %v4897
    %5009 = vmatprep.subr.mxu0 0.0
    %5010 = vmatpush1.msra.mxu0 %v4898
    %5011 = vmatprep.subr.mxu0 0.0
    %5012 = vmatpush1.msra.mxu0 %v4899
    %5013 = vmatprep.subr.mxu0 0.0
    %5014 = vmatpush1.msra.mxu0 %v4900
    %5015 = vmatprep.subr.mxu0 0.0
    %5016 = vmatpush1.msra.mxu0 %v4901
    %5017 = vmatprep.subr.mxu0 0.0
    %5018 = vmatpush1.msra.mxu0 %v4902
    %5019 = vmatprep.subr.mxu0 0.0
    %5020 = vmatpush1.msra.mxu0 %v4903
    %5021 = vmatprep.subr.mxu0 0.0
    %5022 = vmatpush1.msra.mxu0 %v4904
    %5023 = vmatprep.subr.mxu0 0.0
    %5024 = vmatpush1.msra.mxu0 %v4905
    %5025 = vmatprep.subr.mxu0 0.0
    %5026 = vmatpush1.msra.mxu0 %v4906
    %5027 = vmatprep.subr.mxu0 0.0
    %5028 = vmatpush1.msra.mxu0 %v4907
    %5029 = vmatprep.subr.mxu0 0.0
    %5030 = vmatpush1.msra.mxu0 %v4908
    %5031 = vmatprep.subr.mxu0 0.0
    %5032 = vmatpush1.msra.mxu0 %v4909
    %5033 = vmatprep.subr.mxu0 0.0
    %5034 = vmatpush1.msra.mxu0 %v4910
    %5035 = vmatprep.subr.mxu0 0.0
    %5036 = vmatpush1.msra.mxu0 %v4911
    %5037 = vmatprep.subr.mxu0 0.0
    %5038 = vmatpush1.msra.mxu0 %v4912
    %5039 = vmatprep.subr.mxu0 0.0
    %5040 = vmatpush1.msra.mxu0 %v4913
    %5041 = vmatprep.subr.mxu0 0.0
    %5042 = vmatpush1.msra.mxu0 %v4914
    %5043 = vmatprep.subr.mxu0 0.0
    %5044 = vmatpush1.msra.mxu0 %v4915
    %5045 = vmatprep.subr.mxu0 0.0
    %5046 = vmatpush1.msra.mxu0 %v4916
    %5047 = vmatprep.subr.mxu0 0.0
    %5048 = vmatpush1.msra.mxu0 %v4917
    %5049 = vmatprep.subr.mxu0 0.0
    %5050 = vmatpush1.msra.mxu0 %v4918
    %5051 = vmatprep.subr.mxu0 0.0
    %5052 = vmatpush1.msra.mxu0 %v4919
    %5053 = vmatprep.subr.mxu0 0.0
    %5054 = vmatpush1.msra.mxu0 %v4920
    %5055 = vmatprep.mubr.f32.mxu0 %v1944
    %5056 = vmatmul.mubr.f32.gmra.mrb[0].mxu0 %v1942
    %v5057 = vpop.f32.mrb[0].mxu0
    %v5058 = vadd.f32 %v4988, %v5057
    %v5059 = vpop.f32.mrb[0].mxu0
    %5060 = vdwg.mxu0
    %v5061 = vadd.f32 %v4792, %v5058
    %v5062 = vld [vmem:[#allocation2 + $0x20] ss:$0 sm:$0xff]
    %v5063 = vadd.f32 %v5061, %v5062
    %v5064 = vld [vmem:[#allocation7 + $0x14] sm:$0xf]
    %v5065 = vld [vmem:[#allocation7 + $0x30] sm:$0xf]
    %v5066 = vld [vmem:[#allocation7 + $0x4c] sm:$0xf]
    %v5067 = vld [vmem:[#allocation7 + $0x68] sm:$0xf]
    %v5068 = vld [vmem:[#allocation7 + $0x84] sm:$0xf]
    %v5069 = vld [vmem:[#allocation7 + $0xa0] sm:$0xf]
    %v5070 = vld [vmem:[#allocation7 + $0xbc] sm:$0xf]
    %v5071 = vld [vmem:[#allocation7 + $0xd8] sm:$0xf]
    %v5072 = vld [vmem:[#allocation7 + $0xf4] sm:$0xf]
    %v5073 = vld [vmem:[#allocation7 + $0x110] sm:$0xf]
    %v5074 = vld [vmem:[#allocation7 + $0x12c] sm:$0xf]
    %v5075 = vld [vmem:[#allocation7 + $0x148] sm:$0xf]
    %v5076 = vld [vmem:[#allocation7 + $0x164] sm:$0xf]
    %v5077 = vld [vmem:[#allocation7 + $0x180] sm:$0xf]
    %v5078 = vld [vmem:[#allocation7 + $0x19c] sm:$0xf]
    %v5079 = vld [vmem:[#allocation7 + $0x1b8] sm:$0xf]
    %v5080 = vunpack.c.l.bf16 %v5064
    %v5081 = vunpack.c.l.bf16 %v5065
    %v5082 = vunpack.c.l.bf16 %v5066
    %v5083 = vunpack.c.l.bf16 %v5067
    %v5084 = vunpack.c.l.bf16 %v5068
    %v5085 = vunpack.c.l.bf16 %v5069
    %v5086 = vunpack.c.l.bf16 %v5070
    %v5087 = vunpack.c.l.bf16 %v5071
    %v5088 = vunpack.c.l.bf16 %v5072
    %v5089 = vunpack.c.l.bf16 %v5073
    %v5090 = vunpack.c.l.bf16 %v5074
    %v5091 = vunpack.c.l.bf16 %v5075
    %v5092 = vunpack.c.l.bf16 %v5076
    %v5093 = vunpack.c.l.bf16 %v5077
    %v5094 = vunpack.c.l.bf16 %v5078
    %v5095 = vunpack.c.l.bf16 %v5079
    %v5096 = vld [vmem:[#allocation7 + $0x18] sm:$0xf]
    %v5097 = vld [vmem:[#allocation7 + $0x34] sm:$0xf]
    %v5098 = vld [vmem:[#allocation7 + $0x50] sm:$0xf]
    %v5099 = vld [vmem:[#allocation7 + $0x6c] sm:$0xf]
    %v5100 = vld [vmem:[#allocation7 + $0x88] sm:$0xf]
    %v5101 = vld [vmem:[#allocation7 + $0xa4] sm:$0xf]
    %v5102 = vld [vmem:[#allocation7 + $0xc0] sm:$0xf]
    %v5103 = vld [vmem:[#allocation7 + $0xdc] sm:$0xf]
    %v5104 = vld [vmem:[#allocation7 + $0xf8] sm:$0xf]
    %v5105 = vld [vmem:[#allocation7 + $0x114] sm:$0xf]
    %v5106 = vld [vmem:[#allocation7 + $0x130] sm:$0xf]
    %v5107 = vld [vmem:[#allocation7 + $0x14c] sm:$0xf]
    %v5108 = vld [vmem:[#allocation7 + $0x168] sm:$0xf]
    %v5109 = vld [vmem:[#allocation7 + $0x184] sm:$0xf]
    %v5110 = vld [vmem:[#allocation7 + $0x1a0] sm:$0xf]
    %v5111 = vld [vmem:[#allocation7 + $0x1bc] sm:$0xf]
    %v5112 = vunpack.c.l.bf16 %v5096
    %v5113 = vunpack.c.l.bf16 %v5097
    %v5114 = vunpack.c.l.bf16 %v5098
    %v5115 = vunpack.c.l.bf16 %v5099
    %v5116 = vunpack.c.l.bf16 %v5100
    %v5117 = vunpack.c.l.bf16 %v5101
    %v5118 = vunpack.c.l.bf16 %v5102
    %v5119 = vunpack.c.l.bf16 %v5103
    %v5120 = vunpack.c.l.bf16 %v5104
    %v5121 = vunpack.c.l.bf16 %v5105
    %v5122 = vunpack.c.l.bf16 %v5106
    %v5123 = vunpack.c.l.bf16 %v5107
    %v5124 = vunpack.c.l.bf16 %v5108
    %v5125 = vunpack.c.l.bf16 %v5109
    %v5126 = vunpack.c.l.bf16 %v5110
    %v5127 = vunpack.c.l.bf16 %v5111
    %5128 = vmatprep.subr.mxu0 0.0
    %5129 = vmatpush1.msra.mxu0 %v5112
    %5130 = vmatprep.subr.mxu0 0.0
    %5131 = vmatpush1.msra.mxu0 %v5113
    %5132 = vmatprep.subr.mxu0 0.0
    %5133 = vmatpush1.msra.mxu0 %v5114
    %5134 = vmatprep.subr.mxu0 0.0
    %5135 = vmatpush1.msra.mxu0 %v5115
    %5136 = vmatprep.subr.mxu0 0.0
    %5137 = vmatpush1.msra.mxu0 %v5116
    %5138 = vmatprep.subr.mxu0 0.0
    %5139 = vmatpush1.msra.mxu0 %v5117
    %5140 = vmatprep.subr.mxu0 0.0
    %5141 = vmatpush1.msra.mxu0 %v5118
    %5142 = vmatprep.subr.mxu0 0.0
    %5143 = vmatpush1.msra.mxu0 %v5119
    %5144 = vmatprep.subr.mxu0 0.0
    %5145 = vmatpush1.msra.mxu0 %v5120
    %5146 = vmatprep.subr.mxu0 0.0
    %5147 = vmatpush1.msra.mxu0 %v5121
    %5148 = vmatprep.subr.mxu0 0.0
    %5149 = vmatpush1.msra.mxu0 %v5122
    %5150 = vmatprep.subr.mxu0 0.0
    %5151 = vmatpush1.msra.mxu0 %v5123
    %5152 = vmatprep.subr.mxu0 0.0
    %5153 = vmatpush1.msra.mxu0 %v5124
    %5154 = vmatprep.subr.mxu0 0.0
    %5155 = vmatpush1.msra.mxu0 %v5125
    %5156 = vmatprep.subr.mxu0 0.0
    %5157 = vmatpush1.msra.mxu0 %v5126
    %5158 = vmatprep.subr.mxu0 0.0
    %5159 = vmatpush1.msra.mxu0 %v5127
    %5160 = vmatprep.subr.mxu0 0.0
    %5161 = vmatpush1.msra.mxu0 0.0
    %5162 = vmatprep.subr.mxu0 0.0
    %5163 = vmatpush1.msra.mxu0 0.0
    %5164 = vmatprep.subr.mxu0 0.0
    %5165 = vmatpush1.msra.mxu0 0.0
    %5166 = vmatprep.subr.mxu0 0.0
    %5167 = vmatpush1.msra.mxu0 0.0
    %5168 = vmatprep.subr.mxu0 0.0
    %5169 = vmatpush1.msra.mxu0 0.0
    %5170 = vmatprep.subr.mxu0 0.0
    %5171 = vmatpush1.msra.mxu0 0.0
    %5172 = vmatprep.subr.mxu0 0.0
    %5173 = vmatpush1.msra.mxu0 0.0
    %5174 = vmatprep.subr.mxu0 0.0
    %5175 = vmatpush1.msra.mxu0 0.0
    %5176 = vmatprep.subr.mxu0 0.0
    %5177 = vmatpush1.msra.mxu0 0.0
    %5178 = vmatprep.subr.mxu0 0.0
    %5179 = vmatpush1.msra.mxu0 0.0
    %5180 = vmatprep.subr.mxu0 0.0
    %5181 = vmatpush1.msra.mxu0 0.0
    %5182 = vmatprep.subr.mxu0 0.0
    %5183 = vmatpush1.msra.mxu0 0.0
    %5184 = vmatprep.subr.mxu0 0.0
    %5185 = vmatpush1.msra.mxu0 0.0
    %5186 = vmatprep.subr.mxu0 0.0
    %5187 = vmatpush1.msra.mxu0 0.0
    %5188 = vmatprep.subr.mxu0 0.0
    %5189 = vmatpush1.msra.mxu0 0.0
    %5190 = vmatprep.subr.mxu0 0.0
    %5191 = vmatpush1.msra.mxu0 0.0
    %5192 = vmatprep.mubr.f32.mxu0 0.0
    %5193 = vmatmul.mubr.f32.gmra.mrb[0].mxu0 %v2343
    %v5194 = vpop.f32.mrb[0].mxu0
    %v5195 = vadd.f32 0.0, %v5194
    %v5196 = vpop.f32.mrb[0].mxu0
    %5197 = vdwg.mxu0
    %5198 = vmatprep.subr.mxu0 0.0
    %5199 = vmatpush1.msra.mxu0 %v5080
    %5200 = vmatprep.subr.mxu0 0.0
    %5201 = vmatpush1.msra.mxu0 %v5081
    %5202 = vmatprep.subr.mxu0 0.0
    %5203 = vmatpush1.msra.mxu0 %v5082
    %5204 = vmatprep.subr.mxu0 0.0
    %5205 = vmatpush1.msra.mxu0 %v5083
    %5206 = vmatprep.subr.mxu0 0.0
    %5207 = vmatpush1.msra.mxu0 %v5084
    %5208 = vmatprep.subr.mxu0 0.0
    %5209 = vmatpush1.msra.mxu0 %v5085
    %5210 = vmatprep.subr.mxu0 0.0
    %5211 = vmatpush1.msra.mxu0 %v5086
    %5212 = vmatprep.subr.mxu0 0.0
    %5213 = vmatpush1.msra.mxu0 %v5087
    %5214 = vmatprep.subr.mxu0 0.0
    %5215 = vmatpush1.msra.mxu0 %v5088
    %5216 = vmatprep.subr.mxu0 0.0
    %5217 = vmatpush1.msra.mxu0 %v5089
    %5218 = vmatprep.subr.mxu0 0.0
    %5219 = vmatpush1.msra.mxu0 %v5090
    %5220 = vmatprep.subr.mxu0 0.0
    %5221 = vmatpush1.msra.mxu0 %v5091
    %5222 = vmatprep.subr.mxu0 0.0
    %5223 = vmatpush1.msra.mxu0 %v5092
    %5224 = vmatprep.subr.mxu0 0.0
    %5225 = vmatpush1.msra.mxu0 %v5093
    %5226 = vmatprep.subr.mxu0 0.0
    %5227 = vmatpush1.msra.mxu0 %v5094
    %5228 = vmatprep.subr.mxu0 0.0
    %5229 = vmatpush1.msra.mxu0 %v5095
    %5230 = vmatprep.subr.mxu0 0.0
    %5231 = vmatpush1.msra.mxu0 0.0
    %5232 = vmatprep.subr.mxu0 0.0
    %5233 = vmatpush1.msra.mxu0 0.0
    %5234 = vmatprep.subr.mxu0 0.0
    %5235 = vmatpush1.msra.mxu0 0.0
    %5236 = vmatprep.subr.mxu0 0.0
    %5237 = vmatpush1.msra.mxu0 0.0
    %5238 = vmatprep.subr.mxu0 0.0
    %5239 = vmatpush1.msra.mxu0 0.0
    %5240 = vmatprep.subr.mxu0 0.0
    %5241 = vmatpush1.msra.mxu0 0.0
    %5242 = vmatprep.subr.mxu0 0.0
    %5243 = vmatpush1.msra.mxu0 0.0
    %5244 = vmatprep.subr.mxu0 0.0
    %5245 = vmatpush1.msra.mxu0 0.0
    %5246 = vmatprep.subr.mxu0 0.0
    %5247 = vmatpush1.msra.mxu0 0.0
    %5248 = vmatprep.subr.mxu0 0.0
    %5249 = vmatpush1.msra.mxu0 0.0
    %5250 = vmatprep.subr.mxu0 0.0
    %5251 = vmatpush1.msra.mxu0 0.0
    %5252 = vmatprep.subr.mxu0 0.0
    %5253 = vmatpush1.msra.mxu0 0.0
    %5254 = vmatprep.subr.mxu0 0.0
    %5255 = vmatpush1.msra.mxu0 0.0
    %5256 = vmatprep.subr.mxu0 0.0
    %5257 = vmatpush1.msra.mxu0 0.0
    %5258 = vmatprep.subr.mxu0 0.0
    %5259 = vmatpush1.msra.mxu0 0.0
    %5260 = vmatprep.subr.mxu0 0.0
    %5261 = vmatpush1.msra.mxu0 0.0
    %5262 = vmatprep.mubr.f32.mxu0 0.0
    %5263 = vmatmul.mubr.f32.gmra.mrb[0].mxu0 %v5063
    %v5264 = vpop.f32.mrb[0].mxu0
    %v5265 = vadd.f32 %v5195, %v5264
    %v5266 = vpop.f32.mrb[0].mxu0
    %5267 = vdwg.mxu0
    %v5268 = vld [vmem:[#allocation2 + $0x61] ss:$0 sm:$0xff]
    %v5269 = vadd.f32 %v5265, %v5268
    %v5270 = vsub.f32 0.0, %v5269
    %v5271 = vmul.f32 %v5270, 1.442695
    %v5272 = vpow.pop %v5271
    %v5273 = vadd.f32 %v5272, 1.0
    %v5274 = vrcp.pop %v5273
    %v5275 = vmul.f32 1.0, %v5274
    %v5276 = vmul.f32 %v5269, %v5275
    %v5277 = vld [vmem:[#allocation2 + $0x62] ss:$0 sm:$0xff]
    %v5278 = vld [vmem:[#allocation2 + $0x63] ss:$0 sm:$0xff]
    %vm5279 = vcmask 523264
    %v5280 = vsel %vm5279, %v5276, 0.0
    %5281 = vadd.xlane.f32.xlu0 %v5280
    %v5282 = vpop.xlane.xlu0 %5281
    %v5283 = vrcp.pop 64.0
    %v5284 = vmul.f32 %v5282, %v5283
    %v5285 = vsub.f32 %v5276, %v5284
    %v5286 = vmul.f32 %v5285, %v5285
    %v5287 = vsel %vm5279, %v5286, 0.0
    %5288 = vadd.xlane.f32.xlu0 %v5287
    %v5289 = vpop.xlane.xlu0 %5288
    %v5290 = vmul.f32 %v5289, %v5283
    %v5291 = vadd.f32 %v5290, 1e-05
    %v5292 = vrsqrt.pop %v5291
    %v5293 = vmul.f32 %v5285, %v5292
    %v5294 = vmul.f32 %v5293, %v5277
    %v5295 = vadd.f32 %v5294, %v5278
    %v5296 = vld [vmem:[#allocation9] sm:$0xf]
    %v5297 = vld [vmem:[#allocation9 + $0x4] sm:$0xf]
    %v5298 = vld [vmem:[#allocation9 + $0x8] sm:$0xf]
    %v5299 = vld [vmem:[#allocation9 + $0xc] sm:$0xf]
    %v5300 = vld [vmem:[#allocation9 + $0x10] sm:$0xf]
    %v5301 = vld [vmem:[#allocation9 + $0x14] sm:$0xf]
    %v5302 = vld [vmem:[#allocation9 + $0x18] sm:$0xf]
    %v5303 = vld [vmem:[#allocation9 + $0x1c] sm:$0xf]
    %v5304 = vunpack.c.l.bf16 %v5296
    %v5305 = vunpack.c.l.bf16 %v5297
    %v5306 = vunpack.c.l.bf16 %v5298
    %v5307 = vunpack.c.l.bf16 %v5299
    %v5308 = vunpack.c.l.bf16 %v5300
    %v5309 = vunpack.c.l.bf16 %v5301
    %v5310 = vunpack.c.l.bf16 %v5302
    %v5311 = vunpack.c.l.bf16 %v5303
    %v5312 = vld [vmem:[#allocation2 + $0x64] ss:$0 sm:$0xff]
    %v5314 = vsel %vm5279, %v5295, 0
    %5316 = vmatprep.subr.mxu0 0.0
    %5317 = vmatpush1.msra.mxu0 %v5304
    %5318 = vmatprep.subr.mxu0 0.0
    %5319 = vmatpush1.msra.mxu0 %v5305
    %5320 = vmatprep.subr.mxu0 0.0
    %5321 = vmatpush1.msra.mxu0 %v5306
    %5322 = vmatprep.subr.mxu0 0.0
    %5323 = vmatpush1.msra.mxu0 %v5307
    %5324 = vmatprep.subr.mxu0 0.0
    %5325 = vmatpush1.msra.mxu0 %v5308
    %5326 = vmatprep.subr.mxu0 0.0
    %5327 = vmatpush1.msra.mxu0 %v5309
    %5328 = vmatprep.subr.mxu0 0.0
    %5329 = vmatpush1.msra.mxu0 %v5310
    %5330 = vmatprep.subr.mxu0 0.0
    %5331 = vmatpush1.msra.mxu0 %v5311
    %5332 = vmatprep.subr.mxu0 0.0
    %5333 = vmatpush1.msra.mxu0 0.0
    %5334 = vmatprep.subr.mxu0 0.0
    %5335 = vmatpush1.msra.mxu0 0.0
    %5336 = vmatprep.subr.mxu0 0.0
    %5337 = vmatpush1.msra.mxu0 0.0
    %5338 = vmatprep.subr.mxu0 0.0
    %5339 = vmatpush1.msra.mxu0 0.0
    %5340 = vmatprep.subr.mxu0 0.0
    %5341 = vmatpush1.msra.mxu0 0.0
    %5342 = vmatprep.subr.mxu0 0.0
    %5343 = vmatpush1.msra.mxu0 0.0
    %5344 = vmatprep.subr.mxu0 0.0
    %5345 = vmatpush1.msra.mxu0 0.0
    %5346 = vmatprep.subr.mxu0 0.0
    %5347 = vmatpush1.msra.mxu0 0.0
    %5348 = vmatprep.subr.mxu0 0.0
    %5349 = vmatpush1.msra.mxu0 0.0
    %5350 = vmatprep.subr.mxu0 0.0
    %5351 = vmatpush1.msra.mxu0 0.0
    %5352 = vmatprep.subr.mxu0 0.0
    %5353 = vmatpush1.msra.mxu0 0.0
    %5354 = vmatprep.subr.mxu0 0.0
    %5355 = vmatpush1.msra.mxu0 0.0
    %5356 = vmatprep.subr.mxu0 0.0
    %5357 = vmatpush1.msra.mxu0 0.0
    %5358 = vmatprep.subr.mxu0 0.0
    %5359 = vmatpush1.msra.mxu0 0.0
    %5360 = vmatprep.subr.mxu0 0.0
    %5361 = vmatpush1.msra.mxu0 0.0
    %5362 = vmatprep.subr.mxu0 0.0
    %5363 = vmatpush1.msra.mxu0 0.0
    %5364 = vmatprep.subr.mxu0 0.0
    %5365 = vmatpush1.msra.mxu0 0.0
    %5366 = vmatprep.subr.mxu0 0.0
    %5367 = vmatpush1.msra.mxu0 0.0
    %5368 = vmatprep.subr.mxu0 0.0
    %5369 = vmatpush1.msra.mxu0 0.0
    %5370 = vmatprep.subr.mxu0 0.0
    %5371 = vmatpush1.msra.mxu0 0.0
    %5372 = vmatprep.subr.mxu0 0.0
    %5373 = vmatpush1.msra.mxu0 0.0
    %5374 = vmatprep.subr.mxu0 0.0
    %5375 = vmatpush1.msra.mxu0 0.0
    %5376 = vmatprep.subr.mxu0 0.0
    %5377 = vmatpush1.msra.mxu0 0.0
    %5378 = vmatprep.subr.mxu0 0.0
    %5379 = vmatpush1.msra.mxu0 0.0
    %5380 = vmatprep.mubr.f32.mxu0 0.0
    %5381 = vmatmul.mubr.f32.gmra.mrb[0].mxu0 %v5314
    %v5382 = vpop.f32.mrb[0].mxu0
    %v5383 = vadd.f32 %v5312, %v5382
    %v5384 = vpop.f32.mrb[0].mxu0
    %5385 = vdwg.mxu0
    %5386 = vst [vmem:[%s7] sm:$0xff] %v5383
    // Predicated region
    $region50: #{unet1d_forward.1} parent=1 // pred_check
      _
    $region51: #{unet1d_forward.1} parent=1 // pred_check_branch
      %5388 = sbr.rel (0) target = $region53
    $region52: #{unet1d_forward.1} parent=1 // pred_region
      _
    $region53: #{unet1d_forward.1} parent=1 // pred_fallthru
      _
    // Predicated region
    $region54: #{unet1d_forward.1} parent=1 // pred_check
      _
    $region55: #{unet1d_forward.1} parent=1 // pred_check_branch
      %5390 = sbr.rel (0) target = $region57
    $region56: #{unet1d_forward.1} parent=1 // pred_region
      _
    $region57: #{unet1d_forward.1} parent=1 // pred_fallthru
      _
    %5391 = vsyncpa [#allocation3], 1
    %5392 = vsyncpa [#allocation5], 1
    %5393 = vsyncpa [#allocation8], 1

</llo_original>
